<compile_context>
chip_gen: v7x
topology: tpu7x:2x2x1
jax: 0.10.0
libtpu: 0.0.40
codegen_flags: <defaults>
</compile_context>

<pallas_src>
import functools
from collections import namedtuple

import jax
import jax.numpy as jnp
from jax.experimental import pallas as pl
from jax.experimental.pallas import tpu as pltpu

# ----------------------------------------------------------------------------
# Architecture config (matches MobileNetV2.__init__ contract)
# ----------------------------------------------------------------------------
BlockCfg = namedtuple("BlockCfg", ["blocks", "stride", "out_features", "expansion"])
ARCH = [
    BlockCfg(blocks=1, stride=1, out_features=16, expansion=1),
    BlockCfg(blocks=2, stride=2, out_features=24, expansion=2),
]
BN_EPS = 1e-5

CP = 128            # every channel dim padded to one lane tile
NCLS = 1000         # real classes
NCLS_P = 1024       # class dim padded to a lane multiple
C_OUT = 1280        # output-conv channels
MARGIN = 8          # zero rows before/after the depthwise halo regions
VPB = 14            # vec rows per block: exp_b, dw_s, dw_b, pw_s, pw_b, 9 taps


# ----------------------------------------------------------------------------
# The fused whole-network kernel
# ----------------------------------------------------------------------------
def _mobilenet_fused_kernel(
    xcols_ref, w_stack_ref, vec_ref, s1_ref, b_out_ref, b_fc_ref,
    w_out_hbm_ref, w_fc_hbm_ref,
    out_ref,
    pad_ref, w_out_buf, w_fc_buf, dma_sem,
    *, block_meta, regions, n_img, h_fin, w_fin, n_classes):
  f32 = jnp.float32
  bf16 = jnp.bfloat16

  # Background DMAs for the late-use weights; they land while the conv blocks
  # run and are waited on right before first use (output conv / FC).
  w_out_copy = pltpu.make_async_copy(w_out_hbm_ref, w_out_buf, dma_sem.at[0])
  w_fc_copy = pltpu.make_async_copy(w_fc_hbm_ref, w_fc_buf, dma_sem.at[1])
  w_out_copy.start()
  w_fc_copy.start()

  # Zero the depthwise scratch ONCE: halo rows are functional zeros (they
  # replace per-tap row-validity masks); interiors are overwritten each layer.
  pad_ref[...] = jnp.zeros_like(pad_ref)

  def vrow(r):
    return vec_ref[r:r + 1, :]                    # (1, CP) f32, static slice

  def mm(a, w):
    # bf16 MXU matmul with f32 accumulation (weights stored in bf16).
    return jnp.dot(a.astype(bf16), w, preferred_element_type=f32)

  def depthwise(h, vbase, hh, ww, region_base):
    # h: (n_img*hh*ww, CP) f32, rows ordered (img, i, j).  pad_ref layout:
    # per image, hh+2 padded rows of pitch ww (top/bottom halo rows stay 0),
    # so each of the 9 taps is ONE contiguous (hh*ww, CP) slice per image;
    # only dcol != 0 taps need a (hoisted) column-validity mask.
    pitch = (hh + 2) * ww
    m_img = hh * ww
    for img in range(n_img):
      pad_ref[pl.ds(region_base + img * pitch + ww, m_img), :] = (
          h[img * m_img:(img + 1) * m_img, :])
    j_idx = jax.lax.broadcasted_iota(jnp.int32, (m_img, CP), 0) % ww
    vj = {-1: j_idx >= 1, 1: j_idx <= ww - 2}
    scale, bias = vrow(vbase + 1), vrow(vbase + 2)
    taps_w = [vrow(vbase + 5 + t) for t in range(9)]     # hoisted tap weights
    outs = []
    for img in range(n_img):
      base = region_base + img * pitch
      acc = jnp.zeros((m_img, CP), f32)
      for kh in range(3):
        for kw in range(3):
          dh, dcol = kh - 1, kw - 1
          tap = pad_ref[pl.ds(base + (1 + dh) * ww + dcol, m_img), :]
          if dcol != 0:
            tap = jnp.where(vj[dcol], tap, 0.0)
          acc = acc + tap * taps_w[kh * 3 + kw]
      outs.append(jnp.maximum(acc * scale + bias, 0.0))  # folded BN + ReLU
    return outs[0] if n_img == 1 else jnp.concatenate(outs, axis=0)

  # ---- input conv (3x3 s2, im2col'd in glue): conv + bias, no BN/act -------
  y = mm(xcols_ref[...], w_stack_ref[0]) + vrow(0)              # (M0, CP)

  # ---- bottleneck blocks (statically unrolled) ------------------------------
  for bi, (hh, ww, stride, residual) in enumerate(block_meta):
    vbase = 1 + bi * VPB
    res = y
    # expansion 1x1 conv (+bias, no BN) + ReLU6
    h = jnp.clip(mm(y, w_stack_ref[1 + 2 * bi]) + vrow(vbase), 0.0, 6.0)
    # depthwise 3x3 (+bias) + BN + ReLU, computed on the stride-1 grid
    h = depthwise(h, vbase, hh, ww, regions[(hh, ww)])
    if stride == 2:
      # stride-2 subsample = pick rows (2i, 2j): 0/1 bf16 matmul (MXU idle)
      h = jnp.dot(s1_ref[...], h.astype(bf16), preferred_element_type=f32)
    # pointwise 1x1 conv (+bias) + BN + ReLU
    y = jnp.maximum(mm(h, w_stack_ref[2 + 2 * bi]) * vrow(vbase + 3)
                    + vrow(vbase + 4), 0.0)
    if residual:
      y = y + res

  # ---- output conv 1x1 -> 1280 (bias only) ----------------------------------
  w_out_copy.wait()
  y = mm(y, w_out_buf[...]) + b_out_ref[...]            # (n*h_fin*w_fin, 1280)

  # ---- AvgPool2d(7, 7, padding=3): one window covers the whole h_fin x w_fin
  #      map; count_include_pad=True -> divide by 49.  Sublane sum on the XLU.
  hw = h_fin * w_fin
  pooled = jnp.concatenate(
      [jnp.sum(y[img * hw:(img + 1) * hw, :], axis=0, keepdims=True)
       for img in range(n_img)], axis=0) * (1.0 / 49.0)  # (N, 1280)

  # TODO(synk): nn.Dropout() is stochastic only in train mode; eval-mode identity here.

  # ---- FC -> 1024 padded classes, masked softmax over the 1000 real ones ----
  w_fc_copy.wait()
  logits = mm(pooled, w_fc_buf[...]) + b_fc_ref[...]     # (N, NCLS_P)
  cls = jax.lax.broadcasted_iota(jnp.int32, logits.shape, 1)
  logits = jnp.where(cls < n_classes, logits, -1e30)
  mx = jnp.max(logits, axis=-1, keepdims=True)
  e = jnp.exp(logits - mx)
  out_ref[...] = e / jnp.sum(e, axis=-1, keepdims=True)


# ----------------------------------------------------------------------------
# JAX glue (one-off input im2col + constant selection matrix)
# ----------------------------------------------------------------------------
def extract_patches(x, ksize, stride, pad):
  """x: (N,H,W,C) -> (N,Ho,Wo,k*k,C); one-off im2col of the raw network input."""
  n, h, w, c = x.shape
  xp = jnp.pad(x, ((0, 0), (pad, pad), (pad, pad), (0, 0)))
  ho = (h + 2 * pad - ksize) // stride + 1
  wo = (w + 2 * pad - ksize) // stride + 1
  cols = []
  for kh in range(ksize):
    for kw in range(ksize):
      sl = jax.lax.slice(
          xp, (0, kh, kw, 0),
          (n, kh + (ho - 1) * stride + 1, kw + (wo - 1) * stride + 1, c),
          (1, stride, stride, 1))
      cols.append(sl)
  return jnp.stack(cols, axis=3)


def _stride2_select(n, h1, w1):
  """Constant 0/1 (bf16) row-selection matrix picking rows (2i, 2j)."""
  ho, wo = (h1 - 1) // 2 + 1, (w1 - 1) // 2 + 1
  m_out = jnp.arange(n * ho * wo)
  ni = m_out // (ho * wo)
  ii = (m_out % (ho * wo)) // wo
  jj = m_out % wo
  src = ni * (h1 * w1) + 2 * ii * w1 + 2 * jj
  return (jnp.arange(n * h1 * w1)[None, :] == src[:, None]).astype(jnp.bfloat16)


@jax.jit
def mobilenet_v2_forward(packed, x_nchw):
  x = jnp.transpose(x_nchw, (0, 2, 3, 1)).astype(jnp.float32)     # NCHW -> NHWC
  n, _, _, c = x.shape

  # one-off im2col for the 3x3 / stride-2 input conv, K padded to 128 lanes
  p = extract_patches(x, 3, 2, 1)                                  # (N,8,8,9,3)
  ho, wo = p.shape[1], p.shape[2]
  xcols = p.reshape(n * ho * wo, 9 * c)
  xcols = jnp.pad(xcols, ((0, 0), (0, CP - 9 * c))).astype(jnp.bfloat16)

  # static per-block spatial metadata (mirrors MobileNetV2._make_layer)
  block_meta = []
  hh, ww = ho, wo
  for i, cfg in enumerate(ARCH):
    for b in range(1, cfg.blocks + 1):
      stride = cfg.stride if b == 1 else 1
      residual = b > 1 and i != 0
      block_meta.append((hh, ww, stride, residual))
      hh = (hh - 1) // stride + 1
      ww = (ww - 1) // stride + 1
  h_fin, w_fin = hh, ww
  strided = [m for m in block_meta if m[2] == 2]
  assert strided == [(8, 8, 2, False)] and (h_fin, w_fin) == (4, 4), block_meta
  s1 = _stride2_select(n, strided[0][0], strided[0][1])

  # one zero-halo scratch region per distinct spatial size (row pitch = ww)
  regions, off = {}, MARGIN
  for (bh, bw, _, _) in block_meta:
    if (bh, bw) not in regions:
      regions[(bh, bw)] = off
      off += n * (bh + 2) * bw
  pad_rows = -(-(off + MARGIN) // 8) * 8

  # advisory cost estimate for XLA's scheduler
  flops = 2 * (n * ho * wo) * CP * CP
  for (bh, bw, stride, _) in block_meta:
    m = n * bh * bw
    m2 = m if stride == 1 else n * ((bh - 1) // 2 + 1) * ((bw - 1) // 2 + 1)
    flops += 2 * m * CP * CP + 18 * m * CP + 2 * m2 * CP * CP
    if stride == 2:
      flops += 2 * m2 * m * CP
  flops += 2 * (n * h_fin * w_fin) * CP * C_OUT + 2 * n * C_OUT * NCLS_P

  inputs = (xcols, packed["w_stack"], packed["vec"], s1, packed["b_out"],
            packed["b_fc"], packed["w_out"], packed["w_fc"])
  bytes_accessed = sum(int(a.size) * a.dtype.itemsize for a in inputs)
  bytes_accessed += n * NCLS_P * 4

  kernel = functools.partial(
      _mobilenet_fused_kernel, block_meta=tuple(block_meta), regions=regions,
      n_img=n, h_fin=h_fin, w_fin=w_fin, n_classes=NCLS)
  vmem = pl.BlockSpec(memory_space=pltpu.MemorySpace.VMEM)
  hbm = pl.BlockSpec(memory_space=pl.ANY)   # manual async copy inside kernel

  out = pl.pallas_call(
      kernel,
      out_shape=jax.ShapeDtypeStruct((n, NCLS_P), jnp.float32),
      in_specs=[vmem, vmem, vmem, vmem, vmem, vmem, hbm, hbm],
      out_specs=vmem,
      scratch_shapes=[
          pltpu.VMEM((pad_rows, CP), jnp.float32),       # depthwise halo slab
          pltpu.VMEM((CP, C_OUT), jnp.bfloat16),         # output-conv weight
          pltpu.VMEM((C_OUT, NCLS_P), jnp.bfloat16),     # FC weight
          pltpu.SemaphoreType.DMA((2,)),
      ],
      cost_estimate=pl.CostEstimate(
          flops=int(flops), transcendentals=int(n * NCLS_P),
          bytes_accessed=int(bytes_accessed)),
  )(*inputs)
  return out[:, :NCLS]


# ----------------------------------------------------------------------------
# Deterministic parameter construction + one-time packing (fold BN, pad, bf16)
# ----------------------------------------------------------------------------
def make_params(key):
  keys = iter(jax.random.split(key, 128))

  def nrm(shape, s=0.1):
    return s * jax.random.normal(next(keys), shape, dtype=jnp.float32)

  params = {
      "input_conv": dict(w=nrm((27, 32)), b=nrm((32,))),
      "blocks": [],
  }
  in_f = 32
  for i, cfg in enumerate(ARCH):
    for b in range(1, cfg.blocks + 1):
      cexp = cfg.expansion * in_f
      cout = cfg.out_features
      params["blocks"].append(dict(
          exp_w=nrm((in_f, cexp)), exp_b=nrm((cexp,)),
          dw_w=nrm((9, cexp)), dw_b=nrm((cexp,)),
          dw_gamma=1.0 + nrm((cexp,)), dw_beta=nrm((cexp,)),
          dw_mean=nrm((cexp,)), dw_var=1.0 + jnp.abs(nrm((cexp,))),
          pw_w=nrm((cexp, cout)), pw_b=nrm((cout,)),
          pw_gamma=1.0 + nrm((cout,)), pw_beta=nrm((cout,)),
          pw_mean=nrm((cout,)), pw_var=1.0 + jnp.abs(nrm((cout,))),
      ))
      in_f = cout
  params["output_conv"] = dict(w=nrm((in_f, 1280)), b=nrm((1280,)))
  params["fc"] = dict(w=nrm((1280, 1000)), b=nrm((1000,)))
  return params


def pack_params(params):
  """Fold BatchNorm, pad every channel dim to 128 once, cast MXU weights to
  bf16, and consolidate all small per-channel vectors into one f32 slab and
  all 128x128 matmul weights into one bf16 stack (few, large DMAs)."""
  def pad_mat(w):
    r, c = w.shape
    return jnp.pad(w, ((0, CP - r), (0, CP - c))).astype(jnp.bfloat16)

  def pad_vec(v):
    return jnp.pad(v, ((0, CP - v.shape[0]),)).reshape(1, CP).astype(jnp.float32)

  mats = [pad_mat(params["input_conv"]["w"])]
  vec_rows = [pad_vec(params["input_conv"]["b"])]
  for blk in params["blocks"]:
    cexp = blk["exp_w"].shape[1]
    s_dw = blk["dw_gamma"] / jnp.sqrt(blk["dw_var"] + BN_EPS)
    s_pw = blk["pw_gamma"] / jnp.sqrt(blk["pw_var"] + BN_EPS)
    mats.append(pad_mat(blk["exp_w"]))
    mats.append(pad_mat(blk["pw_w"]))
    vec_rows.append(pad_vec(blk["exp_b"]))                                   # +0
    vec_rows.append(pad_vec(s_dw))                                           # +1
    vec_rows.append(pad_vec((blk["dw_b"] - blk["dw_mean"]) * s_dw + blk["dw_beta"]))  # +2
    vec_rows.append(pad_vec(s_pw))                                           # +3
    vec_rows.append(pad_vec((blk["pw_b"] - blk["pw_mean"]) * s_pw + blk["pw_beta"]))  # +4
    vec_rows.append(jnp.pad(blk["dw_w"], ((0, 0), (0, CP - cexp))))          # +5..+13
  vec = jnp.concatenate(vec_rows, axis=0).astype(jnp.float32)
  vec = jnp.pad(vec, ((0, -(-vec.shape[0] // 8) * 8 - vec.shape[0]), (0, 0)))

  cout = params["output_conv"]["w"].shape[0]
  return dict(
      w_stack=jnp.stack(mats),                                      # (7,128,128) bf16
      vec=vec,                                                      # (48,128) f32
      w_out=jnp.pad(params["output_conv"]["w"],
                    ((0, CP - cout), (0, 0))).astype(jnp.bfloat16), # (128,1280) bf16
      b_out=params["output_conv"]["b"].reshape(1, -1).astype(jnp.float32),
      w_fc=jnp.pad(params["fc"]["w"],
                   ((0, 0), (0, NCLS_P - NCLS))).astype(jnp.bfloat16),  # (1280,1024)
      b_fc=jnp.pad(params["fc"]["b"],
                   ((0, NCLS_P - NCLS),)).reshape(1, -1).astype(jnp.float32),
  )


# ----------------------------------------------------------------------------
if __name__ == "__main__":
  key = jax.random.PRNGKey(0)
  pkey, xkey = jax.random.split(key)
  params = make_params(pkey)
  packed = pack_params(params)
  x = jax.random.normal(xkey, (2, 3, 16, 16), dtype=jnp.float32)   # NCHW input

  out = mobilenet_v2_forward(packed, x)
  out = jax.block_until_ready(out)

  assert out.shape == (2, 1000), out.shape
  assert bool(jnp.all(jnp.isfinite(out)))
  assert bool(jnp.allclose(jnp.sum(out, axis=-1), 1.0, atol=1e-3))
  print("KERNEL_OK")
</pallas_src>

<mosaic_0001>
module attributes {stable_mosaic.version = 11 : i64} {
  func.func @_mobilenet_fused_kernel(%arg0: memref<128x128xbf16, #tpu.memory_space<vmem>>, %arg1: memref<7x128x128xbf16, #tpu.memory_space<vmem>>, %arg2: memref<48x128xf32, #tpu.memory_space<vmem>>, %arg3: memref<32x128xbf16, #tpu.memory_space<vmem>>, %arg4: memref<1x1280xf32, #tpu.memory_space<vmem>>, %arg5: memref<1x1024xf32, #tpu.memory_space<vmem>>, %arg6: memref<128x1280xbf16, #tpu.memory_space<any>>, %arg7: memref<1280x1024xbf16, #tpu.memory_space<any>>, %arg8: memref<2x1024xf32, #tpu.memory_space<vmem>>, %arg9: memref<224x128xf32, #tpu.memory_space<vmem>>, %arg10: memref<128x1280xbf16, #tpu.memory_space<vmem>>, %arg11: memref<1280x1024xbf16, #tpu.memory_space<vmem>>, %arg12: memref<2x!tpu.dma_semaphore, #tpu.memory_space<semaphore_mem>>) attributes {dimension_semantics = [], scalar_prefetch = 0 : i64, scratch_operands = 4 : i64, tpu.core_type = #tpu.core_type<tc>} {
    %c0_i32 = arith.constant 0 : i32
    %0 = tpu.memref_slice %arg12[%c0_i32] : memref<2x!tpu.dma_semaphore, #tpu.memory_space<semaphore_mem>> -> memref<1x!tpu.dma_semaphore, #tpu.memory_space<semaphore_mem>>
    %1 = tpu.memref_squeeze %0 : memref<1x!tpu.dma_semaphore, #tpu.memory_space<semaphore_mem>> -> memref<!tpu.dma_semaphore, #tpu.memory_space<semaphore_mem>>
    tpu.enqueue_dma source(%arg6 : memref<128x1280xbf16, #tpu.memory_space<any>>) target(%arg10 : memref<128x1280xbf16, #tpu.memory_space<vmem>>) target_semaphore(%1 : memref<!tpu.dma_semaphore, #tpu.memory_space<semaphore_mem>>)
    %c1_i32 = arith.constant 1 : i32
    %2 = tpu.memref_slice %arg12[%c1_i32] : memref<2x!tpu.dma_semaphore, #tpu.memory_space<semaphore_mem>> -> memref<1x!tpu.dma_semaphore, #tpu.memory_space<semaphore_mem>>
    %3 = tpu.memref_squeeze %2 : memref<1x!tpu.dma_semaphore, #tpu.memory_space<semaphore_mem>> -> memref<!tpu.dma_semaphore, #tpu.memory_space<semaphore_mem>>
    tpu.enqueue_dma source(%arg7 : memref<1280x1024xbf16, #tpu.memory_space<any>>) target(%arg11 : memref<1280x1024xbf16, #tpu.memory_space<vmem>>) target_semaphore(%3 : memref<!tpu.dma_semaphore, #tpu.memory_space<semaphore_mem>>)
    %cst = arith.constant 0.000000e+00 : f32
    %4 = vector.broadcast %cst : f32 to vector<224x128xf32>
    %c0 = arith.constant 0 : index
    %c0_0 = arith.constant 0 : index
    %5 = vector.load %arg9[%c0, %c0_0] : memref<224x128xf32, #tpu.memory_space<vmem>>, vector<224x128xf32>
    tpu.vector_store %arg9[%c0, %c0_0], %4 {strides = array<i32>} : memref<224x128xf32, #tpu.memory_space<vmem>>, vector<224x128xf32>,
    %c0_1 = arith.constant 0 : index
    %c0_2 = arith.constant 0 : index
    %6 = vector.load %arg0[%c0_1, %c0_2] : memref<128x128xbf16, #tpu.memory_space<vmem>>, vector<128x128xbf16>
    %c0_3 = arith.constant 0 : index
    %c0_4 = arith.constant 0 : index
    %c0_5 = arith.constant 0 : index
    %7 = vector.load %arg1[%c0_3, %c0_4, %c0_5] : memref<7x128x128xbf16, #tpu.memory_space<vmem>>, vector<1x128x128xbf16>
    %8 = vector.shape_cast %7 : vector<1x128x128xbf16> to vector<128x128xbf16>
    %cst_6 = arith.constant dense<0.000000e+00> : vector<128x128xf32>
    %9 = tpu.matmul %6, %8, %cst_6 {dimension_numbers = #tpu.dot_dimension_numbers<[1], [0], [0], [1], [0, 0, 1, 1], [], []>} : vector<128x128xbf16>, vector<128x128xbf16>, vector<128x128xf32> -> vector<128x128xf32>
    %c0_7 = arith.constant 0 : index
    %c0_8 = arith.constant 0 : index
    %10 = vector.load %arg2[%c0_7, %c0_8] : memref<48x128xf32, #tpu.memory_space<vmem>>, vector<1x128xf32>
    %11 = vector.broadcast %10 : vector<1x128xf32> to vector<128x128xf32>
    %12 = arith.addf %9, %11 : vector<128x128xf32>
    %c1 = arith.constant 1 : index
    %c0_9 = arith.constant 0 : index
    %c0_10 = arith.constant 0 : index
    %13 = vector.load %arg1[%c1, %c0_9, %c0_10] : memref<7x128x128xbf16, #tpu.memory_space<vmem>>, vector<1x128x128xbf16>
    %14 = vector.shape_cast %13 : vector<1x128x128xbf16> to vector<128x128xbf16>
    %15 = arith.truncf %12 : vector<128x128xf32> to vector<128x128xbf16>
    %cst_11 = arith.constant dense<0.000000e+00> : vector<128x128xf32>
    %16 = tpu.matmul %15, %14, %cst_11 {dimension_numbers = #tpu.dot_dimension_numbers<[1], [0], [0], [1], [0, 0, 1, 1], [], []>} : vector<128x128xbf16>, vector<128x128xbf16>, vector<128x128xf32> -> vector<128x128xf32>
    %c1_12 = arith.constant 1 : index
    %c0_13 = arith.constant 0 : index
    %17 = vector.load %arg2[%c1_12, %c0_13] : memref<48x128xf32, #tpu.memory_space<vmem>>, vector<1x128xf32>
    %18 = vector.broadcast %17 : vector<1x128xf32> to vector<128x128xf32>
    %19 = arith.addf %16, %18 : vector<128x128xf32>
    %cst_14 = arith.constant 0.000000e+00 : f32
    %cst_15 = arith.constant 6.000000e+00 : f32
    %20 = vector.broadcast %cst_14 : f32 to vector<128x128xf32>
    %21 = arith.maximumf %20, %19 : vector<128x128xf32>
    %22 = vector.broadcast %cst_15 : f32 to vector<128x128xf32>
    %23 = arith.minimumf %22, %21 : vector<128x128xf32>
    %24 = vector.extract_strided_slice %23 {offsets = [0, 0], sizes = [64, 128], strides = [1, 1]} : vector<128x128xf32> to vector<64x128xf32>
    %c16 = arith.constant 16 : index
    %c0_16 = arith.constant 0 : index
    %25 = vector.load %arg9[%c16, %c0_16] : memref<224x128xf32, #tpu.memory_space<vmem>>, vector<64x128xf32>
    tpu.vector_store %arg9[%c16, %c0_16], %24 {strides = array<i32>} : memref<224x128xf32, #tpu.memory_space<vmem>>, vector<64x128xf32>,
    %26 = vector.extract_strided_slice %23 {offsets = [64, 0], sizes = [64, 128], strides = [1, 1]} : vector<128x128xf32> to vector<64x128xf32>
    %c96 = arith.constant 96 : index
    %c0_17 = arith.constant 0 : index
    %27 = vector.load %arg9[%c96, %c0_17] : memref<224x128xf32, #tpu.memory_space<vmem>>, vector<64x128xf32>
    tpu.vector_store %arg9[%c96, %c0_17], %26 {strides = array<i32>} : memref<224x128xf32, #tpu.memory_space<vmem>>, vector<64x128xf32>,
    %28 = tpu.iota {dimensions = array<i32: 0>} : vector<64x128xi32>
    %c8_i32 = arith.constant 8 : i32
    %c0_i32_18 = arith.constant 0 : i32
    %29 = arith.cmpi eq, %c8_i32, %c0_i32_18 : i32
    %c1_i32_19 = arith.constant 1 : i32
    %30 = arith.select %29, %c1_i32_19, %c8_i32 : i32
    %31 = vector.broadcast %30 : i32 to vector<64x128xi32>
    %32 = arith.remsi %28, %31 : vector<64x128xi32>
    %c0_i32_20 = arith.constant 0 : i32
    %33 = vector.broadcast %c0_i32_20 : i32 to vector<64x128xi32>
    %34 = arith.cmpi ne, %32, %33 : vector<64x128xi32>
    %c0_i32_21 = arith.constant 0 : i32
    %35 = vector.broadcast %c0_i32_21 : i32 to vector<64x128xi32>
    %36 = arith.cmpi slt, %32, %35 : vector<64x128xi32>
    %c0_i32_22 = arith.constant 0 : i32
    %37 = arith.cmpi slt, %30, %c0_i32_22 : i32
    %38 = vector.broadcast %37 : i1 to vector<64x128xi1>
    %39 = vector.broadcast %38 : vector<64x128xi1> to vector<64x128xi1>
    %40 = arith.xori %36, %39 : vector<64x128xi1>
    %41 = arith.andi %40, %34 : vector<64x128xi1>
    %42 = vector.broadcast %30 : i32 to vector<64x128xi32>
    %43 = arith.addi %32, %42 : vector<64x128xi32>
    %44 = arith.select %41, %43, %32 : vector<64x128xi1>, vector<64x128xi32>
    %c1_i32_23 = arith.constant 1 : i32
    %45 = vector.broadcast %c1_i32_23 : i32 to vector<64x128xi32>
    %46 = arith.cmpi sge, %44, %45 : vector<64x128xi32>
    %c6_i32 = arith.constant 6 : i32
    %47 = vector.broadcast %c6_i32 : i32 to vector<64x128xi32>
    %48 = arith.cmpi sle, %44, %47 : vector<64x128xi32>
    %c2 = arith.constant 2 : index
    %c0_24 = arith.constant 0 : index
    %49 = vector.load %arg2[%c2, %c0_24] : memref<48x128xf32, #tpu.memory_space<vmem>>, vector<1x128xf32>
    %c3 = arith.constant 3 : index
    %c0_25 = arith.constant 0 : index
    %50 = vector.load %arg2[%c3, %c0_25] : memref<48x128xf32, #tpu.memory_space<vmem>>, vector<1x128xf32>
    %c6 = arith.constant 6 : index
    %c0_26 = arith.constant 0 : index
    %51 = vector.load %arg2[%c6, %c0_26] : memref<48x128xf32, #tpu.memory_space<vmem>>, vector<1x128xf32>
    %c7 = arith.constant 7 : index
    %c0_27 = arith.constant 0 : index
    %52 = vector.load %arg2[%c7, %c0_27] : memref<48x128xf32, #tpu.memory_space<vmem>>, vector<1x128xf32>
    %c8 = arith.constant 8 : index
    %c0_28 = arith.constant 0 : index
    %53 = vector.load %arg2[%c8, %c0_28] : memref<48x128xf32, #tpu.memory_space<vmem>>, vector<1x128xf32>
    %c9 = arith.constant 9 : index
    %c0_29 = arith.constant 0 : index
    %54 = vector.load %arg2[%c9, %c0_29] : memref<48x128xf32, #tpu.memory_space<vmem>>, vector<1x128xf32>
    %c10 = arith.constant 10 : index
    %c0_30 = arith.constant 0 : index
    %55 = vector.load %arg2[%c10, %c0_30] : memref<48x128xf32, #tpu.memory_space<vmem>>, vector<1x128xf32>
    %c11 = arith.constant 11 : index
    %c0_31 = arith.constant 0 : index
    %56 = vector.load %arg2[%c11, %c0_31] : memref<48x128xf32, #tpu.memory_space<vmem>>, vector<1x128xf32>
    %c12 = arith.constant 12 : index
    %c0_32 = arith.constant 0 : index
    %57 = vector.load %arg2[%c12, %c0_32] : memref<48x128xf32, #tpu.memory_space<vmem>>, vector<1x128xf32>
    %c13 = arith.constant 13 : index
    %c0_33 = arith.constant 0 : index
    %58 = vector.load %arg2[%c13, %c0_33] : memref<48x128xf32, #tpu.memory_space<vmem>>, vector<1x128xf32>
    %c14 = arith.constant 14 : index
    %c0_34 = arith.constant 0 : index
    %59 = vector.load %arg2[%c14, %c0_34] : memref<48x128xf32, #tpu.memory_space<vmem>>, vector<1x128xf32>
    %cst_35 = arith.constant 0.000000e+00 : f32
    %60 = vector.broadcast %cst_35 : f32 to vector<64x128xf32>
    %c7_36 = arith.constant 7 : index
    %c0_37 = arith.constant 0 : index
    %61 = vector.load %arg9[%c7_36, %c0_37] : memref<224x128xf32, #tpu.memory_space<vmem>>, vector<64x128xf32>
    %cst_38 = arith.constant 0.000000e+00 : f32
    %62 = vector.broadcast %cst_38 : f32 to vector<64x128xf32>
    %63 = arith.select %46, %61, %62 : vector<64x128xi1>, vector<64x128xf32>
    %64 = vector.broadcast %51 : vector<1x128xf32> to vector<64x128xf32>
    %65 = arith.mulf %63, %64 : vector<64x128xf32>
    %66 = arith.addf %60, %65 : vector<64x128xf32>
    %c8_39 = arith.constant 8 : index
    %c0_40 = arith.constant 0 : index
    %67 = vector.load %arg9[%c8_39, %c0_40] : memref<224x128xf32, #tpu.memory_space<vmem>>, vector<64x128xf32>
    %68 = vector.broadcast %52 : vector<1x128xf32> to vector<64x128xf32>
    %69 = arith.mulf %67, %68 : vector<64x128xf32>
    %70 = arith.addf %66, %69 : vector<64x128xf32>
    %c9_41 = arith.constant 9 : index
    %c0_42 = arith.constant 0 : index
    %71 = vector.load %arg9[%c9_41, %c0_42] : memref<224x128xf32, #tpu.memory_space<vmem>>, vector<64x128xf32>
    %cst_43 = arith.constant 0.000000e+00 : f32
    %72 = vector.broadcast %cst_43 : f32 to vector<64x128xf32>
    %73 = arith.select %48, %71, %72 : vector<64x128xi1>, vector<64x128xf32>
    %74 = vector.broadcast %53 : vector<1x128xf32> to vector<64x128xf32>
    %75 = arith.mulf %73, %74 : vector<64x128xf32>
    %76 = arith.addf %70, %75 : vector<64x128xf32>
    %c15 = arith.constant 15 : index
    %c0_44 = arith.constant 0 : index
    %77 = vector.load %arg9[%c15, %c0_44] : memref<224x128xf32, #tpu.memory_space<vmem>>, vector<64x128xf32>
    %cst_45 = arith.constant 0.000000e+00 : f32
    %78 = vector.broadcast %cst_45 : f32 to vector<64x128xf32>
    %79 = arith.select %46, %77, %78 : vector<64x128xi1>, vector<64x128xf32>
    %80 = vector.broadcast %54 : vector<1x128xf32> to vector<64x128xf32>
    %81 = arith.mulf %79, %80 : vector<64x128xf32>
    %82 = arith.addf %76, %81 : vector<64x128xf32>
    %c16_46 = arith.constant 16 : index
    %c0_47 = arith.constant 0 : index
    %83 = vector.load %arg9[%c16_46, %c0_47] : memref<224x128xf32, #tpu.memory_space<vmem>>, vector<64x128xf32>
    %84 = vector.broadcast %55 : vector<1x128xf32> to vector<64x128xf32>
    %85 = arith.mulf %83, %84 : vector<64x128xf32>
    %86 = arith.addf %82, %85 : vector<64x128xf32>
    %c17 = arith.constant 17 : index
    %c0_48 = arith.constant 0 : index
    %87 = vector.load %arg9[%c17, %c0_48] : memref<224x128xf32, #tpu.memory_space<vmem>>, vector<64x128xf32>
    %cst_49 = arith.constant 0.000000e+00 : f32
    %88 = vector.broadcast %cst_49 : f32 to vector<64x128xf32>
    %89 = arith.select %48, %87, %88 : vector<64x128xi1>, vector<64x128xf32>
    %90 = vector.broadcast %56 : vector<1x128xf32> to vector<64x128xf32>
    %91 = arith.mulf %89, %90 : vector<64x128xf32>
    %92 = arith.addf %86, %91 : vector<64x128xf32>
    %c23 = arith.constant 23 : index
    %c0_50 = arith.constant 0 : index
    %93 = vector.load %arg9[%c23, %c0_50] : memref<224x128xf32, #tpu.memory_space<vmem>>, vector<64x128xf32>
    %cst_51 = arith.constant 0.000000e+00 : f32
    %94 = vector.broadcast %cst_51 : f32 to vector<64x128xf32>
    %95 = arith.select %46, %93, %94 : vector<64x128xi1>, vector<64x128xf32>
    %96 = vector.broadcast %57 : vector<1x128xf32> to vector<64x128xf32>
    %97 = arith.mulf %95, %96 : vector<64x128xf32>
    %98 = arith.addf %92, %97 : vector<64x128xf32>
    %c24 = arith.constant 24 : index
    %c0_52 = arith.constant 0 : index
    %99 = vector.load %arg9[%c24, %c0_52] : memref<224x128xf32, #tpu.memory_space<vmem>>, vector<64x128xf32>
    %100 = vector.broadcast %58 : vector<1x128xf32> to vector<64x128xf32>
    %101 = arith.mulf %99, %100 : vector<64x128xf32>
    %102 = arith.addf %98, %101 : vector<64x128xf32>
    %c25 = arith.constant 25 : index
    %c0_53 = arith.constant 0 : index
    %103 = vector.load %arg9[%c25, %c0_53] : memref<224x128xf32, #tpu.memory_space<vmem>>, vector<64x128xf32>
    %cst_54 = arith.constant 0.000000e+00 : f32
    %104 = vector.broadcast %cst_54 : f32 to vector<64x128xf32>
    %105 = arith.select %48, %103, %104 : vector<64x128xi1>, vector<64x128xf32>
    %106 = vector.broadcast %59 : vector<1x128xf32> to vector<64x128xf32>
    %107 = arith.mulf %105, %106 : vector<64x128xf32>
    %108 = arith.addf %102, %107 : vector<64x128xf32>
    %109 = vector.broadcast %49 : vector<1x128xf32> to vector<64x128xf32>
    %110 = arith.mulf %108, %109 : vector<64x128xf32>
    %111 = vector.broadcast %50 : vector<1x128xf32> to vector<64x128xf32>
    %112 = arith.addf %110, %111 : vector<64x128xf32>
    %cst_55 = arith.constant 0.000000e+00 : f32
    %113 = vector.broadcast %cst_55 : f32 to vector<64x128xf32>
    %114 = arith.maximumf %112, %113 : vector<64x128xf32>
    %cst_56 = arith.constant 0.000000e+00 : f32
    %115 = vector.broadcast %cst_56 : f32 to vector<64x128xf32>
    %c87 = arith.constant 87 : index
    %c0_57 = arith.constant 0 : index
    %116 = vector.load %arg9[%c87, %c0_57] : memref<224x128xf32, #tpu.memory_space<vmem>>, vector<64x128xf32>
    %cst_58 = arith.constant 0.000000e+00 : f32
    %117 = vector.broadcast %cst_58 : f32 to vector<64x128xf32>
    %118 = arith.select %46, %116, %117 : vector<64x128xi1>, vector<64x128xf32>
    %119 = vector.broadcast %51 : vector<1x128xf32> to vector<64x128xf32>
    %120 = arith.mulf %118, %119 : vector<64x128xf32>
    %121 = arith.addf %115, %120 : vector<64x128xf32>
    %c88 = arith.constant 88 : index
    %c0_59 = arith.constant 0 : index
    %122 = vector.load %arg9[%c88, %c0_59] : memref<224x128xf32, #tpu.memory_space<vmem>>, vector<64x128xf32>
    %123 = vector.broadcast %52 : vector<1x128xf32> to vector<64x128xf32>
    %124 = arith.mulf %122, %123 : vector<64x128xf32>
    %125 = arith.addf %121, %124 : vector<64x128xf32>
    %c89 = arith.constant 89 : index
    %c0_60 = arith.constant 0 : index
    %126 = vector.load %arg9[%c89, %c0_60] : memref<224x128xf32, #tpu.memory_space<vmem>>, vector<64x128xf32>
    %cst_61 = arith.constant 0.000000e+00 : f32
    %127 = vector.broadcast %cst_61 : f32 to vector<64x128xf32>
    %128 = arith.select %48, %126, %127 : vector<64x128xi1>, vector<64x128xf32>
    %129 = vector.broadcast %53 : vector<1x128xf32> to vector<64x128xf32>
    %130 = arith.mulf %128, %129 : vector<64x128xf32>
    %131 = arith.addf %125, %130 : vector<64x128xf32>
    %c95 = arith.constant 95 : index
    %c0_62 = arith.constant 0 : index
    %132 = vector.load %arg9[%c95, %c0_62] : memref<224x128xf32, #tpu.memory_space<vmem>>, vector<64x128xf32>
    %cst_63 = arith.constant 0.000000e+00 : f32
    %133 = vector.broadcast %cst_63 : f32 to vector<64x128xf32>
    %134 = arith.select %46, %132, %133 : vector<64x128xi1>, vector<64x128xf32>
    %135 = vector.broadcast %54 : vector<1x128xf32> to vector<64x128xf32>
    %136 = arith.mulf %134, %135 : vector<64x128xf32>
    %137 = arith.addf %131, %136 : vector<64x128xf32>
    %c96_64 = arith.constant 96 : index
    %c0_65 = arith.constant 0 : index
    %138 = vector.load %arg9[%c96_64, %c0_65] : memref<224x128xf32, #tpu.memory_space<vmem>>, vector<64x128xf32>
    %139 = vector.broadcast %55 : vector<1x128xf32> to vector<64x128xf32>
    %140 = arith.mulf %138, %139 : vector<64x128xf32>
    %141 = arith.addf %137, %140 : vector<64x128xf32>
    %c97 = arith.constant 97 : index
    %c0_66 = arith.constant 0 : index
    %142 = vector.load %arg9[%c97, %c0_66] : memref<224x128xf32, #tpu.memory_space<vmem>>, vector<64x128xf32>
    %cst_67 = arith.constant 0.000000e+00 : f32
    %143 = vector.broadcast %cst_67 : f32 to vector<64x128xf32>
    %144 = arith.select %48, %142, %143 : vector<64x128xi1>, vector<64x128xf32>
    %145 = vector.broadcast %56 : vector<1x128xf32> to vector<64x128xf32>
    %146 = arith.mulf %144, %145 : vector<64x128xf32>
    %147 = arith.addf %141, %146 : vector<64x128xf32>
    %c103 = arith.constant 103 : index
    %c0_68 = arith.constant 0 : index
    %148 = vector.load %arg9[%c103, %c0_68] : memref<224x128xf32, #tpu.memory_space<vmem>>, vector<64x128xf32>
    %cst_69 = arith.constant 0.000000e+00 : f32
    %149 = vector.broadcast %cst_69 : f32 to vector<64x128xf32>
    %150 = arith.select %46, %148, %149 : vector<64x128xi1>, vector<64x128xf32>
    %151 = vector.broadcast %57 : vector<1x128xf32> to vector<64x128xf32>
    %152 = arith.mulf %150, %151 : vector<64x128xf32>
    %153 = arith.addf %147, %152 : vector<64x128xf32>
    %c104 = arith.constant 104 : index
    %c0_70 = arith.constant 0 : index
    %154 = vector.load %arg9[%c104, %c0_70] : memref<224x128xf32, #tpu.memory_space<vmem>>, vector<64x128xf32>
    %155 = vector.broadcast %58 : vector<1x128xf32> to vector<64x128xf32>
    %156 = arith.mulf %154, %155 : vector<64x128xf32>
    %157 = arith.addf %153, %156 : vector<64x128xf32>
    %c105 = arith.constant 105 : index
    %c0_71 = arith.constant 0 : index
    %158 = vector.load %arg9[%c105, %c0_71] : memref<224x128xf32, #tpu.memory_space<vmem>>, vector<64x128xf32>
    %cst_72 = arith.constant 0.000000e+00 : f32
    %159 = vector.broadcast %cst_72 : f32 to vector<64x128xf32>
    %160 = arith.select %48, %158, %159 : vector<64x128xi1>, vector<64x128xf32>
    %161 = vector.broadcast %59 : vector<1x128xf32> to vector<64x128xf32>
    %162 = arith.mulf %160, %161 : vector<64x128xf32>
    %163 = arith.addf %157, %162 : vector<64x128xf32>
    %164 = vector.broadcast %49 : vector<1x128xf32> to vector<64x128xf32>
    %165 = arith.mulf %163, %164 : vector<64x128xf32>
    %166 = vector.broadcast %50 : vector<1x128xf32> to vector<64x128xf32>
    %167 = arith.addf %165, %166 : vector<64x128xf32>
    %cst_73 = arith.constant 0.000000e+00 : f32
    %168 = vector.broadcast %cst_73 : f32 to vector<64x128xf32>
    %169 = arith.maximumf %167, %168 : vector<64x128xf32>
    %170 = tpu.concatenate %114, %169 in 0 : vector<64x128xf32>, vector<64x128xf32> -> vector<128x128xf32>
    %c2_74 = arith.constant 2 : index
    %c0_75 = arith.constant 0 : index
    %c0_76 = arith.constant 0 : index
    %171 = vector.load %arg1[%c2_74, %c0_75, %c0_76] : memref<7x128x128xbf16, #tpu.memory_space<vmem>>, vector<1x128x128xbf16>
    %172 = vector.shape_cast %171 : vector<1x128x128xbf16> to vector<128x128xbf16>
    %173 = arith.truncf %170 : vector<128x128xf32> to vector<128x128xbf16>
    %cst_77 = arith.constant dense<0.000000e+00> : vector<128x128xf32>
    %174 = tpu.matmul %173, %172, %cst_77 {dimension_numbers = #tpu.dot_dimension_numbers<[1], [0], [0], [1], [0, 0, 1, 1], [], []>} : vector<128x128xbf16>, vector<128x128xbf16>, vector<128x128xf32> -> vector<128x128xf32>
    %c4 = arith.constant 4 : index
    %c0_78 = arith.constant 0 : index
    %175 = vector.load %arg2[%c4, %c0_78] : memref<48x128xf32, #tpu.memory_space<vmem>>, vector<1x128xf32>
    %176 = vector.broadcast %175 : vector<1x128xf32> to vector<128x128xf32>
    %177 = arith.mulf %174, %176 : vector<128x128xf32>
    %c5 = arith.constant 5 : index
    %c0_79 = arith.constant 0 : index
    %178 = vector.load %arg2[%c5, %c0_79] : memref<48x128xf32, #tpu.memory_space<vmem>>, vector<1x128xf32>
    %179 = vector.broadcast %178 : vector<1x128xf32> to vector<128x128xf32>
    %180 = arith.addf %177, %179 : vector<128x128xf32>
    %cst_80 = arith.constant 0.000000e+00 : f32
    %181 = vector.broadcast %cst_80 : f32 to vector<128x128xf32>
    %182 = arith.maximumf %180, %181 : vector<128x128xf32>
    %c3_81 = arith.constant 3 : index
    %c0_82 = arith.constant 0 : index
    %c0_83 = arith.constant 0 : index
    %183 = vector.load %arg1[%c3_81, %c0_82, %c0_83] : memref<7x128x128xbf16, #tpu.memory_space<vmem>>, vector<1x128x128xbf16>
    %184 = vector.shape_cast %183 : vector<1x128x128xbf16> to vector<128x128xbf16>
    %185 = arith.truncf %182 : vector<128x128xf32> to vector<128x128xbf16>
    %cst_84 = arith.constant dense<0.000000e+00> : vector<128x128xf32>
    %186 = tpu.matmul %185, %184, %cst_84 {dimension_numbers = #tpu.dot_dimension_numbers<[1], [0], [0], [1], [0, 0, 1, 1], [], []>} : vector<128x128xbf16>, vector<128x128xbf16>, vector<128x128xf32> -> vector<128x128xf32>
    %c15_85 = arith.constant 15 : index
    %c0_86 = arith.constant 0 : index
    %187 = vector.load %arg2[%c15_85, %c0_86] : memref<48x128xf32, #tpu.memory_space<vmem>>, vector<1x128xf32>
    %188 = vector.broadcast %187 : vector<1x128xf32> to vector<128x128xf32>
    %189 = arith.addf %186, %188 : vector<128x128xf32>
    %cst_87 = arith.constant 0.000000e+00 : f32
    %cst_88 = arith.constant 6.000000e+00 : f32
    %190 = vector.broadcast %cst_87 : f32 to vector<128x128xf32>
    %191 = arith.maximumf %190, %189 : vector<128x128xf32>
    %192 = vector.broadcast %cst_88 : f32 to vector<128x128xf32>
    %193 = arith.minimumf %192, %191 : vector<128x128xf32>
    %194 = vector.extract_strided_slice %193 {offsets = [0, 0], sizes = [64, 128], strides = [1, 1]} : vector<128x128xf32> to vector<64x128xf32>
    %c16_89 = arith.constant 16 : index
    %c0_90 = arith.constant 0 : index
    %195 = vector.load %arg9[%c16_89, %c0_90] : memref<224x128xf32, #tpu.memory_space<vmem>>, vector<64x128xf32>
    tpu.vector_store %arg9[%c16_89, %c0_90], %194 {strides = array<i32>} : memref<224x128xf32, #tpu.memory_space<vmem>>, vector<64x128xf32>,
    %196 = vector.extract_strided_slice %193 {offsets = [64, 0], sizes = [64, 128], strides = [1, 1]} : vector<128x128xf32> to vector<64x128xf32>
    %c96_91 = arith.constant 96 : index
    %c0_92 = arith.constant 0 : index
    %197 = vector.load %arg9[%c96_91, %c0_92] : memref<224x128xf32, #tpu.memory_space<vmem>>, vector<64x128xf32>
    tpu.vector_store %arg9[%c96_91, %c0_92], %196 {strides = array<i32>} : memref<224x128xf32, #tpu.memory_space<vmem>>, vector<64x128xf32>,
    %198 = tpu.iota {dimensions = array<i32: 0>} : vector<64x128xi32>
    %c8_i32_93 = arith.constant 8 : i32
    %c0_i32_94 = arith.constant 0 : i32
    %199 = arith.cmpi eq, %c8_i32_93, %c0_i32_94 : i32
    %c1_i32_95 = arith.constant 1 : i32
    %200 = arith.select %199, %c1_i32_95, %c8_i32_93 : i32
    %201 = vector.broadcast %200 : i32 to vector<64x128xi32>
    %202 = arith.remsi %198, %201 : vector<64x128xi32>
    %c0_i32_96 = arith.constant 0 : i32
    %203 = vector.broadcast %c0_i32_96 : i32 to vector<64x128xi32>
    %204 = arith.cmpi ne, %202, %203 : vector<64x128xi32>
    %c0_i32_97 = arith.constant 0 : i32
    %205 = vector.broadcast %c0_i32_97 : i32 to vector<64x128xi32>
    %206 = arith.cmpi slt, %202, %205 : vector<64x128xi32>
    %c0_i32_98 = arith.constant 0 : i32
    %207 = arith.cmpi slt, %200, %c0_i32_98 : i32
    %208 = vector.broadcast %207 : i1 to vector<64x128xi1>
    %209 = vector.broadcast %208 : vector<64x128xi1> to vector<64x128xi1>
    %210 = arith.xori %206, %209 : vector<64x128xi1>
    %211 = arith.andi %210, %204 : vector<64x128xi1>
    %212 = vector.broadcast %200 : i32 to vector<64x128xi32>
    %213 = arith.addi %202, %212 : vector<64x128xi32>
    %214 = arith.select %211, %213, %202 : vector<64x128xi1>, vector<64x128xi32>
    %c1_i32_99 = arith.constant 1 : i32
    %215 = vector.broadcast %c1_i32_99 : i32 to vector<64x128xi32>
    %216 = arith.cmpi sge, %214, %215 : vector<64x128xi32>
    %c6_i32_100 = arith.constant 6 : i32
    %217 = vector.broadcast %c6_i32_100 : i32 to vector<64x128xi32>
    %218 = arith.cmpi sle, %214, %217 : vector<64x128xi32>
    %c16_101 = arith.constant 16 : index
    %c0_102 = arith.constant 0 : index
    %219 = vector.load %arg2[%c16_101, %c0_102] : memref<48x128xf32, #tpu.memory_space<vmem>>, vector<1x128xf32>
    %c17_103 = arith.constant 17 : index
    %c0_104 = arith.constant 0 : index
    %220 = vector.load %arg2[%c17_103, %c0_104] : memref<48x128xf32, #tpu.memory_space<vmem>>, vector<1x128xf32>
    %c20 = arith.constant 20 : index
    %c0_105 = arith.constant 0 : index
    %221 = vector.load %arg2[%c20, %c0_105] : memref<48x128xf32, #tpu.memory_space<vmem>>, vector<1x128xf32>
    %c21 = arith.constant 21 : index
    %c0_106 = arith.constant 0 : index
    %222 = vector.load %arg2[%c21, %c0_106] : memref<48x128xf32, #tpu.memory_space<vmem>>, vector<1x128xf32>
    %c22 = arith.constant 22 : index
    %c0_107 = arith.constant 0 : index
    %223 = vector.load %arg2[%c22, %c0_107] : memref<48x128xf32, #tpu.memory_space<vmem>>, vector<1x128xf32>
    %c23_108 = arith.constant 23 : index
    %c0_109 = arith.constant 0 : index
    %224 = vector.load %arg2[%c23_108, %c0_109] : memref<48x128xf32, #tpu.memory_space<vmem>>, vector<1x128xf32>
    %c24_110 = arith.constant 24 : index
    %c0_111 = arith.constant 0 : index
    %225 = vector.load %arg2[%c24_110, %c0_111] : memref<48x128xf32, #tpu.memory_space<vmem>>, vector<1x128xf32>
    %c25_112 = arith.constant 25 : index
    %c0_113 = arith.constant 0 : index
    %226 = vector.load %arg2[%c25_112, %c0_113] : memref<48x128xf32, #tpu.memory_space<vmem>>, vector<1x128xf32>
    %c26 = arith.constant 26 : index
    %c0_114 = arith.constant 0 : index
    %227 = vector.load %arg2[%c26, %c0_114] : memref<48x128xf32, #tpu.memory_space<vmem>>, vector<1x128xf32>
    %c27 = arith.constant 27 : index
    %c0_115 = arith.constant 0 : index
    %228 = vector.load %arg2[%c27, %c0_115] : memref<48x128xf32, #tpu.memory_space<vmem>>, vector<1x128xf32>
    %c28 = arith.constant 28 : index
    %c0_116 = arith.constant 0 : index
    %229 = vector.load %arg2[%c28, %c0_116] : memref<48x128xf32, #tpu.memory_space<vmem>>, vector<1x128xf32>
    %cst_117 = arith.constant 0.000000e+00 : f32
    %230 = vector.broadcast %cst_117 : f32 to vector<64x128xf32>
    %c7_118 = arith.constant 7 : index
    %c0_119 = arith.constant 0 : index
    %231 = vector.load %arg9[%c7_118, %c0_119] : memref<224x128xf32, #tpu.memory_space<vmem>>, vector<64x128xf32>
    %cst_120 = arith.constant 0.000000e+00 : f32
    %232 = vector.broadcast %cst_120 : f32 to vector<64x128xf32>
    %233 = arith.select %216, %231, %232 : vector<64x128xi1>, vector<64x128xf32>
    %234 = vector.broadcast %221 : vector<1x128xf32> to vector<64x128xf32>
    %235 = arith.mulf %233, %234 : vector<64x128xf32>
    %236 = arith.addf %230, %235 : vector<64x128xf32>
    %c8_121 = arith.constant 8 : index
    %c0_122 = arith.constant 0 : index
    %237 = vector.load %arg9[%c8_121, %c0_122] : memref<224x128xf32, #tpu.memory_space<vmem>>, vector<64x128xf32>
    %238 = vector.broadcast %222 : vector<1x128xf32> to vector<64x128xf32>
    %239 = arith.mulf %237, %238 : vector<64x128xf32>
    %240 = arith.addf %236, %239 : vector<64x128xf32>
    %c9_123 = arith.constant 9 : index
    %c0_124 = arith.constant 0 : index
    %241 = vector.load %arg9[%c9_123, %c0_124] : memref<224x128xf32, #tpu.memory_space<vmem>>, vector<64x128xf32>
    %cst_125 = arith.constant 0.000000e+00 : f32
    %242 = vector.broadcast %cst_125 : f32 to vector<64x128xf32>
    %243 = arith.select %218, %241, %242 : vector<64x128xi1>, vector<64x128xf32>
    %244 = vector.broadcast %223 : vector<1x128xf32> to vector<64x128xf32>
    %245 = arith.mulf %243, %244 : vector<64x128xf32>
    %246 = arith.addf %240, %245 : vector<64x128xf32>
    %c15_126 = arith.constant 15 : index
    %c0_127 = arith.constant 0 : index
    %247 = vector.load %arg9[%c15_126, %c0_127] : memref<224x128xf32, #tpu.memory_space<vmem>>, vector<64x128xf32>
    %cst_128 = arith.constant 0.000000e+00 : f32
    %248 = vector.broadcast %cst_128 : f32 to vector<64x128xf32>
    %249 = arith.select %216, %247, %248 : vector<64x128xi1>, vector<64x128xf32>
    %250 = vector.broadcast %224 : vector<1x128xf32> to vector<64x128xf32>
    %251 = arith.mulf %249, %250 : vector<64x128xf32>
    %252 = arith.addf %246, %251 : vector<64x128xf32>
    %c16_129 = arith.constant 16 : index
    %c0_130 = arith.constant 0 : index
    %253 = vector.load %arg9[%c16_129, %c0_130] : memref<224x128xf32, #tpu.memory_space<vmem>>, vector<64x128xf32>
    %254 = vector.broadcast %225 : vector<1x128xf32> to vector<64x128xf32>
    %255 = arith.mulf %253, %254 : vector<64x128xf32>
    %256 = arith.addf %252, %255 : vector<64x128xf32>
    %c17_131 = arith.constant 17 : index
    %c0_132 = arith.constant 0 : index
    %257 = vector.load %arg9[%c17_131, %c0_132] : memref<224x128xf32, #tpu.memory_space<vmem>>, vector<64x128xf32>
    %cst_133 = arith.constant 0.000000e+00 : f32
    %258 = vector.broadcast %cst_133 : f32 to vector<64x128xf32>
    %259 = arith.select %218, %257, %258 : vector<64x128xi1>, vector<64x128xf32>
    %260 = vector.broadcast %226 : vector<1x128xf32> to vector<64x128xf32>
    %261 = arith.mulf %259, %260 : vector<64x128xf32>
    %262 = arith.addf %256, %261 : vector<64x128xf32>
    %c23_134 = arith.constant 23 : index
    %c0_135 = arith.constant 0 : index
    %263 = vector.load %arg9[%c23_134, %c0_135] : memref<224x128xf32, #tpu.memory_space<vmem>>, vector<64x128xf32>
    %cst_136 = arith.constant 0.000000e+00 : f32
    %264 = vector.broadcast %cst_136 : f32 to vector<64x128xf32>
    %265 = arith.select %216, %263, %264 : vector<64x128xi1>, vector<64x128xf32>
    %266 = vector.broadcast %227 : vector<1x128xf32> to vector<64x128xf32>
    %267 = arith.mulf %265, %266 : vector<64x128xf32>
    %268 = arith.addf %262, %267 : vector<64x128xf32>
    %c24_137 = arith.constant 24 : index
    %c0_138 = arith.constant 0 : index
    %269 = vector.load %arg9[%c24_137, %c0_138] : memref<224x128xf32, #tpu.memory_space<vmem>>, vector<64x128xf32>
    %270 = vector.broadcast %228 : vector<1x128xf32> to vector<64x128xf32>
    %271 = arith.mulf %269, %270 : vector<64x128xf32>
    %272 = arith.addf %268, %271 : vector<64x128xf32>
    %c25_139 = arith.constant 25 : index
    %c0_140 = arith.constant 0 : index
    %273 = vector.load %arg9[%c25_139, %c0_140] : memref<224x128xf32, #tpu.memory_space<vmem>>, vector<64x128xf32>
    %cst_141 = arith.constant 0.000000e+00 : f32
    %274 = vector.broadcast %cst_141 : f32 to vector<64x128xf32>
    %275 = arith.select %218, %273, %274 : vector<64x128xi1>, vector<64x128xf32>
    %276 = vector.broadcast %229 : vector<1x128xf32> to vector<64x128xf32>
    %277 = arith.mulf %275, %276 : vector<64x128xf32>
    %278 = arith.addf %272, %277 : vector<64x128xf32>
    %279 = vector.broadcast %219 : vector<1x128xf32> to vector<64x128xf32>
    %280 = arith.mulf %278, %279 : vector<64x128xf32>
    %281 = vector.broadcast %220 : vector<1x128xf32> to vector<64x128xf32>
    %282 = arith.addf %280, %281 : vector<64x128xf32>
    %cst_142 = arith.constant 0.000000e+00 : f32
    %283 = vector.broadcast %cst_142 : f32 to vector<64x128xf32>
    %284 = arith.maximumf %282, %283 : vector<64x128xf32>
    %cst_143 = arith.constant 0.000000e+00 : f32
    %285 = vector.broadcast %cst_143 : f32 to vector<64x128xf32>
    %c87_144 = arith.constant 87 : index
    %c0_145 = arith.constant 0 : index
    %286 = vector.load %arg9[%c87_144, %c0_145] : memref<224x128xf32, #tpu.memory_space<vmem>>, vector<64x128xf32>
    %cst_146 = arith.constant 0.000000e+00 : f32
    %287 = vector.broadcast %cst_146 : f32 to vector<64x128xf32>
    %288 = arith.select %216, %286, %287 : vector<64x128xi1>, vector<64x128xf32>
    %289 = vector.broadcast %221 : vector<1x128xf32> to vector<64x128xf32>
    %290 = arith.mulf %288, %289 : vector<64x128xf32>
    %291 = arith.addf %285, %290 : vector<64x128xf32>
    %c88_147 = arith.constant 88 : index
    %c0_148 = arith.constant 0 : index
    %292 = vector.load %arg9[%c88_147, %c0_148] : memref<224x128xf32, #tpu.memory_space<vmem>>, vector<64x128xf32>
    %293 = vector.broadcast %222 : vector<1x128xf32> to vector<64x128xf32>
    %294 = arith.mulf %292, %293 : vector<64x128xf32>
    %295 = arith.addf %291, %294 : vector<64x128xf32>
    %c89_149 = arith.constant 89 : index
    %c0_150 = arith.constant 0 : index
    %296 = vector.load %arg9[%c89_149, %c0_150] : memref<224x128xf32, #tpu.memory_space<vmem>>, vector<64x128xf32>
    %cst_151 = arith.constant 0.000000e+00 : f32
    %297 = vector.broadcast %cst_151 : f32 to vector<64x128xf32>
    %298 = arith.select %218, %296, %297 : vector<64x128xi1>, vector<64x128xf32>
    %299 = vector.broadcast %223 : vector<1x128xf32> to vector<64x128xf32>
    %300 = arith.mulf %298, %299 : vector<64x128xf32>
    %301 = arith.addf %295, %300 : vector<64x128xf32>
    %c95_152 = arith.constant 95 : index
    %c0_153 = arith.constant 0 : index
    %302 = vector.load %arg9[%c95_152, %c0_153] : memref<224x128xf32, #tpu.memory_space<vmem>>, vector<64x128xf32>
    %cst_154 = arith.constant 0.000000e+00 : f32
    %303 = vector.broadcast %cst_154 : f32 to vector<64x128xf32>
    %304 = arith.select %216, %302, %303 : vector<64x128xi1>, vector<64x128xf32>
    %305 = vector.broadcast %224 : vector<1x128xf32> to vector<64x128xf32>
    %306 = arith.mulf %304, %305 : vector<64x128xf32>
    %307 = arith.addf %301, %306 : vector<64x128xf32>
    %c96_155 = arith.constant 96 : index
    %c0_156 = arith.constant 0 : index
    %308 = vector.load %arg9[%c96_155, %c0_156] : memref<224x128xf32, #tpu.memory_space<vmem>>, vector<64x128xf32>
    %309 = vector.broadcast %225 : vector<1x128xf32> to vector<64x128xf32>
    %310 = arith.mulf %308, %309 : vector<64x128xf32>
    %311 = arith.addf %307, %310 : vector<64x128xf32>
    %c97_157 = arith.constant 97 : index
    %c0_158 = arith.constant 0 : index
    %312 = vector.load %arg9[%c97_157, %c0_158] : memref<224x128xf32, #tpu.memory_space<vmem>>, vector<64x128xf32>
    %cst_159 = arith.constant 0.000000e+00 : f32
    %313 = vector.broadcast %cst_159 : f32 to vector<64x128xf32>
    %314 = arith.select %218, %312, %313 : vector<64x128xi1>, vector<64x128xf32>
    %315 = vector.broadcast %226 : vector<1x128xf32> to vector<64x128xf32>
    %316 = arith.mulf %314, %315 : vector<64x128xf32>
    %317 = arith.addf %311, %316 : vector<64x128xf32>
    %c103_160 = arith.constant 103 : index
    %c0_161 = arith.constant 0 : index
    %318 = vector.load %arg9[%c103_160, %c0_161] : memref<224x128xf32, #tpu.memory_space<vmem>>, vector<64x128xf32>
    %cst_162 = arith.constant 0.000000e+00 : f32
    %319 = vector.broadcast %cst_162 : f32 to vector<64x128xf32>
    %320 = arith.select %216, %318, %319 : vector<64x128xi1>, vector<64x128xf32>
    %321 = vector.broadcast %227 : vector<1x128xf32> to vector<64x128xf32>
    %322 = arith.mulf %320, %321 : vector<64x128xf32>
    %323 = arith.addf %317, %322 : vector<64x128xf32>
    %c104_163 = arith.constant 104 : index
    %c0_164 = arith.constant 0 : index
    %324 = vector.load %arg9[%c104_163, %c0_164] : memref<224x128xf32, #tpu.memory_space<vmem>>, vector<64x128xf32>
    %325 = vector.broadcast %228 : vector<1x128xf32> to vector<64x128xf32>
    %326 = arith.mulf %324, %325 : vector<64x128xf32>
    %327 = arith.addf %323, %326 : vector<64x128xf32>
    %c105_165 = arith.constant 105 : index
    %c0_166 = arith.constant 0 : index
    %328 = vector.load %arg9[%c105_165, %c0_166] : memref<224x128xf32, #tpu.memory_space<vmem>>, vector<64x128xf32>
    %cst_167 = arith.constant 0.000000e+00 : f32
    %329 = vector.broadcast %cst_167 : f32 to vector<64x128xf32>
    %330 = arith.select %218, %328, %329 : vector<64x128xi1>, vector<64x128xf32>
    %331 = vector.broadcast %229 : vector<1x128xf32> to vector<64x128xf32>
    %332 = arith.mulf %330, %331 : vector<64x128xf32>
    %333 = arith.addf %327, %332 : vector<64x128xf32>
    %334 = vector.broadcast %219 : vector<1x128xf32> to vector<64x128xf32>
    %335 = arith.mulf %333, %334 : vector<64x128xf32>
    %336 = vector.broadcast %220 : vector<1x128xf32> to vector<64x128xf32>
    %337 = arith.addf %335, %336 : vector<64x128xf32>
    %cst_168 = arith.constant 0.000000e+00 : f32
    %338 = vector.broadcast %cst_168 : f32 to vector<64x128xf32>
    %339 = arith.maximumf %337, %338 : vector<64x128xf32>
    %340 = tpu.concatenate %284, %339 in 0 : vector<64x128xf32>, vector<64x128xf32> -> vector<128x128xf32>
    %c0_169 = arith.constant 0 : index
    %c0_170 = arith.constant 0 : index
    %341 = vector.load %arg3[%c0_169, %c0_170] : memref<32x128xbf16, #tpu.memory_space<vmem>>, vector<32x128xbf16>
    %342 = arith.truncf %340 : vector<128x128xf32> to vector<128x128xbf16>
    %cst_171 = arith.constant dense<0.000000e+00> : vector<32x128xf32>
    %343 = tpu.matmul %341, %342, %cst_171 {dimension_numbers = #tpu.dot_dimension_numbers<[1], [0], [0], [1], [0, 0, 1, 1], [], []>} : vector<32x128xbf16>, vector<128x128xbf16>, vector<32x128xf32> -> vector<32x128xf32>
    %c4_172 = arith.constant 4 : index
    %c0_173 = arith.constant 0 : index
    %c0_174 = arith.constant 0 : index
    %344 = vector.load %arg1[%c4_172, %c0_173, %c0_174] : memref<7x128x128xbf16, #tpu.memory_space<vmem>>, vector<1x128x128xbf16>
    %345 = vector.shape_cast %344 : vector<1x128x128xbf16> to vector<128x128xbf16>
    %346 = arith.truncf %343 : vector<32x128xf32> to vector<32x128xbf16>
    %cst_175 = arith.constant dense<0.000000e+00> : vector<32x128xf32>
    %347 = tpu.matmul %346, %345, %cst_175 {dimension_numbers = #tpu.dot_dimension_numbers<[1], [0], [0], [1], [0, 0, 1, 1], [], []>} : vector<32x128xbf16>, vector<128x128xbf16>, vector<32x128xf32> -> vector<32x128xf32>
    %c18 = arith.constant 18 : index
    %c0_176 = arith.constant 0 : index
    %348 = vector.load %arg2[%c18, %c0_176] : memref<48x128xf32, #tpu.memory_space<vmem>>, vector<1x128xf32>
    %349 = vector.broadcast %348 : vector<1x128xf32> to vector<32x128xf32>
    %350 = arith.mulf %347, %349 : vector<32x128xf32>
    %c19 = arith.constant 19 : index
    %c0_177 = arith.constant 0 : index
    %351 = vector.load %arg2[%c19, %c0_177] : memref<48x128xf32, #tpu.memory_space<vmem>>, vector<1x128xf32>
    %352 = vector.broadcast %351 : vector<1x128xf32> to vector<32x128xf32>
    %353 = arith.addf %350, %352 : vector<32x128xf32>
    %cst_178 = arith.constant 0.000000e+00 : f32
    %354 = vector.broadcast %cst_178 : f32 to vector<32x128xf32>
    %355 = arith.maximumf %353, %354 : vector<32x128xf32>
    %c5_179 = arith.constant 5 : index
    %c0_180 = arith.constant 0 : index
    %c0_181 = arith.constant 0 : index
    %356 = vector.load %arg1[%c5_179, %c0_180, %c0_181] : memref<7x128x128xbf16, #tpu.memory_space<vmem>>, vector<1x128x128xbf16>
    %357 = vector.shape_cast %356 : vector<1x128x128xbf16> to vector<128x128xbf16>
    %358 = arith.truncf %355 : vector<32x128xf32> to vector<32x128xbf16>
    %cst_182 = arith.constant dense<0.000000e+00> : vector<32x128xf32>
    %359 = tpu.matmul %358, %357, %cst_182 {dimension_numbers = #tpu.dot_dimension_numbers<[1], [0], [0], [1], [0, 0, 1, 1], [], []>} : vector<32x128xbf16>, vector<128x128xbf16>, vector<32x128xf32> -> vector<32x128xf32>
    %c29 = arith.constant 29 : index
    %c0_183 = arith.constant 0 : index
    %360 = vector.load %arg2[%c29, %c0_183] : memref<48x128xf32, #tpu.memory_space<vmem>>, vector<1x128xf32>
    %361 = vector.broadcast %360 : vector<1x128xf32> to vector<32x128xf32>
    %362 = arith.addf %359, %361 : vector<32x128xf32>
    %cst_184 = arith.constant 0.000000e+00 : f32
    %cst_185 = arith.constant 6.000000e+00 : f32
    %363 = vector.broadcast %cst_184 : f32 to vector<32x128xf32>
    %364 = arith.maximumf %363, %362 : vector<32x128xf32>
    %365 = vector.broadcast %cst_185 : f32 to vector<32x128xf32>
    %366 = arith.minimumf %365, %364 : vector<32x128xf32>
    %367 = vector.extract_strided_slice %366 {offsets = [0, 0], sizes = [16, 128], strides = [1, 1]} : vector<32x128xf32> to vector<16x128xf32>
    %c172 = arith.constant 172 : index
    %c0_186 = arith.constant 0 : index
    %368 = vector.load %arg9[%c172, %c0_186] : memref<224x128xf32, #tpu.memory_space<vmem>>, vector<16x128xf32>
    tpu.vector_store %arg9[%c172, %c0_186], %367 {strides = array<i32>} : memref<224x128xf32, #tpu.memory_space<vmem>>, vector<16x128xf32>,
    %369 = vector.extract_strided_slice %366 {offsets = [16, 0], sizes = [16, 128], strides = [1, 1]} : vector<32x128xf32> to vector<16x128xf32>
    %c196 = arith.constant 196 : index
    %c0_187 = arith.constant 0 : index
    %370 = vector.load %arg9[%c196, %c0_187] : memref<224x128xf32, #tpu.memory_space<vmem>>, vector<16x128xf32>
    tpu.vector_store %arg9[%c196, %c0_187], %369 {strides = array<i32>} : memref<224x128xf32, #tpu.memory_space<vmem>>, vector<16x128xf32>,
    %371 = tpu.iota {dimensions = array<i32: 0>} : vector<16x128xi32>
    %c4_i32 = arith.constant 4 : i32
    %c0_i32_188 = arith.constant 0 : i32
    %372 = arith.cmpi eq, %c4_i32, %c0_i32_188 : i32
    %c1_i32_189 = arith.constant 1 : i32
    %373 = arith.select %372, %c1_i32_189, %c4_i32 : i32
    %374 = vector.broadcast %373 : i32 to vector<16x128xi32>
    %375 = arith.remsi %371, %374 : vector<16x128xi32>
    %c0_i32_190 = arith.constant 0 : i32
    %376 = vector.broadcast %c0_i32_190 : i32 to vector<16x128xi32>
    %377 = arith.cmpi ne, %375, %376 : vector<16x128xi32>
    %c0_i32_191 = arith.constant 0 : i32
    %378 = vector.broadcast %c0_i32_191 : i32 to vector<16x128xi32>
    %379 = arith.cmpi slt, %375, %378 : vector<16x128xi32>
    %c0_i32_192 = arith.constant 0 : i32
    %380 = arith.cmpi slt, %373, %c0_i32_192 : i32
    %381 = vector.broadcast %380 : i1 to vector<16x128xi1>
    %382 = vector.broadcast %381 : vector<16x128xi1> to vector<16x128xi1>
    %383 = arith.xori %379, %382 : vector<16x128xi1>
    %384 = arith.andi %383, %377 : vector<16x128xi1>
    %385 = vector.broadcast %373 : i32 to vector<16x128xi32>
    %386 = arith.addi %375, %385 : vector<16x128xi32>
    %387 = arith.select %384, %386, %375 : vector<16x128xi1>, vector<16x128xi32>
    %c1_i32_193 = arith.constant 1 : i32
    %388 = vector.broadcast %c1_i32_193 : i32 to vector<16x128xi32>
    %389 = arith.cmpi sge, %387, %388 : vector<16x128xi32>
    %c2_i32 = arith.constant 2 : i32
    %390 = vector.broadcast %c2_i32 : i32 to vector<16x128xi32>
    %391 = arith.cmpi sle, %387, %390 : vector<16x128xi32>
    %c30 = arith.constant 30 : index
    %c0_194 = arith.constant 0 : index
    %392 = vector.load %arg2[%c30, %c0_194] : memref<48x128xf32, #tpu.memory_space<vmem>>, vector<1x128xf32>
    %c31 = arith.constant 31 : index
    %c0_195 = arith.constant 0 : index
    %393 = vector.load %arg2[%c31, %c0_195] : memref<48x128xf32, #tpu.memory_space<vmem>>, vector<1x128xf32>
    %c34 = arith.constant 34 : index
    %c0_196 = arith.constant 0 : index
    %394 = vector.load %arg2[%c34, %c0_196] : memref<48x128xf32, #tpu.memory_space<vmem>>, vector<1x128xf32>
    %c35 = arith.constant 35 : index
    %c0_197 = arith.constant 0 : index
    %395 = vector.load %arg2[%c35, %c0_197] : memref<48x128xf32, #tpu.memory_space<vmem>>, vector<1x128xf32>
    %c36 = arith.constant 36 : index
    %c0_198 = arith.constant 0 : index
    %396 = vector.load %arg2[%c36, %c0_198] : memref<48x128xf32, #tpu.memory_space<vmem>>, vector<1x128xf32>
    %c37 = arith.constant 37 : index
    %c0_199 = arith.constant 0 : index
    %397 = vector.load %arg2[%c37, %c0_199] : memref<48x128xf32, #tpu.memory_space<vmem>>, vector<1x128xf32>
    %c38 = arith.constant 38 : index
    %c0_200 = arith.constant 0 : index
    %398 = vector.load %arg2[%c38, %c0_200] : memref<48x128xf32, #tpu.memory_space<vmem>>, vector<1x128xf32>
    %c39 = arith.constant 39 : index
    %c0_201 = arith.constant 0 : index
    %399 = vector.load %arg2[%c39, %c0_201] : memref<48x128xf32, #tpu.memory_space<vmem>>, vector<1x128xf32>
    %c40 = arith.constant 40 : index
    %c0_202 = arith.constant 0 : index
    %400 = vector.load %arg2[%c40, %c0_202] : memref<48x128xf32, #tpu.memory_space<vmem>>, vector<1x128xf32>
    %c41 = arith.constant 41 : index
    %c0_203 = arith.constant 0 : index
    %401 = vector.load %arg2[%c41, %c0_203] : memref<48x128xf32, #tpu.memory_space<vmem>>, vector<1x128xf32>
    %c42 = arith.constant 42 : index
    %c0_204 = arith.constant 0 : index
    %402 = vector.load %arg2[%c42, %c0_204] : memref<48x128xf32, #tpu.memory_space<vmem>>, vector<1x128xf32>
    %cst_205 = arith.constant 0.000000e+00 : f32
    %403 = vector.broadcast %cst_205 : f32 to vector<16x128xf32>
    %c167 = arith.constant 167 : index
    %c0_206 = arith.constant 0 : index
    %404 = vector.load %arg9[%c167, %c0_206] : memref<224x128xf32, #tpu.memory_space<vmem>>, vector<16x128xf32>
    %cst_207 = arith.constant 0.000000e+00 : f32
    %405 = vector.broadcast %cst_207 : f32 to vector<16x128xf32>
    %406 = arith.select %389, %404, %405 : vector<16x128xi1>, vector<16x128xf32>
    %407 = vector.broadcast %394 : vector<1x128xf32> to vector<16x128xf32>
    %408 = arith.mulf %406, %407 : vector<16x128xf32>
    %409 = arith.addf %403, %408 : vector<16x128xf32>
    %c168 = arith.constant 168 : index
    %c0_208 = arith.constant 0 : index
    %410 = vector.load %arg9[%c168, %c0_208] : memref<224x128xf32, #tpu.memory_space<vmem>>, vector<16x128xf32>
    %411 = vector.broadcast %395 : vector<1x128xf32> to vector<16x128xf32>
    %412 = arith.mulf %410, %411 : vector<16x128xf32>
    %413 = arith.addf %409, %412 : vector<16x128xf32>
    %c169 = arith.constant 169 : index
    %c0_209 = arith.constant 0 : index
    %414 = vector.load %arg9[%c169, %c0_209] : memref<224x128xf32, #tpu.memory_space<vmem>>, vector<16x128xf32>
    %cst_210 = arith.constant 0.000000e+00 : f32
    %415 = vector.broadcast %cst_210 : f32 to vector<16x128xf32>
    %416 = arith.select %391, %414, %415 : vector<16x128xi1>, vector<16x128xf32>
    %417 = vector.broadcast %396 : vector<1x128xf32> to vector<16x128xf32>
    %418 = arith.mulf %416, %417 : vector<16x128xf32>
    %419 = arith.addf %413, %418 : vector<16x128xf32>
    %c171 = arith.constant 171 : index
    %c0_211 = arith.constant 0 : index
    %420 = vector.load %arg9[%c171, %c0_211] : memref<224x128xf32, #tpu.memory_space<vmem>>, vector<16x128xf32>
    %cst_212 = arith.constant 0.000000e+00 : f32
    %421 = vector.broadcast %cst_212 : f32 to vector<16x128xf32>
    %422 = arith.select %389, %420, %421 : vector<16x128xi1>, vector<16x128xf32>
    %423 = vector.broadcast %397 : vector<1x128xf32> to vector<16x128xf32>
    %424 = arith.mulf %422, %423 : vector<16x128xf32>
    %425 = arith.addf %419, %424 : vector<16x128xf32>
    %c172_213 = arith.constant 172 : index
    %c0_214 = arith.constant 0 : index
    %426 = vector.load %arg9[%c172_213, %c0_214] : memref<224x128xf32, #tpu.memory_space<vmem>>, vector<16x128xf32>
    %427 = vector.broadcast %398 : vector<1x128xf32> to vector<16x128xf32>
    %428 = arith.mulf %426, %427 : vector<16x128xf32>
    %429 = arith.addf %425, %428 : vector<16x128xf32>
    %c173 = arith.constant 173 : index
    %c0_215 = arith.constant 0 : index
    %430 = vector.load %arg9[%c173, %c0_215] : memref<224x128xf32, #tpu.memory_space<vmem>>, vector<16x128xf32>
    %cst_216 = arith.constant 0.000000e+00 : f32
    %431 = vector.broadcast %cst_216 : f32 to vector<16x128xf32>
    %432 = arith.select %391, %430, %431 : vector<16x128xi1>, vector<16x128xf32>
    %433 = vector.broadcast %399 : vector<1x128xf32> to vector<16x128xf32>
    %434 = arith.mulf %432, %433 : vector<16x128xf32>
    %435 = arith.addf %429, %434 : vector<16x128xf32>
    %c175 = arith.constant 175 : index
    %c0_217 = arith.constant 0 : index
    %436 = vector.load %arg9[%c175, %c0_217] : memref<224x128xf32, #tpu.memory_space<vmem>>, vector<16x128xf32>
    %cst_218 = arith.constant 0.000000e+00 : f32
    %437 = vector.broadcast %cst_218 : f32 to vector<16x128xf32>
    %438 = arith.select %389, %436, %437 : vector<16x128xi1>, vector<16x128xf32>
    %439 = vector.broadcast %400 : vector<1x128xf32> to vector<16x128xf32>
    %440 = arith.mulf %438, %439 : vector<16x128xf32>
    %441 = arith.addf %435, %440 : vector<16x128xf32>
    %c176 = arith.constant 176 : index
    %c0_219 = arith.constant 0 : index
    %442 = vector.load %arg9[%c176, %c0_219] : memref<224x128xf32, #tpu.memory_space<vmem>>, vector<16x128xf32>
    %443 = vector.broadcast %401 : vector<1x128xf32> to vector<16x128xf32>
    %444 = arith.mulf %442, %443 : vector<16x128xf32>
    %445 = arith.addf %441, %444 : vector<16x128xf32>
    %c177 = arith.constant 177 : index
    %c0_220 = arith.constant 0 : index
    %446 = vector.load %arg9[%c177, %c0_220] : memref<224x128xf32, #tpu.memory_space<vmem>>, vector<16x128xf32>
    %cst_221 = arith.constant 0.000000e+00 : f32
    %447 = vector.broadcast %cst_221 : f32 to vector<16x128xf32>
    %448 = arith.select %391, %446, %447 : vector<16x128xi1>, vector<16x128xf32>
    %449 = vector.broadcast %402 : vector<1x128xf32> to vector<16x128xf32>
    %450 = arith.mulf %448, %449 : vector<16x128xf32>
    %451 = arith.addf %445, %450 : vector<16x128xf32>
    %452 = vector.broadcast %392 : vector<1x128xf32> to vector<16x128xf32>
    %453 = arith.mulf %451, %452 : vector<16x128xf32>
    %454 = vector.broadcast %393 : vector<1x128xf32> to vector<16x128xf32>
    %455 = arith.addf %453, %454 : vector<16x128xf32>
    %cst_222 = arith.constant 0.000000e+00 : f32
    %456 = vector.broadcast %cst_222 : f32 to vector<16x128xf32>
    %457 = arith.maximumf %455, %456 : vector<16x128xf32>
    %cst_223 = arith.constant 0.000000e+00 : f32
    %458 = vector.broadcast %cst_223 : f32 to vector<16x128xf32>
    %c191 = arith.constant 191 : index
    %c0_224 = arith.constant 0 : index
    %459 = vector.load %arg9[%c191, %c0_224] : memref<224x128xf32, #tpu.memory_space<vmem>>, vector<16x128xf32>
    %cst_225 = arith.constant 0.000000e+00 : f32
    %460 = vector.broadcast %cst_225 : f32 to vector<16x128xf32>
    %461 = arith.select %389, %459, %460 : vector<16x128xi1>, vector<16x128xf32>
    %462 = vector.broadcast %394 : vector<1x128xf32> to vector<16x128xf32>
    %463 = arith.mulf %461, %462 : vector<16x128xf32>
    %464 = arith.addf %458, %463 : vector<16x128xf32>
    %c192 = arith.constant 192 : index
    %c0_226 = arith.constant 0 : index
    %465 = vector.load %arg9[%c192, %c0_226] : memref<224x128xf32, #tpu.memory_space<vmem>>, vector<16x128xf32>
    %466 = vector.broadcast %395 : vector<1x128xf32> to vector<16x128xf32>
    %467 = arith.mulf %465, %466 : vector<16x128xf32>
    %468 = arith.addf %464, %467 : vector<16x128xf32>
    %c193 = arith.constant 193 : index
    %c0_227 = arith.constant 0 : index
    %469 = vector.load %arg9[%c193, %c0_227] : memref<224x128xf32, #tpu.memory_space<vmem>>, vector<16x128xf32>
    %cst_228 = arith.constant 0.000000e+00 : f32
    %470 = vector.broadcast %cst_228 : f32 to vector<16x128xf32>
    %471 = arith.select %391, %469, %470 : vector<16x128xi1>, vector<16x128xf32>
    %472 = vector.broadcast %396 : vector<1x128xf32> to vector<16x128xf32>
    %473 = arith.mulf %471, %472 : vector<16x128xf32>
    %474 = arith.addf %468, %473 : vector<16x128xf32>
    %c195 = arith.constant 195 : index
    %c0_229 = arith.constant 0 : index
    %475 = vector.load %arg9[%c195, %c0_229] : memref<224x128xf32, #tpu.memory_space<vmem>>, vector<16x128xf32>
    %cst_230 = arith.constant 0.000000e+00 : f32
    %476 = vector.broadcast %cst_230 : f32 to vector<16x128xf32>
    %477 = arith.select %389, %475, %476 : vector<16x128xi1>, vector<16x128xf32>
    %478 = vector.broadcast %397 : vector<1x128xf32> to vector<16x128xf32>
    %479 = arith.mulf %477, %478 : vector<16x128xf32>
    %480 = arith.addf %474, %479 : vector<16x128xf32>
    %c196_231 = arith.constant 196 : index
    %c0_232 = arith.constant 0 : index
    %481 = vector.load %arg9[%c196_231, %c0_232] : memref<224x128xf32, #tpu.memory_space<vmem>>, vector<16x128xf32>
    %482 = vector.broadcast %398 : vector<1x128xf32> to vector<16x128xf32>
    %483 = arith.mulf %481, %482 : vector<16x128xf32>
    %484 = arith.addf %480, %483 : vector<16x128xf32>
    %c197 = arith.constant 197 : index
    %c0_233 = arith.constant 0 : index
    %485 = vector.load %arg9[%c197, %c0_233] : memref<224x128xf32, #tpu.memory_space<vmem>>, vector<16x128xf32>
    %cst_234 = arith.constant 0.000000e+00 : f32
    %486 = vector.broadcast %cst_234 : f32 to vector<16x128xf32>
    %487 = arith.select %391, %485, %486 : vector<16x128xi1>, vector<16x128xf32>
    %488 = vector.broadcast %399 : vector<1x128xf32> to vector<16x128xf32>
    %489 = arith.mulf %487, %488 : vector<16x128xf32>
    %490 = arith.addf %484, %489 : vector<16x128xf32>
    %c199 = arith.constant 199 : index
    %c0_235 = arith.constant 0 : index
    %491 = vector.load %arg9[%c199, %c0_235] : memref<224x128xf32, #tpu.memory_space<vmem>>, vector<16x128xf32>
    %cst_236 = arith.constant 0.000000e+00 : f32
    %492 = vector.broadcast %cst_236 : f32 to vector<16x128xf32>
    %493 = arith.select %389, %491, %492 : vector<16x128xi1>, vector<16x128xf32>
    %494 = vector.broadcast %400 : vector<1x128xf32> to vector<16x128xf32>
    %495 = arith.mulf %493, %494 : vector<16x128xf32>
    %496 = arith.addf %490, %495 : vector<16x128xf32>
    %c200 = arith.constant 200 : index
    %c0_237 = arith.constant 0 : index
    %497 = vector.load %arg9[%c200, %c0_237] : memref<224x128xf32, #tpu.memory_space<vmem>>, vector<16x128xf32>
    %498 = vector.broadcast %401 : vector<1x128xf32> to vector<16x128xf32>
    %499 = arith.mulf %497, %498 : vector<16x128xf32>
    %500 = arith.addf %496, %499 : vector<16x128xf32>
    %c201 = arith.constant 201 : index
    %c0_238 = arith.constant 0 : index
    %501 = vector.load %arg9[%c201, %c0_238] : memref<224x128xf32, #tpu.memory_space<vmem>>, vector<16x128xf32>
    %cst_239 = arith.constant 0.000000e+00 : f32
    %502 = vector.broadcast %cst_239 : f32 to vector<16x128xf32>
    %503 = arith.select %391, %501, %502 : vector<16x128xi1>, vector<16x128xf32>
    %504 = vector.broadcast %402 : vector<1x128xf32> to vector<16x128xf32>
    %505 = arith.mulf %503, %504 : vector<16x128xf32>
    %506 = arith.addf %500, %505 : vector<16x128xf32>
    %507 = vector.broadcast %392 : vector<1x128xf32> to vector<16x128xf32>
    %508 = arith.mulf %506, %507 : vector<16x128xf32>
    %509 = vector.broadcast %393 : vector<1x128xf32> to vector<16x128xf32>
    %510 = arith.addf %508, %509 : vector<16x128xf32>
    %cst_240 = arith.constant 0.000000e+00 : f32
    %511 = vector.broadcast %cst_240 : f32 to vector<16x128xf32>
    %512 = arith.maximumf %510, %511 : vector<16x128xf32>
    %513 = tpu.concatenate %457, %512 in 0 : vector<16x128xf32>, vector<16x128xf32> -> vector<32x128xf32>
    %c6_241 = arith.constant 6 : index
    %c0_242 = arith.constant 0 : index
    %c0_243 = arith.constant 0 : index
    %514 = vector.load %arg1[%c6_241, %c0_242, %c0_243] : memref<7x128x128xbf16, #tpu.memory_space<vmem>>, vector<1x128x128xbf16>
    %515 = vector.shape_cast %514 : vector<1x128x128xbf16> to vector<128x128xbf16>
    %516 = arith.truncf %513 : vector<32x128xf32> to vector<32x128xbf16>
    %cst_244 = arith.constant dense<0.000000e+00> : vector<32x128xf32>
    %517 = tpu.matmul %516, %515, %cst_244 {dimension_numbers = #tpu.dot_dimension_numbers<[1], [0], [0], [1], [0, 0, 1, 1], [], []>} : vector<32x128xbf16>, vector<128x128xbf16>, vector<32x128xf32> -> vector<32x128xf32>
    %c32 = arith.constant 32 : index
    %c0_245 = arith.constant 0 : index
    %518 = vector.load %arg2[%c32, %c0_245] : memref<48x128xf32, #tpu.memory_space<vmem>>, vector<1x128xf32>
    %519 = vector.broadcast %518 : vector<1x128xf32> to vector<32x128xf32>
    %520 = arith.mulf %517, %519 : vector<32x128xf32>
    %c33 = arith.constant 33 : index
    %c0_246 = arith.constant 0 : index
    %521 = vector.load %arg2[%c33, %c0_246] : memref<48x128xf32, #tpu.memory_space<vmem>>, vector<1x128xf32>
    %522 = vector.broadcast %521 : vector<1x128xf32> to vector<32x128xf32>
    %523 = arith.addf %520, %522 : vector<32x128xf32>
    %cst_247 = arith.constant 0.000000e+00 : f32
    %524 = vector.broadcast %cst_247 : f32 to vector<32x128xf32>
    %525 = arith.maximumf %523, %524 : vector<32x128xf32>
    %526 = arith.addf %525, %355 : vector<32x128xf32>
    %c0_i32_248 = arith.constant 0 : i32
    %527 = tpu.memref_slice %arg12[%c0_i32_248] : memref<2x!tpu.dma_semaphore, #tpu.memory_space<semaphore_mem>> -> memref<1x!tpu.dma_semaphore, #tpu.memory_space<semaphore_mem>>
    %528 = tpu.memref_squeeze %527 : memref<1x!tpu.dma_semaphore, #tpu.memory_space<semaphore_mem>> -> memref<!tpu.dma_semaphore, #tpu.memory_space<semaphore_mem>>
    tpu.wait_dma2 semaphore(%528 : memref<!tpu.dma_semaphore, #tpu.memory_space<semaphore_mem>>) src(%arg6 : memref<128x1280xbf16, #tpu.memory_space<any>>) dst(%arg10 : memref<128x1280xbf16, #tpu.memory_space<vmem>>)
    %c0_249 = arith.constant 0 : index
    %c0_250 = arith.constant 0 : index
    %529 = vector.load %arg10[%c0_249, %c0_250] : memref<128x1280xbf16, #tpu.memory_space<vmem>>, vector<128x1280xbf16>
    %530 = arith.truncf %526 : vector<32x128xf32> to vector<32x128xbf16>
    %cst_251 = arith.constant dense<0.000000e+00> : vector<32x1280xf32>
    %531 = tpu.matmul %530, %529, %cst_251 {dimension_numbers = #tpu.dot_dimension_numbers<[1], [0], [0], [1], [0, 0, 1, 1], [], []>} : vector<32x128xbf16>, vector<128x1280xbf16>, vector<32x1280xf32> -> vector<32x1280xf32>
    %c0_252 = arith.constant 0 : index
    %c0_253 = arith.constant 0 : index
    %532 = vector.load %arg4[%c0_252, %c0_253] : memref<1x1280xf32, #tpu.memory_space<vmem>>, vector<1x1280xf32>
    %533 = vector.broadcast %532 : vector<1x1280xf32> to vector<32x1280xf32>
    %534 = arith.addf %531, %533 : vector<32x1280xf32>
    %535 = vector.extract_strided_slice %534 {offsets = [0, 0], sizes = [16, 1280], strides = [1, 1]} : vector<32x1280xf32> to vector<16x1280xf32>
    %cst_254 = arith.constant dense<0.000000e+00> : vector<1280xf32>
    %536 = vector.multi_reduction <add>, %535, %cst_254 [0] : vector<16x1280xf32> to vector<1280xf32>
    %537 = vector.shape_cast %536 : vector<1280xf32> to vector<1x1280xf32>
    %538 = vector.extract_strided_slice %534 {offsets = [16, 0], sizes = [16, 1280], strides = [1, 1]} : vector<32x1280xf32> to vector<16x1280xf32>
    %cst_255 = arith.constant dense<0.000000e+00> : vector<1280xf32>
    %539 = vector.multi_reduction <add>, %538, %cst_255 [0] : vector<16x1280xf32> to vector<1280xf32>
    %540 = vector.shape_cast %539 : vector<1280xf32> to vector<1x1280xf32>
    %541 = tpu.concatenate %537, %540 in 0 : vector<1x1280xf32>, vector<1x1280xf32> -> vector<2x1280xf32>
    %cst_256 = arith.constant 0.0204081628 : f32
    %542 = vector.broadcast %cst_256 : f32 to vector<2x1280xf32>
    %543 = arith.mulf %541, %542 : vector<2x1280xf32>
    %c1_i32_257 = arith.constant 1 : i32
    %544 = tpu.memref_slice %arg12[%c1_i32_257] : memref<2x!tpu.dma_semaphore, #tpu.memory_space<semaphore_mem>> -> memref<1x!tpu.dma_semaphore, #tpu.memory_space<semaphore_mem>>
    %545 = tpu.memref_squeeze %544 : memref<1x!tpu.dma_semaphore, #tpu.memory_space<semaphore_mem>> -> memref<!tpu.dma_semaphore, #tpu.memory_space<semaphore_mem>>
    tpu.wait_dma2 semaphore(%545 : memref<!tpu.dma_semaphore, #tpu.memory_space<semaphore_mem>>) src(%arg7 : memref<1280x1024xbf16, #tpu.memory_space<any>>) dst(%arg11 : memref<1280x1024xbf16, #tpu.memory_space<vmem>>)
    %c0_258 = arith.constant 0 : index
    %c0_259 = arith.constant 0 : index
    %546 = vector.load %arg11[%c0_258, %c0_259] : memref<1280x1024xbf16, #tpu.memory_space<vmem>>, vector<1280x1024xbf16>
    %547 = arith.truncf %543 : vector<2x1280xf32> to vector<2x1280xbf16>
    %cst_260 = arith.constant dense<0.000000e+00> : vector<2x1024xf32>
    %548 = tpu.matmul %547, %546, %cst_260 {dimension_numbers = #tpu.dot_dimension_numbers<[1], [0], [0], [1], [0, 0, 1, 1], [], []>} : vector<2x1280xbf16>, vector<1280x1024xbf16>, vector<2x1024xf32> -> vector<2x1024xf32>
    %c0_261 = arith.constant 0 : index
    %c0_262 = arith.constant 0 : index
    %549 = vector.load %arg5[%c0_261, %c0_262] : memref<1x1024xf32, #tpu.memory_space<vmem>>, vector<1x1024xf32>
    %550 = vector.broadcast %549 : vector<1x1024xf32> to vector<2x1024xf32>
    %551 = arith.addf %548, %550 : vector<2x1024xf32>
    %552 = tpu.iota {dimensions = array<i32: 1>} : vector<2x1024xi32>
    %c1000_i32 = arith.constant 1000 : i32
    %553 = vector.broadcast %c1000_i32 : i32 to vector<2x1024xi32>
    %554 = arith.cmpi slt, %552, %553 : vector<2x1024xi32>
    %cst_263 = arith.constant -1.000000e+30 : f32
    %555 = vector.broadcast %cst_263 : f32 to vector<2x1024xf32>
    %556 = arith.select %554, %551, %555 : vector<2x1024xi1>, vector<2x1024xf32>
    %cst_264 = arith.constant dense<0xFF800000> : vector<2xf32>
    %557 = vector.multi_reduction <maximumf>, %556, %cst_264 [1] : vector<2x1024xf32> to vector<2xf32>
    %558 = vector.shape_cast %557 : vector<2xf32> to vector<2x1xf32>
    %559 = vector.broadcast %558 : vector<2x1xf32> to vector<2x1024xf32>
    %560 = arith.subf %556, %559 : vector<2x1024xf32>
    %561 = math.exp %560 : vector<2x1024xf32>
    %cst_265 = arith.constant dense<0.000000e+00> : vector<2xf32>
    %562 = vector.multi_reduction <add>, %561, %cst_265 [1] : vector<2x1024xf32> to vector<2xf32>
    %563 = vector.shape_cast %562 : vector<2xf32> to vector<2x1xf32>
    %564 = vector.broadcast %563 : vector<2x1xf32> to vector<2x1024xf32>
    %565 = arith.divf %561, %564 : vector<2x1024xf32>
    %c0_266 = arith.constant 0 : index
    %c0_267 = arith.constant 0 : index
    %566 = vector.load %arg8[%c0_266, %c0_267] : memref<2x1024xf32, #tpu.memory_space<vmem>>, vector<2x1024xf32>
    tpu.vector_store %arg8[%c0_266, %c0_267], %565 {strides = array<i32>} : memref<2x1024xf32, #tpu.memory_space<vmem>>, vector<2x1024xf32>,
    return
  }
}

</mosaic_0001>

<llo_original>
// kernel: mobilenet_v2_forward.1
$region0: #{mobilenet_v2_forward.1}
  #allocation0 [shape = 'u32[]', space=smem, size = 0x4, offset = 0x4, fixed_abs, tag = 'smem constant byte address 0x4 - core index']
  #allocation1 [shape = 'u32[144,128]{1,0:T(1,128)}', space=vmem, size = 0x12000, scoped, tag = 'internal scratch']
  #allocation2 [shape = 'f32[224,128]{1,0:T(8,128)}', space=vmem, size = 0x1c000, scoped, tag = 'scratch operand']
  #allocation3 [shape = 'bf16[128,1280]{1,0:T(16,128)(2,1)}', space=vmem, size = 0x50000, scoped, tag = 'scratch operand']
  #allocation4 [shape = 'bf16[1280,1024]{1,0:T(16,128)(2,1)}', space=vmem, size = 0x280000, scoped, tag = 'scratch operand']
  #allocation5 [shape = 's32[2]{0}', space=sflag, size = 0x8, scoped, tag = 'scratch operand']
  #allocation15 [shape = 's32[]', space=sflag, size = 0x4, offset = 0, fixed_abs, tag = 'sflag constant byte address 0x0 - dummy sync flag']
  #allocation17 [shape = 's32[]', space=sflag, size = 0x4, offset = 0, fixed_abs, tag = 'sflag constant byte address 0x0 - dummy sync flag']
  %s0 = inlined_call_operand.vmem [shape: bf16[128,128], index: 0, kind: input, shape index: {}]
  %s1 = inlined_call_operand.hbm [shape: bf16[7,128,128], index: 1, kind: input, shape index: {}]
  %s2 = inlined_call_operand.hbm [shape: f32[48,128], index: 2, kind: input, shape index: {}]
  %s3 = inlined_call_operand.vmem [shape: bf16[32,128], index: 3, kind: input, shape index: {}]
  %s4 = inlined_call_operand.hbm [shape: f32[1,1280], index: 4, kind: input, shape index: {}]
  %s5 = inlined_call_operand.hbm [shape: f32[1,1024], index: 5, kind: input, shape index: {}]
  %s6 = inlined_call_operand.hbm [shape: bf16[128,1280], index: 6, kind: input, shape index: {}]
  %s7 = inlined_call_operand.hbm [shape: bf16[1280,1024], index: 7, kind: input, shape index: {}]
  %s8 = inlined_call_operand.hbm [shape: f32[2,1024], index: 8, kind: output, shape index: {}]
  %s9 = sld [smem:[#allocation0]]
  $region50: #{mobilenet_v2_forward.1} parent=0
    _
  %s11 = ssub.s32 1, %s9
  %s12 = scalar_select 0, %s11, %s9
  $region1: #{mobilenet_v2_forward.1} parent=0
    #allocation6 [shape = 'u8[229376]{0}', space=vmem, size = 0x38000, scoped, tag = 'input window, operand 1, single buffered']
    #allocation7 [shape = 's32[1]{0}', space=sflag, size = 0x4, scoped, tag = 'scoped memory for mobilenet_v2_forward.1']
    #allocation8 [shape = 's32[1]{0}', space=sflag, size = 0x4, scoped, tag = 'scoped memory for mobilenet_v2_forward.1']
    #allocation9 [shape = 'u8[24576]{0}', space=vmem, size = 0x6000, scoped, tag = 'input window, operand 2, single buffered']
    #allocation10 [shape = 's32[1]{0}', space=sflag, size = 0x4, scoped, tag = 'scoped memory for mobilenet_v2_forward.1']
    #allocation11 [shape = 'u8[5120]{0}', space=vmem, size = 0x1400, scoped, tag = 'input window, operand 4, single buffered']
    #allocation12 [shape = 'u8[4096]{0}', space=vmem, size = 0x1000, scoped, tag = 'input window, operand 5, single buffered']
    #allocation13 [shape = 's32[1]{0}', space=sflag, size = 0x4, scoped, tag = 'scoped memory for mobilenet_v2_forward.1']
    #allocation14 [shape = 'u8[8192]{0}', space=vmem, size = 0x2000, scoped, tag = 'output window, operand 0, single buffered']
    #allocation16 [shape = 'u32[9]{0}', space=smem, size = 0x24, scoped, tag = 'DMA stride descriptor']
    #allocation18 [shape = 'u32[9]{0}', space=smem, size = 0x24, scoped, tag = 'DMA stride descriptor']
    %13 = vsyncpa [#allocation7], 0
    %14 = vsyncpa [#allocation10], 0
    %15 = vsyncpa [#allocation13], 0
    %16 = vsyncpa [#allocation8], 0
    // Predicated region
    $region2: #{mobilenet_v2_forward.1} parent=1 // pred_check
      _
    $region3: #{mobilenet_v2_forward.1} parent=1 // pred_check_branch
      %18 = sbr.rel (0) target = $region5
    $region4: #{mobilenet_v2_forward.1} parent=1 // pred_region
      _
    $region5: #{mobilenet_v2_forward.1} parent=1 // pred_fallthru
      _
    // Predicated region
    $region6: #{mobilenet_v2_forward.1} parent=1 // pred_check
      _
    $region7: #{mobilenet_v2_forward.1} parent=1 // pred_check_branch
      %20 = sbr.rel (0) target = $region9
    $region8: #{mobilenet_v2_forward.1} parent=1 // pred_region
      %s22 = ssub.s32 7168, 7168
      %23 = vsyncadd [#allocation7], %s22
      %s24 = sshll.u32 [#allocation6], 4
      %s25 = int_to_ptr.vmem [resolvable:$true] %s24
      %30 = dma.hbm_to_vmem [thread:$0]  %s1, 7168, %s25, [#allocation7], 64, 64, 4
    $region9: #{mobilenet_v2_forward.1} parent=1 // pred_fallthru
      _
    // Predicated region
    $region10: #{mobilenet_v2_forward.1} parent=1 // pred_check
      _
    $region11: #{mobilenet_v2_forward.1} parent=1 // pred_check_branch
      %32 = sbr.rel (0) target = $region13
    $region12: #{mobilenet_v2_forward.1} parent=1 // pred_region
      %s34 = ssub.s32 768, 768
      %35 = vsyncadd [#allocation10], %s34
      %s36 = sshll.u32 [#allocation9], 4
      %s37 = int_to_ptr.vmem [resolvable:$true] %s36
      %42 = dma.hbm_to_vmem [thread:$0]  %s2, 768, %s37, [#allocation10], 128, 128, 8
    $region13: #{mobilenet_v2_forward.1} parent=1 // pred_fallthru
      _
    // Predicated region
    $region14: #{mobilenet_v2_forward.1} parent=1 // pred_check
      _
    $region15: #{mobilenet_v2_forward.1} parent=1 // pred_check_branch
      %44 = sbr.rel (0) target = $region17
    $region16: #{mobilenet_v2_forward.1} parent=1 // pred_region
      _
    $region17: #{mobilenet_v2_forward.1} parent=1 // pred_fallthru
      _
    // Predicated region
    $region18: #{mobilenet_v2_forward.1} parent=1 // pred_check
      _
    $region19: #{mobilenet_v2_forward.1} parent=1 // pred_check_branch
      %46 = sbr.rel (0) target = $region21
    $region20: #{mobilenet_v2_forward.1} parent=1 // pred_region
      %s48 = ssub.s32 160, 160
      %49 = vsyncadd [#allocation10], %s48
      %s51 = sshll.u32 [#allocation11], 4
      %s52 = int_to_ptr.vmem [resolvable:$true] %s51
      %54 = dma.hbm_to_vmem [thread:$0]  %s4, 160, %s52, [#allocation10]
    $region21: #{mobilenet_v2_forward.1} parent=1 // pred_fallthru
      _
    // Predicated region
    $region22: #{mobilenet_v2_forward.1} parent=1 // pred_check
      _
    $region23: #{mobilenet_v2_forward.1} parent=1 // pred_check_branch
      %56 = sbr.rel (0) target = $region25
    $region24: #{mobilenet_v2_forward.1} parent=1 // pred_region
      %s58 = ssub.s32 128, 128
      %59 = vsyncadd [#allocation13], %s58
      %s61 = sshll.u32 [#allocation12], 4
      %s62 = int_to_ptr.vmem [resolvable:$true] %s61
      %64 = dma.hbm_to_vmem [thread:$0]  %s5, 128, %s62, [#allocation13]
    $region25: #{mobilenet_v2_forward.1} parent=1 // pred_fallthru
      _
    // Predicated region
    $region26: #{mobilenet_v2_forward.1} parent=1 // pred_check
      _
    $region27: #{mobilenet_v2_forward.1} parent=1 // pred_check_branch
      %66 = sbr.rel (0) target = $region29
    $region28: #{mobilenet_v2_forward.1} parent=1 // pred_region
      %67 = dma.done [#allocation7], 7168
    $region29: #{mobilenet_v2_forward.1} parent=1 // pred_fallthru
      _
    // Predicated region
    $region30: #{mobilenet_v2_forward.1} parent=1 // pred_check
      _
    $region31: #{mobilenet_v2_forward.1} parent=1 // pred_check_branch
      %69 = sbr.rel (0) target = $region33
    $region32: #{mobilenet_v2_forward.1} parent=1 // pred_region
      %70 = dma.done [#allocation10], 768
    $region33: #{mobilenet_v2_forward.1} parent=1 // pred_fallthru
      _
    // Predicated region
    $region34: #{mobilenet_v2_forward.1} parent=1 // pred_check
      _
    $region35: #{mobilenet_v2_forward.1} parent=1 // pred_check_branch
      %72 = sbr.rel (0) target = $region37
    $region36: #{mobilenet_v2_forward.1} parent=1 // pred_region
      %73 = dma.done [#allocation10], 160
    $region37: #{mobilenet_v2_forward.1} parent=1 // pred_fallthru
      _
    // Predicated region
    $region38: #{mobilenet_v2_forward.1} parent=1 // pred_check
      _
    $region39: #{mobilenet_v2_forward.1} parent=1 // pred_check_branch
      %75 = sbr.rel (0) target = $region41
    $region40: #{mobilenet_v2_forward.1} parent=1 // pred_region
      %76 = dma.done [#allocation13], 128
    $region41: #{mobilenet_v2_forward.1} parent=1 // pred_fallthru
      _
    %s79 = sshll.u32 1, 14
    %s80 = sxor.u32 4294967295, %s79
    %s82 = sld [smem:[#allocation0]]
    %s83 = sadd.s32 2, %s82
    %s85 = sshll.u32 7, 26
    %s86 = sxor.u32 4294967295, %s85
    %s87 = sand.u32 0, %s86
    %s88 = sshll.u32 %s83, 26
    %s89 = sor.u32 %s87, %s88
    %s90 = sshll.u32 [#allocation3], 4
    %s91 = int_to_ptr.vmem [resolvable:$true] %s90
    %94 = sst [smem:[#allocation16]] 1280
    %s95 = scalar_lea.smem [#allocation16], 1
    %96 = sst [smem:[%s95]] 1280
    %s97 = scalar_lea.smem [#allocation16], 2
    %98 = sst [smem:[%s97]] 10
    %s99 = scalar_lea.smem [#allocation16], 3
    %100 = sst [smem:[%s99]] 64
    %s101 = scalar_lea.smem [#allocation16], 4
    %102 = sst [smem:[%s101]] 128
    %s103 = scalar_lea.smem [#allocation16], 5
    %104 = sst [smem:[%s103]] 2
    %s105 = scalar_lea.smem [#allocation16], 6
    %106 = sst [smem:[%s105]] 640
    %s107 = scalar_lea.smem [#allocation16], 7
    %108 = sst [smem:[%s107]] 64
    %s109 = scalar_lea.smem [#allocation16], 8
    %110 = sst [smem:[%s109]] 4
    %112 = dma.general %s6, 10240, %s91, [#allocation5], [#allocation15], [#allocation16], %s89, 0
    %s113 = scalar_lea.sflag [#allocation5], 1
    %s115 = sshll.u32 1, 14
    %s116 = sxor.u32 4294967295, %s115
    %s118 = sadd.s32 2, %s82
    %s120 = sshll.u32 7, 26
    %s121 = sxor.u32 4294967295, %s120
    %s122 = sand.u32 0, %s121
    %s123 = sshll.u32 %s118, 26
    %s124 = sor.u32 %s122, %s123
    %s125 = sshll.u32 [#allocation4], 4
    %s126 = int_to_ptr.vmem [resolvable:$true] %s125
    %129 = sst [smem:[#allocation18]] 1024
    %s130 = scalar_lea.smem [#allocation18], 1
    %131 = sst [smem:[%s130]] 1024
    %s132 = scalar_lea.smem [#allocation18], 2
    %133 = sst [smem:[%s132]] 8
    %s134 = scalar_lea.smem [#allocation18], 3
    %135 = sst [smem:[%s134]] 64
    %s136 = scalar_lea.smem [#allocation18], 4
    %137 = sst [smem:[%s136]] 128
    %s138 = scalar_lea.smem [#allocation18], 5
    %139 = sst [smem:[%s138]] 2
    %s140 = scalar_lea.smem [#allocation18], 6
    %141 = sst [smem:[%s140]] 512
    %s142 = scalar_lea.smem [#allocation18], 7
    %143 = sst [smem:[%s142]] 64
    %s144 = scalar_lea.smem [#allocation18], 8
    %145 = sst [smem:[%s144]] 4
    %147 = dma.general %s7, 81920, %s126, %s113, [#allocation17], [#allocation18], %s124, 0
    %148 = vst [vmem:[#allocation2] sm:$0xff] 0.0
    %149 = vst [vmem:[#allocation2 + $0x8] sm:$0xff] 0.0
    %150 = vst [vmem:[#allocation2 + $0x10] sm:$0xff] 0.0
    %151 = vst [vmem:[#allocation2 + $0x18] sm:$0xff] 0.0
    %152 = vst [vmem:[#allocation2 + $0x20] sm:$0xff] 0.0
    %153 = vst [vmem:[#allocation2 + $0x28] sm:$0xff] 0.0
    %154 = vst [vmem:[#allocation2 + $0x30] sm:$0xff] 0.0
    %155 = vst [vmem:[#allocation2 + $0x38] sm:$0xff] 0.0
    %156 = vst [vmem:[#allocation2 + $0x40] sm:$0xff] 0.0
    %157 = vst [vmem:[#allocation2 + $0x48] sm:$0xff] 0.0
    %158 = vst [vmem:[#allocation2 + $0x50] sm:$0xff] 0.0
    %159 = vst [vmem:[#allocation2 + $0x58] sm:$0xff] 0.0
    %160 = vst [vmem:[#allocation2 + $0x60] sm:$0xff] 0.0
    %161 = vst [vmem:[#allocation2 + $0x68] sm:$0xff] 0.0
    %162 = vst [vmem:[#allocation2 + $0x70] sm:$0xff] 0.0
    %163 = vst [vmem:[#allocation2 + $0x78] sm:$0xff] 0.0
    %164 = vst [vmem:[#allocation2 + $0x80] sm:$0xff] 0.0
    %165 = vst [vmem:[#allocation2 + $0x88] sm:$0xff] 0.0
    %166 = vst [vmem:[#allocation2 + $0x90] sm:$0xff] 0.0
    %167 = vst [vmem:[#allocation2 + $0x98] sm:$0xff] 0.0
    %168 = vst [vmem:[#allocation2 + $0xa0] sm:$0xff] 0.0
    %169 = vst [vmem:[#allocation2 + $0xa8] sm:$0xff] 0.0
    %170 = vst [vmem:[#allocation2 + $0xb0] sm:$0xff] 0.0
    %171 = vst [vmem:[#allocation2 + $0xb8] sm:$0xff] 0.0
    %172 = vst [vmem:[#allocation2 + $0xc0] sm:$0xff] 0.0
    %173 = vst [vmem:[#allocation2 + $0xc8] sm:$0xff] 0.0
    %174 = vst [vmem:[#allocation2 + $0xd0] sm:$0xff] 0.0
    %175 = vst [vmem:[#allocation2 + $0xd8] sm:$0xff] 0.0
    %v176 = vld [vmem:[%s0] sm:$0xf]
    %v177 = vld [vmem:[%s0 + $0x4] sm:$0xf]
    %v178 = vld [vmem:[%s0 + $0x8] sm:$0xf]
    %v179 = vld [vmem:[%s0 + $0xc] sm:$0xf]
    %v180 = vld [vmem:[%s0 + $0x10] sm:$0xf]
    %v181 = vld [vmem:[%s0 + $0x14] sm:$0xf]
    %v182 = vld [vmem:[%s0 + $0x18] sm:$0xf]
    %v183 = vld [vmem:[%s0 + $0x1c] sm:$0xf]
    %v184 = vld [vmem:[%s0 + $0x20] sm:$0xf]
    %v185 = vld [vmem:[%s0 + $0x24] sm:$0xf]
    %v186 = vld [vmem:[%s0 + $0x28] sm:$0xf]
    %v187 = vld [vmem:[%s0 + $0x2c] sm:$0xf]
    %v188 = vld [vmem:[%s0 + $0x30] sm:$0xf]
    %v189 = vld [vmem:[%s0 + $0x34] sm:$0xf]
    %v190 = vld [vmem:[%s0 + $0x38] sm:$0xf]
    %v191 = vld [vmem:[%s0 + $0x3c] sm:$0xf]
    %v192 = vld [vmem:[#allocation6] sm:$0xf]
    %v193 = vld [vmem:[#allocation6 + $0x4] sm:$0xf]
    %v194 = vld [vmem:[#allocation6 + $0x8] sm:$0xf]
    %v195 = vld [vmem:[#allocation6 + $0xc] sm:$0xf]
    %v196 = vld [vmem:[#allocation6 + $0x10] sm:$0xf]
    %v197 = vld [vmem:[#allocation6 + $0x14] sm:$0xf]
    %v198 = vld [vmem:[#allocation6 + $0x18] sm:$0xf]
    %v199 = vld [vmem:[#allocation6 + $0x1c] sm:$0xf]
    %v200 = vld [vmem:[#allocation6 + $0x20] sm:$0xf]
    %v201 = vld [vmem:[#allocation6 + $0x24] sm:$0xf]
    %v202 = vld [vmem:[#allocation6 + $0x28] sm:$0xf]
    %v203 = vld [vmem:[#allocation6 + $0x2c] sm:$0xf]
    %v204 = vld [vmem:[#allocation6 + $0x30] sm:$0xf]
    %v205 = vld [vmem:[#allocation6 + $0x34] sm:$0xf]
    %v206 = vld [vmem:[#allocation6 + $0x38] sm:$0xf]
    %v207 = vld [vmem:[#allocation6 + $0x3c] sm:$0xf]
    %v208 = vld [vmem:[#allocation9] sm:$0x1]
    %v209 = vlaneseq
    %v210 = vshrl.u32 %v209, 7
    %v211 = vsub.s32 0, %v210
    %v212 = vrot.slane %v208, %v211
    %v229 = vunpack.c.l.b16 %v176
    %v230 = vunpack.c.l.b16 %v177
    %v231 = vunpack.c.l.b16 %v178
    %v232 = vunpack.c.l.b16 %v179
    %v233 = vunpack.c.l.b16 %v180
    %v234 = vunpack.c.l.b16 %v181
    %v235 = vunpack.c.l.b16 %v182
    %v236 = vunpack.c.l.b16 %v183
    %v237 = vunpack.c.l.b16 %v184
    %v238 = vunpack.c.l.b16 %v185
    %v239 = vunpack.c.l.b16 %v186
    %v240 = vunpack.c.l.b16 %v187
    %v241 = vunpack.c.l.b16 %v188
    %v242 = vunpack.c.l.b16 %v189
    %v243 = vunpack.c.l.b16 %v190
    %v244 = vunpack.c.l.b16 %v191
    %v245 = vpack.c.b16 %v230, %v229
    %v246 = vpack.c.b16 %v232, %v231
    %v247 = vpack.c.b16 %v234, %v233
    %v248 = vpack.c.b16 %v236, %v235
    %v249 = vpack.c.b16 %v238, %v237
    %v250 = vpack.c.b16 %v240, %v239
    %v251 = vpack.c.b16 %v242, %v241
    %v252 = vpack.c.b16 %v244, %v243
    %v277 = vunpack.c.l.b16 %v192
    %v278 = vunpack.c.l.b16 %v193
    %v279 = vunpack.c.l.b16 %v194
    %v280 = vunpack.c.l.b16 %v195
    %v281 = vunpack.c.l.b16 %v196
    %v282 = vunpack.c.l.b16 %v197
    %v283 = vunpack.c.l.b16 %v198
    %v284 = vunpack.c.l.b16 %v199
    %v285 = vunpack.c.l.b16 %v200
    %v286 = vunpack.c.l.b16 %v201
    %v287 = vunpack.c.l.b16 %v202
    %v288 = vunpack.c.l.b16 %v203
    %v289 = vunpack.c.l.b16 %v204
    %v290 = vunpack.c.l.b16 %v205
    %v291 = vunpack.c.l.b16 %v206
    %v292 = vunpack.c.l.b16 %v207
    %v293 = vpack.c.b16 %v278, %v277
    %v294 = vpack.c.b16 %v280, %v279
    %v295 = vpack.c.b16 %v282, %v281
    %v296 = vpack.c.b16 %v284, %v283
    %v297 = vpack.c.b16 %v286, %v285
    %v298 = vpack.c.b16 %v288, %v287
    %v299 = vpack.c.b16 %v290, %v289
    %v300 = vpack.c.b16 %v292, %v291
    %309 = vmatprep.subr.bf16.mxu0 0
    %310 = vmatpush1.bf16.msra.mxu0 %v293
    %311 = vmatprep.subr.bf16.mxu0 0
    %312 = vmatpush1.bf16.msra.mxu0 %v294
    %313 = vmatprep.subr.bf16.mxu0 0
    %314 = vmatpush1.bf16.msra.mxu0 %v295
    %315 = vmatprep.subr.bf16.mxu0 0
    %316 = vmatpush1.bf16.msra.mxu0 %v296
    %317 = vmatprep.subr.bf16.mxu0 0
    %318 = vmatpush1.bf16.msra.mxu0 %v297
    %319 = vmatprep.subr.bf16.mxu0 0
    %320 = vmatpush1.bf16.msra.mxu0 %v298
    %321 = vmatprep.subr.bf16.mxu0 0
    %322 = vmatpush1.bf16.msra.mxu0 %v299
    %323 = vmatprep.subr.bf16.mxu0 0
    %324 = vmatpush1.bf16.msra.mxu0 %v300
    %325 = vmatprep.subr.bf16.mxu0 0
    %326 = vmatpush1.bf16.msra.mxu0 0
    %327 = vmatprep.subr.bf16.mxu0 0
    %328 = vmatpush1.bf16.msra.mxu0 0
    %329 = vmatprep.subr.bf16.mxu0 0
    %330 = vmatpush1.bf16.msra.mxu0 0
    %331 = vmatprep.subr.bf16.mxu0 0
    %332 = vmatpush1.bf16.msra.mxu0 0
    %333 = vmatprep.subr.bf16.mxu0 0
    %334 = vmatpush1.bf16.msra.mxu0 0
    %335 = vmatprep.subr.bf16.mxu0 0
    %336 = vmatpush1.bf16.msra.mxu0 0
    %337 = vmatprep.subr.bf16.mxu0 0
    %338 = vmatpush1.bf16.msra.mxu0 0
    %339 = vmatprep.subr.bf16.mxu0 0
    %340 = vmatpush1.bf16.msra.mxu0 0
    %341 = vmatprep.mubr.bf16.mxu0 0
    %342 = vmatmul.mubr.bf16.gmra.mrb[0].mxu0 %v245
    %v343 = vpop.f32.mrb[0].mxu0
    %v344 = vadd.f32 %v212, %v343
    %v345 = vpop.f32.mrb[0].mxu0
    %v346 = vpop.f32.mrb[0].mxu0
    %v347 = vadd.f32 %v212, %v346
    %v348 = vpop.f32.mrb[0].mxu0
    %349 = vmatprep.mubr.bf16.mxu0 0
    %350 = vmatmul.mubr.bf16.gmra.mrb[0].mxu0 %v246
    %v351 = vpop.f32.mrb[0].mxu0
    %v352 = vadd.f32 %v212, %v351
    %v353 = vpop.f32.mrb[0].mxu0
    %v354 = vpop.f32.mrb[0].mxu0
    %v355 = vadd.f32 %v212, %v354
    %v356 = vpop.f32.mrb[0].mxu0
    %357 = vmatprep.mubr.bf16.mxu0 0
    %358 = vmatmul.mubr.bf16.gmra.mrb[0].mxu0 %v247
    %v359 = vpop.f32.mrb[0].mxu0
    %v360 = vadd.f32 %v212, %v359
    %v361 = vpop.f32.mrb[0].mxu0
    %v362 = vpop.f32.mrb[0].mxu0
    %v363 = vadd.f32 %v212, %v362
    %v364 = vpop.f32.mrb[0].mxu0
    %365 = vmatprep.mubr.bf16.mxu0 0
    %366 = vmatmul.mubr.bf16.gmra.mrb[0].mxu0 %v248
    %v367 = vpop.f32.mrb[0].mxu0
    %v368 = vadd.f32 %v212, %v367
    %v369 = vpop.f32.mrb[0].mxu0
    %v370 = vpop.f32.mrb[0].mxu0
    %v371 = vadd.f32 %v212, %v370
    %v372 = vpop.f32.mrb[0].mxu0
    %373 = vmatprep.mubr.bf16.mxu0 0
    %374 = vmatmul.mubr.bf16.gmra.mrb[0].mxu0 %v249
    %v375 = vpop.f32.mrb[0].mxu0
    %v376 = vadd.f32 %v212, %v375
    %v377 = vpop.f32.mrb[0].mxu0
    %v378 = vpop.f32.mrb[0].mxu0
    %v379 = vadd.f32 %v212, %v378
    %v380 = vpop.f32.mrb[0].mxu0
    %381 = vmatprep.mubr.bf16.mxu0 0
    %382 = vmatmul.mubr.bf16.gmra.mrb[0].mxu0 %v250
    %v383 = vpop.f32.mrb[0].mxu0
    %v384 = vadd.f32 %v212, %v383
    %v385 = vpop.f32.mrb[0].mxu0
    %v386 = vpop.f32.mrb[0].mxu0
    %v387 = vadd.f32 %v212, %v386
    %v388 = vpop.f32.mrb[0].mxu0
    %389 = vmatprep.mubr.bf16.mxu0 0
    %390 = vmatmul.mubr.bf16.gmra.mrb[0].mxu0 %v251
    %v391 = vpop.f32.mrb[0].mxu0
    %v392 = vadd.f32 %v212, %v391
    %v393 = vpop.f32.mrb[0].mxu0
    %v394 = vpop.f32.mrb[0].mxu0
    %v395 = vadd.f32 %v212, %v394
    %v396 = vpop.f32.mrb[0].mxu0
    %397 = vmatprep.mubr.bf16.mxu0 0
    %398 = vmatmul.mubr.bf16.gmra.mrb[0].mxu0 %v252
    %v399 = vpop.f32.mrb[0].mxu0
    %v400 = vadd.f32 %v212, %v399
    %v401 = vpop.f32.mrb[0].mxu0
    %v402 = vpop.f32.mrb[0].mxu0
    %v403 = vadd.f32 %v212, %v402
    %v404 = vpop.f32.mrb[0].mxu0
    %405 = vdwg.mxu0
    %s406 = scalar_lea.vmem [#allocation6], 64
    %v407 = vld [vmem:[%s406] sm:$0xf]
    %v408 = vld [vmem:[%s406 + $0x4] sm:$0xf]
    %v409 = vld [vmem:[%s406 + $0x8] sm:$0xf]
    %v410 = vld [vmem:[%s406 + $0xc] sm:$0xf]
    %v411 = vld [vmem:[%s406 + $0x10] sm:$0xf]
    %v412 = vld [vmem:[%s406 + $0x14] sm:$0xf]
    %v413 = vld [vmem:[%s406 + $0x18] sm:$0xf]
    %v414 = vld [vmem:[%s406 + $0x1c] sm:$0xf]
    %v415 = vld [vmem:[%s406 + $0x20] sm:$0xf]
    %v416 = vld [vmem:[%s406 + $0x24] sm:$0xf]
    %v417 = vld [vmem:[%s406 + $0x28] sm:$0xf]
    %v418 = vld [vmem:[%s406 + $0x2c] sm:$0xf]
    %v419 = vld [vmem:[%s406 + $0x30] sm:$0xf]
    %v420 = vld [vmem:[%s406 + $0x34] sm:$0xf]
    %v421 = vld [vmem:[%s406 + $0x38] sm:$0xf]
    %v422 = vld [vmem:[%s406 + $0x3c] sm:$0xf]
    %v423 = vpack.c.bf16 %v347, %v344
    %v424 = vpack.c.bf16 %v355, %v352
    %v425 = vpack.c.bf16 %v363, %v360
    %v426 = vpack.c.bf16 %v371, %v368
    %v427 = vpack.c.bf16 %v379, %v376
    %v428 = vpack.c.bf16 %v387, %v384
    %v429 = vpack.c.bf16 %v395, %v392
    %v430 = vpack.c.bf16 %v403, %v400
    %v431 = vld [vmem:[#allocation9 + $0x1] sm:$0x1]
    %v432 = vlaneseq
    %v433 = vshrl.u32 %v432, 7
    %v434 = vsub.s32 0, %v433
    %v435 = vrot.slane %v431, %v434
    %v452 = vunpack.c.l.b16 %v407
    %v453 = vunpack.c.l.b16 %v408
    %v454 = vunpack.c.l.b16 %v409
    %v455 = vunpack.c.l.b16 %v410
    %v456 = vunpack.c.l.b16 %v411
    %v457 = vunpack.c.l.b16 %v412
    %v458 = vunpack.c.l.b16 %v413
    %v459 = vunpack.c.l.b16 %v414
    %v460 = vunpack.c.l.b16 %v415
    %v461 = vunpack.c.l.b16 %v416
    %v462 = vunpack.c.l.b16 %v417
    %v463 = vunpack.c.l.b16 %v418
    %v464 = vunpack.c.l.b16 %v419
    %v465 = vunpack.c.l.b16 %v420
    %v466 = vunpack.c.l.b16 %v421
    %v467 = vunpack.c.l.b16 %v422
    %v468 = vpack.c.b16 %v453, %v452
    %v469 = vpack.c.b16 %v455, %v454
    %v470 = vpack.c.b16 %v457, %v456
    %v471 = vpack.c.b16 %v459, %v458
    %v472 = vpack.c.b16 %v461, %v460
    %v473 = vpack.c.b16 %v463, %v462
    %v474 = vpack.c.b16 %v465, %v464
    %v475 = vpack.c.b16 %v467, %v466
    %484 = vmatprep.subr.bf16.mxu0 0
    %485 = vmatpush1.bf16.msra.mxu0 %v468
    %486 = vmatprep.subr.bf16.mxu0 0
    %487 = vmatpush1.bf16.msra.mxu0 %v469
    %488 = vmatprep.subr.bf16.mxu0 0
    %489 = vmatpush1.bf16.msra.mxu0 %v470
    %490 = vmatprep.subr.bf16.mxu0 0
    %491 = vmatpush1.bf16.msra.mxu0 %v471
    %492 = vmatprep.subr.bf16.mxu0 0
    %493 = vmatpush1.bf16.msra.mxu0 %v472
    %494 = vmatprep.subr.bf16.mxu0 0
    %495 = vmatpush1.bf16.msra.mxu0 %v473
    %496 = vmatprep.subr.bf16.mxu0 0
    %497 = vmatpush1.bf16.msra.mxu0 %v474
    %498 = vmatprep.subr.bf16.mxu0 0
    %499 = vmatpush1.bf16.msra.mxu0 %v475
    %500 = vmatprep.subr.bf16.mxu0 0
    %501 = vmatpush1.bf16.msra.mxu0 0
    %502 = vmatprep.subr.bf16.mxu0 0
    %503 = vmatpush1.bf16.msra.mxu0 0
    %504 = vmatprep.subr.bf16.mxu0 0
    %505 = vmatpush1.bf16.msra.mxu0 0
    %506 = vmatprep.subr.bf16.mxu0 0
    %507 = vmatpush1.bf16.msra.mxu0 0
    %508 = vmatprep.subr.bf16.mxu0 0
    %509 = vmatpush1.bf16.msra.mxu0 0
    %510 = vmatprep.subr.bf16.mxu0 0
    %511 = vmatpush1.bf16.msra.mxu0 0
    %512 = vmatprep.subr.bf16.mxu0 0
    %513 = vmatpush1.bf16.msra.mxu0 0
    %514 = vmatprep.subr.bf16.mxu0 0
    %515 = vmatpush1.bf16.msra.mxu0 0
    %516 = vmatprep.mubr.bf16.mxu0 0
    %517 = vmatmul.mubr.bf16.gmra.mrb[0].mxu0 %v423
    %v518 = vpop.f32.mrb[0].mxu0
    %v519 = vadd.f32 %v435, %v518
    %v520 = vpop.f32.mrb[0].mxu0
    %v521 = vpop.f32.mrb[0].mxu0
    %v522 = vadd.f32 %v435, %v521
    %v523 = vpop.f32.mrb[0].mxu0
    %524 = vmatprep.mubr.bf16.mxu0 0
    %525 = vmatmul.mubr.bf16.gmra.mrb[0].mxu0 %v424
    %v526 = vpop.f32.mrb[0].mxu0
    %v527 = vadd.f32 %v435, %v526
    %v528 = vpop.f32.mrb[0].mxu0
    %v529 = vpop.f32.mrb[0].mxu0
    %v530 = vadd.f32 %v435, %v529
    %v531 = vpop.f32.mrb[0].mxu0
    %532 = vmatprep.mubr.bf16.mxu0 0
    %533 = vmatmul.mubr.bf16.gmra.mrb[0].mxu0 %v425
    %v534 = vpop.f32.mrb[0].mxu0
    %v535 = vadd.f32 %v435, %v534
    %v536 = vpop.f32.mrb[0].mxu0
    %v537 = vpop.f32.mrb[0].mxu0
    %v538 = vadd.f32 %v435, %v537
    %v539 = vpop.f32.mrb[0].mxu0
    %540 = vmatprep.mubr.bf16.mxu0 0
    %541 = vmatmul.mubr.bf16.gmra.mrb[0].mxu0 %v426
    %v542 = vpop.f32.mrb[0].mxu0
    %v543 = vadd.f32 %v435, %v542
    %v544 = vpop.f32.mrb[0].mxu0
    %v545 = vpop.f32.mrb[0].mxu0
    %v546 = vadd.f32 %v435, %v545
    %v547 = vpop.f32.mrb[0].mxu0
    %548 = vmatprep.mubr.bf16.mxu0 0
    %549 = vmatmul.mubr.bf16.gmra.mrb[0].mxu0 %v427
    %v550 = vpop.f32.mrb[0].mxu0
    %v551 = vadd.f32 %v435, %v550
    %v552 = vpop.f32.mrb[0].mxu0
    %v553 = vpop.f32.mrb[0].mxu0
    %v554 = vadd.f32 %v435, %v553
    %v555 = vpop.f32.mrb[0].mxu0
    %556 = vmatprep.mubr.bf16.mxu0 0
    %557 = vmatmul.mubr.bf16.gmra.mrb[0].mxu0 %v428
    %v558 = vpop.f32.mrb[0].mxu0
    %v559 = vadd.f32 %v435, %v558
    %v560 = vpop.f32.mrb[0].mxu0
    %v561 = vpop.f32.mrb[0].mxu0
    %v562 = vadd.f32 %v435, %v561
    %v563 = vpop.f32.mrb[0].mxu0
    %564 = vmatprep.mubr.bf16.mxu0 0
    %565 = vmatmul.mubr.bf16.gmra.mrb[0].mxu0 %v429
    %v566 = vpop.f32.mrb[0].mxu0
    %v567 = vadd.f32 %v435, %v566
    %v568 = vpop.f32.mrb[0].mxu0
    %v569 = vpop.f32.mrb[0].mxu0
    %v570 = vadd.f32 %v435, %v569
    %v571 = vpop.f32.mrb[0].mxu0
    %572 = vmatprep.mubr.bf16.mxu0 0
    %573 = vmatmul.mubr.bf16.gmra.mrb[0].mxu0 %v430
    %v574 = vpop.f32.mrb[0].mxu0
    %v575 = vadd.f32 %v435, %v574
    %v576 = vpop.f32.mrb[0].mxu0
    %v577 = vpop.f32.mrb[0].mxu0
    %v578 = vadd.f32 %v435, %v577
    %v579 = vpop.f32.mrb[0].mxu0
    %580 = vdwg.mxu0
    %v581 = vmax.f32 %v519, 0.0
    %v582 = vmax.f32 %v522, 0.0
    %v583 = vmax.f32 %v527, 0.0
    %v584 = vmax.f32 %v530, 0.0
    %v585 = vmax.f32 %v535, 0.0
    %v586 = vmax.f32 %v538, 0.0
    %v587 = vmax.f32 %v543, 0.0
    %v588 = vmax.f32 %v546, 0.0
    %v589 = vmax.f32 %v551, 0.0
    %v590 = vmax.f32 %v554, 0.0
    %v591 = vmax.f32 %v559, 0.0
    %v592 = vmax.f32 %v562, 0.0
    %v593 = vmax.f32 %v567, 0.0
    %v594 = vmax.f32 %v570, 0.0
    %v595 = vmax.f32 %v575, 0.0
    %v596 = vmax.f32 %v578, 0.0
    %v597 = vmin.f32 %v581, 6.0
    %v598 = vmin.f32 %v582, 6.0
    %v599 = vmin.f32 %v583, 6.0
    %v600 = vmin.f32 %v584, 6.0
    %v601 = vmin.f32 %v585, 6.0
    %v602 = vmin.f32 %v586, 6.0
    %v603 = vmin.f32 %v587, 6.0
    %v604 = vmin.f32 %v588, 6.0
    %v605 = vmin.f32 %v589, 6.0
    %v606 = vmin.f32 %v590, 6.0
    %v607 = vmin.f32 %v591, 6.0
    %v608 = vmin.f32 %v592, 6.0
    %v609 = vmin.f32 %v593, 6.0
    %v610 = vmin.f32 %v594, 6.0
    %v611 = vmin.f32 %v595, 6.0
    %v612 = vmin.f32 %v596, 6.0
    %613 = vst [vmem:[#allocation2 + $0x10] sm:$0xff] %v597
    %614 = vst [vmem:[#allocation2 + $0x18] sm:$0xff] %v598
    %615 = vst [vmem:[#allocation2 + $0x20] sm:$0xff] %v599
    %616 = vst [vmem:[#allocation2 + $0x28] sm:$0xff] %v600
    %617 = vst [vmem:[#allocation2 + $0x30] sm:$0xff] %v601
    %618 = vst [vmem:[#allocation2 + $0x38] sm:$0xff] %v602
    %619 = vst [vmem:[#allocation2 + $0x40] sm:$0xff] %v603
    %620 = vst [vmem:[#allocation2 + $0x48] sm:$0xff] %v604
    %621 = vst [vmem:[#allocation2 + $0x60] sm:$0xff] %v605
    %622 = vst [vmem:[#allocation2 + $0x68] sm:$0xff] %v606
    %623 = vst [vmem:[#allocation2 + $0x70] sm:$0xff] %v607
    %624 = vst [vmem:[#allocation2 + $0x78] sm:$0xff] %v608
    %625 = vst [vmem:[#allocation2 + $0x80] sm:$0xff] %v609
    %626 = vst [vmem:[#allocation2 + $0x88] sm:$0xff] %v610
    %627 = vst [vmem:[#allocation2 + $0x90] sm:$0xff] %v611
    %628 = vst [vmem:[#allocation2 + $0x98] sm:$0xff] %v612
    %v629 = vlaneseq
    %v630 = vshrl.u32 %v629, 7
    %v631 = vadd.s32 %v630, 8
    %v632 = vadd.s32 %v630, 16
    %v633 = vadd.s32 %v630, 24
    %v634 = vadd.s32 %v630, 32
    %v635 = vadd.s32 %v630, 40
    %v636 = vadd.s32 %v630, 48
    %v637 = vadd.s32 %v630, 56
    %vm638 = vcmp.lt.s32.totalorder %v630, 0
    %v639 = vsub.s32 0, %v630
    %v640 = vsel %vm638, %v639, %v630
    %v641 = vshrl.u32 %v640, 3
    %v642 = vand.u32 %v640, 7
    %v643 = vsub.s32 0, %v642
    %v644 = vsel %vm638, %v643, %v642
    %vm645 = vcmp.lt.s32.totalorder %v631, 0
    %v646 = vsub.s32 0, %v631
    %v647 = vsel %vm645, %v646, %v631
    %v648 = vshrl.u32 %v647, 3
    %v649 = vand.u32 %v647, 7
    %v650 = vsub.s32 0, %v649
    %v651 = vsel %vm645, %v650, %v649
    %vm652 = vcmp.lt.s32.totalorder %v632, 0
    %v653 = vsub.s32 0, %v632
    %v654 = vsel %vm652, %v653, %v632
    %v655 = vshrl.u32 %v654, 3
    %v656 = vand.u32 %v654, 7
    %v657 = vsub.s32 0, %v656
    %v658 = vsel %vm652, %v657, %v656
    %vm659 = vcmp.lt.s32.totalorder %v633, 0
    %v660 = vsub.s32 0, %v633
    %v661 = vsel %vm659, %v660, %v633
    %v662 = vshrl.u32 %v661, 3
    %v663 = vand.u32 %v661, 7
    %v664 = vsub.s32 0, %v663
    %v665 = vsel %vm659, %v664, %v663
    %vm666 = vcmp.lt.s32.totalorder %v634, 0
    %v667 = vsub.s32 0, %v634
    %v668 = vsel %vm666, %v667, %v634
    %v669 = vshrl.u32 %v668, 3
    %v670 = vand.u32 %v668, 7
    %v671 = vsub.s32 0, %v670
    %v672 = vsel %vm666, %v671, %v670
    %vm673 = vcmp.lt.s32.totalorder %v635, 0
    %v674 = vsub.s32 0, %v635
    %v675 = vsel %vm673, %v674, %v635
    %v676 = vshrl.u32 %v675, 3
    %v677 = vand.u32 %v675, 7
    %v678 = vsub.s32 0, %v677
    %v679 = vsel %vm673, %v678, %v677
    %vm680 = vcmp.lt.s32.totalorder %v636, 0
    %v681 = vsub.s32 0, %v636
    %v682 = vsel %vm680, %v681, %v636
    %v683 = vshrl.u32 %v682, 3
    %v684 = vand.u32 %v682, 7
    %v685 = vsub.s32 0, %v684
    %v686 = vsel %vm680, %v685, %v684
    %vm687 = vcmp.lt.s32.totalorder %v637, 0
    %v688 = vsub.s32 0, %v637
    %v689 = vsel %vm687, %v688, %v637
    %v690 = vshrl.u32 %v689, 3
    %v691 = vand.u32 %v689, 7
    %v692 = vsub.s32 0, %v691
    %v693 = vsel %vm687, %v692, %v691
    %vm694 = vcmp.ne.s32.totalorder %v644, 0
    %vm695 = vcmp.ne.s32.totalorder %v651, 0
    %vm696 = vcmp.ne.s32.totalorder %v658, 0
    %vm697 = vcmp.ne.s32.totalorder %v665, 0
    %vm698 = vcmp.ne.s32.totalorder %v672, 0
    %vm699 = vcmp.ne.s32.totalorder %v679, 0
    %vm700 = vcmp.ne.s32.totalorder %v686, 0
    %vm701 = vcmp.ne.s32.totalorder %v693, 0
    %vm702 = vcmp.lt.s32.totalorder %v644, 0
    %vm703 = vcmp.lt.s32.totalorder %v651, 0
    %vm704 = vcmp.lt.s32.totalorder %v658, 0
    %vm705 = vcmp.lt.s32.totalorder %v665, 0
    %vm706 = vcmp.lt.s32.totalorder %v672, 0
    %vm707 = vcmp.lt.s32.totalorder %v679, 0
    %vm708 = vcmp.lt.s32.totalorder %v686, 0
    %vm709 = vcmp.lt.s32.totalorder %v693, 0
    %vm710 = vmand %vm702, %vm694
    %vm711 = vmand %vm703, %vm695
    %vm712 = vmand %vm704, %vm696
    %vm713 = vmand %vm705, %vm697
    %vm714 = vmand %vm706, %vm698
    %vm715 = vmand %vm707, %vm699
    %vm716 = vmand %vm708, %vm700
    %vm717 = vmand %vm709, %vm701
    %v718 = vadd.s32 %v644, 8
    %v719 = vadd.s32 %v651, 8
    %v720 = vadd.s32 %v658, 8
    %v721 = vadd.s32 %v665, 8
    %v722 = vadd.s32 %v672, 8
    %v723 = vadd.s32 %v679, 8
    %v724 = vadd.s32 %v686, 8
    %v725 = vadd.s32 %v693, 8
    %v726 = vsel %vm710, %v718, %v644
    %v727 = vsel %vm711, %v719, %v651
    %v728 = vsel %vm712, %v720, %v658
    %v729 = vsel %vm713, %v721, %v665
    %v730 = vsel %vm714, %v722, %v672
    %v731 = vsel %vm715, %v723, %v679
    %v732 = vsel %vm716, %v724, %v686
    %v733 = vsel %vm717, %v725, %v693
    %vm734 = vcmp.ge.s32.totalorder %v726, 1
    %vm735 = vcmp.ge.s32.totalorder %v727, 1
    %vm736 = vcmp.ge.s32.totalorder %v728, 1
    %vm737 = vcmp.ge.s32.totalorder %v729, 1
    %vm738 = vcmp.ge.s32.totalorder %v730, 1
    %vm739 = vcmp.ge.s32.totalorder %v731, 1
    %vm740 = vcmp.ge.s32.totalorder %v732, 1
    %vm741 = vcmp.ge.s32.totalorder %v733, 1
    %vm742 = vcmp.le.s32.totalorder %v726, 6
    %vm743 = vcmp.le.s32.totalorder %v727, 6
    %vm744 = vcmp.le.s32.totalorder %v728, 6
    %vm745 = vcmp.le.s32.totalorder %v729, 6
    %vm746 = vcmp.le.s32.totalorder %v730, 6
    %vm747 = vcmp.le.s32.totalorder %v731, 6
    %vm748 = vcmp.le.s32.totalorder %v732, 6
    %vm749 = vcmp.le.s32.totalorder %v733, 6
    %v750 = vld [vmem:[#allocation9 + $0x2] sm:$0x1]
    %v751 = vld [vmem:[#allocation9 + $0x3] sm:$0x1]
    %v752 = vld [vmem:[#allocation9 + $0x6] sm:$0x1]
    %v753 = vld [vmem:[#allocation9 + $0x7] sm:$0x1]
    %v754 = vld [vmem:[#allocation9 + $0x8] sm:$0x1]
    %v755 = vld [vmem:[#allocation9 + $0x9] sm:$0x1]
    %v756 = vld [vmem:[#allocation9 + $0xa] sm:$0x1]
    %v757 = vld [vmem:[#allocation9 + $0xb] sm:$0x1]
    %v758 = vld [vmem:[#allocation9 + $0xc] sm:$0x1]
    %v759 = vld [vmem:[#allocation9 + $0xd] sm:$0x1]
    %v760 = vld [vmem:[#allocation9 + $0xe] sm:$0x1]
    %v761 = vld [vmem:[#allocation2 + $0x7] sm:$0xff]
    %v762 = vld [vmem:[#allocation2 + $0xf] sm:$0xff]
    %v763 = vld [vmem:[#allocation2 + $0x17] sm:$0xff]
    %v764 = vld [vmem:[#allocation2 + $0x1f] sm:$0xff]
    %v765 = vld [vmem:[#allocation2 + $0x27] sm:$0xff]
    %v766 = vld [vmem:[#allocation2 + $0x2f] sm:$0xff]
    %v767 = vld [vmem:[#allocation2 + $0x37] sm:$0xff]
    %v768 = vld [vmem:[#allocation2 + $0x3f] sm:$0xff]
    %v769 = vsel %vm734, %v761, 0.0
    %v770 = vsel %vm735, %v762, 0.0
    %v771 = vsel %vm736, %v763, 0.0
    %v772 = vsel %vm737, %v764, 0.0
    %v773 = vsel %vm738, %v765, 0.0
    %v774 = vsel %vm739, %v766, 0.0
    %v775 = vsel %vm740, %v767, 0.0
    %v776 = vsel %vm741, %v768, 0.0
    %v777 = vlaneseq
    %v778 = vshrl.u32 %v777, 7
    %v779 = vsub.s32 0, %v778
    %v780 = vrot.slane %v752, %v779
    %v781 = vmul.f32 %v769, %v780
    %v782 = vmul.f32 %v770, %v780
    %v783 = vmul.f32 %v771, %v780
    %v784 = vmul.f32 %v772, %v780
    %v785 = vmul.f32 %v773, %v780
    %v786 = vmul.f32 %v774, %v780
    %v787 = vmul.f32 %v775, %v780
    %v788 = vmul.f32 %v776, %v780
    %v789 = vadd.f32 %v781, 0.0
    %v790 = vadd.f32 %v782, 0.0
    %v791 = vadd.f32 %v783, 0.0
    %v792 = vadd.f32 %v784, 0.0
    %v793 = vadd.f32 %v785, 0.0
    %v794 = vadd.f32 %v786, 0.0
    %v795 = vadd.f32 %v787, 0.0
    %v796 = vadd.f32 %v788, 0.0
    %v797 = vld [vmem:[#allocation2 + $0x8] sm:$0xff]
    %v798 = vld [vmem:[#allocation2 + $0x10] sm:$0xff]
    %v799 = vld [vmem:[#allocation2 + $0x18] sm:$0xff]
    %v800 = vld [vmem:[#allocation2 + $0x20] sm:$0xff]
    %v801 = vld [vmem:[#allocation2 + $0x28] sm:$0xff]
    %v802 = vld [vmem:[#allocation2 + $0x30] sm:$0xff]
    %v803 = vld [vmem:[#allocation2 + $0x38] sm:$0xff]
    %v804 = vld [vmem:[#allocation2 + $0x40] sm:$0xff]
    %v805 = vlaneseq
    %v806 = vshrl.u32 %v805, 7
    %v807 = vsub.s32 0, %v806
    %v808 = vrot.slane %v753, %v807
    %v809 = vmul.f32 %v797, %v808
    %v810 = vmul.f32 %v798, %v808
    %v811 = vmul.f32 %v799, %v808
    %v812 = vmul.f32 %v800, %v808
    %v813 = vmul.f32 %v801, %v808
    %v814 = vmul.f32 %v802, %v808
    %v815 = vmul.f32 %v803, %v808
    %v816 = vmul.f32 %v804, %v808
    %v817 = vadd.f32 %v789, %v809
    %v818 = vadd.f32 %v790, %v810
    %v819 = vadd.f32 %v791, %v811
    %v820 = vadd.f32 %v792, %v812
    %v821 = vadd.f32 %v793, %v813
    %v822 = vadd.f32 %v794, %v814
    %v823 = vadd.f32 %v795, %v815
    %v824 = vadd.f32 %v796, %v816
    %v825 = vld [vmem:[#allocation2 + $0x9] sm:$0xff]
    %v826 = vld [vmem:[#allocation2 + $0x11] sm:$0xff]
    %v827 = vld [vmem:[#allocation2 + $0x19] sm:$0xff]
    %v828 = vld [vmem:[#allocation2 + $0x21] sm:$0xff]
    %v829 = vld [vmem:[#allocation2 + $0x29] sm:$0xff]
    %v830 = vld [vmem:[#allocation2 + $0x31] sm:$0xff]
    %v831 = vld [vmem:[#allocation2 + $0x39] sm:$0xff]
    %v832 = vld [vmem:[#allocation2 + $0x41] sm:$0xff]
    %v833 = vsel %vm742, %v825, 0.0
    %v834 = vsel %vm743, %v826, 0.0
    %v835 = vsel %vm744, %v827, 0.0
    %v836 = vsel %vm745, %v828, 0.0
    %v837 = vsel %vm746, %v829, 0.0
    %v838 = vsel %vm747, %v830, 0.0
    %v839 = vsel %vm748, %v831, 0.0
    %v840 = vsel %vm749, %v832, 0.0
    %v841 = vlaneseq
    %v842 = vshrl.u32 %v841, 7
    %v843 = vsub.s32 0, %v842
    %v844 = vrot.slane %v754, %v843
    %v845 = vmul.f32 %v833, %v844
    %v846 = vmul.f32 %v834, %v844
    %v847 = vmul.f32 %v835, %v844
    %v848 = vmul.f32 %v836, %v844
    %v849 = vmul.f32 %v837, %v844
    %v850 = vmul.f32 %v838, %v844
    %v851 = vmul.f32 %v839, %v844
    %v852 = vmul.f32 %v840, %v844
    %v853 = vadd.f32 %v817, %v845
    %v854 = vadd.f32 %v818, %v846
    %v855 = vadd.f32 %v819, %v847
    %v856 = vadd.f32 %v820, %v848
    %v857 = vadd.f32 %v821, %v849
    %v858 = vadd.f32 %v822, %v850
    %v859 = vadd.f32 %v823, %v851
    %v860 = vadd.f32 %v824, %v852
    %v861 = vld [vmem:[#allocation2 + $0x47] sm:$0xff]
    %v862 = vsel %vm734, %v762, 0.0
    %v863 = vsel %vm735, %v763, 0.0
    %v864 = vsel %vm736, %v764, 0.0
    %v865 = vsel %vm737, %v765, 0.0
    %v866 = vsel %vm738, %v766, 0.0
    %v867 = vsel %vm739, %v767, 0.0
    %v868 = vsel %vm740, %v768, 0.0
    %v869 = vsel %vm741, %v861, 0.0
    %v870 = vlaneseq
    %v871 = vshrl.u32 %v870, 7
    %v872 = vsub.s32 0, %v871
    %v873 = vrot.slane %v755, %v872
    %v874 = vmul.f32 %v862, %v873
    %v875 = vmul.f32 %v863, %v873
    %v876 = vmul.f32 %v864, %v873
    %v877 = vmul.f32 %v865, %v873
    %v878 = vmul.f32 %v866, %v873
    %v879 = vmul.f32 %v867, %v873
    %v880 = vmul.f32 %v868, %v873
    %v881 = vmul.f32 %v869, %v873
    %v882 = vadd.f32 %v853, %v874
    %v883 = vadd.f32 %v854, %v875
    %v884 = vadd.f32 %v855, %v876
    %v885 = vadd.f32 %v856, %v877
    %v886 = vadd.f32 %v857, %v878
    %v887 = vadd.f32 %v858, %v879
    %v888 = vadd.f32 %v859, %v880
    %v889 = vadd.f32 %v860, %v881
    %v890 = vld [vmem:[#allocation2 + $0x48] sm:$0xff]
    %v891 = vlaneseq
    %v892 = vshrl.u32 %v891, 7
    %v893 = vsub.s32 0, %v892
    %v894 = vrot.slane %v756, %v893
    %v895 = vmul.f32 %v798, %v894
    %v896 = vmul.f32 %v799, %v894
    %v897 = vmul.f32 %v800, %v894
    %v898 = vmul.f32 %v801, %v894
    %v899 = vmul.f32 %v802, %v894
    %v900 = vmul.f32 %v803, %v894
    %v901 = vmul.f32 %v804, %v894
    %v902 = vmul.f32 %v890, %v894
    %v903 = vadd.f32 %v882, %v895
    %v904 = vadd.f32 %v883, %v896
    %v905 = vadd.f32 %v884, %v897
    %v906 = vadd.f32 %v885, %v898
    %v907 = vadd.f32 %v886, %v899
    %v908 = vadd.f32 %v887, %v900
    %v909 = vadd.f32 %v888, %v901
    %v910 = vadd.f32 %v889, %v902
    %v911 = vld [vmem:[#allocation2 + $0x49] sm:$0xff]
    %v912 = vsel %vm742, %v826, 0.0
    %v913 = vsel %vm743, %v827, 0.0
    %v914 = vsel %vm744, %v828, 0.0
    %v915 = vsel %vm745, %v829, 0.0
    %v916 = vsel %vm746, %v830, 0.0
    %v917 = vsel %vm747, %v831, 0.0
    %v918 = vsel %vm748, %v832, 0.0
    %v919 = vsel %vm749, %v911, 0.0
    %v920 = vlaneseq
    %v921 = vshrl.u32 %v920, 7
    %v922 = vsub.s32 0, %v921
    %v923 = vrot.slane %v757, %v922
    %v924 = vmul.f32 %v912, %v923
    %v925 = vmul.f32 %v913, %v923
    %v926 = vmul.f32 %v914, %v923
    %v927 = vmul.f32 %v915, %v923
    %v928 = vmul.f32 %v916, %v923
    %v929 = vmul.f32 %v917, %v923
    %v930 = vmul.f32 %v918, %v923
    %v931 = vmul.f32 %v919, %v923
    %v932 = vadd.f32 %v903, %v924
    %v933 = vadd.f32 %v904, %v925
    %v934 = vadd.f32 %v905, %v926
    %v935 = vadd.f32 %v906, %v927
    %v936 = vadd.f32 %v907, %v928
    %v937 = vadd.f32 %v908, %v929
    %v938 = vadd.f32 %v909, %v930
    %v939 = vadd.f32 %v910, %v931
    %v940 = vld [vmem:[#allocation2 + $0x4f] sm:$0xff]
    %v941 = vsel %vm734, %v763, 0.0
    %v942 = vsel %vm735, %v764, 0.0
    %v943 = vsel %vm736, %v765, 0.0
    %v944 = vsel %vm737, %v766, 0.0
    %v945 = vsel %vm738, %v767, 0.0
    %v946 = vsel %vm739, %v768, 0.0
    %v947 = vsel %vm740, %v861, 0.0
    %v948 = vsel %vm741, %v940, 0.0
    %v949 = vlaneseq
    %v950 = vshrl.u32 %v949, 7
    %v951 = vsub.s32 0, %v950
    %v952 = vrot.slane %v758, %v951
    %v953 = vmul.f32 %v941, %v952
    %v954 = vmul.f32 %v942, %v952
    %v955 = vmul.f32 %v943, %v952
    %v956 = vmul.f32 %v944, %v952
    %v957 = vmul.f32 %v945, %v952
    %v958 = vmul.f32 %v946, %v952
    %v959 = vmul.f32 %v947, %v952
    %v960 = vmul.f32 %v948, %v952
    %v961 = vadd.f32 %v932, %v953
    %v962 = vadd.f32 %v933, %v954
    %v963 = vadd.f32 %v934, %v955
    %v964 = vadd.f32 %v935, %v956
    %v965 = vadd.f32 %v936, %v957
    %v966 = vadd.f32 %v937, %v958
    %v967 = vadd.f32 %v938, %v959
    %v968 = vadd.f32 %v939, %v960
    %v969 = vld [vmem:[#allocation2 + $0x50] sm:$0xff]
    %v970 = vlaneseq
    %v971 = vshrl.u32 %v970, 7
    %v972 = vsub.s32 0, %v971
    %v973 = vrot.slane %v759, %v972
    %v974 = vmul.f32 %v799, %v973
    %v975 = vmul.f32 %v800, %v973
    %v976 = vmul.f32 %v801, %v973
    %v977 = vmul.f32 %v802, %v973
    %v978 = vmul.f32 %v803, %v973
    %v979 = vmul.f32 %v804, %v973
    %v980 = vmul.f32 %v890, %v973
    %v981 = vmul.f32 %v969, %v973
    %v982 = vadd.f32 %v961, %v974
    %v983 = vadd.f32 %v962, %v975
    %v984 = vadd.f32 %v963, %v976
    %v985 = vadd.f32 %v964, %v977
    %v986 = vadd.f32 %v965, %v978
    %v987 = vadd.f32 %v966, %v979
    %v988 = vadd.f32 %v967, %v980
    %v989 = vadd.f32 %v968, %v981
    %v990 = vld [vmem:[#allocation2 + $0x51] sm:$0xff]
    %v991 = vsel %vm742, %v827, 0.0
    %v992 = vsel %vm743, %v828, 0.0
    %v993 = vsel %vm744, %v829, 0.0
    %v994 = vsel %vm745, %v830, 0.0
    %v995 = vsel %vm746, %v831, 0.0
    %v996 = vsel %vm747, %v832, 0.0
    %v997 = vsel %vm748, %v911, 0.0
    %v998 = vsel %vm749, %v990, 0.0
    %v999 = vlaneseq
    %v1000 = vshrl.u32 %v999, 7
    %v1001 = vsub.s32 0, %v1000
    %v1002 = vrot.slane %v760, %v1001
    %v1003 = vmul.f32 %v991, %v1002
    %v1004 = vmul.f32 %v992, %v1002
    %v1005 = vmul.f32 %v993, %v1002
    %v1006 = vmul.f32 %v994, %v1002
    %v1007 = vmul.f32 %v995, %v1002
    %v1008 = vmul.f32 %v996, %v1002
    %v1009 = vmul.f32 %v997, %v1002
    %v1010 = vmul.f32 %v998, %v1002
    %v1011 = vadd.f32 %v982, %v1003
    %v1012 = vadd.f32 %v983, %v1004
    %v1013 = vadd.f32 %v984, %v1005
    %v1014 = vadd.f32 %v985, %v1006
    %v1015 = vadd.f32 %v986, %v1007
    %v1016 = vadd.f32 %v987, %v1008
    %v1017 = vadd.f32 %v988, %v1009
    %v1018 = vadd.f32 %v989, %v1010
    %v1019 = vlaneseq
    %v1020 = vshrl.u32 %v1019, 7
    %v1021 = vsub.s32 0, %v1020
    %v1022 = vrot.slane %v750, %v1021
    %v1023 = vmul.f32 %v1011, %v1022
    %v1024 = vmul.f32 %v1012, %v1022
    %v1025 = vmul.f32 %v1013, %v1022
    %v1026 = vmul.f32 %v1014, %v1022
    %v1027 = vmul.f32 %v1015, %v1022
    %v1028 = vmul.f32 %v1016, %v1022
    %v1029 = vmul.f32 %v1017, %v1022
    %v1030 = vmul.f32 %v1018, %v1022
    %v1031 = vlaneseq
    %v1032 = vshrl.u32 %v1031, 7
    %v1033 = vsub.s32 0, %v1032
    %v1034 = vrot.slane %v751, %v1033
    %v1035 = vadd.f32 %v1023, %v1034
    %v1036 = vadd.f32 %v1024, %v1034
    %v1037 = vadd.f32 %v1025, %v1034
    %v1038 = vadd.f32 %v1026, %v1034
    %v1039 = vadd.f32 %v1027, %v1034
    %v1040 = vadd.f32 %v1028, %v1034
    %v1041 = vadd.f32 %v1029, %v1034
    %v1042 = vadd.f32 %v1030, %v1034
    %v1043 = vmax.f32 %v1035, 0.0
    %v1044 = vmax.f32 %v1036, 0.0
    %v1045 = vmax.f32 %v1037, 0.0
    %v1046 = vmax.f32 %v1038, 0.0
    %v1047 = vmax.f32 %v1039, 0.0
    %v1048 = vmax.f32 %v1040, 0.0
    %v1049 = vmax.f32 %v1041, 0.0
    %v1050 = vmax.f32 %v1042, 0.0
    %v1051 = vld [vmem:[#allocation2 + $0x57] sm:$0xff]
    %v1052 = vld [vmem:[#allocation2 + $0x5f] sm:$0xff]
    %v1053 = vld [vmem:[#allocation2 + $0x67] sm:$0xff]
    %v1054 = vld [vmem:[#allocation2 + $0x6f] sm:$0xff]
    %v1055 = vld [vmem:[#allocation2 + $0x77] sm:$0xff]
    %v1056 = vld [vmem:[#allocation2 + $0x7f] sm:$0xff]
    %v1057 = vld [vmem:[#allocation2 + $0x87] sm:$0xff]
    %v1058 = vld [vmem:[#allocation2 + $0x8f] sm:$0xff]
    %v1059 = vsel %vm734, %v1051, 0.0
    %v1060 = vsel %vm735, %v1052, 0.0
    %v1061 = vsel %vm736, %v1053, 0.0
    %v1062 = vsel %vm737, %v1054, 0.0
    %v1063 = vsel %vm738, %v1055, 0.0
    %v1064 = vsel %vm739, %v1056, 0.0
    %v1065 = vsel %vm740, %v1057, 0.0
    %v1066 = vsel %vm741, %v1058, 0.0
    %v1067 = vmul.f32 %v1059, %v780
    %v1068 = vmul.f32 %v1060, %v780
    %v1069 = vmul.f32 %v1061, %v780
    %v1070 = vmul.f32 %v1062, %v780
    %v1071 = vmul.f32 %v1063, %v780
    %v1072 = vmul.f32 %v1064, %v780
    %v1073 = vmul.f32 %v1065, %v780
    %v1074 = vmul.f32 %v1066, %v780
    %v1075 = vadd.f32 %v1067, 0.0
    %v1076 = vadd.f32 %v1068, 0.0
    %v1077 = vadd.f32 %v1069, 0.0
    %v1078 = vadd.f32 %v1070, 0.0
    %v1079 = vadd.f32 %v1071, 0.0
    %v1080 = vadd.f32 %v1072, 0.0
    %v1081 = vadd.f32 %v1073, 0.0
    %v1082 = vadd.f32 %v1074, 0.0
    %v1083 = vld [vmem:[#allocation2 + $0x58] sm:$0xff]
    %v1084 = vld [vmem:[#allocation2 + $0x60] sm:$0xff]
    %v1085 = vld [vmem:[#allocation2 + $0x68] sm:$0xff]
    %v1086 = vld [vmem:[#allocation2 + $0x70] sm:$0xff]
    %v1087 = vld [vmem:[#allocation2 + $0x78] sm:$0xff]
    %v1088 = vld [vmem:[#allocation2 + $0x80] sm:$0xff]
    %v1089 = vld [vmem:[#allocation2 + $0x88] sm:$0xff]
    %v1090 = vld [vmem:[#allocation2 + $0x90] sm:$0xff]
    %v1091 = vmul.f32 %v1083, %v808
    %v1092 = vmul.f32 %v1084, %v808
    %v1093 = vmul.f32 %v1085, %v808
    %v1094 = vmul.f32 %v1086, %v808
    %v1095 = vmul.f32 %v1087, %v808
    %v1096 = vmul.f32 %v1088, %v808
    %v1097 = vmul.f32 %v1089, %v808
    %v1098 = vmul.f32 %v1090, %v808
    %v1099 = vadd.f32 %v1075, %v1091
    %v1100 = vadd.f32 %v1076, %v1092
    %v1101 = vadd.f32 %v1077, %v1093
    %v1102 = vadd.f32 %v1078, %v1094
    %v1103 = vadd.f32 %v1079, %v1095
    %v1104 = vadd.f32 %v1080, %v1096
    %v1105 = vadd.f32 %v1081, %v1097
    %v1106 = vadd.f32 %v1082, %v1098
    %v1107 = vld [vmem:[#allocation2 + $0x59] sm:$0xff]
    %v1108 = vld [vmem:[#allocation2 + $0x61] sm:$0xff]
    %v1109 = vld [vmem:[#allocation2 + $0x69] sm:$0xff]
    %v1110 = vld [vmem:[#allocation2 + $0x71] sm:$0xff]
    %v1111 = vld [vmem:[#allocation2 + $0x79] sm:$0xff]
    %v1112 = vld [vmem:[#allocation2 + $0x81] sm:$0xff]
    %v1113 = vld [vmem:[#allocation2 + $0x89] sm:$0xff]
    %v1114 = vld [vmem:[#allocation2 + $0x91] sm:$0xff]
    %v1115 = vsel %vm742, %v1107, 0.0
    %v1116 = vsel %vm743, %v1108, 0.0
    %v1117 = vsel %vm744, %v1109, 0.0
    %v1118 = vsel %vm745, %v1110, 0.0
    %v1119 = vsel %vm746, %v1111, 0.0
    %v1120 = vsel %vm747, %v1112, 0.0
    %v1121 = vsel %vm748, %v1113, 0.0
    %v1122 = vsel %vm749, %v1114, 0.0
    %v1123 = vmul.f32 %v1115, %v844
    %v1124 = vmul.f32 %v1116, %v844
    %v1125 = vmul.f32 %v1117, %v844
    %v1126 = vmul.f32 %v1118, %v844
    %v1127 = vmul.f32 %v1119, %v844
    %v1128 = vmul.f32 %v1120, %v844
    %v1129 = vmul.f32 %v1121, %v844
    %v1130 = vmul.f32 %v1122, %v844
    %v1131 = vadd.f32 %v1099, %v1123
    %v1132 = vadd.f32 %v1100, %v1124
    %v1133 = vadd.f32 %v1101, %v1125
    %v1134 = vadd.f32 %v1102, %v1126
    %v1135 = vadd.f32 %v1103, %v1127
    %v1136 = vadd.f32 %v1104, %v1128
    %v1137 = vadd.f32 %v1105, %v1129
    %v1138 = vadd.f32 %v1106, %v1130
    %v1139 = vld [vmem:[#allocation2 + $0x97] sm:$0xff]
    %v1140 = vsel %vm734, %v1052, 0.0
    %v1141 = vsel %vm735, %v1053, 0.0
    %v1142 = vsel %vm736, %v1054, 0.0
    %v1143 = vsel %vm737, %v1055, 0.0
    %v1144 = vsel %vm738, %v1056, 0.0
    %v1145 = vsel %vm739, %v1057, 0.0
    %v1146 = vsel %vm740, %v1058, 0.0
    %v1147 = vsel %vm741, %v1139, 0.0
    %v1148 = vmul.f32 %v1140, %v873
    %v1149 = vmul.f32 %v1141, %v873
    %v1150 = vmul.f32 %v1142, %v873
    %v1151 = vmul.f32 %v1143, %v873
    %v1152 = vmul.f32 %v1144, %v873
    %v1153 = vmul.f32 %v1145, %v873
    %v1154 = vmul.f32 %v1146, %v873
    %v1155 = vmul.f32 %v1147, %v873
    %v1156 = vadd.f32 %v1131, %v1148
    %v1157 = vadd.f32 %v1132, %v1149
    %v1158 = vadd.f32 %v1133, %v1150
    %v1159 = vadd.f32 %v1134, %v1151
    %v1160 = vadd.f32 %v1135, %v1152
    %v1161 = vadd.f32 %v1136, %v1153
    %v1162 = vadd.f32 %v1137, %v1154
    %v1163 = vadd.f32 %v1138, %v1155
    %v1164 = vld [vmem:[#allocation2 + $0x98] sm:$0xff]
    %v1165 = vmul.f32 %v1084, %v894
    %v1166 = vmul.f32 %v1085, %v894
    %v1167 = vmul.f32 %v1086, %v894
    %v1168 = vmul.f32 %v1087, %v894
    %v1169 = vmul.f32 %v1088, %v894
    %v1170 = vmul.f32 %v1089, %v894
    %v1171 = vmul.f32 %v1090, %v894
    %v1172 = vmul.f32 %v1164, %v894
    %v1173 = vadd.f32 %v1156, %v1165
    %v1174 = vadd.f32 %v1157, %v1166
    %v1175 = vadd.f32 %v1158, %v1167
    %v1176 = vadd.f32 %v1159, %v1168
    %v1177 = vadd.f32 %v1160, %v1169
    %v1178 = vadd.f32 %v1161, %v1170
    %v1179 = vadd.f32 %v1162, %v1171
    %v1180 = vadd.f32 %v1163, %v1172
    %v1181 = vld [vmem:[#allocation2 + $0x99] sm:$0xff]
    %v1182 = vsel %vm742, %v1108, 0.0
    %v1183 = vsel %vm743, %v1109, 0.0
    %v1184 = vsel %vm744, %v1110, 0.0
    %v1185 = vsel %vm745, %v1111, 0.0
    %v1186 = vsel %vm746, %v1112, 0.0
    %v1187 = vsel %vm747, %v1113, 0.0
    %v1188 = vsel %vm748, %v1114, 0.0
    %v1189 = vsel %vm749, %v1181, 0.0
    %v1190 = vmul.f32 %v1182, %v923
    %v1191 = vmul.f32 %v1183, %v923
    %v1192 = vmul.f32 %v1184, %v923
    %v1193 = vmul.f32 %v1185, %v923
    %v1194 = vmul.f32 %v1186, %v923
    %v1195 = vmul.f32 %v1187, %v923
    %v1196 = vmul.f32 %v1188, %v923
    %v1197 = vmul.f32 %v1189, %v923
    %v1198 = vadd.f32 %v1173, %v1190
    %v1199 = vadd.f32 %v1174, %v1191
    %v1200 = vadd.f32 %v1175, %v1192
    %v1201 = vadd.f32 %v1176, %v1193
    %v1202 = vadd.f32 %v1177, %v1194
    %v1203 = vadd.f32 %v1178, %v1195
    %v1204 = vadd.f32 %v1179, %v1196
    %v1205 = vadd.f32 %v1180, %v1197
    %v1206 = vld [vmem:[#allocation2 + $0x9f] sm:$0xff]
    %v1207 = vsel %vm734, %v1053, 0.0
    %v1208 = vsel %vm735, %v1054, 0.0
    %v1209 = vsel %vm736, %v1055, 0.0
    %v1210 = vsel %vm737, %v1056, 0.0
    %v1211 = vsel %vm738, %v1057, 0.0
    %v1212 = vsel %vm739, %v1058, 0.0
    %v1213 = vsel %vm740, %v1139, 0.0
    %v1214 = vsel %vm741, %v1206, 0.0
    %v1215 = vmul.f32 %v1207, %v952
    %v1216 = vmul.f32 %v1208, %v952
    %v1217 = vmul.f32 %v1209, %v952
    %v1218 = vmul.f32 %v1210, %v952
    %v1219 = vmul.f32 %v1211, %v952
    %v1220 = vmul.f32 %v1212, %v952
    %v1221 = vmul.f32 %v1213, %v952
    %v1222 = vmul.f32 %v1214, %v952
    %v1223 = vadd.f32 %v1198, %v1215
    %v1224 = vadd.f32 %v1199, %v1216
    %v1225 = vadd.f32 %v1200, %v1217
    %v1226 = vadd.f32 %v1201, %v1218
    %v1227 = vadd.f32 %v1202, %v1219
    %v1228 = vadd.f32 %v1203, %v1220
    %v1229 = vadd.f32 %v1204, %v1221
    %v1230 = vadd.f32 %v1205, %v1222
    %v1231 = vld [vmem:[#allocation2 + $0xa0] sm:$0xff]
    %v1232 = vmul.f32 %v1085, %v973
    %v1233 = vmul.f32 %v1086, %v973
    %v1234 = vmul.f32 %v1087, %v973
    %v1235 = vmul.f32 %v1088, %v973
    %v1236 = vmul.f32 %v1089, %v973
    %v1237 = vmul.f32 %v1090, %v973
    %v1238 = vmul.f32 %v1164, %v973
    %v1239 = vmul.f32 %v1231, %v973
    %v1240 = vadd.f32 %v1223, %v1232
    %v1241 = vadd.f32 %v1224, %v1233
    %v1242 = vadd.f32 %v1225, %v1234
    %v1243 = vadd.f32 %v1226, %v1235
    %v1244 = vadd.f32 %v1227, %v1236
    %v1245 = vadd.f32 %v1228, %v1237
    %v1246 = vadd.f32 %v1229, %v1238
    %v1247 = vadd.f32 %v1230, %v1239
    %v1248 = vld [vmem:[#allocation2 + $0xa1] sm:$0xff]
    %v1249 = vsel %vm742, %v1109, 0.0
    %v1250 = vsel %vm743, %v1110, 0.0
    %v1251 = vsel %vm744, %v1111, 0.0
    %v1252 = vsel %vm745, %v1112, 0.0
    %v1253 = vsel %vm746, %v1113, 0.0
    %v1254 = vsel %vm747, %v1114, 0.0
    %v1255 = vsel %vm748, %v1181, 0.0
    %v1256 = vsel %vm749, %v1248, 0.0
    %v1257 = vmul.f32 %v1249, %v1002
    %v1258 = vmul.f32 %v1250, %v1002
    %v1259 = vmul.f32 %v1251, %v1002
    %v1260 = vmul.f32 %v1252, %v1002
    %v1261 = vmul.f32 %v1253, %v1002
    %v1262 = vmul.f32 %v1254, %v1002
    %v1263 = vmul.f32 %v1255, %v1002
    %v1264 = vmul.f32 %v1256, %v1002
    %v1265 = vadd.f32 %v1240, %v1257
    %v1266 = vadd.f32 %v1241, %v1258
    %v1267 = vadd.f32 %v1242, %v1259
    %v1268 = vadd.f32 %v1243, %v1260
    %v1269 = vadd.f32 %v1244, %v1261
    %v1270 = vadd.f32 %v1245, %v1262
    %v1271 = vadd.f32 %v1246, %v1263
    %v1272 = vadd.f32 %v1247, %v1264
    %v1273 = vmul.f32 %v1265, %v1022
    %v1274 = vmul.f32 %v1266, %v1022
    %v1275 = vmul.f32 %v1267, %v1022
    %v1276 = vmul.f32 %v1268, %v1022
    %v1277 = vmul.f32 %v1269, %v1022
    %v1278 = vmul.f32 %v1270, %v1022
    %v1279 = vmul.f32 %v1271, %v1022
    %v1280 = vmul.f32 %v1272, %v1022
    %v1281 = vadd.f32 %v1273, %v1034
    %v1282 = vadd.f32 %v1274, %v1034
    %v1283 = vadd.f32 %v1275, %v1034
    %v1284 = vadd.f32 %v1276, %v1034
    %v1285 = vadd.f32 %v1277, %v1034
    %v1286 = vadd.f32 %v1278, %v1034
    %v1287 = vadd.f32 %v1279, %v1034
    %v1288 = vadd.f32 %v1280, %v1034
    %v1289 = vmax.f32 %v1281, 0.0
    %v1290 = vmax.f32 %v1282, 0.0
    %v1291 = vmax.f32 %v1283, 0.0
    %v1292 = vmax.f32 %v1284, 0.0
    %v1293 = vmax.f32 %v1285, 0.0
    %v1294 = vmax.f32 %v1286, 0.0
    %v1295 = vmax.f32 %v1287, 0.0
    %v1296 = vmax.f32 %v1288, 0.0
    %s1297 = scalar_lea.vmem [#allocation6], 128
    %v1298 = vld [vmem:[%s1297] sm:$0xf]
    %v1299 = vld [vmem:[%s1297 + $0x4] sm:$0xf]
    %v1300 = vld [vmem:[%s1297 + $0x8] sm:$0xf]
    %v1301 = vld [vmem:[%s1297 + $0xc] sm:$0xf]
    %v1302 = vld [vmem:[%s1297 + $0x10] sm:$0xf]
    %v1303 = vld [vmem:[%s1297 + $0x14] sm:$0xf]
    %v1304 = vld [vmem:[%s1297 + $0x18] sm:$0xf]
    %v1305 = vld [vmem:[%s1297 + $0x1c] sm:$0xf]
    %v1306 = vld [vmem:[%s1297 + $0x20] sm:$0xf]
    %v1307 = vld [vmem:[%s1297 + $0x24] sm:$0xf]
    %v1308 = vld [vmem:[%s1297 + $0x28] sm:$0xf]
    %v1309 = vld [vmem:[%s1297 + $0x2c] sm:$0xf]
    %v1310 = vld [vmem:[%s1297 + $0x30] sm:$0xf]
    %v1311 = vld [vmem:[%s1297 + $0x34] sm:$0xf]
    %v1312 = vld [vmem:[%s1297 + $0x38] sm:$0xf]
    %v1313 = vld [vmem:[%s1297 + $0x3c] sm:$0xf]
    %v1314 = vpack.c.bf16 %v1044, %v1043
    %v1315 = vpack.c.bf16 %v1046, %v1045
    %v1316 = vpack.c.bf16 %v1048, %v1047
    %v1317 = vpack.c.bf16 %v1050, %v1049
    %v1318 = vpack.c.bf16 %v1290, %v1289
    %v1319 = vpack.c.bf16 %v1292, %v1291
    %v1320 = vpack.c.bf16 %v1294, %v1293
    %v1321 = vpack.c.bf16 %v1296, %v1295
    %v1338 = vunpack.c.l.b16 %v1298
    %v1339 = vunpack.c.l.b16 %v1299
    %v1340 = vunpack.c.l.b16 %v1300
    %v1341 = vunpack.c.l.b16 %v1301
    %v1342 = vunpack.c.l.b16 %v1302
    %v1343 = vunpack.c.l.b16 %v1303
    %v1344 = vunpack.c.l.b16 %v1304
    %v1345 = vunpack.c.l.b16 %v1305
    %v1346 = vunpack.c.l.b16 %v1306
    %v1347 = vunpack.c.l.b16 %v1307
    %v1348 = vunpack.c.l.b16 %v1308
    %v1349 = vunpack.c.l.b16 %v1309
    %v1350 = vunpack.c.l.b16 %v1310
    %v1351 = vunpack.c.l.b16 %v1311
    %v1352 = vunpack.c.l.b16 %v1312
    %v1353 = vunpack.c.l.b16 %v1313
    %v1354 = vpack.c.b16 %v1339, %v1338
    %v1355 = vpack.c.b16 %v1341, %v1340
    %v1356 = vpack.c.b16 %v1343, %v1342
    %v1357 = vpack.c.b16 %v1345, %v1344
    %v1358 = vpack.c.b16 %v1347, %v1346
    %v1359 = vpack.c.b16 %v1349, %v1348
    %v1360 = vpack.c.b16 %v1351, %v1350
    %v1361 = vpack.c.b16 %v1353, %v1352
    %1370 = vmatprep.subr.bf16.mxu0 0
    %1371 = vmatpush1.bf16.msra.mxu0 %v1354
    %1372 = vmatprep.subr.bf16.mxu0 0
    %1373 = vmatpush1.bf16.msra.mxu0 %v1355
    %1374 = vmatprep.subr.bf16.mxu0 0
    %1375 = vmatpush1.bf16.msra.mxu0 %v1356
    %1376 = vmatprep.subr.bf16.mxu0 0
    %1377 = vmatpush1.bf16.msra.mxu0 %v1357
    %1378 = vmatprep.subr.bf16.mxu0 0
    %1379 = vmatpush1.bf16.msra.mxu0 %v1358
    %1380 = vmatprep.subr.bf16.mxu0 0
    %1381 = vmatpush1.bf16.msra.mxu0 %v1359
    %1382 = vmatprep.subr.bf16.mxu0 0
    %1383 = vmatpush1.bf16.msra.mxu0 %v1360
    %1384 = vmatprep.subr.bf16.mxu0 0
    %1385 = vmatpush1.bf16.msra.mxu0 %v1361
    %1386 = vmatprep.subr.bf16.mxu0 0
    %1387 = vmatpush1.bf16.msra.mxu0 0
    %1388 = vmatprep.subr.bf16.mxu0 0
    %1389 = vmatpush1.bf16.msra.mxu0 0
    %1390 = vmatprep.subr.bf16.mxu0 0
    %1391 = vmatpush1.bf16.msra.mxu0 0
    %1392 = vmatprep.subr.bf16.mxu0 0
    %1393 = vmatpush1.bf16.msra.mxu0 0
    %1394 = vmatprep.subr.bf16.mxu0 0
    %1395 = vmatpush1.bf16.msra.mxu0 0
    %1396 = vmatprep.subr.bf16.mxu0 0
    %1397 = vmatpush1.bf16.msra.mxu0 0
    %1398 = vmatprep.subr.bf16.mxu0 0
    %1399 = vmatpush1.bf16.msra.mxu0 0
    %1400 = vmatprep.subr.bf16.mxu0 0
    %1401 = vmatpush1.bf16.msra.mxu0 0
    %1402 = vmatprep.mubr.bf16.mxu0 0
    %1403 = vmatmul.mubr.bf16.gmra.mrb[0].mxu0 %v1314
    %v1404 = vpop.f32.mrb[0].mxu0
    %v1405 = vadd.f32 0.0, %v1404
    %v1406 = vpop.f32.mrb[0].mxu0
    %v1407 = vpop.f32.mrb[0].mxu0
    %v1408 = vadd.f32 0.0, %v1407
    %v1409 = vpop.f32.mrb[0].mxu0
    %1410 = vmatprep.mubr.bf16.mxu0 0
    %1411 = vmatmul.mubr.bf16.gmra.mrb[0].mxu0 %v1315
    %v1412 = vpop.f32.mrb[0].mxu0
    %v1413 = vadd.f32 0.0, %v1412
    %v1414 = vpop.f32.mrb[0].mxu0
    %v1415 = vpop.f32.mrb[0].mxu0
    %v1416 = vadd.f32 0.0, %v1415
    %v1417 = vpop.f32.mrb[0].mxu0
    %1418 = vmatprep.mubr.bf16.mxu0 0
    %1419 = vmatmul.mubr.bf16.gmra.mrb[0].mxu0 %v1316
    %v1420 = vpop.f32.mrb[0].mxu0
    %v1421 = vadd.f32 0.0, %v1420
    %v1422 = vpop.f32.mrb[0].mxu0
    %v1423 = vpop.f32.mrb[0].mxu0
    %v1424 = vadd.f32 0.0, %v1423
    %v1425 = vpop.f32.mrb[0].mxu0
    %1426 = vmatprep.mubr.bf16.mxu0 0
    %1427 = vmatmul.mubr.bf16.gmra.mrb[0].mxu0 %v1317
    %v1428 = vpop.f32.mrb[0].mxu0
    %v1429 = vadd.f32 0.0, %v1428
    %v1430 = vpop.f32.mrb[0].mxu0
    %v1431 = vpop.f32.mrb[0].mxu0
    %v1432 = vadd.f32 0.0, %v1431
    %v1433 = vpop.f32.mrb[0].mxu0
    %1434 = vmatprep.mubr.bf16.mxu0 0
    %1435 = vmatmul.mubr.bf16.gmra.mrb[0].mxu0 %v1318
    %v1436 = vpop.f32.mrb[0].mxu0
    %v1437 = vadd.f32 0.0, %v1436
    %v1438 = vpop.f32.mrb[0].mxu0
    %v1439 = vpop.f32.mrb[0].mxu0
    %v1440 = vadd.f32 0.0, %v1439
    %v1441 = vpop.f32.mrb[0].mxu0
    %1442 = vmatprep.mubr.bf16.mxu0 0
    %1443 = vmatmul.mubr.bf16.gmra.mrb[0].mxu0 %v1319
    %v1444 = vpop.f32.mrb[0].mxu0
    %v1445 = vadd.f32 0.0, %v1444
    %v1446 = vpop.f32.mrb[0].mxu0
    %v1447 = vpop.f32.mrb[0].mxu0
    %v1448 = vadd.f32 0.0, %v1447
    %v1449 = vpop.f32.mrb[0].mxu0
    %1450 = vmatprep.mubr.bf16.mxu0 0
    %1451 = vmatmul.mubr.bf16.gmra.mrb[0].mxu0 %v1320
    %v1452 = vpop.f32.mrb[0].mxu0
    %v1453 = vadd.f32 0.0, %v1452
    %v1454 = vpop.f32.mrb[0].mxu0
    %v1455 = vpop.f32.mrb[0].mxu0
    %v1456 = vadd.f32 0.0, %v1455
    %v1457 = vpop.f32.mrb[0].mxu0
    %1458 = vmatprep.mubr.bf16.mxu0 0
    %1459 = vmatmul.mubr.bf16.gmra.mrb[0].mxu0 %v1321
    %v1460 = vpop.f32.mrb[0].mxu0
    %v1461 = vadd.f32 0.0, %v1460
    %v1462 = vpop.f32.mrb[0].mxu0
    %v1463 = vpop.f32.mrb[0].mxu0
    %v1464 = vadd.f32 0.0, %v1463
    %v1465 = vpop.f32.mrb[0].mxu0
    %1466 = vdwg.mxu0
    %v1467 = vld [vmem:[#allocation9 + $0x4] sm:$0x1]
    %v1468 = vlaneseq
    %v1469 = vshrl.u32 %v1468, 7
    %v1470 = vsub.s32 0, %v1469
    %v1471 = vrot.slane %v1467, %v1470
    %v1472 = vmul.f32 %v1405, %v1471
    %v1473 = vmul.f32 %v1408, %v1471
    %v1474 = vmul.f32 %v1413, %v1471
    %v1475 = vmul.f32 %v1416, %v1471
    %v1476 = vmul.f32 %v1421, %v1471
    %v1477 = vmul.f32 %v1424, %v1471
    %v1478 = vmul.f32 %v1429, %v1471
    %v1479 = vmul.f32 %v1432, %v1471
    %v1480 = vmul.f32 %v1437, %v1471
    %v1481 = vmul.f32 %v1440, %v1471
    %v1482 = vmul.f32 %v1445, %v1471
    %v1483 = vmul.f32 %v1448, %v1471
    %v1484 = vmul.f32 %v1453, %v1471
    %v1485 = vmul.f32 %v1456, %v1471
    %v1486 = vmul.f32 %v1461, %v1471
    %v1487 = vmul.f32 %v1464, %v1471
    %v1488 = vld [vmem:[#allocation9 + $0x5] sm:$0x1]
    %v1489 = vlaneseq
    %v1490 = vshrl.u32 %v1489, 7
    %v1491 = vsub.s32 0, %v1490
    %v1492 = vrot.slane %v1488, %v1491
    %v1493 = vadd.f32 %v1472, %v1492
    %v1494 = vadd.f32 %v1473, %v1492
    %v1495 = vadd.f32 %v1474, %v1492
    %v1496 = vadd.f32 %v1475, %v1492
    %v1497 = vadd.f32 %v1476, %v1492
    %v1498 = vadd.f32 %v1477, %v1492
    %v1499 = vadd.f32 %v1478, %v1492
    %v1500 = vadd.f32 %v1479, %v1492
    %v1501 = vadd.f32 %v1480, %v1492
    %v1502 = vadd.f32 %v1481, %v1492
    %v1503 = vadd.f32 %v1482, %v1492
    %v1504 = vadd.f32 %v1483, %v1492
    %v1505 = vadd.f32 %v1484, %v1492
    %v1506 = vadd.f32 %v1485, %v1492
    %v1507 = vadd.f32 %v1486, %v1492
    %v1508 = vadd.f32 %v1487, %v1492
    %v1509 = vmax.f32 %v1493, 0.0
    %v1510 = vmax.f32 %v1494, 0.0
    %v1511 = vmax.f32 %v1495, 0.0
    %v1512 = vmax.f32 %v1496, 0.0
    %v1513 = vmax.f32 %v1497, 0.0
    %v1514 = vmax.f32 %v1498, 0.0
    %v1515 = vmax.f32 %v1499, 0.0
    %v1516 = vmax.f32 %v1500, 0.0
    %v1517 = vmax.f32 %v1501, 0.0
    %v1518 = vmax.f32 %v1502, 0.0
    %v1519 = vmax.f32 %v1503, 0.0
    %v1520 = vmax.f32 %v1504, 0.0
    %v1521 = vmax.f32 %v1505, 0.0
    %v1522 = vmax.f32 %v1506, 0.0
    %v1523 = vmax.f32 %v1507, 0.0
    %v1524 = vmax.f32 %v1508, 0.0
    %s1525 = scalar_lea.vmem [#allocation6], 192
    %v1526 = vld [vmem:[%s1525] sm:$0xf]
    %v1527 = vld [vmem:[%s1525 + $0x4] sm:$0xf]
    %v1528 = vld [vmem:[%s1525 + $0x8] sm:$0xf]
    %v1529 = vld [vmem:[%s1525 + $0xc] sm:$0xf]
    %v1530 = vld [vmem:[%s1525 + $0x10] sm:$0xf]
    %v1531 = vld [vmem:[%s1525 + $0x14] sm:$0xf]
    %v1532 = vld [vmem:[%s1525 + $0x18] sm:$0xf]
    %v1533 = vld [vmem:[%s1525 + $0x1c] sm:$0xf]
    %v1534 = vld [vmem:[%s1525 + $0x20] sm:$0xf]
    %v1535 = vld [vmem:[%s1525 + $0x24] sm:$0xf]
    %v1536 = vld [vmem:[%s1525 + $0x28] sm:$0xf]
    %v1537 = vld [vmem:[%s1525 + $0x2c] sm:$0xf]
    %v1538 = vld [vmem:[%s1525 + $0x30] sm:$0xf]
    %v1539 = vld [vmem:[%s1525 + $0x34] sm:$0xf]
    %v1540 = vld [vmem:[%s1525 + $0x38] sm:$0xf]
    %v1541 = vld [vmem:[%s1525 + $0x3c] sm:$0xf]
    %v1542 = vpack.c.bf16 %v1510, %v1509
    %v1543 = vpack.c.bf16 %v1512, %v1511
    %v1544 = vpack.c.bf16 %v1514, %v1513
    %v1545 = vpack.c.bf16 %v1516, %v1515
    %v1546 = vpack.c.bf16 %v1518, %v1517
    %v1547 = vpack.c.bf16 %v1520, %v1519
    %v1548 = vpack.c.bf16 %v1522, %v1521
    %v1549 = vpack.c.bf16 %v1524, %v1523
    %v1550 = vld [vmem:[#allocation9 + $0xf] sm:$0x1]
    %v1551 = vlaneseq
    %v1552 = vshrl.u32 %v1551, 7
    %v1553 = vsub.s32 0, %v1552
    %v1554 = vrot.slane %v1550, %v1553
    %v1571 = vunpack.c.l.b16 %v1526
    %v1572 = vunpack.c.l.b16 %v1527
    %v1573 = vunpack.c.l.b16 %v1528
    %v1574 = vunpack.c.l.b16 %v1529
    %v1575 = vunpack.c.l.b16 %v1530
    %v1576 = vunpack.c.l.b16 %v1531
    %v1577 = vunpack.c.l.b16 %v1532
    %v1578 = vunpack.c.l.b16 %v1533
    %v1579 = vunpack.c.l.b16 %v1534
    %v1580 = vunpack.c.l.b16 %v1535
    %v1581 = vunpack.c.l.b16 %v1536
    %v1582 = vunpack.c.l.b16 %v1537
    %v1583 = vunpack.c.l.b16 %v1538
    %v1584 = vunpack.c.l.b16 %v1539
    %v1585 = vunpack.c.l.b16 %v1540
    %v1586 = vunpack.c.l.b16 %v1541
    %v1587 = vpack.c.b16 %v1572, %v1571
    %v1588 = vpack.c.b16 %v1574, %v1573
    %v1589 = vpack.c.b16 %v1576, %v1575
    %v1590 = vpack.c.b16 %v1578, %v1577
    %v1591 = vpack.c.b16 %v1580, %v1579
    %v1592 = vpack.c.b16 %v1582, %v1581
    %v1593 = vpack.c.b16 %v1584, %v1583
    %v1594 = vpack.c.b16 %v1586, %v1585
    %1603 = vmatprep.subr.bf16.mxu0 0
    %1604 = vmatpush1.bf16.msra.mxu0 %v1587
    %1605 = vmatprep.subr.bf16.mxu0 0
    %1606 = vmatpush1.bf16.msra.mxu0 %v1588
    %1607 = vmatprep.subr.bf16.mxu0 0
    %1608 = vmatpush1.bf16.msra.mxu0 %v1589
    %1609 = vmatprep.subr.bf16.mxu0 0
    %1610 = vmatpush1.bf16.msra.mxu0 %v1590
    %1611 = vmatprep.subr.bf16.mxu0 0
    %1612 = vmatpush1.bf16.msra.mxu0 %v1591
    %1613 = vmatprep.subr.bf16.mxu0 0
    %1614 = vmatpush1.bf16.msra.mxu0 %v1592
    %1615 = vmatprep.subr.bf16.mxu0 0
    %1616 = vmatpush1.bf16.msra.mxu0 %v1593
    %1617 = vmatprep.subr.bf16.mxu0 0
    %1618 = vmatpush1.bf16.msra.mxu0 %v1594
    %1619 = vmatprep.subr.bf16.mxu0 0
    %1620 = vmatpush1.bf16.msra.mxu0 0
    %1621 = vmatprep.subr.bf16.mxu0 0
    %1622 = vmatpush1.bf16.msra.mxu0 0
    %1623 = vmatprep.subr.bf16.mxu0 0
    %1624 = vmatpush1.bf16.msra.mxu0 0
    %1625 = vmatprep.subr.bf16.mxu0 0
    %1626 = vmatpush1.bf16.msra.mxu0 0
    %1627 = vmatprep.subr.bf16.mxu0 0
    %1628 = vmatpush1.bf16.msra.mxu0 0
    %1629 = vmatprep.subr.bf16.mxu0 0
    %1630 = vmatpush1.bf16.msra.mxu0 0
    %1631 = vmatprep.subr.bf16.mxu0 0
    %1632 = vmatpush1.bf16.msra.mxu0 0
    %1633 = vmatprep.subr.bf16.mxu0 0
    %1634 = vmatpush1.bf16.msra.mxu0 0
    %1635 = vmatprep.mubr.bf16.mxu0 0
    %1636 = vmatmul.mubr.bf16.gmra.mrb[0].mxu0 %v1542
    %v1637 = vpop.f32.mrb[0].mxu0
    %v1638 = vadd.f32 %v1554, %v1637
    %v1639 = vpop.f32.mrb[0].mxu0
    %v1640 = vpop.f32.mrb[0].mxu0
    %v1641 = vadd.f32 %v1554, %v1640
    %v1642 = vpop.f32.mrb[0].mxu0
    %1643 = vmatprep.mubr.bf16.mxu0 0
    %1644 = vmatmul.mubr.bf16.gmra.mrb[0].mxu0 %v1543
    %v1645 = vpop.f32.mrb[0].mxu0
    %v1646 = vadd.f32 %v1554, %v1645
    %v1647 = vpop.f32.mrb[0].mxu0
    %v1648 = vpop.f32.mrb[0].mxu0
    %v1649 = vadd.f32 %v1554, %v1648
    %v1650 = vpop.f32.mrb[0].mxu0
    %1651 = vmatprep.mubr.bf16.mxu0 0
    %1652 = vmatmul.mubr.bf16.gmra.mrb[0].mxu0 %v1544
    %v1653 = vpop.f32.mrb[0].mxu0
    %v1654 = vadd.f32 %v1554, %v1653
    %v1655 = vpop.f32.mrb[0].mxu0
    %v1656 = vpop.f32.mrb[0].mxu0
    %v1657 = vadd.f32 %v1554, %v1656
    %v1658 = vpop.f32.mrb[0].mxu0
    %1659 = vmatprep.mubr.bf16.mxu0 0
    %1660 = vmatmul.mubr.bf16.gmra.mrb[0].mxu0 %v1545
    %v1661 = vpop.f32.mrb[0].mxu0
    %v1662 = vadd.f32 %v1554, %v1661
    %v1663 = vpop.f32.mrb[0].mxu0
    %v1664 = vpop.f32.mrb[0].mxu0
    %v1665 = vadd.f32 %v1554, %v1664
    %v1666 = vpop.f32.mrb[0].mxu0
    %1667 = vmatprep.mubr.bf16.mxu0 0
    %1668 = vmatmul.mubr.bf16.gmra.mrb[0].mxu0 %v1546
    %v1669 = vpop.f32.mrb[0].mxu0
    %v1670 = vadd.f32 %v1554, %v1669
    %v1671 = vpop.f32.mrb[0].mxu0
    %v1672 = vpop.f32.mrb[0].mxu0
    %v1673 = vadd.f32 %v1554, %v1672
    %v1674 = vpop.f32.mrb[0].mxu0
    %1675 = vmatprep.mubr.bf16.mxu0 0
    %1676 = vmatmul.mubr.bf16.gmra.mrb[0].mxu0 %v1547
    %v1677 = vpop.f32.mrb[0].mxu0
    %v1678 = vadd.f32 %v1554, %v1677
    %v1679 = vpop.f32.mrb[0].mxu0
    %v1680 = vpop.f32.mrb[0].mxu0
    %v1681 = vadd.f32 %v1554, %v1680
    %v1682 = vpop.f32.mrb[0].mxu0
    %1683 = vmatprep.mubr.bf16.mxu0 0
    %1684 = vmatmul.mubr.bf16.gmra.mrb[0].mxu0 %v1548
    %v1685 = vpop.f32.mrb[0].mxu0
    %v1686 = vadd.f32 %v1554, %v1685
    %v1687 = vpop.f32.mrb[0].mxu0
    %v1688 = vpop.f32.mrb[0].mxu0
    %v1689 = vadd.f32 %v1554, %v1688
    %v1690 = vpop.f32.mrb[0].mxu0
    %1691 = vmatprep.mubr.bf16.mxu0 0
    %1692 = vmatmul.mubr.bf16.gmra.mrb[0].mxu0 %v1549
    %v1693 = vpop.f32.mrb[0].mxu0
    %v1694 = vadd.f32 %v1554, %v1693
    %v1695 = vpop.f32.mrb[0].mxu0
    %v1696 = vpop.f32.mrb[0].mxu0
    %v1697 = vadd.f32 %v1554, %v1696
    %v1698 = vpop.f32.mrb[0].mxu0
    %1699 = vdwg.mxu0
    %v1700 = vmax.f32 %v1638, 0.0
    %v1701 = vmax.f32 %v1641, 0.0
    %v1702 = vmax.f32 %v1646, 0.0
    %v1703 = vmax.f32 %v1649, 0.0
    %v1704 = vmax.f32 %v1654, 0.0
    %v1705 = vmax.f32 %v1657, 0.0
    %v1706 = vmax.f32 %v1662, 0.0
    %v1707 = vmax.f32 %v1665, 0.0
    %v1708 = vmax.f32 %v1670, 0.0
    %v1709 = vmax.f32 %v1673, 0.0
    %v1710 = vmax.f32 %v1678, 0.0
    %v1711 = vmax.f32 %v1681, 0.0
    %v1712 = vmax.f32 %v1686, 0.0
    %v1713 = vmax.f32 %v1689, 0.0
    %v1714 = vmax.f32 %v1694, 0.0
    %v1715 = vmax.f32 %v1697, 0.0
    %v1716 = vmin.f32 %v1700, 6.0
    %v1717 = vmin.f32 %v1701, 6.0
    %v1718 = vmin.f32 %v1702, 6.0
    %v1719 = vmin.f32 %v1703, 6.0
    %v1720 = vmin.f32 %v1704, 6.0
    %v1721 = vmin.f32 %v1705, 6.0
    %v1722 = vmin.f32 %v1706, 6.0
    %v1723 = vmin.f32 %v1707, 6.0
    %v1724 = vmin.f32 %v1708, 6.0
    %v1725 = vmin.f32 %v1709, 6.0
    %v1726 = vmin.f32 %v1710, 6.0
    %v1727 = vmin.f32 %v1711, 6.0
    %v1728 = vmin.f32 %v1712, 6.0
    %v1729 = vmin.f32 %v1713, 6.0
    %v1730 = vmin.f32 %v1714, 6.0
    %v1731 = vmin.f32 %v1715, 6.0
    %1732 = vst [vmem:[#allocation2 + $0x10] sm:$0xff] %v1716
    %1733 = vst [vmem:[#allocation2 + $0x18] sm:$0xff] %v1717
    %1734 = vst [vmem:[#allocation2 + $0x20] sm:$0xff] %v1718
    %1735 = vst [vmem:[#allocation2 + $0x28] sm:$0xff] %v1719
    %1736 = vst [vmem:[#allocation2 + $0x30] sm:$0xff] %v1720
    %1737 = vst [vmem:[#allocation2 + $0x38] sm:$0xff] %v1721
    %1738 = vst [vmem:[#allocation2 + $0x40] sm:$0xff] %v1722
    %1739 = vst [vmem:[#allocation2 + $0x48] sm:$0xff] %v1723
    %1740 = vst [vmem:[#allocation2 + $0x60] sm:$0xff] %v1724
    %1741 = vst [vmem:[#allocation2 + $0x68] sm:$0xff] %v1725
    %1742 = vst [vmem:[#allocation2 + $0x70] sm:$0xff] %v1726
    %1743 = vst [vmem:[#allocation2 + $0x78] sm:$0xff] %v1727
    %1744 = vst [vmem:[#allocation2 + $0x80] sm:$0xff] %v1728
    %1745 = vst [vmem:[#allocation2 + $0x88] sm:$0xff] %v1729
    %1746 = vst [vmem:[#allocation2 + $0x90] sm:$0xff] %v1730
    %1747 = vst [vmem:[#allocation2 + $0x98] sm:$0xff] %v1731
    %v1748 = vld [vmem:[#allocation9 + $0x10] sm:$0x1]
    %v1749 = vld [vmem:[#allocation9 + $0x11] sm:$0x1]
    %v1750 = vld [vmem:[#allocation9 + $0x14] sm:$0x1]
    %v1751 = vld [vmem:[#allocation9 + $0x15] sm:$0x1]
    %v1752 = vld [vmem:[#allocation9 + $0x16] sm:$0x1]
    %v1753 = vld [vmem:[#allocation9 + $0x17] sm:$0x1]
    %v1754 = vld [vmem:[#allocation9 + $0x18] sm:$0x1]
    %v1755 = vld [vmem:[#allocation9 + $0x19] sm:$0x1]
    %v1756 = vld [vmem:[#allocation9 + $0x1a] sm:$0x1]
    %v1757 = vld [vmem:[#allocation9 + $0x1b] sm:$0x1]
    %v1758 = vld [vmem:[#allocation9 + $0x1c] sm:$0x1]
    %v1759 = vld [vmem:[#allocation2 + $0x7] sm:$0xff]
    %v1760 = vld [vmem:[#allocation2 + $0xf] sm:$0xff]
    %v1761 = vld [vmem:[#allocation2 + $0x17] sm:$0xff]
    %v1762 = vld [vmem:[#allocation2 + $0x1f] sm:$0xff]
    %v1763 = vld [vmem:[#allocation2 + $0x27] sm:$0xff]
    %v1764 = vld [vmem:[#allocation2 + $0x2f] sm:$0xff]
    %v1765 = vld [vmem:[#allocation2 + $0x37] sm:$0xff]
    %v1766 = vld [vmem:[#allocation2 + $0x3f] sm:$0xff]
    %v1767 = vsel %vm734, %v1759, 0.0
    %v1768 = vsel %vm735, %v1760, 0.0
    %v1769 = vsel %vm736, %v1761, 0.0
    %v1770 = vsel %vm737, %v1762, 0.0
    %v1771 = vsel %vm738, %v1763, 0.0
    %v1772 = vsel %vm739, %v1764, 0.0
    %v1773 = vsel %vm740, %v1765, 0.0
    %v1774 = vsel %vm741, %v1766, 0.0
    %v1775 = vlaneseq
    %v1776 = vshrl.u32 %v1775, 7
    %v1777 = vsub.s32 0, %v1776
    %v1778 = vrot.slane %v1750, %v1777
    %v1779 = vmul.f32 %v1767, %v1778
    %v1780 = vmul.f32 %v1768, %v1778
    %v1781 = vmul.f32 %v1769, %v1778
    %v1782 = vmul.f32 %v1770, %v1778
    %v1783 = vmul.f32 %v1771, %v1778
    %v1784 = vmul.f32 %v1772, %v1778
    %v1785 = vmul.f32 %v1773, %v1778
    %v1786 = vmul.f32 %v1774, %v1778
    %v1787 = vadd.f32 %v1779, 0.0
    %v1788 = vadd.f32 %v1780, 0.0
    %v1789 = vadd.f32 %v1781, 0.0
    %v1790 = vadd.f32 %v1782, 0.0
    %v1791 = vadd.f32 %v1783, 0.0
    %v1792 = vadd.f32 %v1784, 0.0
    %v1793 = vadd.f32 %v1785, 0.0
    %v1794 = vadd.f32 %v1786, 0.0
    %v1795 = vld [vmem:[#allocation2 + $0x8] sm:$0xff]
    %v1796 = vld [vmem:[#allocation2 + $0x10] sm:$0xff]
    %v1797 = vld [vmem:[#allocation2 + $0x18] sm:$0xff]
    %v1798 = vld [vmem:[#allocation2 + $0x20] sm:$0xff]
    %v1799 = vld [vmem:[#allocation2 + $0x28] sm:$0xff]
    %v1800 = vld [vmem:[#allocation2 + $0x30] sm:$0xff]
    %v1801 = vld [vmem:[#allocation2 + $0x38] sm:$0xff]
    %v1802 = vld [vmem:[#allocation2 + $0x40] sm:$0xff]
    %v1803 = vlaneseq
    %v1804 = vshrl.u32 %v1803, 7
    %v1805 = vsub.s32 0, %v1804
    %v1806 = vrot.slane %v1751, %v1805
    %v1807 = vmul.f32 %v1795, %v1806
    %v1808 = vmul.f32 %v1796, %v1806
    %v1809 = vmul.f32 %v1797, %v1806
    %v1810 = vmul.f32 %v1798, %v1806
    %v1811 = vmul.f32 %v1799, %v1806
    %v1812 = vmul.f32 %v1800, %v1806
    %v1813 = vmul.f32 %v1801, %v1806
    %v1814 = vmul.f32 %v1802, %v1806
    %v1815 = vadd.f32 %v1787, %v1807
    %v1816 = vadd.f32 %v1788, %v1808
    %v1817 = vadd.f32 %v1789, %v1809
    %v1818 = vadd.f32 %v1790, %v1810
    %v1819 = vadd.f32 %v1791, %v1811
    %v1820 = vadd.f32 %v1792, %v1812
    %v1821 = vadd.f32 %v1793, %v1813
    %v1822 = vadd.f32 %v1794, %v1814
    %v1823 = vld [vmem:[#allocation2 + $0x9] sm:$0xff]
    %v1824 = vld [vmem:[#allocation2 + $0x11] sm:$0xff]
    %v1825 = vld [vmem:[#allocation2 + $0x19] sm:$0xff]
    %v1826 = vld [vmem:[#allocation2 + $0x21] sm:$0xff]
    %v1827 = vld [vmem:[#allocation2 + $0x29] sm:$0xff]
    %v1828 = vld [vmem:[#allocation2 + $0x31] sm:$0xff]
    %v1829 = vld [vmem:[#allocation2 + $0x39] sm:$0xff]
    %v1830 = vld [vmem:[#allocation2 + $0x41] sm:$0xff]
    %v1831 = vsel %vm742, %v1823, 0.0
    %v1832 = vsel %vm743, %v1824, 0.0
    %v1833 = vsel %vm744, %v1825, 0.0
    %v1834 = vsel %vm745, %v1826, 0.0
    %v1835 = vsel %vm746, %v1827, 0.0
    %v1836 = vsel %vm747, %v1828, 0.0
    %v1837 = vsel %vm748, %v1829, 0.0
    %v1838 = vsel %vm749, %v1830, 0.0
    %v1839 = vlaneseq
    %v1840 = vshrl.u32 %v1839, 7
    %v1841 = vsub.s32 0, %v1840
    %v1842 = vrot.slane %v1752, %v1841
    %v1843 = vmul.f32 %v1831, %v1842
    %v1844 = vmul.f32 %v1832, %v1842
    %v1845 = vmul.f32 %v1833, %v1842
    %v1846 = vmul.f32 %v1834, %v1842
    %v1847 = vmul.f32 %v1835, %v1842
    %v1848 = vmul.f32 %v1836, %v1842
    %v1849 = vmul.f32 %v1837, %v1842
    %v1850 = vmul.f32 %v1838, %v1842
    %v1851 = vadd.f32 %v1815, %v1843
    %v1852 = vadd.f32 %v1816, %v1844
    %v1853 = vadd.f32 %v1817, %v1845
    %v1854 = vadd.f32 %v1818, %v1846
    %v1855 = vadd.f32 %v1819, %v1847
    %v1856 = vadd.f32 %v1820, %v1848
    %v1857 = vadd.f32 %v1821, %v1849
    %v1858 = vadd.f32 %v1822, %v1850
    %v1859 = vld [vmem:[#allocation2 + $0x47] sm:$0xff]
    %v1860 = vsel %vm734, %v1760, 0.0
    %v1861 = vsel %vm735, %v1761, 0.0
    %v1862 = vsel %vm736, %v1762, 0.0
    %v1863 = vsel %vm737, %v1763, 0.0
    %v1864 = vsel %vm738, %v1764, 0.0
    %v1865 = vsel %vm739, %v1765, 0.0
    %v1866 = vsel %vm740, %v1766, 0.0
    %v1867 = vsel %vm741, %v1859, 0.0
    %v1868 = vlaneseq
    %v1869 = vshrl.u32 %v1868, 7
    %v1870 = vsub.s32 0, %v1869
    %v1871 = vrot.slane %v1753, %v1870
    %v1872 = vmul.f32 %v1860, %v1871
    %v1873 = vmul.f32 %v1861, %v1871
    %v1874 = vmul.f32 %v1862, %v1871
    %v1875 = vmul.f32 %v1863, %v1871
    %v1876 = vmul.f32 %v1864, %v1871
    %v1877 = vmul.f32 %v1865, %v1871
    %v1878 = vmul.f32 %v1866, %v1871
    %v1879 = vmul.f32 %v1867, %v1871
    %v1880 = vadd.f32 %v1851, %v1872
    %v1881 = vadd.f32 %v1852, %v1873
    %v1882 = vadd.f32 %v1853, %v1874
    %v1883 = vadd.f32 %v1854, %v1875
    %v1884 = vadd.f32 %v1855, %v1876
    %v1885 = vadd.f32 %v1856, %v1877
    %v1886 = vadd.f32 %v1857, %v1878
    %v1887 = vadd.f32 %v1858, %v1879
    %v1888 = vld [vmem:[#allocation2 + $0x48] sm:$0xff]
    %v1889 = vlaneseq
    %v1890 = vshrl.u32 %v1889, 7
    %v1891 = vsub.s32 0, %v1890
    %v1892 = vrot.slane %v1754, %v1891
    %v1893 = vmul.f32 %v1796, %v1892
    %v1894 = vmul.f32 %v1797, %v1892
    %v1895 = vmul.f32 %v1798, %v1892
    %v1896 = vmul.f32 %v1799, %v1892
    %v1897 = vmul.f32 %v1800, %v1892
    %v1898 = vmul.f32 %v1801, %v1892
    %v1899 = vmul.f32 %v1802, %v1892
    %v1900 = vmul.f32 %v1888, %v1892
    %v1901 = vadd.f32 %v1880, %v1893
    %v1902 = vadd.f32 %v1881, %v1894
    %v1903 = vadd.f32 %v1882, %v1895
    %v1904 = vadd.f32 %v1883, %v1896
    %v1905 = vadd.f32 %v1884, %v1897
    %v1906 = vadd.f32 %v1885, %v1898
    %v1907 = vadd.f32 %v1886, %v1899
    %v1908 = vadd.f32 %v1887, %v1900
    %v1909 = vld [vmem:[#allocation2 + $0x49] sm:$0xff]
    %v1910 = vsel %vm742, %v1824, 0.0
    %v1911 = vsel %vm743, %v1825, 0.0
    %v1912 = vsel %vm744, %v1826, 0.0
    %v1913 = vsel %vm745, %v1827, 0.0
    %v1914 = vsel %vm746, %v1828, 0.0
    %v1915 = vsel %vm747, %v1829, 0.0
    %v1916 = vsel %vm748, %v1830, 0.0
    %v1917 = vsel %vm749, %v1909, 0.0
    %v1918 = vlaneseq
    %v1919 = vshrl.u32 %v1918, 7
    %v1920 = vsub.s32 0, %v1919
    %v1921 = vrot.slane %v1755, %v1920
    %v1922 = vmul.f32 %v1910, %v1921
    %v1923 = vmul.f32 %v1911, %v1921
    %v1924 = vmul.f32 %v1912, %v1921
    %v1925 = vmul.f32 %v1913, %v1921
    %v1926 = vmul.f32 %v1914, %v1921
    %v1927 = vmul.f32 %v1915, %v1921
    %v1928 = vmul.f32 %v1916, %v1921
    %v1929 = vmul.f32 %v1917, %v1921
    %v1930 = vadd.f32 %v1901, %v1922
    %v1931 = vadd.f32 %v1902, %v1923
    %v1932 = vadd.f32 %v1903, %v1924
    %v1933 = vadd.f32 %v1904, %v1925
    %v1934 = vadd.f32 %v1905, %v1926
    %v1935 = vadd.f32 %v1906, %v1927
    %v1936 = vadd.f32 %v1907, %v1928
    %v1937 = vadd.f32 %v1908, %v1929
    %v1938 = vld [vmem:[#allocation2 + $0x4f] sm:$0xff]
    %v1939 = vsel %vm734, %v1761, 0.0
    %v1940 = vsel %vm735, %v1762, 0.0
    %v1941 = vsel %vm736, %v1763, 0.0
    %v1942 = vsel %vm737, %v1764, 0.0
    %v1943 = vsel %vm738, %v1765, 0.0
    %v1944 = vsel %vm739, %v1766, 0.0
    %v1945 = vsel %vm740, %v1859, 0.0
    %v1946 = vsel %vm741, %v1938, 0.0
    %v1947 = vlaneseq
    %v1948 = vshrl.u32 %v1947, 7
    %v1949 = vsub.s32 0, %v1948
    %v1950 = vrot.slane %v1756, %v1949
    %v1951 = vmul.f32 %v1939, %v1950
    %v1952 = vmul.f32 %v1940, %v1950
    %v1953 = vmul.f32 %v1941, %v1950
    %v1954 = vmul.f32 %v1942, %v1950
    %v1955 = vmul.f32 %v1943, %v1950
    %v1956 = vmul.f32 %v1944, %v1950
    %v1957 = vmul.f32 %v1945, %v1950
    %v1958 = vmul.f32 %v1946, %v1950
    %v1959 = vadd.f32 %v1930, %v1951
    %v1960 = vadd.f32 %v1931, %v1952
    %v1961 = vadd.f32 %v1932, %v1953
    %v1962 = vadd.f32 %v1933, %v1954
    %v1963 = vadd.f32 %v1934, %v1955
    %v1964 = vadd.f32 %v1935, %v1956
    %v1965 = vadd.f32 %v1936, %v1957
    %v1966 = vadd.f32 %v1937, %v1958
    %v1967 = vld [vmem:[#allocation2 + $0x50] sm:$0xff]
    %v1968 = vlaneseq
    %v1969 = vshrl.u32 %v1968, 7
    %v1970 = vsub.s32 0, %v1969
    %v1971 = vrot.slane %v1757, %v1970
    %v1972 = vmul.f32 %v1797, %v1971
    %v1973 = vmul.f32 %v1798, %v1971
    %v1974 = vmul.f32 %v1799, %v1971
    %v1975 = vmul.f32 %v1800, %v1971
    %v1976 = vmul.f32 %v1801, %v1971
    %v1977 = vmul.f32 %v1802, %v1971
    %v1978 = vmul.f32 %v1888, %v1971
    %v1979 = vmul.f32 %v1967, %v1971
    %v1980 = vadd.f32 %v1959, %v1972
    %v1981 = vadd.f32 %v1960, %v1973
    %v1982 = vadd.f32 %v1961, %v1974
    %v1983 = vadd.f32 %v1962, %v1975
    %v1984 = vadd.f32 %v1963, %v1976
    %v1985 = vadd.f32 %v1964, %v1977
    %v1986 = vadd.f32 %v1965, %v1978
    %v1987 = vadd.f32 %v1966, %v1979
    %v1988 = vld [vmem:[#allocation2 + $0x51] sm:$0xff]
    %v1989 = vsel %vm742, %v1825, 0.0
    %v1990 = vsel %vm743, %v1826, 0.0
    %v1991 = vsel %vm744, %v1827, 0.0
    %v1992 = vsel %vm745, %v1828, 0.0
    %v1993 = vsel %vm746, %v1829, 0.0
    %v1994 = vsel %vm747, %v1830, 0.0
    %v1995 = vsel %vm748, %v1909, 0.0
    %v1996 = vsel %vm749, %v1988, 0.0
    %v1997 = vlaneseq
    %v1998 = vshrl.u32 %v1997, 7
    %v1999 = vsub.s32 0, %v1998
    %v2000 = vrot.slane %v1758, %v1999
    %v2001 = vmul.f32 %v1989, %v2000
    %v2002 = vmul.f32 %v1990, %v2000
    %v2003 = vmul.f32 %v1991, %v2000
    %v2004 = vmul.f32 %v1992, %v2000
    %v2005 = vmul.f32 %v1993, %v2000
    %v2006 = vmul.f32 %v1994, %v2000
    %v2007 = vmul.f32 %v1995, %v2000
    %v2008 = vmul.f32 %v1996, %v2000
    %v2009 = vadd.f32 %v1980, %v2001
    %v2010 = vadd.f32 %v1981, %v2002
    %v2011 = vadd.f32 %v1982, %v2003
    %v2012 = vadd.f32 %v1983, %v2004
    %v2013 = vadd.f32 %v1984, %v2005
    %v2014 = vadd.f32 %v1985, %v2006
    %v2015 = vadd.f32 %v1986, %v2007
    %v2016 = vadd.f32 %v1987, %v2008
    %v2017 = vlaneseq
    %v2018 = vshrl.u32 %v2017, 7
    %v2019 = vsub.s32 0, %v2018
    %v2020 = vrot.slane %v1748, %v2019
    %v2021 = vmul.f32 %v2009, %v2020
    %v2022 = vmul.f32 %v2010, %v2020
    %v2023 = vmul.f32 %v2011, %v2020
    %v2024 = vmul.f32 %v2012, %v2020
    %v2025 = vmul.f32 %v2013, %v2020
    %v2026 = vmul.f32 %v2014, %v2020
    %v2027 = vmul.f32 %v2015, %v2020
    %v2028 = vmul.f32 %v2016, %v2020
    %v2029 = vlaneseq
    %v2030 = vshrl.u32 %v2029, 7
    %v2031 = vsub.s32 0, %v2030
    %v2032 = vrot.slane %v1749, %v2031
    %v2033 = vadd.f32 %v2021, %v2032
    %v2034 = vadd.f32 %v2022, %v2032
    %v2035 = vadd.f32 %v2023, %v2032
    %v2036 = vadd.f32 %v2024, %v2032
    %v2037 = vadd.f32 %v2025, %v2032
    %v2038 = vadd.f32 %v2026, %v2032
    %v2039 = vadd.f32 %v2027, %v2032
    %v2040 = vadd.f32 %v2028, %v2032
    %v2041 = vmax.f32 %v2033, 0.0
    %v2042 = vmax.f32 %v2034, 0.0
    %v2043 = vmax.f32 %v2035, 0.0
    %v2044 = vmax.f32 %v2036, 0.0
    %v2045 = vmax.f32 %v2037, 0.0
    %v2046 = vmax.f32 %v2038, 0.0
    %v2047 = vmax.f32 %v2039, 0.0
    %v2048 = vmax.f32 %v2040, 0.0
    %v2049 = vld [vmem:[#allocation2 + $0x57] sm:$0xff]
    %v2050 = vld [vmem:[#allocation2 + $0x5f] sm:$0xff]
    %v2051 = vld [vmem:[#allocation2 + $0x67] sm:$0xff]
    %v2052 = vld [vmem:[#allocation2 + $0x6f] sm:$0xff]
    %v2053 = vld [vmem:[#allocation2 + $0x77] sm:$0xff]
    %v2054 = vld [vmem:[#allocation2 + $0x7f] sm:$0xff]
    %v2055 = vld [vmem:[#allocation2 + $0x87] sm:$0xff]
    %v2056 = vld [vmem:[#allocation2 + $0x8f] sm:$0xff]
    %v2057 = vsel %vm734, %v2049, 0.0
    %v2058 = vsel %vm735, %v2050, 0.0
    %v2059 = vsel %vm736, %v2051, 0.0
    %v2060 = vsel %vm737, %v2052, 0.0
    %v2061 = vsel %vm738, %v2053, 0.0
    %v2062 = vsel %vm739, %v2054, 0.0
    %v2063 = vsel %vm740, %v2055, 0.0
    %v2064 = vsel %vm741, %v2056, 0.0
    %v2065 = vmul.f32 %v2057, %v1778
    %v2066 = vmul.f32 %v2058, %v1778
    %v2067 = vmul.f32 %v2059, %v1778
    %v2068 = vmul.f32 %v2060, %v1778
    %v2069 = vmul.f32 %v2061, %v1778
    %v2070 = vmul.f32 %v2062, %v1778
    %v2071 = vmul.f32 %v2063, %v1778
    %v2072 = vmul.f32 %v2064, %v1778
    %v2073 = vadd.f32 %v2065, 0.0
    %v2074 = vadd.f32 %v2066, 0.0
    %v2075 = vadd.f32 %v2067, 0.0
    %v2076 = vadd.f32 %v2068, 0.0
    %v2077 = vadd.f32 %v2069, 0.0
    %v2078 = vadd.f32 %v2070, 0.0
    %v2079 = vadd.f32 %v2071, 0.0
    %v2080 = vadd.f32 %v2072, 0.0
    %v2081 = vld [vmem:[#allocation2 + $0x58] sm:$0xff]
    %v2082 = vld [vmem:[#allocation2 + $0x60] sm:$0xff]
    %v2083 = vld [vmem:[#allocation2 + $0x68] sm:$0xff]
    %v2084 = vld [vmem:[#allocation2 + $0x70] sm:$0xff]
    %v2085 = vld [vmem:[#allocation2 + $0x78] sm:$0xff]
    %v2086 = vld [vmem:[#allocation2 + $0x80] sm:$0xff]
    %v2087 = vld [vmem:[#allocation2 + $0x88] sm:$0xff]
    %v2088 = vld [vmem:[#allocation2 + $0x90] sm:$0xff]
    %v2089 = vmul.f32 %v2081, %v1806
    %v2090 = vmul.f32 %v2082, %v1806
    %v2091 = vmul.f32 %v2083, %v1806
    %v2092 = vmul.f32 %v2084, %v1806
    %v2093 = vmul.f32 %v2085, %v1806
    %v2094 = vmul.f32 %v2086, %v1806
    %v2095 = vmul.f32 %v2087, %v1806
    %v2096 = vmul.f32 %v2088, %v1806
    %v2097 = vadd.f32 %v2073, %v2089
    %v2098 = vadd.f32 %v2074, %v2090
    %v2099 = vadd.f32 %v2075, %v2091
    %v2100 = vadd.f32 %v2076, %v2092
    %v2101 = vadd.f32 %v2077, %v2093
    %v2102 = vadd.f32 %v2078, %v2094
    %v2103 = vadd.f32 %v2079, %v2095
    %v2104 = vadd.f32 %v2080, %v2096
    %v2105 = vld [vmem:[#allocation2 + $0x59] sm:$0xff]
    %v2106 = vld [vmem:[#allocation2 + $0x61] sm:$0xff]
    %v2107 = vld [vmem:[#allocation2 + $0x69] sm:$0xff]
    %v2108 = vld [vmem:[#allocation2 + $0x71] sm:$0xff]
    %v2109 = vld [vmem:[#allocation2 + $0x79] sm:$0xff]
    %v2110 = vld [vmem:[#allocation2 + $0x81] sm:$0xff]
    %v2111 = vld [vmem:[#allocation2 + $0x89] sm:$0xff]
    %v2112 = vld [vmem:[#allocation2 + $0x91] sm:$0xff]
    %v2113 = vsel %vm742, %v2105, 0.0
    %v2114 = vsel %vm743, %v2106, 0.0
    %v2115 = vsel %vm744, %v2107, 0.0
    %v2116 = vsel %vm745, %v2108, 0.0
    %v2117 = vsel %vm746, %v2109, 0.0
    %v2118 = vsel %vm747, %v2110, 0.0
    %v2119 = vsel %vm748, %v2111, 0.0
    %v2120 = vsel %vm749, %v2112, 0.0
    %v2121 = vmul.f32 %v2113, %v1842
    %v2122 = vmul.f32 %v2114, %v1842
    %v2123 = vmul.f32 %v2115, %v1842
    %v2124 = vmul.f32 %v2116, %v1842
    %v2125 = vmul.f32 %v2117, %v1842
    %v2126 = vmul.f32 %v2118, %v1842
    %v2127 = vmul.f32 %v2119, %v1842
    %v2128 = vmul.f32 %v2120, %v1842
    %v2129 = vadd.f32 %v2097, %v2121
    %v2130 = vadd.f32 %v2098, %v2122
    %v2131 = vadd.f32 %v2099, %v2123
    %v2132 = vadd.f32 %v2100, %v2124
    %v2133 = vadd.f32 %v2101, %v2125
    %v2134 = vadd.f32 %v2102, %v2126
    %v2135 = vadd.f32 %v2103, %v2127
    %v2136 = vadd.f32 %v2104, %v2128
    %v2137 = vld [vmem:[#allocation2 + $0x97] sm:$0xff]
    %v2138 = vsel %vm734, %v2050, 0.0
    %v2139 = vsel %vm735, %v2051, 0.0
    %v2140 = vsel %vm736, %v2052, 0.0
    %v2141 = vsel %vm737, %v2053, 0.0
    %v2142 = vsel %vm738, %v2054, 0.0
    %v2143 = vsel %vm739, %v2055, 0.0
    %v2144 = vsel %vm740, %v2056, 0.0
    %v2145 = vsel %vm741, %v2137, 0.0
    %v2146 = vmul.f32 %v2138, %v1871
    %v2147 = vmul.f32 %v2139, %v1871
    %v2148 = vmul.f32 %v2140, %v1871
    %v2149 = vmul.f32 %v2141, %v1871
    %v2150 = vmul.f32 %v2142, %v1871
    %v2151 = vmul.f32 %v2143, %v1871
    %v2152 = vmul.f32 %v2144, %v1871
    %v2153 = vmul.f32 %v2145, %v1871
    %v2154 = vadd.f32 %v2129, %v2146
    %v2155 = vadd.f32 %v2130, %v2147
    %v2156 = vadd.f32 %v2131, %v2148
    %v2157 = vadd.f32 %v2132, %v2149
    %v2158 = vadd.f32 %v2133, %v2150
    %v2159 = vadd.f32 %v2134, %v2151
    %v2160 = vadd.f32 %v2135, %v2152
    %v2161 = vadd.f32 %v2136, %v2153
    %v2162 = vld [vmem:[#allocation2 + $0x98] sm:$0xff]
    %v2163 = vmul.f32 %v2082, %v1892
    %v2164 = vmul.f32 %v2083, %v1892
    %v2165 = vmul.f32 %v2084, %v1892
    %v2166 = vmul.f32 %v2085, %v1892
    %v2167 = vmul.f32 %v2086, %v1892
    %v2168 = vmul.f32 %v2087, %v1892
    %v2169 = vmul.f32 %v2088, %v1892
    %v2170 = vmul.f32 %v2162, %v1892
    %v2171 = vadd.f32 %v2154, %v2163
    %v2172 = vadd.f32 %v2155, %v2164
    %v2173 = vadd.f32 %v2156, %v2165
    %v2174 = vadd.f32 %v2157, %v2166
    %v2175 = vadd.f32 %v2158, %v2167
    %v2176 = vadd.f32 %v2159, %v2168
    %v2177 = vadd.f32 %v2160, %v2169
    %v2178 = vadd.f32 %v2161, %v2170
    %v2179 = vld [vmem:[#allocation2 + $0x99] sm:$0xff]
    %v2180 = vsel %vm742, %v2106, 0.0
    %v2181 = vsel %vm743, %v2107, 0.0
    %v2182 = vsel %vm744, %v2108, 0.0
    %v2183 = vsel %vm745, %v2109, 0.0
    %v2184 = vsel %vm746, %v2110, 0.0
    %v2185 = vsel %vm747, %v2111, 0.0
    %v2186 = vsel %vm748, %v2112, 0.0
    %v2187 = vsel %vm749, %v2179, 0.0
    %v2188 = vmul.f32 %v2180, %v1921
    %v2189 = vmul.f32 %v2181, %v1921
    %v2190 = vmul.f32 %v2182, %v1921
    %v2191 = vmul.f32 %v2183, %v1921
    %v2192 = vmul.f32 %v2184, %v1921
    %v2193 = vmul.f32 %v2185, %v1921
    %v2194 = vmul.f32 %v2186, %v1921
    %v2195 = vmul.f32 %v2187, %v1921
    %v2196 = vadd.f32 %v2171, %v2188
    %v2197 = vadd.f32 %v2172, %v2189
    %v2198 = vadd.f32 %v2173, %v2190
    %v2199 = vadd.f32 %v2174, %v2191
    %v2200 = vadd.f32 %v2175, %v2192
    %v2201 = vadd.f32 %v2176, %v2193
    %v2202 = vadd.f32 %v2177, %v2194
    %v2203 = vadd.f32 %v2178, %v2195
    %v2204 = vld [vmem:[#allocation2 + $0x9f] sm:$0xff]
    %v2205 = vsel %vm734, %v2051, 0.0
    %v2206 = vsel %vm735, %v2052, 0.0
    %v2207 = vsel %vm736, %v2053, 0.0
    %v2208 = vsel %vm737, %v2054, 0.0
    %v2209 = vsel %vm738, %v2055, 0.0
    %v2210 = vsel %vm739, %v2056, 0.0
    %v2211 = vsel %vm740, %v2137, 0.0
    %v2212 = vsel %vm741, %v2204, 0.0
    %v2213 = vmul.f32 %v2205, %v1950
    %v2214 = vmul.f32 %v2206, %v1950
    %v2215 = vmul.f32 %v2207, %v1950
    %v2216 = vmul.f32 %v2208, %v1950
    %v2217 = vmul.f32 %v2209, %v1950
    %v2218 = vmul.f32 %v2210, %v1950
    %v2219 = vmul.f32 %v2211, %v1950
    %v2220 = vmul.f32 %v2212, %v1950
    %v2221 = vadd.f32 %v2196, %v2213
    %v2222 = vadd.f32 %v2197, %v2214
    %v2223 = vadd.f32 %v2198, %v2215
    %v2224 = vadd.f32 %v2199, %v2216
    %v2225 = vadd.f32 %v2200, %v2217
    %v2226 = vadd.f32 %v2201, %v2218
    %v2227 = vadd.f32 %v2202, %v2219
    %v2228 = vadd.f32 %v2203, %v2220
    %v2229 = vld [vmem:[#allocation2 + $0xa0] sm:$0xff]
    %v2230 = vmul.f32 %v2083, %v1971
    %v2231 = vmul.f32 %v2084, %v1971
    %v2232 = vmul.f32 %v2085, %v1971
    %v2233 = vmul.f32 %v2086, %v1971
    %v2234 = vmul.f32 %v2087, %v1971
    %v2235 = vmul.f32 %v2088, %v1971
    %v2236 = vmul.f32 %v2162, %v1971
    %v2237 = vmul.f32 %v2229, %v1971
    %v2238 = vadd.f32 %v2221, %v2230
    %v2239 = vadd.f32 %v2222, %v2231
    %v2240 = vadd.f32 %v2223, %v2232
    %v2241 = vadd.f32 %v2224, %v2233
    %v2242 = vadd.f32 %v2225, %v2234
    %v2243 = vadd.f32 %v2226, %v2235
    %v2244 = vadd.f32 %v2227, %v2236
    %v2245 = vadd.f32 %v2228, %v2237
    %v2246 = vld [vmem:[#allocation2 + $0xa1] sm:$0xff]
    %v2247 = vsel %vm742, %v2107, 0.0
    %v2248 = vsel %vm743, %v2108, 0.0
    %v2249 = vsel %vm744, %v2109, 0.0
    %v2250 = vsel %vm745, %v2110, 0.0
    %v2251 = vsel %vm746, %v2111, 0.0
    %v2252 = vsel %vm747, %v2112, 0.0
    %v2253 = vsel %vm748, %v2179, 0.0
    %v2254 = vsel %vm749, %v2246, 0.0
    %v2255 = vmul.f32 %v2247, %v2000
    %v2256 = vmul.f32 %v2248, %v2000
    %v2257 = vmul.f32 %v2249, %v2000
    %v2258 = vmul.f32 %v2250, %v2000
    %v2259 = vmul.f32 %v2251, %v2000
    %v2260 = vmul.f32 %v2252, %v2000
    %v2261 = vmul.f32 %v2253, %v2000
    %v2262 = vmul.f32 %v2254, %v2000
    %v2263 = vadd.f32 %v2238, %v2255
    %v2264 = vadd.f32 %v2239, %v2256
    %v2265 = vadd.f32 %v2240, %v2257
    %v2266 = vadd.f32 %v2241, %v2258
    %v2267 = vadd.f32 %v2242, %v2259
    %v2268 = vadd.f32 %v2243, %v2260
    %v2269 = vadd.f32 %v2244, %v2261
    %v2270 = vadd.f32 %v2245, %v2262
    %v2271 = vmul.f32 %v2263, %v2020
    %v2272 = vmul.f32 %v2264, %v2020
    %v2273 = vmul.f32 %v2265, %v2020
    %v2274 = vmul.f32 %v2266, %v2020
    %v2275 = vmul.f32 %v2267, %v2020
    %v2276 = vmul.f32 %v2268, %v2020
    %v2277 = vmul.f32 %v2269, %v2020
    %v2278 = vmul.f32 %v2270, %v2020
    %v2279 = vadd.f32 %v2271, %v2032
    %v2280 = vadd.f32 %v2272, %v2032
    %v2281 = vadd.f32 %v2273, %v2032
    %v2282 = vadd.f32 %v2274, %v2032
    %v2283 = vadd.f32 %v2275, %v2032
    %v2284 = vadd.f32 %v2276, %v2032
    %v2285 = vadd.f32 %v2277, %v2032
    %v2286 = vadd.f32 %v2278, %v2032
    %v2287 = vmax.f32 %v2279, 0.0
    %v2288 = vmax.f32 %v2280, 0.0
    %v2289 = vmax.f32 %v2281, 0.0
    %v2290 = vmax.f32 %v2282, 0.0
    %v2291 = vmax.f32 %v2283, 0.0
    %v2292 = vmax.f32 %v2284, 0.0
    %v2293 = vmax.f32 %v2285, 0.0
    %v2294 = vmax.f32 %v2286, 0.0
    %v2295 = vld [vmem:[%s3] sm:$0xf]
    %v2296 = vld [vmem:[%s3 + $0x4] sm:$0xf]
    %v2297 = vld [vmem:[%s3 + $0x8] sm:$0xf]
    %v2298 = vld [vmem:[%s3 + $0xc] sm:$0xf]
    %v2299 = vpack.c.bf16 %v2042, %v2041
    %v2300 = vpack.c.bf16 %v2044, %v2043
    %v2301 = vpack.c.bf16 %v2046, %v2045
    %v2302 = vpack.c.bf16 %v2048, %v2047
    %v2303 = vpack.c.bf16 %v2288, %v2287
    %v2304 = vpack.c.bf16 %v2290, %v2289
    %v2305 = vpack.c.bf16 %v2292, %v2291
    %v2306 = vpack.c.bf16 %v2294, %v2293
    %v2311 = vunpack.c.l.b16 %v2295
    %v2312 = vunpack.c.l.b16 %v2296
    %v2313 = vunpack.c.l.b16 %v2297
    %v2314 = vunpack.c.l.b16 %v2298
    %v2315 = vpack.c.b16 %v2312, %v2311
    %v2316 = vpack.c.b16 %v2314, %v2313
    %2319 = vmatprep.subr.bf16.mxu0 0
    %2320 = vmatpush1.bf16.msra.mxu0 %v2299
    %2321 = vmatprep.subr.bf16.mxu0 0
    %2322 = vmatpush1.bf16.msra.mxu0 %v2300
    %2323 = vmatprep.subr.bf16.mxu0 0
    %2324 = vmatpush1.bf16.msra.mxu0 %v2301
    %2325 = vmatprep.subr.bf16.mxu0 0
    %2326 = vmatpush1.bf16.msra.mxu0 %v2302
    %2327 = vmatprep.subr.bf16.mxu0 0
    %2328 = vmatpush1.bf16.msra.mxu0 %v2303
    %2329 = vmatprep.subr.bf16.mxu0 0
    %2330 = vmatpush1.bf16.msra.mxu0 %v2304
    %2331 = vmatprep.subr.bf16.mxu0 0
    %2332 = vmatpush1.bf16.msra.mxu0 %v2305
    %2333 = vmatprep.subr.bf16.mxu0 0
    %2334 = vmatpush1.bf16.msra.mxu0 %v2306
    %2335 = vmatprep.subr.bf16.mxu0 0
    %2336 = vmatpush1.bf16.msra.mxu0 0
    %2337 = vmatprep.subr.bf16.mxu0 0
    %2338 = vmatpush1.bf16.msra.mxu0 0
    %2339 = vmatprep.subr.bf16.mxu0 0
    %2340 = vmatpush1.bf16.msra.mxu0 0
    %2341 = vmatprep.subr.bf16.mxu0 0
    %2342 = vmatpush1.bf16.msra.mxu0 0
    %2343 = vmatprep.subr.bf16.mxu0 0
    %2344 = vmatpush1.bf16.msra.mxu0 0
    %2345 = vmatprep.subr.bf16.mxu0 0
    %2346 = vmatpush1.bf16.msra.mxu0 0
    %2347 = vmatprep.subr.bf16.mxu0 0
    %2348 = vmatpush1.bf16.msra.mxu0 0
    %2349 = vmatprep.subr.bf16.mxu0 0
    %2350 = vmatpush1.bf16.msra.mxu0 0
    %2351 = vmatprep.mubr.bf16.mxu0 0
    %2352 = vmatmul.mubr.bf16.gmra.mrb[0].mxu0 %v2315
    %v2353 = vpop.f32.mrb[0].mxu0
    %v2354 = vadd.f32 0.0, %v2353
    %v2355 = vpop.f32.mrb[0].mxu0
    %v2356 = vpop.f32.mrb[0].mxu0
    %v2357 = vadd.f32 0.0, %v2356
    %v2358 = vpop.f32.mrb[0].mxu0
    %2359 = vmatprep.mubr.bf16.mxu0 0
    %2360 = vmatmul.mubr.bf16.gmra.mrb[0].mxu0 %v2316
    %v2361 = vpop.f32.mrb[0].mxu0
    %v2362 = vadd.f32 0.0, %v2361
    %v2363 = vpop.f32.mrb[0].mxu0
    %v2364 = vpop.f32.mrb[0].mxu0
    %v2365 = vadd.f32 0.0, %v2364
    %v2366 = vpop.f32.mrb[0].mxu0
    %2367 = vdwg.mxu0
    %s2368 = scalar_lea.vmem [#allocation6], 256
    %v2369 = vld [vmem:[%s2368] sm:$0xf]
    %v2370 = vld [vmem:[%s2368 + $0x4] sm:$0xf]
    %v2371 = vld [vmem:[%s2368 + $0x8] sm:$0xf]
    %v2372 = vld [vmem:[%s2368 + $0xc] sm:$0xf]
    %v2373 = vld [vmem:[%s2368 + $0x10] sm:$0xf]
    %v2374 = vld [vmem:[%s2368 + $0x14] sm:$0xf]
    %v2375 = vld [vmem:[%s2368 + $0x18] sm:$0xf]
    %v2376 = vld [vmem:[%s2368 + $0x1c] sm:$0xf]
    %v2377 = vld [vmem:[%s2368 + $0x20] sm:$0xf]
    %v2378 = vld [vmem:[%s2368 + $0x24] sm:$0xf]
    %v2379 = vld [vmem:[%s2368 + $0x28] sm:$0xf]
    %v2380 = vld [vmem:[%s2368 + $0x2c] sm:$0xf]
    %v2381 = vld [vmem:[%s2368 + $0x30] sm:$0xf]
    %v2382 = vld [vmem:[%s2368 + $0x34] sm:$0xf]
    %v2383 = vld [vmem:[%s2368 + $0x38] sm:$0xf]
    %v2384 = vld [vmem:[%s2368 + $0x3c] sm:$0xf]
    %v2385 = vpack.c.bf16 %v2357, %v2354
    %v2386 = vpack.c.bf16 %v2365, %v2362
    %v2403 = vunpack.c.l.b16 %v2369
    %v2404 = vunpack.c.l.b16 %v2370
    %v2405 = vunpack.c.l.b16 %v2371
    %v2406 = vunpack.c.l.b16 %v2372
    %v2407 = vunpack.c.l.b16 %v2373
    %v2408 = vunpack.c.l.b16 %v2374
    %v2409 = vunpack.c.l.b16 %v2375
    %v2410 = vunpack.c.l.b16 %v2376
    %v2411 = vunpack.c.l.b16 %v2377
    %v2412 = vunpack.c.l.b16 %v2378
    %v2413 = vunpack.c.l.b16 %v2379
    %v2414 = vunpack.c.l.b16 %v2380
    %v2415 = vunpack.c.l.b16 %v2381
    %v2416 = vunpack.c.l.b16 %v2382
    %v2417 = vunpack.c.l.b16 %v2383
    %v2418 = vunpack.c.l.b16 %v2384
    %v2419 = vpack.c.b16 %v2404, %v2403
    %v2420 = vpack.c.b16 %v2406, %v2405
    %v2421 = vpack.c.b16 %v2408, %v2407
    %v2422 = vpack.c.b16 %v2410, %v2409
    %v2423 = vpack.c.b16 %v2412, %v2411
    %v2424 = vpack.c.b16 %v2414, %v2413
    %v2425 = vpack.c.b16 %v2416, %v2415
    %v2426 = vpack.c.b16 %v2418, %v2417
    %2435 = vmatprep.subr.bf16.mxu0 0
    %2436 = vmatpush1.bf16.msra.mxu0 %v2419
    %2437 = vmatprep.subr.bf16.mxu0 0
    %2438 = vmatpush1.bf16.msra.mxu0 %v2420
    %2439 = vmatprep.subr.bf16.mxu0 0
    %2440 = vmatpush1.bf16.msra.mxu0 %v2421
    %2441 = vmatprep.subr.bf16.mxu0 0
    %2442 = vmatpush1.bf16.msra.mxu0 %v2422
    %2443 = vmatprep.subr.bf16.mxu0 0
    %2444 = vmatpush1.bf16.msra.mxu0 %v2423
    %2445 = vmatprep.subr.bf16.mxu0 0
    %2446 = vmatpush1.bf16.msra.mxu0 %v2424
    %2447 = vmatprep.subr.bf16.mxu0 0
    %2448 = vmatpush1.bf16.msra.mxu0 %v2425
    %2449 = vmatprep.subr.bf16.mxu0 0
    %2450 = vmatpush1.bf16.msra.mxu0 %v2426
    %2451 = vmatprep.subr.bf16.mxu0 0
    %2452 = vmatpush1.bf16.msra.mxu0 0
    %2453 = vmatprep.subr.bf16.mxu0 0
    %2454 = vmatpush1.bf16.msra.mxu0 0
    %2455 = vmatprep.subr.bf16.mxu0 0
    %2456 = vmatpush1.bf16.msra.mxu0 0
    %2457 = vmatprep.subr.bf16.mxu0 0
    %2458 = vmatpush1.bf16.msra.mxu0 0
    %2459 = vmatprep.subr.bf16.mxu0 0
    %2460 = vmatpush1.bf16.msra.mxu0 0
    %2461 = vmatprep.subr.bf16.mxu0 0
    %2462 = vmatpush1.bf16.msra.mxu0 0
    %2463 = vmatprep.subr.bf16.mxu0 0
    %2464 = vmatpush1.bf16.msra.mxu0 0
    %2465 = vmatprep.subr.bf16.mxu0 0
    %2466 = vmatpush1.bf16.msra.mxu0 0
    %2467 = vmatprep.mubr.bf16.mxu0 0
    %2468 = vmatmul.mubr.bf16.gmra.mrb[0].mxu0 %v2385
    %v2469 = vpop.f32.mrb[0].mxu0
    %v2470 = vadd.f32 0.0, %v2469
    %v2471 = vpop.f32.mrb[0].mxu0
    %v2472 = vpop.f32.mrb[0].mxu0
    %v2473 = vadd.f32 0.0, %v2472
    %v2474 = vpop.f32.mrb[0].mxu0
    %2475 = vmatprep.mubr.bf16.mxu0 0
    %2476 = vmatmul.mubr.bf16.gmra.mrb[0].mxu0 %v2386
    %v2477 = vpop.f32.mrb[0].mxu0
    %v2478 = vadd.f32 0.0, %v2477
    %v2479 = vpop.f32.mrb[0].mxu0
    %v2480 = vpop.f32.mrb[0].mxu0
    %v2481 = vadd.f32 0.0, %v2480
    %v2482 = vpop.f32.mrb[0].mxu0
    %2483 = vdwg.mxu0
    %v2484 = vld [vmem:[#allocation9 + $0x12] sm:$0x1]
    %v2485 = vlaneseq
    %v2486 = vshrl.u32 %v2485, 7
    %v2487 = vsub.s32 0, %v2486
    %v2488 = vrot.slane %v2484, %v2487
    %v2489 = vmul.f32 %v2470, %v2488
    %v2490 = vmul.f32 %v2473, %v2488
    %v2491 = vmul.f32 %v2478, %v2488
    %v2492 = vmul.f32 %v2481, %v2488
    %v2493 = vld [vmem:[#allocation9 + $0x13] sm:$0x1]
    %v2494 = vlaneseq
    %v2495 = vshrl.u32 %v2494, 7
    %v2496 = vsub.s32 0, %v2495
    %v2497 = vrot.slane %v2493, %v2496
    %v2498 = vadd.f32 %v2489, %v2497
    %v2499 = vadd.f32 %v2490, %v2497
    %v2500 = vadd.f32 %v2491, %v2497
    %v2501 = vadd.f32 %v2492, %v2497
    %v2502 = vmax.f32 %v2498, 0.0
    %v2503 = vmax.f32 %v2499, 0.0
    %v2504 = vmax.f32 %v2500, 0.0
    %v2505 = vmax.f32 %v2501, 0.0
    %s2506 = scalar_lea.vmem [#allocation6], 320
    %v2507 = vld [vmem:[%s2506] sm:$0xf]
    %v2508 = vld [vmem:[%s2506 + $0x4] sm:$0xf]
    %v2509 = vld [vmem:[%s2506 + $0x8] sm:$0xf]
    %v2510 = vld [vmem:[%s2506 + $0xc] sm:$0xf]
    %v2511 = vld [vmem:[%s2506 + $0x10] sm:$0xf]
    %v2512 = vld [vmem:[%s2506 + $0x14] sm:$0xf]
    %v2513 = vld [vmem:[%s2506 + $0x18] sm:$0xf]
    %v2514 = vld [vmem:[%s2506 + $0x1c] sm:$0xf]
    %v2515 = vld [vmem:[%s2506 + $0x20] sm:$0xf]
    %v2516 = vld [vmem:[%s2506 + $0x24] sm:$0xf]
    %v2517 = vld [vmem:[%s2506 + $0x28] sm:$0xf]
    %v2518 = vld [vmem:[%s2506 + $0x2c] sm:$0xf]
    %v2519 = vld [vmem:[%s2506 + $0x30] sm:$0xf]
    %v2520 = vld [vmem:[%s2506 + $0x34] sm:$0xf]
    %v2521 = vld [vmem:[%s2506 + $0x38] sm:$0xf]
    %v2522 = vld [vmem:[%s2506 + $0x3c] sm:$0xf]
    %v2523 = vpack.c.bf16 %v2503, %v2502
    %v2524 = vpack.c.bf16 %v2505, %v2504
    %v2525 = vld [vmem:[#allocation9 + $0x1d] sm:$0x1]
    %v2526 = vlaneseq
    %v2527 = vshrl.u32 %v2526, 7
    %v2528 = vsub.s32 0, %v2527
    %v2529 = vrot.slane %v2525, %v2528
    %v2546 = vunpack.c.l.b16 %v2507
    %v2547 = vunpack.c.l.b16 %v2508
    %v2548 = vunpack.c.l.b16 %v2509
    %v2549 = vunpack.c.l.b16 %v2510
    %v2550 = vunpack.c.l.b16 %v2511
    %v2551 = vunpack.c.l.b16 %v2512
    %v2552 = vunpack.c.l.b16 %v2513
    %v2553 = vunpack.c.l.b16 %v2514
    %v2554 = vunpack.c.l.b16 %v2515
    %v2555 = vunpack.c.l.b16 %v2516
    %v2556 = vunpack.c.l.b16 %v2517
    %v2557 = vunpack.c.l.b16 %v2518
    %v2558 = vunpack.c.l.b16 %v2519
    %v2559 = vunpack.c.l.b16 %v2520
    %v2560 = vunpack.c.l.b16 %v2521
    %v2561 = vunpack.c.l.b16 %v2522
    %v2562 = vpack.c.b16 %v2547, %v2546
    %v2563 = vpack.c.b16 %v2549, %v2548
    %v2564 = vpack.c.b16 %v2551, %v2550
    %v2565 = vpack.c.b16 %v2553, %v2552
    %v2566 = vpack.c.b16 %v2555, %v2554
    %v2567 = vpack.c.b16 %v2557, %v2556
    %v2568 = vpack.c.b16 %v2559, %v2558
    %v2569 = vpack.c.b16 %v2561, %v2560
    %2578 = vmatprep.subr.bf16.mxu0 0
    %2579 = vmatpush1.bf16.msra.mxu0 %v2562
    %2580 = vmatprep.subr.bf16.mxu0 0
    %2581 = vmatpush1.bf16.msra.mxu0 %v2563
    %2582 = vmatprep.subr.bf16.mxu0 0
    %2583 = vmatpush1.bf16.msra.mxu0 %v2564
    %2584 = vmatprep.subr.bf16.mxu0 0
    %2585 = vmatpush1.bf16.msra.mxu0 %v2565
    %2586 = vmatprep.subr.bf16.mxu0 0
    %2587 = vmatpush1.bf16.msra.mxu0 %v2566
    %2588 = vmatprep.subr.bf16.mxu0 0
    %2589 = vmatpush1.bf16.msra.mxu0 %v2567
    %2590 = vmatprep.subr.bf16.mxu0 0
    %2591 = vmatpush1.bf16.msra.mxu0 %v2568
    %2592 = vmatprep.subr.bf16.mxu0 0
    %2593 = vmatpush1.bf16.msra.mxu0 %v2569
    %2594 = vmatprep.subr.bf16.mxu0 0
    %2595 = vmatpush1.bf16.msra.mxu0 0
    %2596 = vmatprep.subr.bf16.mxu0 0
    %2597 = vmatpush1.bf16.msra.mxu0 0
    %2598 = vmatprep.subr.bf16.mxu0 0
    %2599 = vmatpush1.bf16.msra.mxu0 0
    %2600 = vmatprep.subr.bf16.mxu0 0
    %2601 = vmatpush1.bf16.msra.mxu0 0
    %2602 = vmatprep.subr.bf16.mxu0 0
    %2603 = vmatpush1.bf16.msra.mxu0 0
    %2604 = vmatprep.subr.bf16.mxu0 0
    %2605 = vmatpush1.bf16.msra.mxu0 0
    %2606 = vmatprep.subr.bf16.mxu0 0
    %2607 = vmatpush1.bf16.msra.mxu0 0
    %2608 = vmatprep.subr.bf16.mxu0 0
    %2609 = vmatpush1.bf16.msra.mxu0 0
    %2610 = vmatprep.mubr.bf16.mxu0 0
    %2611 = vmatmul.mubr.bf16.gmra.mrb[0].mxu0 %v2523
    %v2612 = vpop.f32.mrb[0].mxu0
    %v2613 = vadd.f32 %v2529, %v2612
    %v2614 = vpop.f32.mrb[0].mxu0
    %v2615 = vpop.f32.mrb[0].mxu0
    %v2616 = vadd.f32 %v2529, %v2615
    %v2617 = vpop.f32.mrb[0].mxu0
    %2618 = vmatprep.mubr.bf16.mxu0 0
    %2619 = vmatmul.mubr.bf16.gmra.mrb[0].mxu0 %v2524
    %v2620 = vpop.f32.mrb[0].mxu0
    %v2621 = vadd.f32 %v2529, %v2620
    %v2622 = vpop.f32.mrb[0].mxu0
    %v2623 = vpop.f32.mrb[0].mxu0
    %v2624 = vadd.f32 %v2529, %v2623
    %v2625 = vpop.f32.mrb[0].mxu0
    %2626 = vdwg.mxu0
    %v2627 = vmax.f32 %v2613, 0.0
    %v2628 = vmax.f32 %v2616, 0.0
    %v2629 = vmax.f32 %v2621, 0.0
    %v2630 = vmax.f32 %v2624, 0.0
    %v2631 = vmin.f32 %v2627, 6.0
    %v2632 = vmin.f32 %v2628, 6.0
    %v2633 = vmin.f32 %v2629, 6.0
    %v2634 = vmin.f32 %v2630, 6.0
    %2635 = vst [vmem:[#allocation2 + $0xac] sm:$0xff] %v2631
    %2636 = vst [vmem:[#allocation2 + $0xb4] sm:$0xff] %v2632
    %2637 = vst [vmem:[#allocation2 + $0xc4] sm:$0xff] %v2633
    %2638 = vst [vmem:[#allocation2 + $0xcc] sm:$0xff] %v2634
    %vm2639 = vcmp.lt.s32.totalorder %v630, 0
    %v2640 = vsub.s32 0, %v630
    %v2641 = vsel %vm2639, %v2640, %v630
    %v2642 = vshrl.u32 %v2641, 2
    %v2643 = vand.u32 %v2641, 3
    %v2644 = vsub.s32 0, %v2643
    %v2645 = vsel %vm2639, %v2644, %v2643
    %vm2646 = vcmp.lt.s32.totalorder %v631, 0
    %v2647 = vsub.s32 0, %v631
    %v2648 = vsel %vm2646, %v2647, %v631
    %v2649 = vshrl.u32 %v2648, 2
    %v2650 = vand.u32 %v2648, 3
    %v2651 = vsub.s32 0, %v2650
    %v2652 = vsel %vm2646, %v2651, %v2650
    %vm2653 = vcmp.ne.s32.totalorder %v2645, 0
    %vm2654 = vcmp.ne.s32.totalorder %v2652, 0
    %vm2655 = vcmp.lt.s32.totalorder %v2645, 0
    %vm2656 = vcmp.lt.s32.totalorder %v2652, 0
    %vm2657 = vmand %vm2655, %vm2653
    %vm2658 = vmand %vm2656, %vm2654
    %v2659 = vadd.s32 %v2645, 4
    %v2660 = vadd.s32 %v2652, 4
    %v2661 = vsel %vm2657, %v2659, %v2645
    %v2662 = vsel %vm2658, %v2660, %v2652
    %vm2663 = vcmp.ge.s32.totalorder %v2661, 1
    %vm2664 = vcmp.ge.s32.totalorder %v2662, 1
    %vm2665 = vcmp.le.s32.totalorder %v2661, 2
    %vm2666 = vcmp.le.s32.totalorder %v2662, 2
    %v2667 = vld [vmem:[#allocation9 + $0x1e] sm:$0x1]
    %v2668 = vld [vmem:[#allocation9 + $0x1f] sm:$0x1]
    %v2669 = vld [vmem:[#allocation9 + $0x22] sm:$0x1]
    %v2670 = vld [vmem:[#allocation9 + $0x23] sm:$0x1]
    %v2671 = vld [vmem:[#allocation9 + $0x24] sm:$0x1]
    %v2672 = vld [vmem:[#allocation9 + $0x25] sm:$0x1]
    %v2673 = vld [vmem:[#allocation9 + $0x26] sm:$0x1]
    %v2674 = vld [vmem:[#allocation9 + $0x27] sm:$0x1]
    %v2675 = vld [vmem:[#allocation9 + $0x28] sm:$0x1]
    %v2676 = vld [vmem:[#allocation9 + $0x29] sm:$0x1]
    %v2677 = vld [vmem:[#allocation9 + $0x2a] sm:$0x1]
    %v2678 = vld [vmem:[#allocation2 + $0xa7] sm:$0xff]
    %v2679 = vld [vmem:[#allocation2 + $0xaf] sm:$0xff]
    %v2680 = vsel %vm2663, %v2678, 0.0
    %v2681 = vsel %vm2664, %v2679, 0.0
    %v2682 = vlaneseq
    %v2683 = vshrl.u32 %v2682, 7
    %v2684 = vsub.s32 0, %v2683
    %v2685 = vrot.slane %v2669, %v2684
    %v2686 = vmul.f32 %v2680, %v2685
    %v2687 = vmul.f32 %v2681, %v2685
    %v2688 = vadd.f32 %v2686, 0.0
    %v2689 = vadd.f32 %v2687, 0.0
    %v2690 = vld [vmem:[#allocation2 + $0xa8] sm:$0xff]
    %v2691 = vld [vmem:[#allocation2 + $0xb0] sm:$0xff]
    %v2692 = vlaneseq
    %v2693 = vshrl.u32 %v2692, 7
    %v2694 = vsub.s32 0, %v2693
    %v2695 = vrot.slane %v2670, %v2694
    %v2696 = vmul.f32 %v2690, %v2695
    %v2697 = vmul.f32 %v2691, %v2695
    %v2698 = vadd.f32 %v2688, %v2696
    %v2699 = vadd.f32 %v2689, %v2697
    %v2700 = vld [vmem:[#allocation2 + $0xa9] sm:$0xff]
    %v2701 = vld [vmem:[#allocation2 + $0xb1] sm:$0xff]
    %v2702 = vsel %vm2665, %v2700, 0.0
    %v2703 = vsel %vm2666, %v2701, 0.0
    %v2704 = vlaneseq
    %v2705 = vshrl.u32 %v2704, 7
    %v2706 = vsub.s32 0, %v2705
    %v2707 = vrot.slane %v2671, %v2706
    %v2708 = vmul.f32 %v2702, %v2707
    %v2709 = vmul.f32 %v2703, %v2707
    %v2710 = vadd.f32 %v2698, %v2708
    %v2711 = vadd.f32 %v2699, %v2709
    %v2712 = vld [vmem:[#allocation2 + $0xab] sm:$0xff]
    %v2713 = vld [vmem:[#allocation2 + $0xb3] sm:$0xff]
    %v2714 = vsel %vm2663, %v2712, 0.0
    %v2715 = vsel %vm2664, %v2713, 0.0
    %v2716 = vlaneseq
    %v2717 = vshrl.u32 %v2716, 7
    %v2718 = vsub.s32 0, %v2717
    %v2719 = vrot.slane %v2672, %v2718
    %v2720 = vmul.f32 %v2714, %v2719
    %v2721 = vmul.f32 %v2715, %v2719
    %v2722 = vadd.f32 %v2710, %v2720
    %v2723 = vadd.f32 %v2711, %v2721
    %v2724 = vld [vmem:[#allocation2 + $0xac] sm:$0xff]
    %v2725 = vld [vmem:[#allocation2 + $0xb4] sm:$0xff]
    %v2726 = vlaneseq
    %v2727 = vshrl.u32 %v2726, 7
    %v2728 = vsub.s32 0, %v2727
    %v2729 = vrot.slane %v2673, %v2728
    %v2730 = vmul.f32 %v2724, %v2729
    %v2731 = vmul.f32 %v2725, %v2729
    %v2732 = vadd.f32 %v2722, %v2730
    %v2733 = vadd.f32 %v2723, %v2731
    %v2734 = vld [vmem:[#allocation2 + $0xad] sm:$0xff]
    %v2735 = vld [vmem:[#allocation2 + $0xb5] sm:$0xff]
    %v2736 = vsel %vm2665, %v2734, 0.0
    %v2737 = vsel %vm2666, %v2735, 0.0
    %v2738 = vlaneseq
    %v2739 = vshrl.u32 %v2738, 7
    %v2740 = vsub.s32 0, %v2739
    %v2741 = vrot.slane %v2674, %v2740
    %v2742 = vmul.f32 %v2736, %v2741
    %v2743 = vmul.f32 %v2737, %v2741
    %v2744 = vadd.f32 %v2732, %v2742
    %v2745 = vadd.f32 %v2733, %v2743
    %v2746 = vld [vmem:[#allocation2 + $0xb7] sm:$0xff]
    %v2747 = vsel %vm2663, %v2679, 0.0
    %v2748 = vsel %vm2664, %v2746, 0.0
    %v2749 = vlaneseq
    %v2750 = vshrl.u32 %v2749, 7
    %v2751 = vsub.s32 0, %v2750
    %v2752 = vrot.slane %v2675, %v2751
    %v2753 = vmul.f32 %v2747, %v2752
    %v2754 = vmul.f32 %v2748, %v2752
    %v2755 = vadd.f32 %v2744, %v2753
    %v2756 = vadd.f32 %v2745, %v2754
    %v2757 = vld [vmem:[#allocation2 + $0xb8] sm:$0xff]
    %v2758 = vlaneseq
    %v2759 = vshrl.u32 %v2758, 7
    %v2760 = vsub.s32 0, %v2759
    %v2761 = vrot.slane %v2676, %v2760
    %v2762 = vmul.f32 %v2691, %v2761
    %v2763 = vmul.f32 %v2757, %v2761
    %v2764 = vadd.f32 %v2755, %v2762
    %v2765 = vadd.f32 %v2756, %v2763
    %v2766 = vld [vmem:[#allocation2 + $0xb9] sm:$0xff]
    %v2767 = vsel %vm2665, %v2701, 0.0
    %v2768 = vsel %vm2666, %v2766, 0.0
    %v2769 = vlaneseq
    %v2770 = vshrl.u32 %v2769, 7
    %v2771 = vsub.s32 0, %v2770
    %v2772 = vrot.slane %v2677, %v2771
    %v2773 = vmul.f32 %v2767, %v2772
    %v2774 = vmul.f32 %v2768, %v2772
    %v2775 = vadd.f32 %v2764, %v2773
    %v2776 = vadd.f32 %v2765, %v2774
    %v2777 = vlaneseq
    %v2778 = vshrl.u32 %v2777, 7
    %v2779 = vsub.s32 0, %v2778
    %v2780 = vrot.slane %v2667, %v2779
    %v2781 = vmul.f32 %v2775, %v2780
    %v2782 = vmul.f32 %v2776, %v2780
    %v2783 = vlaneseq
    %v2784 = vshrl.u32 %v2783, 7
    %v2785 = vsub.s32 0, %v2784
    %v2786 = vrot.slane %v2668, %v2785
    %v2787 = vadd.f32 %v2781, %v2786
    %v2788 = vadd.f32 %v2782, %v2786
    %v2789 = vmax.f32 %v2787, 0.0
    %v2790 = vmax.f32 %v2788, 0.0
    %v2791 = vld [vmem:[#allocation2 + $0xbf] sm:$0xff]
    %v2792 = vld [vmem:[#allocation2 + $0xc7] sm:$0xff]
    %v2793 = vsel %vm2663, %v2791, 0.0
    %v2794 = vsel %vm2664, %v2792, 0.0
    %v2795 = vmul.f32 %v2793, %v2685
    %v2796 = vmul.f32 %v2794, %v2685
    %v2797 = vadd.f32 %v2795, 0.0
    %v2798 = vadd.f32 %v2796, 0.0
    %v2799 = vld [vmem:[#allocation2 + $0xc0] sm:$0xff]
    %v2800 = vld [vmem:[#allocation2 + $0xc8] sm:$0xff]
    %v2801 = vmul.f32 %v2799, %v2695
    %v2802 = vmul.f32 %v2800, %v2695
    %v2803 = vadd.f32 %v2797, %v2801
    %v2804 = vadd.f32 %v2798, %v2802
    %v2805 = vld [vmem:[#allocation2 + $0xc1] sm:$0xff]
    %v2806 = vld [vmem:[#allocation2 + $0xc9] sm:$0xff]
    %v2807 = vsel %vm2665, %v2805, 0.0
    %v2808 = vsel %vm2666, %v2806, 0.0
    %v2809 = vmul.f32 %v2807, %v2707
    %v2810 = vmul.f32 %v2808, %v2707
    %v2811 = vadd.f32 %v2803, %v2809
    %v2812 = vadd.f32 %v2804, %v2810
    %v2813 = vld [vmem:[#allocation2 + $0xc3] sm:$0xff]
    %v2814 = vld [vmem:[#allocation2 + $0xcb] sm:$0xff]
    %v2815 = vsel %vm2663, %v2813, 0.0
    %v2816 = vsel %vm2664, %v2814, 0.0
    %v2817 = vmul.f32 %v2815, %v2719
    %v2818 = vmul.f32 %v2816, %v2719
    %v2819 = vadd.f32 %v2811, %v2817
    %v2820 = vadd.f32 %v2812, %v2818
    %v2821 = vld [vmem:[#allocation2 + $0xc4] sm:$0xff]
    %v2822 = vld [vmem:[#allocation2 + $0xcc] sm:$0xff]
    %v2823 = vmul.f32 %v2821, %v2729
    %v2824 = vmul.f32 %v2822, %v2729
    %v2825 = vadd.f32 %v2819, %v2823
    %v2826 = vadd.f32 %v2820, %v2824
    %v2827 = vld [vmem:[#allocation2 + $0xc5] sm:$0xff]
    %v2828 = vld [vmem:[#allocation2 + $0xcd] sm:$0xff]
    %v2829 = vsel %vm2665, %v2827, 0.0
    %v2830 = vsel %vm2666, %v2828, 0.0
    %v2831 = vmul.f32 %v2829, %v2741
    %v2832 = vmul.f32 %v2830, %v2741
    %v2833 = vadd.f32 %v2825, %v2831
    %v2834 = vadd.f32 %v2826, %v2832
    %v2835 = vld [vmem:[#allocation2 + $0xcf] sm:$0xff]
    %v2836 = vsel %vm2663, %v2792, 0.0
    %v2837 = vsel %vm2664, %v2835, 0.0
    %v2838 = vmul.f32 %v2836, %v2752
    %v2839 = vmul.f32 %v2837, %v2752
    %v2840 = vadd.f32 %v2833, %v2838
    %v2841 = vadd.f32 %v2834, %v2839
    %v2842 = vld [vmem:[#allocation2 + $0xd0] sm:$0xff]
    %v2843 = vmul.f32 %v2800, %v2761
    %v2844 = vmul.f32 %v2842, %v2761
    %v2845 = vadd.f32 %v2840, %v2843
    %v2846 = vadd.f32 %v2841, %v2844
    %v2847 = vld [vmem:[#allocation2 + $0xd1] sm:$0xff]
    %v2848 = vsel %vm2665, %v2806, 0.0
    %v2849 = vsel %vm2666, %v2847, 0.0
    %v2850 = vmul.f32 %v2848, %v2772
    %v2851 = vmul.f32 %v2849, %v2772
    %v2852 = vadd.f32 %v2845, %v2850
    %v2853 = vadd.f32 %v2846, %v2851
    %v2854 = vmul.f32 %v2852, %v2780
    %v2855 = vmul.f32 %v2853, %v2780
    %v2856 = vadd.f32 %v2854, %v2786
    %v2857 = vadd.f32 %v2855, %v2786
    %v2858 = vmax.f32 %v2856, 0.0
    %v2859 = vmax.f32 %v2857, 0.0
    %s2860 = scalar_lea.vmem [#allocation6], 384
    %v2861 = vld [vmem:[%s2860] sm:$0xf]
    %v2862 = vld [vmem:[%s2860 + $0x4] sm:$0xf]
    %v2863 = vld [vmem:[%s2860 + $0x8] sm:$0xf]
    %v2864 = vld [vmem:[%s2860 + $0xc] sm:$0xf]
    %v2865 = vld [vmem:[%s2860 + $0x10] sm:$0xf]
    %v2866 = vld [vmem:[%s2860 + $0x14] sm:$0xf]
    %v2867 = vld [vmem:[%s2860 + $0x18] sm:$0xf]
    %v2868 = vld [vmem:[%s2860 + $0x1c] sm:$0xf]
    %v2869 = vld [vmem:[%s2860 + $0x20] sm:$0xf]
    %v2870 = vld [vmem:[%s2860 + $0x24] sm:$0xf]
    %v2871 = vld [vmem:[%s2860 + $0x28] sm:$0xf]
    %v2872 = vld [vmem:[%s2860 + $0x2c] sm:$0xf]
    %v2873 = vld [vmem:[%s2860 + $0x30] sm:$0xf]
    %v2874 = vld [vmem:[%s2860 + $0x34] sm:$0xf]
    %v2875 = vld [vmem:[%s2860 + $0x38] sm:$0xf]
    %v2876 = vld [vmem:[%s2860 + $0x3c] sm:$0xf]
    %v2877 = vpack.c.bf16 %v2790, %v2789
    %v2878 = vpack.c.bf16 %v2859, %v2858
    %v2895 = vunpack.c.l.b16 %v2861
    %v2896 = vunpack.c.l.b16 %v2862
    %v2897 = vunpack.c.l.b16 %v2863
    %v2898 = vunpack.c.l.b16 %v2864
    %v2899 = vunpack.c.l.b16 %v2865
    %v2900 = vunpack.c.l.b16 %v2866
    %v2901 = vunpack.c.l.b16 %v2867
    %v2902 = vunpack.c.l.b16 %v2868
    %v2903 = vunpack.c.l.b16 %v2869
    %v2904 = vunpack.c.l.b16 %v2870
    %v2905 = vunpack.c.l.b16 %v2871
    %v2906 = vunpack.c.l.b16 %v2872
    %v2907 = vunpack.c.l.b16 %v2873
    %v2908 = vunpack.c.l.b16 %v2874
    %v2909 = vunpack.c.l.b16 %v2875
    %v2910 = vunpack.c.l.b16 %v2876
    %v2911 = vpack.c.b16 %v2896, %v2895
    %v2912 = vpack.c.b16 %v2898, %v2897
    %v2913 = vpack.c.b16 %v2900, %v2899
    %v2914 = vpack.c.b16 %v2902, %v2901
    %v2915 = vpack.c.b16 %v2904, %v2903
    %v2916 = vpack.c.b16 %v2906, %v2905
    %v2917 = vpack.c.b16 %v2908, %v2907
    %v2918 = vpack.c.b16 %v2910, %v2909
    %2927 = vmatprep.subr.bf16.mxu0 0
    %2928 = vmatpush1.bf16.msra.mxu0 %v2911
    %2929 = vmatprep.subr.bf16.mxu0 0
    %2930 = vmatpush1.bf16.msra.mxu0 %v2912
    %2931 = vmatprep.subr.bf16.mxu0 0
    %2932 = vmatpush1.bf16.msra.mxu0 %v2913
    %2933 = vmatprep.subr.bf16.mxu0 0
    %2934 = vmatpush1.bf16.msra.mxu0 %v2914
    %2935 = vmatprep.subr.bf16.mxu0 0
    %2936 = vmatpush1.bf16.msra.mxu0 %v2915
    %2937 = vmatprep.subr.bf16.mxu0 0
    %2938 = vmatpush1.bf16.msra.mxu0 %v2916
    %2939 = vmatprep.subr.bf16.mxu0 0
    %2940 = vmatpush1.bf16.msra.mxu0 %v2917
    %2941 = vmatprep.subr.bf16.mxu0 0
    %2942 = vmatpush1.bf16.msra.mxu0 %v2918
    %2943 = vmatprep.subr.bf16.mxu0 0
    %2944 = vmatpush1.bf16.msra.mxu0 0
    %2945 = vmatprep.subr.bf16.mxu0 0
    %2946 = vmatpush1.bf16.msra.mxu0 0
    %2947 = vmatprep.subr.bf16.mxu0 0
    %2948 = vmatpush1.bf16.msra.mxu0 0
    %2949 = vmatprep.subr.bf16.mxu0 0
    %2950 = vmatpush1.bf16.msra.mxu0 0
    %2951 = vmatprep.subr.bf16.mxu0 0
    %2952 = vmatpush1.bf16.msra.mxu0 0
    %2953 = vmatprep.subr.bf16.mxu0 0
    %2954 = vmatpush1.bf16.msra.mxu0 0
    %2955 = vmatprep.subr.bf16.mxu0 0
    %2956 = vmatpush1.bf16.msra.mxu0 0
    %2957 = vmatprep.subr.bf16.mxu0 0
    %2958 = vmatpush1.bf16.msra.mxu0 0
    %2959 = vmatprep.mubr.bf16.mxu0 0
    %2960 = vmatmul.mubr.bf16.gmra.mrb[0].mxu0 %v2877
    %v2961 = vpop.f32.mrb[0].mxu0
    %v2962 = vadd.f32 0.0, %v2961
    %v2963 = vpop.f32.mrb[0].mxu0
    %v2964 = vpop.f32.mrb[0].mxu0
    %v2965 = vadd.f32 0.0, %v2964
    %v2966 = vpop.f32.mrb[0].mxu0
    %2967 = vmatprep.mubr.bf16.mxu0 0
    %2968 = vmatmul.mubr.bf16.gmra.mrb[0].mxu0 %v2878
    %v2969 = vpop.f32.mrb[0].mxu0
    %v2970 = vadd.f32 0.0, %v2969
    %v2971 = vpop.f32.mrb[0].mxu0
    %v2972 = vpop.f32.mrb[0].mxu0
    %v2973 = vadd.f32 0.0, %v2972
    %v2974 = vpop.f32.mrb[0].mxu0
    %2975 = vdwg.mxu0
    %v2976 = vld [vmem:[#allocation9 + $0x20] sm:$0x1]
    %v2977 = vlaneseq
    %v2978 = vshrl.u32 %v2977, 7
    %v2979 = vsub.s32 0, %v2978
    %v2980 = vrot.slane %v2976, %v2979
    %v2981 = vmul.f32 %v2962, %v2980
    %v2982 = vmul.f32 %v2965, %v2980
    %v2983 = vmul.f32 %v2970, %v2980
    %v2984 = vmul.f32 %v2973, %v2980
    %v2985 = vld [vmem:[#allocation9 + $0x21] sm:$0x1]
    %v2986 = vlaneseq
    %v2987 = vshrl.u32 %v2986, 7
    %v2988 = vsub.s32 0, %v2987
    %v2989 = vrot.slane %v2985, %v2988
    %v2990 = vadd.f32 %v2981, %v2989
    %v2991 = vadd.f32 %v2982, %v2989
    %v2992 = vadd.f32 %v2983, %v2989
    %v2993 = vadd.f32 %v2984, %v2989
    %v2994 = vmax.f32 %v2990, 0.0
    %v2995 = vmax.f32 %v2991, 0.0
    %v2996 = vmax.f32 %v2992, 0.0
    %v2997 = vmax.f32 %v2993, 0.0
    %v2998 = vadd.f32 %v2994, %v2502
    %v2999 = vadd.f32 %v2995, %v2503
    %v3000 = vadd.f32 %v2996, %v2504
    %v3001 = vadd.f32 %v2997, %v2505
    %s3002 = smul.u32 4, 16
    %s3003 = smul.u32 %s3002, 10
    %s3004 = sshll.u32 %s3003, 4
    %3005 = dma.done [#allocation5], %s3004
    %v3006 = vld [vmem:[#allocation3] sm:$0xff]
    %v3007 = vld [vmem:[#allocation3 + $0x8] sm:$0xff]
    %v3008 = vld [vmem:[#allocation3 + $0x10] sm:$0xff]
    %v3009 = vld [vmem:[#allocation3 + $0x18] sm:$0xff]
    %v3010 = vld [vmem:[#allocation3 + $0x20] sm:$0xff]
    %v3011 = vld [vmem:[#allocation3 + $0x28] sm:$0xff]
    %v3012 = vld [vmem:[#allocation3 + $0x30] sm:$0xff]
    %v3013 = vld [vmem:[#allocation3 + $0x38] sm:$0xff]
    %v3014 = vld [vmem:[#allocation3 + $0x40] sm:$0xff]
    %v3015 = vld [vmem:[#allocation3 + $0x48] sm:$0xff]
    %v3016 = vld [vmem:[#allocation3 + $0x50] sm:$0xff]
    %v3017 = vld [vmem:[#allocation3 + $0x58] sm:$0xff]
    %v3018 = vld [vmem:[#allocation3 + $0x60] sm:$0xff]
    %v3019 = vld [vmem:[#allocation3 + $0x68] sm:$0xff]
    %v3020 = vld [vmem:[#allocation3 + $0x70] sm:$0xff]
    %v3021 = vld [vmem:[#allocation3 + $0x78] sm:$0xff]
    %v3022 = vld [vmem:[#allocation3 + $0x80] sm:$0xff]
    %v3023 = vld [vmem:[#allocation3 + $0x88] sm:$0xff]
    %v3024 = vld [vmem:[#allocation3 + $0x90] sm:$0xff]
    %v3025 = vld [vmem:[#allocation3 + $0x98] sm:$0xff]
    %v3026 = vld [vmem:[#allocation3 + $0xa0] sm:$0xff]
    %v3027 = vld [vmem:[#allocation3 + $0xa8] sm:$0xff]
    %v3028 = vld [vmem:[#allocation3 + $0xb0] sm:$0xff]
    %v3029 = vld [vmem:[#allocation3 + $0xb8] sm:$0xff]
    %v3030 = vld [vmem:[#allocation3 + $0xc0] sm:$0xff]
    %v3031 = vld [vmem:[#allocation3 + $0xc8] sm:$0xff]
    %v3032 = vld [vmem:[#allocation3 + $0xd0] sm:$0xff]
    %v3033 = vld [vmem:[#allocation3 + $0xd8] sm:$0xff]
    %v3034 = vld [vmem:[#allocation3 + $0xe0] sm:$0xff]
    %v3035 = vld [vmem:[#allocation3 + $0xe8] sm:$0xff]
    %v3036 = vld [vmem:[#allocation3 + $0xf0] sm:$0xff]
    %v3037 = vld [vmem:[#allocation3 + $0xf8] sm:$0xff]
    %v3038 = vld [vmem:[#allocation3 + $0x100] sm:$0xff]
    %v3039 = vld [vmem:[#allocation3 + $0x108] sm:$0xff]
    %v3040 = vld [vmem:[#allocation3 + $0x110] sm:$0xff]
    %v3041 = vld [vmem:[#allocation3 + $0x118] sm:$0xff]
    %v3042 = vld [vmem:[#allocation3 + $0x120] sm:$0xff]
    %v3043 = vld [vmem:[#allocation3 + $0x128] sm:$0xff]
    %v3044 = vld [vmem:[#allocation3 + $0x130] sm:$0xff]
    %v3045 = vld [vmem:[#allocation3 + $0x138] sm:$0xff]
    %v3046 = vld [vmem:[#allocation3 + $0x140] sm:$0xff]
    %v3047 = vld [vmem:[#allocation3 + $0x148] sm:$0xff]
    %v3048 = vld [vmem:[#allocation3 + $0x150] sm:$0xff]
    %v3049 = vld [vmem:[#allocation3 + $0x158] sm:$0xff]
    %v3050 = vld [vmem:[#allocation3 + $0x160] sm:$0xff]
    %v3051 = vld [vmem:[#allocation3 + $0x168] sm:$0xff]
    %v3052 = vld [vmem:[#allocation3 + $0x170] sm:$0xff]
    %v3053 = vld [vmem:[#allocation3 + $0x178] sm:$0xff]
    %v3054 = vld [vmem:[#allocation3 + $0x180] sm:$0xff]
    %v3055 = vld [vmem:[#allocation3 + $0x188] sm:$0xff]
    %v3056 = vld [vmem:[#allocation3 + $0x190] sm:$0xff]
    %v3057 = vld [vmem:[#allocation3 + $0x198] sm:$0xff]
    %v3058 = vld [vmem:[#allocation3 + $0x1a0] sm:$0xff]
    %v3059 = vld [vmem:[#allocation3 + $0x1a8] sm:$0xff]
    %v3060 = vld [vmem:[#allocation3 + $0x1b0] sm:$0xff]
    %v3061 = vld [vmem:[#allocation3 + $0x1b8] sm:$0xff]
    %v3062 = vld [vmem:[#allocation3 + $0x1c0] sm:$0xff]
    %v3063 = vld [vmem:[#allocation3 + $0x1c8] sm:$0xff]
    %v3064 = vld [vmem:[#allocation3 + $0x1d0] sm:$0xff]
    %v3065 = vld [vmem:[#allocation3 + $0x1d8] sm:$0xff]
    %v3066 = vld [vmem:[#allocation3 + $0x1e0] sm:$0xff]
    %v3067 = vld [vmem:[#allocation3 + $0x1e8] sm:$0xff]
    %v3068 = vld [vmem:[#allocation3 + $0x1f0] sm:$0xff]
    %v3069 = vld [vmem:[#allocation3 + $0x1f8] sm:$0xff]
    %v3070 = vld [vmem:[#allocation3 + $0x200] sm:$0xff]
    %v3071 = vld [vmem:[#allocation3 + $0x208] sm:$0xff]
    %v3072 = vld [vmem:[#allocation3 + $0x210] sm:$0xff]
    %v3073 = vld [vmem:[#allocation3 + $0x218] sm:$0xff]
    %v3074 = vld [vmem:[#allocation3 + $0x220] sm:$0xff]
    %v3075 = vld [vmem:[#allocation3 + $0x228] sm:$0xff]
    %v3076 = vld [vmem:[#allocation3 + $0x230] sm:$0xff]
    %v3077 = vld [vmem:[#allocation3 + $0x238] sm:$0xff]
    %v3078 = vld [vmem:[#allocation3 + $0x240] sm:$0xff]
    %v3079 = vld [vmem:[#allocation3 + $0x248] sm:$0xff]
    %v3080 = vld [vmem:[#allocation3 + $0x250] sm:$0xff]
    %v3081 = vld [vmem:[#allocation3 + $0x258] sm:$0xff]
    %v3082 = vld [vmem:[#allocation3 + $0x260] sm:$0xff]
    %v3083 = vld [vmem:[#allocation3 + $0x268] sm:$0xff]
    %v3084 = vld [vmem:[#allocation3 + $0x270] sm:$0xff]
    %v3085 = vld [vmem:[#allocation3 + $0x278] sm:$0xff]
    %v3086 = vpack.c.bf16 %v2999, %v2998
    %v3087 = vpack.c.bf16 %v3001, %v3000
    %v3088 = vld [vmem:[#allocation11] sm:$0xff]
    %v3089 = vld [vmem:[#allocation11 + $0x8] sm:$0x3]
    %v3092 = vlaneseq
    %v3093 = vshrl.u32 %v3092, 7
    %v3094 = vsub.s32 0, %v3093
    %v3095 = vrot.slane %v3088, %v3094
    %v3096 = vlaneseq
    %v3097 = vshrl.u32 %v3096, 7
    %v3098 = vsub.s32 1, %v3097
    %v3099 = vrot.slane %v3088, %v3098
    %v3100 = vlaneseq
    %v3101 = vshrl.u32 %v3100, 7
    %v3102 = vsub.s32 2, %v3101
    %v3103 = vrot.slane %v3088, %v3102
    %v3104 = vlaneseq
    %v3105 = vshrl.u32 %v3104, 7
    %v3106 = vsub.s32 3, %v3105
    %v3107 = vrot.slane %v3088, %v3106
    %v3108 = vlaneseq
    %v3109 = vshrl.u32 %v3108, 7
    %v3110 = vsub.s32 4, %v3109
    %v3111 = vrot.slane %v3088, %v3110
    %v3112 = vlaneseq
    %v3113 = vshrl.u32 %v3112, 7
    %v3114 = vsub.s32 5, %v3113
    %v3115 = vrot.slane %v3088, %v3114
    %v3116 = vlaneseq
    %v3117 = vshrl.u32 %v3116, 7
    %v3118 = vsub.s32 6, %v3117
    %v3119 = vrot.slane %v3088, %v3118
    %v3120 = vlaneseq
    %v3121 = vshrl.u32 %v3120, 7
    %v3122 = vsub.s32 7, %v3121
    %v3123 = vrot.slane %v3088, %v3122
    %v3124 = vlaneseq
    %v3125 = vshrl.u32 %v3124, 7
    %v3126 = vsub.s32 0, %v3125
    %v3127 = vrot.slane %v3089, %v3126
    %v3128 = vlaneseq
    %v3129 = vshrl.u32 %v3128, 7
    %v3130 = vsub.s32 1, %v3129
    %v3131 = vrot.slane %v3089, %v3130
    %3142 = vmatprep.subr.bf16.mxu0 %v3007
    %3143 = vmatpush1.bf16.msra.mxu0 %v3006
    %3144 = vmatprep.subr.bf16.mxu0 %v3017
    %3145 = vmatpush1.bf16.msra.mxu0 %v3016
    %3146 = vmatprep.subr.bf16.mxu0 %v3027
    %3147 = vmatpush1.bf16.msra.mxu0 %v3026
    %3148 = vmatprep.subr.bf16.mxu0 %v3037
    %3149 = vmatpush1.bf16.msra.mxu0 %v3036
    %3150 = vmatprep.subr.bf16.mxu0 %v3047
    %3151 = vmatpush1.bf16.msra.mxu0 %v3046
    %3152 = vmatprep.subr.bf16.mxu0 %v3057
    %3153 = vmatpush1.bf16.msra.mxu0 %v3056
    %3154 = vmatprep.subr.bf16.mxu0 %v3067
    %3155 = vmatpush1.bf16.msra.mxu0 %v3066
    %3156 = vmatprep.subr.bf16.mxu0 %v3077
    %3157 = vmatpush1.bf16.msra.mxu0 %v3076
    %3158 = vmatprep.subr.bf16.mxu0 0
    %3159 = vmatpush1.bf16.msra.mxu0 0
    %3160 = vmatprep.subr.bf16.mxu0 0
    %3161 = vmatpush1.bf16.msra.mxu0 0
    %3162 = vmatprep.subr.bf16.mxu0 0
    %3163 = vmatpush1.bf16.msra.mxu0 0
    %3164 = vmatprep.subr.bf16.mxu0 0
    %3165 = vmatpush1.bf16.msra.mxu0 0
    %3166 = vmatprep.subr.bf16.mxu0 0
    %3167 = vmatpush1.bf16.msra.mxu0 0
    %3168 = vmatprep.subr.bf16.mxu0 0
    %3169 = vmatpush1.bf16.msra.mxu0 0
    %3170 = vmatprep.subr.bf16.mxu0 0
    %3171 = vmatpush1.bf16.msra.mxu0 0
    %3172 = vmatprep.subr.bf16.mxu0 0
    %3173 = vmatpush1.bf16.msra.mxu0 0
    %3174 = vmatprep.mubr.bf16.mxu0 0
    %3175 = vmatmul.mubr.bf16.gmra.mrb[0].mxu0 %v3086
    %v3176 = vpop.f32.mrb[0].mxu0
    %v3177 = vadd.f32 %v3095, %v3176
    %v3178 = vpop.f32.mrb[0].mxu0
    %v3179 = vadd.f32 %v3099, %v3178
    %v3180 = vpop.f32.mrb[0].mxu0
    %v3181 = vadd.f32 %v3095, %v3180
    %v3182 = vpop.f32.mrb[0].mxu0
    %v3183 = vadd.f32 %v3099, %v3182
    %3184 = vmatprep.mubr.bf16.mxu0 0
    %3185 = vmatmul.mubr.bf16.gmra.mrb[0].mxu0 %v3087
    %v3186 = vpop.f32.mrb[0].mxu0
    %v3187 = vadd.f32 %v3095, %v3186
    %v3188 = vpop.f32.mrb[0].mxu0
    %v3189 = vadd.f32 %v3099, %v3188
    %v3190 = vpop.f32.mrb[0].mxu0
    %v3191 = vadd.f32 %v3095, %v3190
    %v3192 = vpop.f32.mrb[0].mxu0
    %v3193 = vadd.f32 %v3099, %v3192
    %3194 = vdwg.mxu0
    %3195 = vmatprep.subr.bf16.mxu0 %v3009
    %3196 = vmatpush1.bf16.msra.mxu0 %v3008
    %3197 = vmatprep.subr.bf16.mxu0 %v3019
    %3198 = vmatpush1.bf16.msra.mxu0 %v3018
    %3199 = vmatprep.subr.bf16.mxu0 %v3029
    %3200 = vmatpush1.bf16.msra.mxu0 %v3028
    %3201 = vmatprep.subr.bf16.mxu0 %v3039
    %3202 = vmatpush1.bf16.msra.mxu0 %v3038
    %3203 = vmatprep.subr.bf16.mxu0 %v3049
    %3204 = vmatpush1.bf16.msra.mxu0 %v3048
    %3205 = vmatprep.subr.bf16.mxu0 %v3059
    %3206 = vmatpush1.bf16.msra.mxu0 %v3058
    %3207 = vmatprep.subr.bf16.mxu0 %v3069
    %3208 = vmatpush1.bf16.msra.mxu0 %v3068
    %3209 = vmatprep.subr.bf16.mxu0 %v3079
    %3210 = vmatpush1.bf16.msra.mxu0 %v3078
    %3211 = vmatprep.subr.bf16.mxu0 0
    %3212 = vmatpush1.bf16.msra.mxu0 0
    %3213 = vmatprep.subr.bf16.mxu0 0
    %3214 = vmatpush1.bf16.msra.mxu0 0
    %3215 = vmatprep.subr.bf16.mxu0 0
    %3216 = vmatpush1.bf16.msra.mxu0 0
    %3217 = vmatprep.subr.bf16.mxu0 0
    %3218 = vmatpush1.bf16.msra.mxu0 0
    %3219 = vmatprep.subr.bf16.mxu0 0
    %3220 = vmatpush1.bf16.msra.mxu0 0
    %3221 = vmatprep.subr.bf16.mxu0 0
    %3222 = vmatpush1.bf16.msra.mxu0 0
    %3223 = vmatprep.subr.bf16.mxu0 0
    %3224 = vmatpush1.bf16.msra.mxu0 0
    %3225 = vmatprep.subr.bf16.mxu0 0
    %3226 = vmatpush1.bf16.msra.mxu0 0
    %3227 = vmatprep.mubr.bf16.mxu0 0
    %3228 = vmatmul.mubr.bf16.gmra.mrb[0].mxu0 %v3086
    %v3229 = vpop.f32.mrb[0].mxu0
    %v3230 = vadd.f32 %v3103, %v3229
    %v3231 = vpop.f32.mrb[0].mxu0
    %v3232 = vadd.f32 %v3107, %v3231
    %v3233 = vpop.f32.mrb[0].mxu0
    %v3234 = vadd.f32 %v3103, %v3233
    %v3235 = vpop.f32.mrb[0].mxu0
    %v3236 = vadd.f32 %v3107, %v3235
    %3237 = vmatprep.mubr.bf16.mxu0 0
    %3238 = vmatmul.mubr.bf16.gmra.mrb[0].mxu0 %v3087
    %v3239 = vpop.f32.mrb[0].mxu0
    %v3240 = vadd.f32 %v3103, %v3239
    %v3241 = vpop.f32.mrb[0].mxu0
    %v3242 = vadd.f32 %v3107, %v3241
    %v3243 = vpop.f32.mrb[0].mxu0
    %v3244 = vadd.f32 %v3103, %v3243
    %v3245 = vpop.f32.mrb[0].mxu0
    %v3246 = vadd.f32 %v3107, %v3245
    %3247 = vdwg.mxu0
    %3248 = vmatprep.subr.bf16.mxu0 %v3011
    %3249 = vmatpush1.bf16.msra.mxu0 %v3010
    %3250 = vmatprep.subr.bf16.mxu0 %v3021
    %3251 = vmatpush1.bf16.msra.mxu0 %v3020
    %3252 = vmatprep.subr.bf16.mxu0 %v3031
    %3253 = vmatpush1.bf16.msra.mxu0 %v3030
    %3254 = vmatprep.subr.bf16.mxu0 %v3041
    %3255 = vmatpush1.bf16.msra.mxu0 %v3040
    %3256 = vmatprep.subr.bf16.mxu0 %v3051
    %3257 = vmatpush1.bf16.msra.mxu0 %v3050
    %3258 = vmatprep.subr.bf16.mxu0 %v3061
    %3259 = vmatpush1.bf16.msra.mxu0 %v3060
    %3260 = vmatprep.subr.bf16.mxu0 %v3071
    %3261 = vmatpush1.bf16.msra.mxu0 %v3070
    %3262 = vmatprep.subr.bf16.mxu0 %v3081
    %3263 = vmatpush1.bf16.msra.mxu0 %v3080
    %3264 = vmatprep.subr.bf16.mxu0 0
    %3265 = vmatpush1.bf16.msra.mxu0 0
    %3266 = vmatprep.subr.bf16.mxu0 0
    %3267 = vmatpush1.bf16.msra.mxu0 0
    %3268 = vmatprep.subr.bf16.mxu0 0
    %3269 = vmatpush1.bf16.msra.mxu0 0
    %3270 = vmatprep.subr.bf16.mxu0 0
    %3271 = vmatpush1.bf16.msra.mxu0 0
    %3272 = vmatprep.subr.bf16.mxu0 0
    %3273 = vmatpush1.bf16.msra.mxu0 0
    %3274 = vmatprep.subr.bf16.mxu0 0
    %3275 = vmatpush1.bf16.msra.mxu0 0
    %3276 = vmatprep.subr.bf16.mxu0 0
    %3277 = vmatpush1.bf16.msra.mxu0 0
    %3278 = vmatprep.subr.bf16.mxu0 0
    %3279 = vmatpush1.bf16.msra.mxu0 0
    %3280 = vmatprep.mubr.bf16.mxu0 0
    %3281 = vmatmul.mubr.bf16.gmra.mrb[0].mxu0 %v3086
    %v3282 = vpop.f32.mrb[0].mxu0
    %v3283 = vadd.f32 %v3111, %v3282
    %v3284 = vpop.f32.mrb[0].mxu0
    %v3285 = vadd.f32 %v3115, %v3284
    %v3286 = vpop.f32.mrb[0].mxu0
    %v3287 = vadd.f32 %v3111, %v3286
    %v3288 = vpop.f32.mrb[0].mxu0
    %v3289 = vadd.f32 %v3115, %v3288
    %3290 = vmatprep.mubr.bf16.mxu0 0
    %3291 = vmatmul.mubr.bf16.gmra.mrb[0].mxu0 %v3087
    %v3292 = vpop.f32.mrb[0].mxu0
    %v3293 = vadd.f32 %v3111, %v3292
    %v3294 = vpop.f32.mrb[0].mxu0
    %v3295 = vadd.f32 %v3115, %v3294
    %v3296 = vpop.f32.mrb[0].mxu0
    %v3297 = vadd.f32 %v3111, %v3296
    %v3298 = vpop.f32.mrb[0].mxu0
    %v3299 = vadd.f32 %v3115, %v3298
    %3300 = vdwg.mxu0
    %3301 = vmatprep.subr.bf16.mxu0 %v3013
    %3302 = vmatpush1.bf16.msra.mxu0 %v3012
    %3303 = vmatprep.subr.bf16.mxu0 %v3023
    %3304 = vmatpush1.bf16.msra.mxu0 %v3022
    %3305 = vmatprep.subr.bf16.mxu0 %v3033
    %3306 = vmatpush1.bf16.msra.mxu0 %v3032
    %3307 = vmatprep.subr.bf16.mxu0 %v3043
    %3308 = vmatpush1.bf16.msra.mxu0 %v3042
    %3309 = vmatprep.subr.bf16.mxu0 %v3053
    %3310 = vmatpush1.bf16.msra.mxu0 %v3052
    %3311 = vmatprep.subr.bf16.mxu0 %v3063
    %3312 = vmatpush1.bf16.msra.mxu0 %v3062
    %3313 = vmatprep.subr.bf16.mxu0 %v3073
    %3314 = vmatpush1.bf16.msra.mxu0 %v3072
    %3315 = vmatprep.subr.bf16.mxu0 %v3083
    %3316 = vmatpush1.bf16.msra.mxu0 %v3082
    %3317 = vmatprep.subr.bf16.mxu0 0
    %3318 = vmatpush1.bf16.msra.mxu0 0
    %3319 = vmatprep.subr.bf16.mxu0 0
    %3320 = vmatpush1.bf16.msra.mxu0 0
    %3321 = vmatprep.subr.bf16.mxu0 0
    %3322 = vmatpush1.bf16.msra.mxu0 0
    %3323 = vmatprep.subr.bf16.mxu0 0
    %3324 = vmatpush1.bf16.msra.mxu0 0
    %3325 = vmatprep.subr.bf16.mxu0 0
    %3326 = vmatpush1.bf16.msra.mxu0 0
    %3327 = vmatprep.subr.bf16.mxu0 0
    %3328 = vmatpush1.bf16.msra.mxu0 0
    %3329 = vmatprep.subr.bf16.mxu0 0
    %3330 = vmatpush1.bf16.msra.mxu0 0
    %3331 = vmatprep.subr.bf16.mxu0 0
    %3332 = vmatpush1.bf16.msra.mxu0 0
    %3333 = vmatprep.mubr.bf16.mxu0 0
    %3334 = vmatmul.mubr.bf16.gmra.mrb[0].mxu0 %v3086
    %v3335 = vpop.f32.mrb[0].mxu0
    %v3336 = vadd.f32 %v3119, %v3335
    %v3337 = vpop.f32.mrb[0].mxu0
    %v3338 = vadd.f32 %v3123, %v3337
    %v3339 = vpop.f32.mrb[0].mxu0
    %v3340 = vadd.f32 %v3119, %v3339
    %v3341 = vpop.f32.mrb[0].mxu0
    %v3342 = vadd.f32 %v3123, %v3341
    %3343 = vmatprep.mubr.bf16.mxu0 0
    %3344 = vmatmul.mubr.bf16.gmra.mrb[0].mxu0 %v3087
    %v3345 = vpop.f32.mrb[0].mxu0
    %v3346 = vadd.f32 %v3119, %v3345
    %v3347 = vpop.f32.mrb[0].mxu0
    %v3348 = vadd.f32 %v3123, %v3347
    %v3349 = vpop.f32.mrb[0].mxu0
    %v3350 = vadd.f32 %v3119, %v3349
    %v3351 = vpop.f32.mrb[0].mxu0
    %v3352 = vadd.f32 %v3123, %v3351
    %3353 = vdwg.mxu0
    %3354 = vmatprep.subr.bf16.mxu0 %v3015
    %3355 = vmatpush1.bf16.msra.mxu0 %v3014
    %3356 = vmatprep.subr.bf16.mxu0 %v3025
    %3357 = vmatpush1.bf16.msra.mxu0 %v3024
    %3358 = vmatprep.subr.bf16.mxu0 %v3035
    %3359 = vmatpush1.bf16.msra.mxu0 %v3034
    %3360 = vmatprep.subr.bf16.mxu0 %v3045
    %3361 = vmatpush1.bf16.msra.mxu0 %v3044
    %3362 = vmatprep.subr.bf16.mxu0 %v3055
    %3363 = vmatpush1.bf16.msra.mxu0 %v3054
    %3364 = vmatprep.subr.bf16.mxu0 %v3065
    %3365 = vmatpush1.bf16.msra.mxu0 %v3064
    %3366 = vmatprep.subr.bf16.mxu0 %v3075
    %3367 = vmatpush1.bf16.msra.mxu0 %v3074
    %3368 = vmatprep.subr.bf16.mxu0 %v3085
    %3369 = vmatpush1.bf16.msra.mxu0 %v3084
    %3370 = vmatprep.subr.bf16.mxu0 0
    %3371 = vmatpush1.bf16.msra.mxu0 0
    %3372 = vmatprep.subr.bf16.mxu0 0
    %3373 = vmatpush1.bf16.msra.mxu0 0
    %3374 = vmatprep.subr.bf16.mxu0 0
    %3375 = vmatpush1.bf16.msra.mxu0 0
    %3376 = vmatprep.subr.bf16.mxu0 0
    %3377 = vmatpush1.bf16.msra.mxu0 0
    %3378 = vmatprep.subr.bf16.mxu0 0
    %3379 = vmatpush1.bf16.msra.mxu0 0
    %3380 = vmatprep.subr.bf16.mxu0 0
    %3381 = vmatpush1.bf16.msra.mxu0 0
    %3382 = vmatprep.subr.bf16.mxu0 0
    %3383 = vmatpush1.bf16.msra.mxu0 0
    %3384 = vmatprep.subr.bf16.mxu0 0
    %3385 = vmatpush1.bf16.msra.mxu0 0
    %3386 = vmatprep.mubr.bf16.mxu0 0
    %3387 = vmatmul.mubr.bf16.gmra.mrb[0].mxu0 %v3086
    %v3388 = vpop.f32.mrb[0].mxu0
    %v3389 = vadd.f32 %v3127, %v3388
    %v3390 = vpop.f32.mrb[0].mxu0
    %v3391 = vadd.f32 %v3131, %v3390
    %v3392 = vpop.f32.mrb[0].mxu0
    %v3393 = vadd.f32 %v3127, %v3392
    %v3394 = vpop.f32.mrb[0].mxu0
    %v3395 = vadd.f32 %v3131, %v3394
    %3396 = vmatprep.mubr.bf16.mxu0 0
    %3397 = vmatmul.mubr.bf16.gmra.mrb[0].mxu0 %v3087
    %v3398 = vpop.f32.mrb[0].mxu0
    %v3399 = vadd.f32 %v3127, %v3398
    %v3400 = vpop.f32.mrb[0].mxu0
    %v3401 = vadd.f32 %v3131, %v3400
    %v3402 = vpop.f32.mrb[0].mxu0
    %v3403 = vadd.f32 %v3127, %v3402
    %v3404 = vpop.f32.mrb[0].mxu0
    %v3405 = vadd.f32 %v3131, %v3404
    %3406 = vdwg.mxu0
    %v3407 = vadd.f32 %v3177, %v3181
    %v3408 = vrot.slane %v3407, 4
    %v3409 = vadd.f32 %v3407, %v3408
    %v3410 = vrot.slane %v3409, 2
    %v3411 = vadd.f32 %v3409, %v3410
    %v3412 = vrot.slane %v3411, 1
    %v3413 = vadd.f32 %v3411, %v3412
    %v3414 = vadd.f32 %v3179, %v3183
    %v3415 = vrot.slane %v3414, 4
    %v3416 = vadd.f32 %v3414, %v3415
    %v3417 = vrot.slane %v3416, 2
    %v3418 = vadd.f32 %v3416, %v3417
    %v3419 = vrot.slane %v3418, 1
    %v3420 = vadd.f32 %v3418, %v3419
    %v3421 = vadd.f32 %v3230, %v3234
    %v3422 = vrot.slane %v3421, 4
    %v3423 = vadd.f32 %v3421, %v3422
    %v3424 = vrot.slane %v3423, 2
    %v3425 = vadd.f32 %v3423, %v3424
    %v3426 = vrot.slane %v3425, 1
    %v3427 = vadd.f32 %v3425, %v3426
    %v3428 = vadd.f32 %v3232, %v3236
    %v3429 = vrot.slane %v3428, 4
    %v3430 = vadd.f32 %v3428, %v3429
    %v3431 = vrot.slane %v3430, 2
    %v3432 = vadd.f32 %v3430, %v3431
    %v3433 = vrot.slane %v3432, 1
    %v3434 = vadd.f32 %v3432, %v3433
    %v3435 = vadd.f32 %v3283, %v3287
    %v3436 = vrot.slane %v3435, 4
    %v3437 = vadd.f32 %v3435, %v3436
    %v3438 = vrot.slane %v3437, 2
    %v3439 = vadd.f32 %v3437, %v3438
    %v3440 = vrot.slane %v3439, 1
    %v3441 = vadd.f32 %v3439, %v3440
    %v3442 = vadd.f32 %v3285, %v3289
    %v3443 = vrot.slane %v3442, 4
    %v3444 = vadd.f32 %v3442, %v3443
    %v3445 = vrot.slane %v3444, 2
    %v3446 = vadd.f32 %v3444, %v3445
    %v3447 = vrot.slane %v3446, 1
    %v3448 = vadd.f32 %v3446, %v3447
    %v3449 = vadd.f32 %v3336, %v3340
    %v3450 = vrot.slane %v3449, 4
    %v3451 = vadd.f32 %v3449, %v3450
    %v3452 = vrot.slane %v3451, 2
    %v3453 = vadd.f32 %v3451, %v3452
    %v3454 = vrot.slane %v3453, 1
    %v3455 = vadd.f32 %v3453, %v3454
    %v3456 = vadd.f32 %v3338, %v3342
    %v3457 = vrot.slane %v3456, 4
    %v3458 = vadd.f32 %v3456, %v3457
    %v3459 = vrot.slane %v3458, 2
    %v3460 = vadd.f32 %v3458, %v3459
    %v3461 = vrot.slane %v3460, 1
    %v3462 = vadd.f32 %v3460, %v3461
    %v3463 = vadd.f32 %v3389, %v3393
    %v3464 = vrot.slane %v3463, 4
    %v3465 = vadd.f32 %v3463, %v3464
    %v3466 = vrot.slane %v3465, 2
    %v3467 = vadd.f32 %v3465, %v3466
    %v3468 = vrot.slane %v3467, 1
    %v3469 = vadd.f32 %v3467, %v3468
    %v3470 = vadd.f32 %v3391, %v3395
    %v3471 = vrot.slane %v3470, 4
    %v3472 = vadd.f32 %v3470, %v3471
    %v3473 = vrot.slane %v3472, 2
    %v3474 = vadd.f32 %v3472, %v3473
    %v3475 = vrot.slane %v3474, 1
    %v3476 = vadd.f32 %v3474, %v3475
    %v3477 = vadd.f32 %v3187, %v3191
    %v3478 = vrot.slane %v3477, 4
    %v3479 = vadd.f32 %v3477, %v3478
    %v3480 = vrot.slane %v3479, 2
    %v3481 = vadd.f32 %v3479, %v3480
    %v3482 = vrot.slane %v3481, 1
    %v3483 = vadd.f32 %v3481, %v3482
    %v3484 = vadd.f32 %v3189, %v3193
    %v3485 = vrot.slane %v3484, 4
    %v3486 = vadd.f32 %v3484, %v3485
    %v3487 = vrot.slane %v3486, 2
    %v3488 = vadd.f32 %v3486, %v3487
    %v3489 = vrot.slane %v3488, 1
    %v3490 = vadd.f32 %v3488, %v3489
    %v3491 = vadd.f32 %v3240, %v3244
    %v3492 = vrot.slane %v3491, 4
    %v3493 = vadd.f32 %v3491, %v3492
    %v3494 = vrot.slane %v3493, 2
    %v3495 = vadd.f32 %v3493, %v3494
    %v3496 = vrot.slane %v3495, 1
    %v3497 = vadd.f32 %v3495, %v3496
    %v3498 = vadd.f32 %v3242, %v3246
    %v3499 = vrot.slane %v3498, 4
    %v3500 = vadd.f32 %v3498, %v3499
    %v3501 = vrot.slane %v3500, 2
    %v3502 = vadd.f32 %v3500, %v3501
    %v3503 = vrot.slane %v3502, 1
    %v3504 = vadd.f32 %v3502, %v3503
    %v3505 = vadd.f32 %v3293, %v3297
    %v3506 = vrot.slane %v3505, 4
    %v3507 = vadd.f32 %v3505, %v3506
    %v3508 = vrot.slane %v3507, 2
    %v3509 = vadd.f32 %v3507, %v3508
    %v3510 = vrot.slane %v3509, 1
    %v3511 = vadd.f32 %v3509, %v3510
    %v3512 = vadd.f32 %v3295, %v3299
    %v3513 = vrot.slane %v3512, 4
    %v3514 = vadd.f32 %v3512, %v3513
    %v3515 = vrot.slane %v3514, 2
    %v3516 = vadd.f32 %v3514, %v3515
    %v3517 = vrot.slane %v3516, 1
    %v3518 = vadd.f32 %v3516, %v3517
    %v3519 = vadd.f32 %v3346, %v3350
    %v3520 = vrot.slane %v3519, 4
    %v3521 = vadd.f32 %v3519, %v3520
    %v3522 = vrot.slane %v3521, 2
    %v3523 = vadd.f32 %v3521, %v3522
    %v3524 = vrot.slane %v3523, 1
    %v3525 = vadd.f32 %v3523, %v3524
    %v3526 = vadd.f32 %v3348, %v3352
    %v3527 = vrot.slane %v3526, 4
    %v3528 = vadd.f32 %v3526, %v3527
    %v3529 = vrot.slane %v3528, 2
    %v3530 = vadd.f32 %v3528, %v3529
    %v3531 = vrot.slane %v3530, 1
    %v3532 = vadd.f32 %v3530, %v3531
    %v3533 = vadd.f32 %v3399, %v3403
    %v3534 = vrot.slane %v3533, 4
    %v3535 = vadd.f32 %v3533, %v3534
    %v3536 = vrot.slane %v3535, 2
    %v3537 = vadd.f32 %v3535, %v3536
    %v3538 = vrot.slane %v3537, 1
    %v3539 = vadd.f32 %v3537, %v3538
    %v3540 = vadd.f32 %v3401, %v3405
    %v3541 = vrot.slane %v3540, 4
    %v3542 = vadd.f32 %v3540, %v3541
    %v3543 = vrot.slane %v3542, 2
    %v3544 = vadd.f32 %v3542, %v3543
    %v3545 = vrot.slane %v3544, 1
    %v3546 = vadd.f32 %v3544, %v3545
    %vm3547 = vcmask 1040384
    %v3548 = vsel %vm3547, %v3413, %v3483
    %v3549 = vsel %vm3547, %v3420, %v3490
    %v3550 = vsel %vm3547, %v3427, %v3497
    %v3551 = vsel %vm3547, %v3434, %v3504
    %v3552 = vsel %vm3547, %v3441, %v3511
    %v3553 = vsel %vm3547, %v3448, %v3518
    %v3554 = vsel %vm3547, %v3455, %v3525
    %v3555 = vsel %vm3547, %v3462, %v3532
    %v3556 = vsel %vm3547, %v3469, %v3539
    %v3557 = vsel %vm3547, %v3476, %v3546
    %v3558 = vmul.f32 %v3548, 0.020408163
    %v3559 = vmul.f32 %v3549, 0.020408163
    %v3560 = vmul.f32 %v3550, 0.020408163
    %v3561 = vmul.f32 %v3551, 0.020408163
    %v3562 = vmul.f32 %v3552, 0.020408163
    %v3563 = vmul.f32 %v3553, 0.020408163
    %v3564 = vmul.f32 %v3554, 0.020408163
    %v3565 = vmul.f32 %v3555, 0.020408163
    %v3566 = vmul.f32 %v3556, 0.020408163
    %v3567 = vmul.f32 %v3557, 0.020408163
    %s3568 = smul.u32 4, 160
    %s3569 = smul.u32 %s3568, 8
    %s3570 = sshll.u32 %s3569, 4
    %3571 = dma.done %s113, %s3570
    %v3572 = vld [vmem:[#allocation4] sm:$0xff]
    %v3573 = vld [vmem:[#allocation4 + $0x8] sm:$0xff]
    %v3574 = vld [vmem:[#allocation4 + $0x10] sm:$0xff]
    %v3575 = vld [vmem:[#allocation4 + $0x18] sm:$0xff]
    %v3576 = vld [vmem:[#allocation4 + $0x20] sm:$0xff]
    %v3577 = vld [vmem:[#allocation4 + $0x28] sm:$0xff]
    %v3578 = vld [vmem:[#allocation4 + $0x30] sm:$0xff]
    %v3579 = vld [vmem:[#allocation4 + $0x38] sm:$0xff]
    %v3580 = vld [vmem:[#allocation4 + $0x40] sm:$0xff]
    %v3581 = vld [vmem:[#allocation4 + $0x48] sm:$0xff]
    %v3582 = vld [vmem:[#allocation4 + $0x50] sm:$0xff]
    %v3583 = vld [vmem:[#allocation4 + $0x58] sm:$0xff]
    %v3584 = vld [vmem:[#allocation4 + $0x60] sm:$0xff]
    %v3585 = vld [vmem:[#allocation4 + $0x68] sm:$0xff]
    %v3586 = vld [vmem:[#allocation4 + $0x70] sm:$0xff]
    %v3587 = vld [vmem:[#allocation4 + $0x78] sm:$0xff]
    %v3588 = vld [vmem:[#allocation4 + $0x80] sm:$0xff]
    %v3589 = vld [vmem:[#allocation4 + $0x88] sm:$0xff]
    %v3590 = vld [vmem:[#allocation4 + $0x90] sm:$0xff]
    %v3591 = vld [vmem:[#allocation4 + $0x98] sm:$0xff]
    %v3592 = vld [vmem:[#allocation4 + $0xa0] sm:$0xff]
    %v3593 = vld [vmem:[#allocation4 + $0xa8] sm:$0xff]
    %v3594 = vld [vmem:[#allocation4 + $0xb0] sm:$0xff]
    %v3595 = vld [vmem:[#allocation4 + $0xb8] sm:$0xff]
    %v3596 = vld [vmem:[#allocation4 + $0xc0] sm:$0xff]
    %v3597 = vld [vmem:[#allocation4 + $0xc8] sm:$0xff]
    %v3598 = vld [vmem:[#allocation4 + $0xd0] sm:$0xff]
    %v3599 = vld [vmem:[#allocation4 + $0xd8] sm:$0xff]
    %v3600 = vld [vmem:[#allocation4 + $0xe0] sm:$0xff]
    %v3601 = vld [vmem:[#allocation4 + $0xe8] sm:$0xff]
    %v3602 = vld [vmem:[#allocation4 + $0xf0] sm:$0xff]
    %v3603 = vld [vmem:[#allocation4 + $0xf8] sm:$0xff]
    %v3604 = vld [vmem:[#allocation4 + $0x100] sm:$0xff]
    %v3605 = vld [vmem:[#allocation4 + $0x108] sm:$0xff]
    %v3606 = vld [vmem:[#allocation4 + $0x110] sm:$0xff]
    %v3607 = vld [vmem:[#allocation4 + $0x118] sm:$0xff]
    %v3608 = vld [vmem:[#allocation4 + $0x120] sm:$0xff]
    %v3609 = vld [vmem:[#allocation4 + $0x128] sm:$0xff]
    %v3610 = vld [vmem:[#allocation4 + $0x130] sm:$0xff]
    %v3611 = vld [vmem:[#allocation4 + $0x138] sm:$0xff]
    %v3612 = vld [vmem:[#allocation4 + $0x140] sm:$0xff]
    %v3613 = vld [vmem:[#allocation4 + $0x148] sm:$0xff]
    %v3614 = vld [vmem:[#allocation4 + $0x150] sm:$0xff]
    %v3615 = vld [vmem:[#allocation4 + $0x158] sm:$0xff]
    %v3616 = vld [vmem:[#allocation4 + $0x160] sm:$0xff]
    %v3617 = vld [vmem:[#allocation4 + $0x168] sm:$0xff]
    %v3618 = vld [vmem:[#allocation4 + $0x170] sm:$0xff]
    %v3619 = vld [vmem:[#allocation4 + $0x178] sm:$0xff]
    %v3620 = vld [vmem:[#allocation4 + $0x180] sm:$0xff]
    %v3621 = vld [vmem:[#allocation4 + $0x188] sm:$0xff]
    %v3622 = vld [vmem:[#allocation4 + $0x190] sm:$0xff]
    %v3623 = vld [vmem:[#allocation4 + $0x198] sm:$0xff]
    %v3624 = vld [vmem:[#allocation4 + $0x1a0] sm:$0xff]
    %v3625 = vld [vmem:[#allocation4 + $0x1a8] sm:$0xff]
    %v3626 = vld [vmem:[#allocation4 + $0x1b0] sm:$0xff]
    %v3627 = vld [vmem:[#allocation4 + $0x1b8] sm:$0xff]
    %v3628 = vld [vmem:[#allocation4 + $0x1c0] sm:$0xff]
    %v3629 = vld [vmem:[#allocation4 + $0x1c8] sm:$0xff]
    %v3630 = vld [vmem:[#allocation4 + $0x1d0] sm:$0xff]
    %v3631 = vld [vmem:[#allocation4 + $0x1d8] sm:$0xff]
    %v3632 = vld [vmem:[#allocation4 + $0x1e0] sm:$0xff]
    %v3633 = vld [vmem:[#allocation4 + $0x1e8] sm:$0xff]
    %v3634 = vld [vmem:[#allocation4 + $0x1f0] sm:$0xff]
    %v3635 = vld [vmem:[#allocation4 + $0x1f8] sm:$0xff]
    %v3636 = vld [vmem:[#allocation4 + $0x200] sm:$0xff]
    %v3637 = vld [vmem:[#allocation4 + $0x208] sm:$0xff]
    %v3638 = vld [vmem:[#allocation4 + $0x210] sm:$0xff]
    %v3639 = vld [vmem:[#allocation4 + $0x218] sm:$0xff]
    %v3640 = vld [vmem:[#allocation4 + $0x220] sm:$0xff]
    %v3641 = vld [vmem:[#allocation4 + $0x228] sm:$0xff]
    %v3642 = vld [vmem:[#allocation4 + $0x230] sm:$0xff]
    %v3643 = vld [vmem:[#allocation4 + $0x238] sm:$0xff]
    %v3644 = vld [vmem:[#allocation4 + $0x240] sm:$0xff]
    %v3645 = vld [vmem:[#allocation4 + $0x248] sm:$0xff]
    %v3646 = vld [vmem:[#allocation4 + $0x250] sm:$0xff]
    %v3647 = vld [vmem:[#allocation4 + $0x258] sm:$0xff]
    %v3648 = vld [vmem:[#allocation4 + $0x260] sm:$0xff]
    %v3649 = vld [vmem:[#allocation4 + $0x268] sm:$0xff]
    %v3650 = vld [vmem:[#allocation4 + $0x270] sm:$0xff]
    %v3651 = vld [vmem:[#allocation4 + $0x278] sm:$0xff]
    %v3652 = vld [vmem:[#allocation4 + $0x280] sm:$0xff]
    %v3653 = vld [vmem:[#allocation4 + $0x288] sm:$0xff]
    %v3654 = vld [vmem:[#allocation4 + $0x290] sm:$0xff]
    %v3655 = vld [vmem:[#allocation4 + $0x298] sm:$0xff]
    %v3656 = vld [vmem:[#allocation4 + $0x2a0] sm:$0xff]
    %v3657 = vld [vmem:[#allocation4 + $0x2a8] sm:$0xff]
    %v3658 = vld [vmem:[#allocation4 + $0x2b0] sm:$0xff]
    %v3659 = vld [vmem:[#allocation4 + $0x2b8] sm:$0xff]
    %v3660 = vld [vmem:[#allocation4 + $0x2c0] sm:$0xff]
    %v3661 = vld [vmem:[#allocation4 + $0x2c8] sm:$0xff]
    %v3662 = vld [vmem:[#allocation4 + $0x2d0] sm:$0xff]
    %v3663 = vld [vmem:[#allocation4 + $0x2d8] sm:$0xff]
    %v3664 = vld [vmem:[#allocation4 + $0x2e0] sm:$0xff]
    %v3665 = vld [vmem:[#allocation4 + $0x2e8] sm:$0xff]
    %v3666 = vld [vmem:[#allocation4 + $0x2f0] sm:$0xff]
    %v3667 = vld [vmem:[#allocation4 + $0x2f8] sm:$0xff]
    %v3668 = vld [vmem:[#allocation4 + $0x300] sm:$0xff]
    %v3669 = vld [vmem:[#allocation4 + $0x308] sm:$0xff]
    %v3670 = vld [vmem:[#allocation4 + $0x310] sm:$0xff]
    %v3671 = vld [vmem:[#allocation4 + $0x318] sm:$0xff]
    %v3672 = vld [vmem:[#allocation4 + $0x320] sm:$0xff]
    %v3673 = vld [vmem:[#allocation4 + $0x328] sm:$0xff]
    %v3674 = vld [vmem:[#allocation4 + $0x330] sm:$0xff]
    %v3675 = vld [vmem:[#allocation4 + $0x338] sm:$0xff]
    %v3676 = vld [vmem:[#allocation4 + $0x340] sm:$0xff]
    %v3677 = vld [vmem:[#allocation4 + $0x348] sm:$0xff]
    %v3678 = vld [vmem:[#allocation4 + $0x350] sm:$0xff]
    %v3679 = vld [vmem:[#allocation4 + $0x358] sm:$0xff]
    %v3680 = vld [vmem:[#allocation4 + $0x360] sm:$0xff]
    %v3681 = vld [vmem:[#allocation4 + $0x368] sm:$0xff]
    %v3682 = vld [vmem:[#allocation4 + $0x370] sm:$0xff]
    %v3683 = vld [vmem:[#allocation4 + $0x378] sm:$0xff]
    %v3684 = vld [vmem:[#allocation4 + $0x380] sm:$0xff]
    %v3685 = vld [vmem:[#allocation4 + $0x388] sm:$0xff]
    %v3686 = vld [vmem:[#allocation4 + $0x390] sm:$0xff]
    %v3687 = vld [vmem:[#allocation4 + $0x398] sm:$0xff]
    %v3688 = vld [vmem:[#allocation4 + $0x3a0] sm:$0xff]
    %v3689 = vld [vmem:[#allocation4 + $0x3a8] sm:$0xff]
    %v3690 = vld [vmem:[#allocation4 + $0x3b0] sm:$0xff]
    %v3691 = vld [vmem:[#allocation4 + $0x3b8] sm:$0xff]
    %v3692 = vld [vmem:[#allocation4 + $0x3c0] sm:$0xff]
    %v3693 = vld [vmem:[#allocation4 + $0x3c8] sm:$0xff]
    %v3694 = vld [vmem:[#allocation4 + $0x3d0] sm:$0xff]
    %v3695 = vld [vmem:[#allocation4 + $0x3d8] sm:$0xff]
    %v3696 = vld [vmem:[#allocation4 + $0x3e0] sm:$0xff]
    %v3697 = vld [vmem:[#allocation4 + $0x3e8] sm:$0xff]
    %v3698 = vld [vmem:[#allocation4 + $0x3f0] sm:$0xff]
    %v3699 = vld [vmem:[#allocation4 + $0x3f8] sm:$0xff]
    %v3700 = vld [vmem:[#allocation4 + $0x400] sm:$0xff]
    %v3701 = vld [vmem:[#allocation4 + $0x408] sm:$0xff]
    %v3702 = vld [vmem:[#allocation4 + $0x410] sm:$0xff]
    %v3703 = vld [vmem:[#allocation4 + $0x418] sm:$0xff]
    %v3704 = vld [vmem:[#allocation4 + $0x420] sm:$0xff]
    %v3705 = vld [vmem:[#allocation4 + $0x428] sm:$0xff]
    %v3706 = vld [vmem:[#allocation4 + $0x430] sm:$0xff]
    %v3707 = vld [vmem:[#allocation4 + $0x438] sm:$0xff]
    %v3708 = vld [vmem:[#allocation4 + $0x440] sm:$0xff]
    %v3709 = vld [vmem:[#allocation4 + $0x448] sm:$0xff]
    %v3710 = vld [vmem:[#allocation4 + $0x450] sm:$0xff]
    %v3711 = vld [vmem:[#allocation4 + $0x458] sm:$0xff]
    %v3712 = vld [vmem:[#allocation4 + $0x460] sm:$0xff]
    %v3713 = vld [vmem:[#allocation4 + $0x468] sm:$0xff]
    %v3714 = vld [vmem:[#allocation4 + $0x470] sm:$0xff]
    %v3715 = vld [vmem:[#allocation4 + $0x478] sm:$0xff]
    %v3716 = vld [vmem:[#allocation4 + $0x480] sm:$0xff]
    %v3717 = vld [vmem:[#allocation4 + $0x488] sm:$0xff]
    %v3718 = vld [vmem:[#allocation4 + $0x490] sm:$0xff]
    %v3719 = vld [vmem:[#allocation4 + $0x498] sm:$0xff]
    %v3720 = vld [vmem:[#allocation4 + $0x4a0] sm:$0xff]
    %v3721 = vld [vmem:[#allocation4 + $0x4a8] sm:$0xff]
    %v3722 = vld [vmem:[#allocation4 + $0x4b0] sm:$0xff]
    %v3723 = vld [vmem:[#allocation4 + $0x4b8] sm:$0xff]
    %v3724 = vld [vmem:[#allocation4 + $0x4c0] sm:$0xff]
    %v3725 = vld [vmem:[#allocation4 + $0x4c8] sm:$0xff]
    %v3726 = vld [vmem:[#allocation4 + $0x4d0] sm:$0xff]
    %v3727 = vld [vmem:[#allocation4 + $0x4d8] sm:$0xff]
    %v3728 = vld [vmem:[#allocation4 + $0x4e0] sm:$0xff]
    %v3729 = vld [vmem:[#allocation4 + $0x4e8] sm:$0xff]
    %v3730 = vld [vmem:[#allocation4 + $0x4f0] sm:$0xff]
    %v3731 = vld [vmem:[#allocation4 + $0x4f8] sm:$0xff]
    %v3732 = vld [vmem:[#allocation4 + $0x500] sm:$0xff]
    %v3733 = vld [vmem:[#allocation4 + $0x508] sm:$0xff]
    %v3734 = vld [vmem:[#allocation4 + $0x510] sm:$0xff]
    %v3735 = vld [vmem:[#allocation4 + $0x518] sm:$0xff]
    %v3736 = vld [vmem:[#allocation4 + $0x520] sm:$0xff]
    %v3737 = vld [vmem:[#allocation4 + $0x528] sm:$0xff]
    %v3738 = vld [vmem:[#allocation4 + $0x530] sm:$0xff]
    %v3739 = vld [vmem:[#allocation4 + $0x538] sm:$0xff]
    %v3740 = vld [vmem:[#allocation4 + $0x540] sm:$0xff]
    %v3741 = vld [vmem:[#allocation4 + $0x548] sm:$0xff]
    %v3742 = vld [vmem:[#allocation4 + $0x550] sm:$0xff]
    %v3743 = vld [vmem:[#allocation4 + $0x558] sm:$0xff]
    %v3744 = vld [vmem:[#allocation4 + $0x560] sm:$0xff]
    %v3745 = vld [vmem:[#allocation4 + $0x568] sm:$0xff]
    %v3746 = vld [vmem:[#allocation4 + $0x570] sm:$0xff]
    %v3747 = vld [vmem:[#allocation4 + $0x578] sm:$0xff]
    %v3748 = vld [vmem:[#allocation4 + $0x580] sm:$0xff]
    %v3749 = vld [vmem:[#allocation4 + $0x588] sm:$0xff]
    %v3750 = vld [vmem:[#allocation4 + $0x590] sm:$0xff]
    %v3751 = vld [vmem:[#allocation4 + $0x598] sm:$0xff]
    %v3752 = vld [vmem:[#allocation4 + $0x5a0] sm:$0xff]
    %v3753 = vld [vmem:[#allocation4 + $0x5a8] sm:$0xff]
    %v3754 = vld [vmem:[#allocation4 + $0x5b0] sm:$0xff]
    %v3755 = vld [vmem:[#allocation4 + $0x5b8] sm:$0xff]
    %v3756 = vld [vmem:[#allocation4 + $0x5c0] sm:$0xff]
    %v3757 = vld [vmem:[#allocation4 + $0x5c8] sm:$0xff]
    %v3758 = vld [vmem:[#allocation4 + $0x5d0] sm:$0xff]
    %v3759 = vld [vmem:[#allocation4 + $0x5d8] sm:$0xff]
    %v3760 = vld [vmem:[#allocation4 + $0x5e0] sm:$0xff]
    %v3761 = vld [vmem:[#allocation4 + $0x5e8] sm:$0xff]
    %v3762 = vld [vmem:[#allocation4 + $0x5f0] sm:$0xff]
    %v3763 = vld [vmem:[#allocation4 + $0x5f8] sm:$0xff]
    %v3764 = vld [vmem:[#allocation4 + $0x600] sm:$0xff]
    %v3765 = vld [vmem:[#allocation4 + $0x608] sm:$0xff]
    %v3766 = vld [vmem:[#allocation4 + $0x610] sm:$0xff]
    %v3767 = vld [vmem:[#allocation4 + $0x618] sm:$0xff]
    %v3768 = vld [vmem:[#allocation4 + $0x620] sm:$0xff]
    %v3769 = vld [vmem:[#allocation4 + $0x628] sm:$0xff]
    %v3770 = vld [vmem:[#allocation4 + $0x630] sm:$0xff]
    %v3771 = vld [vmem:[#allocation4 + $0x638] sm:$0xff]
    %v3772 = vld [vmem:[#allocation4 + $0x640] sm:$0xff]
    %v3773 = vld [vmem:[#allocation4 + $0x648] sm:$0xff]
    %v3774 = vld [vmem:[#allocation4 + $0x650] sm:$0xff]
    %v3775 = vld [vmem:[#allocation4 + $0x658] sm:$0xff]
    %v3776 = vld [vmem:[#allocation4 + $0x660] sm:$0xff]
    %v3777 = vld [vmem:[#allocation4 + $0x668] sm:$0xff]
    %v3778 = vld [vmem:[#allocation4 + $0x670] sm:$0xff]
    %v3779 = vld [vmem:[#allocation4 + $0x678] sm:$0xff]
    %v3780 = vld [vmem:[#allocation4 + $0x680] sm:$0xff]
    %v3781 = vld [vmem:[#allocation4 + $0x688] sm:$0xff]
    %v3782 = vld [vmem:[#allocation4 + $0x690] sm:$0xff]
    %v3783 = vld [vmem:[#allocation4 + $0x698] sm:$0xff]
    %v3784 = vld [vmem:[#allocation4 + $0x6a0] sm:$0xff]
    %v3785 = vld [vmem:[#allocation4 + $0x6a8] sm:$0xff]
    %v3786 = vld [vmem:[#allocation4 + $0x6b0] sm:$0xff]
    %v3787 = vld [vmem:[#allocation4 + $0x6b8] sm:$0xff]
    %v3788 = vld [vmem:[#allocation4 + $0x6c0] sm:$0xff]
    %v3789 = vld [vmem:[#allocation4 + $0x6c8] sm:$0xff]
    %v3790 = vld [vmem:[#allocation4 + $0x6d0] sm:$0xff]
    %v3791 = vld [vmem:[#allocation4 + $0x6d8] sm:$0xff]
    %v3792 = vld [vmem:[#allocation4 + $0x6e0] sm:$0xff]
    %v3793 = vld [vmem:[#allocation4 + $0x6e8] sm:$0xff]
    %v3794 = vld [vmem:[#allocation4 + $0x6f0] sm:$0xff]
    %v3795 = vld [vmem:[#allocation4 + $0x6f8] sm:$0xff]
    %v3796 = vld [vmem:[#allocation4 + $0x700] sm:$0xff]
    %v3797 = vld [vmem:[#allocation4 + $0x708] sm:$0xff]
    %v3798 = vld [vmem:[#allocation4 + $0x710] sm:$0xff]
    %v3799 = vld [vmem:[#allocation4 + $0x718] sm:$0xff]
    %v3800 = vld [vmem:[#allocation4 + $0x720] sm:$0xff]
    %v3801 = vld [vmem:[#allocation4 + $0x728] sm:$0xff]
    %v3802 = vld [vmem:[#allocation4 + $0x730] sm:$0xff]
    %v3803 = vld [vmem:[#allocation4 + $0x738] sm:$0xff]
    %v3804 = vld [vmem:[#allocation4 + $0x740] sm:$0xff]
    %v3805 = vld [vmem:[#allocation4 + $0x748] sm:$0xff]
    %v3806 = vld [vmem:[#allocation4 + $0x750] sm:$0xff]
    %v3807 = vld [vmem:[#allocation4 + $0x758] sm:$0xff]
    %v3808 = vld [vmem:[#allocation4 + $0x760] sm:$0xff]
    %v3809 = vld [vmem:[#allocation4 + $0x768] sm:$0xff]
    %v3810 = vld [vmem:[#allocation4 + $0x770] sm:$0xff]
    %v3811 = vld [vmem:[#allocation4 + $0x778] sm:$0xff]
    %v3812 = vld [vmem:[#allocation4 + $0x780] sm:$0xff]
    %v3813 = vld [vmem:[#allocation4 + $0x788] sm:$0xff]
    %v3814 = vld [vmem:[#allocation4 + $0x790] sm:$0xff]
    %v3815 = vld [vmem:[#allocation4 + $0x798] sm:$0xff]
    %v3816 = vld [vmem:[#allocation4 + $0x7a0] sm:$0xff]
    %v3817 = vld [vmem:[#allocation4 + $0x7a8] sm:$0xff]
    %v3818 = vld [vmem:[#allocation4 + $0x7b0] sm:$0xff]
    %v3819 = vld [vmem:[#allocation4 + $0x7b8] sm:$0xff]
    %v3820 = vld [vmem:[#allocation4 + $0x7c0] sm:$0xff]
    %v3821 = vld [vmem:[#allocation4 + $0x7c8] sm:$0xff]
    %v3822 = vld [vmem:[#allocation4 + $0x7d0] sm:$0xff]
    %v3823 = vld [vmem:[#allocation4 + $0x7d8] sm:$0xff]
    %v3824 = vld [vmem:[#allocation4 + $0x7e0] sm:$0xff]
    %v3825 = vld [vmem:[#allocation4 + $0x7e8] sm:$0xff]
    %v3826 = vld [vmem:[#allocation4 + $0x7f0] sm:$0xff]
    %v3827 = vld [vmem:[#allocation4 + $0x7f8] sm:$0xff]
    %v3828 = vld [vmem:[#allocation4 + $0x800] sm:$0xff]
    %v3829 = vld [vmem:[#allocation4 + $0x808] sm:$0xff]
    %v3830 = vld [vmem:[#allocation4 + $0x810] sm:$0xff]
    %v3831 = vld [vmem:[#allocation4 + $0x818] sm:$0xff]
    %v3832 = vld [vmem:[#allocation4 + $0x820] sm:$0xff]
    %v3833 = vld [vmem:[#allocation4 + $0x828] sm:$0xff]
    %v3834 = vld [vmem:[#allocation4 + $0x830] sm:$0xff]
    %v3835 = vld [vmem:[#allocation4 + $0x838] sm:$0xff]
    %v3836 = vld [vmem:[#allocation4 + $0x840] sm:$0xff]
    %v3837 = vld [vmem:[#allocation4 + $0x848] sm:$0xff]
    %v3838 = vld [vmem:[#allocation4 + $0x850] sm:$0xff]
    %v3839 = vld [vmem:[#allocation4 + $0x858] sm:$0xff]
    %v3840 = vld [vmem:[#allocation4 + $0x860] sm:$0xff]
    %v3841 = vld [vmem:[#allocation4 + $0x868] sm:$0xff]
    %v3842 = vld [vmem:[#allocation4 + $0x870] sm:$0xff]
    %v3843 = vld [vmem:[#allocation4 + $0x878] sm:$0xff]
    %v3844 = vld [vmem:[#allocation4 + $0x880] sm:$0xff]
    %v3845 = vld [vmem:[#allocation4 + $0x888] sm:$0xff]
    %v3846 = vld [vmem:[#allocation4 + $0x890] sm:$0xff]
    %v3847 = vld [vmem:[#allocation4 + $0x898] sm:$0xff]
    %v3848 = vld [vmem:[#allocation4 + $0x8a0] sm:$0xff]
    %v3849 = vld [vmem:[#allocation4 + $0x8a8] sm:$0xff]
    %v3850 = vld [vmem:[#allocation4 + $0x8b0] sm:$0xff]
    %v3851 = vld [vmem:[#allocation4 + $0x8b8] sm:$0xff]
    %v3852 = vld [vmem:[#allocation4 + $0x8c0] sm:$0xff]
    %v3853 = vld [vmem:[#allocation4 + $0x8c8] sm:$0xff]
    %v3854 = vld [vmem:[#allocation4 + $0x8d0] sm:$0xff]
    %v3855 = vld [vmem:[#allocation4 + $0x8d8] sm:$0xff]
    %v3856 = vld [vmem:[#allocation4 + $0x8e0] sm:$0xff]
    %v3857 = vld [vmem:[#allocation4 + $0x8e8] sm:$0xff]
    %v3858 = vld [vmem:[#allocation4 + $0x8f0] sm:$0xff]
    %v3859 = vld [vmem:[#allocation4 + $0x8f8] sm:$0xff]
    %v3860 = vld [vmem:[#allocation4 + $0x900] sm:$0xff]
    %v3861 = vld [vmem:[#allocation4 + $0x908] sm:$0xff]
    %v3862 = vld [vmem:[#allocation4 + $0x910] sm:$0xff]
    %v3863 = vld [vmem:[#allocation4 + $0x918] sm:$0xff]
    %v3864 = vld [vmem:[#allocation4 + $0x920] sm:$0xff]
    %v3865 = vld [vmem:[#allocation4 + $0x928] sm:$0xff]
    %v3866 = vld [vmem:[#allocation4 + $0x930] sm:$0xff]
    %v3867 = vld [vmem:[#allocation4 + $0x938] sm:$0xff]
    %v3868 = vld [vmem:[#allocation4 + $0x940] sm:$0xff]
    %v3869 = vld [vmem:[#allocation4 + $0x948] sm:$0xff]
    %v3870 = vld [vmem:[#allocation4 + $0x950] sm:$0xff]
    %v3871 = vld [vmem:[#allocation4 + $0x958] sm:$0xff]
    %v3872 = vld [vmem:[#allocation4 + $0x960] sm:$0xff]
    %v3873 = vld [vmem:[#allocation4 + $0x968] sm:$0xff]
    %v3874 = vld [vmem:[#allocation4 + $0x970] sm:$0xff]
    %v3875 = vld [vmem:[#allocation4 + $0x978] sm:$0xff]
    %v3876 = vld [vmem:[#allocation4 + $0x980] sm:$0xff]
    %v3877 = vld [vmem:[#allocation4 + $0x988] sm:$0xff]
    %v3878 = vld [vmem:[#allocation4 + $0x990] sm:$0xff]
    %v3879 = vld [vmem:[#allocation4 + $0x998] sm:$0xff]
    %v3880 = vld [vmem:[#allocation4 + $0x9a0] sm:$0xff]
    %v3881 = vld [vmem:[#allocation4 + $0x9a8] sm:$0xff]
    %v3882 = vld [vmem:[#allocation4 + $0x9b0] sm:$0xff]
    %v3883 = vld [vmem:[#allocation4 + $0x9b8] sm:$0xff]
    %v3884 = vld [vmem:[#allocation4 + $0x9c0] sm:$0xff]
    %v3885 = vld [vmem:[#allocation4 + $0x9c8] sm:$0xff]
    %v3886 = vld [vmem:[#allocation4 + $0x9d0] sm:$0xff]
    %v3887 = vld [vmem:[#allocation4 + $0x9d8] sm:$0xff]
    %v3888 = vld [vmem:[#allocation4 + $0x9e0] sm:$0xff]
    %v3889 = vld [vmem:[#allocation4 + $0x9e8] sm:$0xff]
    %v3890 = vld [vmem:[#allocation4 + $0x9f0] sm:$0xff]
    %v3891 = vld [vmem:[#allocation4 + $0x9f8] sm:$0xff]
    %v3892 = vld [vmem:[#allocation4 + $0xa00] sm:$0xff]
    %v3893 = vld [vmem:[#allocation4 + $0xa08] sm:$0xff]
    %v3894 = vld [vmem:[#allocation4 + $0xa10] sm:$0xff]
    %v3895 = vld [vmem:[#allocation4 + $0xa18] sm:$0xff]
    %v3896 = vld [vmem:[#allocation4 + $0xa20] sm:$0xff]
    %v3897 = vld [vmem:[#allocation4 + $0xa28] sm:$0xff]
    %v3898 = vld [vmem:[#allocation4 + $0xa30] sm:$0xff]
    %v3899 = vld [vmem:[#allocation4 + $0xa38] sm:$0xff]
    %v3900 = vld [vmem:[#allocation4 + $0xa40] sm:$0xff]
    %v3901 = vld [vmem:[#allocation4 + $0xa48] sm:$0xff]
    %v3902 = vld [vmem:[#allocation4 + $0xa50] sm:$0xff]
    %v3903 = vld [vmem:[#allocation4 + $0xa58] sm:$0xff]
    %v3904 = vld [vmem:[#allocation4 + $0xa60] sm:$0xff]
    %v3905 = vld [vmem:[#allocation4 + $0xa68] sm:$0xff]
    %v3906 = vld [vmem:[#allocation4 + $0xa70] sm:$0xff]
    %v3907 = vld [vmem:[#allocation4 + $0xa78] sm:$0xff]
    %v3908 = vld [vmem:[#allocation4 + $0xa80] sm:$0xff]
    %v3909 = vld [vmem:[#allocation4 + $0xa88] sm:$0xff]
    %v3910 = vld [vmem:[#allocation4 + $0xa90] sm:$0xff]
    %v3911 = vld [vmem:[#allocation4 + $0xa98] sm:$0xff]
    %v3912 = vld [vmem:[#allocation4 + $0xaa0] sm:$0xff]
    %v3913 = vld [vmem:[#allocation4 + $0xaa8] sm:$0xff]
    %v3914 = vld [vmem:[#allocation4 + $0xab0] sm:$0xff]
    %v3915 = vld [vmem:[#allocation4 + $0xab8] sm:$0xff]
    %v3916 = vld [vmem:[#allocation4 + $0xac0] sm:$0xff]
    %v3917 = vld [vmem:[#allocation4 + $0xac8] sm:$0xff]
    %v3918 = vld [vmem:[#allocation4 + $0xad0] sm:$0xff]
    %v3919 = vld [vmem:[#allocation4 + $0xad8] sm:$0xff]
    %v3920 = vld [vmem:[#allocation4 + $0xae0] sm:$0xff]
    %v3921 = vld [vmem:[#allocation4 + $0xae8] sm:$0xff]
    %v3922 = vld [vmem:[#allocation4 + $0xaf0] sm:$0xff]
    %v3923 = vld [vmem:[#allocation4 + $0xaf8] sm:$0xff]
    %v3924 = vld [vmem:[#allocation4 + $0xb00] sm:$0xff]
    %v3925 = vld [vmem:[#allocation4 + $0xb08] sm:$0xff]
    %v3926 = vld [vmem:[#allocation4 + $0xb10] sm:$0xff]
    %v3927 = vld [vmem:[#allocation4 + $0xb18] sm:$0xff]
    %v3928 = vld [vmem:[#allocation4 + $0xb20] sm:$0xff]
    %v3929 = vld [vmem:[#allocation4 + $0xb28] sm:$0xff]
    %v3930 = vld [vmem:[#allocation4 + $0xb30] sm:$0xff]
    %v3931 = vld [vmem:[#allocation4 + $0xb38] sm:$0xff]
    %v3932 = vld [vmem:[#allocation4 + $0xb40] sm:$0xff]
    %v3933 = vld [vmem:[#allocation4 + $0xb48] sm:$0xff]
    %v3934 = vld [vmem:[#allocation4 + $0xb50] sm:$0xff]
    %v3935 = vld [vmem:[#allocation4 + $0xb58] sm:$0xff]
    %v3936 = vld [vmem:[#allocation4 + $0xb60] sm:$0xff]
    %v3937 = vld [vmem:[#allocation4 + $0xb68] sm:$0xff]
    %v3938 = vld [vmem:[#allocation4 + $0xb70] sm:$0xff]
    %v3939 = vld [vmem:[#allocation4 + $0xb78] sm:$0xff]
    %v3940 = vld [vmem:[#allocation4 + $0xb80] sm:$0xff]
    %v3941 = vld [vmem:[#allocation4 + $0xb88] sm:$0xff]
    %v3942 = vld [vmem:[#allocation4 + $0xb90] sm:$0xff]
    %v3943 = vld [vmem:[#allocation4 + $0xb98] sm:$0xff]
    %v3944 = vld [vmem:[#allocation4 + $0xba0] sm:$0xff]
    %v3945 = vld [vmem:[#allocation4 + $0xba8] sm:$0xff]
    %v3946 = vld [vmem:[#allocation4 + $0xbb0] sm:$0xff]
    %v3947 = vld [vmem:[#allocation4 + $0xbb8] sm:$0xff]
    %v3948 = vld [vmem:[#allocation4 + $0xbc0] sm:$0xff]
    %v3949 = vld [vmem:[#allocation4 + $0xbc8] sm:$0xff]
    %v3950 = vld [vmem:[#allocation4 + $0xbd0] sm:$0xff]
    %v3951 = vld [vmem:[#allocation4 + $0xbd8] sm:$0xff]
    %v3952 = vld [vmem:[#allocation4 + $0xbe0] sm:$0xff]
    %v3953 = vld [vmem:[#allocation4 + $0xbe8] sm:$0xff]
    %v3954 = vld [vmem:[#allocation4 + $0xbf0] sm:$0xff]
    %v3955 = vld [vmem:[#allocation4 + $0xbf8] sm:$0xff]
    %v3956 = vld [vmem:[#allocation4 + $0xc00] sm:$0xff]
    %v3957 = vld [vmem:[#allocation4 + $0xc08] sm:$0xff]
    %v3958 = vld [vmem:[#allocation4 + $0xc10] sm:$0xff]
    %v3959 = vld [vmem:[#allocation4 + $0xc18] sm:$0xff]
    %v3960 = vld [vmem:[#allocation4 + $0xc20] sm:$0xff]
    %v3961 = vld [vmem:[#allocation4 + $0xc28] sm:$0xff]
    %v3962 = vld [vmem:[#allocation4 + $0xc30] sm:$0xff]
    %v3963 = vld [vmem:[#allocation4 + $0xc38] sm:$0xff]
    %v3964 = vld [vmem:[#allocation4 + $0xc40] sm:$0xff]
    %v3965 = vld [vmem:[#allocation4 + $0xc48] sm:$0xff]
    %v3966 = vld [vmem:[#allocation4 + $0xc50] sm:$0xff]
    %v3967 = vld [vmem:[#allocation4 + $0xc58] sm:$0xff]
    %v3968 = vld [vmem:[#allocation4 + $0xc60] sm:$0xff]
    %v3969 = vld [vmem:[#allocation4 + $0xc68] sm:$0xff]
    %v3970 = vld [vmem:[#allocation4 + $0xc70] sm:$0xff]
    %v3971 = vld [vmem:[#allocation4 + $0xc78] sm:$0xff]
    %v3972 = vld [vmem:[#allocation4 + $0xc80] sm:$0xff]
    %v3973 = vld [vmem:[#allocation4 + $0xc88] sm:$0xff]
    %v3974 = vld [vmem:[#allocation4 + $0xc90] sm:$0xff]
    %v3975 = vld [vmem:[#allocation4 + $0xc98] sm:$0xff]
    %v3976 = vld [vmem:[#allocation4 + $0xca0] sm:$0xff]
    %v3977 = vld [vmem:[#allocation4 + $0xca8] sm:$0xff]
    %v3978 = vld [vmem:[#allocation4 + $0xcb0] sm:$0xff]
    %v3979 = vld [vmem:[#allocation4 + $0xcb8] sm:$0xff]
    %v3980 = vld [vmem:[#allocation4 + $0xcc0] sm:$0xff]
    %v3981 = vld [vmem:[#allocation4 + $0xcc8] sm:$0xff]
    %v3982 = vld [vmem:[#allocation4 + $0xcd0] sm:$0xff]
    %v3983 = vld [vmem:[#allocation4 + $0xcd8] sm:$0xff]
    %v3984 = vld [vmem:[#allocation4 + $0xce0] sm:$0xff]
    %v3985 = vld [vmem:[#allocation4 + $0xce8] sm:$0xff]
    %v3986 = vld [vmem:[#allocation4 + $0xcf0] sm:$0xff]
    %v3987 = vld [vmem:[#allocation4 + $0xcf8] sm:$0xff]
    %v3988 = vld [vmem:[#allocation4 + $0xd00] sm:$0xff]
    %v3989 = vld [vmem:[#allocation4 + $0xd08] sm:$0xff]
    %v3990 = vld [vmem:[#allocation4 + $0xd10] sm:$0xff]
    %v3991 = vld [vmem:[#allocation4 + $0xd18] sm:$0xff]
    %v3992 = vld [vmem:[#allocation4 + $0xd20] sm:$0xff]
    %v3993 = vld [vmem:[#allocation4 + $0xd28] sm:$0xff]
    %v3994 = vld [vmem:[#allocation4 + $0xd30] sm:$0xff]
    %v3995 = vld [vmem:[#allocation4 + $0xd38] sm:$0xff]
    %v3996 = vld [vmem:[#allocation4 + $0xd40] sm:$0xff]
    %v3997 = vld [vmem:[#allocation4 + $0xd48] sm:$0xff]
    %v3998 = vld [vmem:[#allocation4 + $0xd50] sm:$0xff]
    %v3999 = vld [vmem:[#allocation4 + $0xd58] sm:$0xff]
    %v4000 = vld [vmem:[#allocation4 + $0xd60] sm:$0xff]
    %v4001 = vld [vmem:[#allocation4 + $0xd68] sm:$0xff]
    %v4002 = vld [vmem:[#allocation4 + $0xd70] sm:$0xff]
    %v4003 = vld [vmem:[#allocation4 + $0xd78] sm:$0xff]
    %v4004 = vld [vmem:[#allocation4 + $0xd80] sm:$0xff]
    %v4005 = vld [vmem:[#allocation4 + $0xd88] sm:$0xff]
    %v4006 = vld [vmem:[#allocation4 + $0xd90] sm:$0xff]
    %v4007 = vld [vmem:[#allocation4 + $0xd98] sm:$0xff]
    %v4008 = vld [vmem:[#allocation4 + $0xda0] sm:$0xff]
    %v4009 = vld [vmem:[#allocation4 + $0xda8] sm:$0xff]
    %v4010 = vld [vmem:[#allocation4 + $0xdb0] sm:$0xff]
    %v4011 = vld [vmem:[#allocation4 + $0xdb8] sm:$0xff]
    %v4012 = vld [vmem:[#allocation4 + $0xdc0] sm:$0xff]
    %v4013 = vld [vmem:[#allocation4 + $0xdc8] sm:$0xff]
    %v4014 = vld [vmem:[#allocation4 + $0xdd0] sm:$0xff]
    %v4015 = vld [vmem:[#allocation4 + $0xdd8] sm:$0xff]
    %v4016 = vld [vmem:[#allocation4 + $0xde0] sm:$0xff]
    %v4017 = vld [vmem:[#allocation4 + $0xde8] sm:$0xff]
    %v4018 = vld [vmem:[#allocation4 + $0xdf0] sm:$0xff]
    %v4019 = vld [vmem:[#allocation4 + $0xdf8] sm:$0xff]
    %v4020 = vld [vmem:[#allocation4 + $0xe00] sm:$0xff]
    %v4021 = vld [vmem:[#allocation4 + $0xe08] sm:$0xff]
    %v4022 = vld [vmem:[#allocation4 + $0xe10] sm:$0xff]
    %v4023 = vld [vmem:[#allocation4 + $0xe18] sm:$0xff]
    %v4024 = vld [vmem:[#allocation4 + $0xe20] sm:$0xff]
    %v4025 = vld [vmem:[#allocation4 + $0xe28] sm:$0xff]
    %v4026 = vld [vmem:[#allocation4 + $0xe30] sm:$0xff]
    %v4027 = vld [vmem:[#allocation4 + $0xe38] sm:$0xff]
    %v4028 = vld [vmem:[#allocation4 + $0xe40] sm:$0xff]
    %v4029 = vld [vmem:[#allocation4 + $0xe48] sm:$0xff]
    %v4030 = vld [vmem:[#allocation4 + $0xe50] sm:$0xff]
    %v4031 = vld [vmem:[#allocation4 + $0xe58] sm:$0xff]
    %v4032 = vld [vmem:[#allocation4 + $0xe60] sm:$0xff]
    %v4033 = vld [vmem:[#allocation4 + $0xe68] sm:$0xff]
    %v4034 = vld [vmem:[#allocation4 + $0xe70] sm:$0xff]
    %v4035 = vld [vmem:[#allocation4 + $0xe78] sm:$0xff]
    %v4036 = vld [vmem:[#allocation4 + $0xe80] sm:$0xff]
    %v4037 = vld [vmem:[#allocation4 + $0xe88] sm:$0xff]
    %v4038 = vld [vmem:[#allocation4 + $0xe90] sm:$0xff]
    %v4039 = vld [vmem:[#allocation4 + $0xe98] sm:$0xff]
    %v4040 = vld [vmem:[#allocation4 + $0xea0] sm:$0xff]
    %v4041 = vld [vmem:[#allocation4 + $0xea8] sm:$0xff]
    %v4042 = vld [vmem:[#allocation4 + $0xeb0] sm:$0xff]
    %v4043 = vld [vmem:[#allocation4 + $0xeb8] sm:$0xff]
    %v4044 = vld [vmem:[#allocation4 + $0xec0] sm:$0xff]
    %v4045 = vld [vmem:[#allocation4 + $0xec8] sm:$0xff]
    %v4046 = vld [vmem:[#allocation4 + $0xed0] sm:$0xff]
    %v4047 = vld [vmem:[#allocation4 + $0xed8] sm:$0xff]
    %v4048 = vld [vmem:[#allocation4 + $0xee0] sm:$0xff]
    %v4049 = vld [vmem:[#allocation4 + $0xee8] sm:$0xff]
    %v4050 = vld [vmem:[#allocation4 + $0xef0] sm:$0xff]
    %v4051 = vld [vmem:[#allocation4 + $0xef8] sm:$0xff]
    %v4052 = vld [vmem:[#allocation4 + $0xf00] sm:$0xff]
    %v4053 = vld [vmem:[#allocation4 + $0xf08] sm:$0xff]
    %v4054 = vld [vmem:[#allocation4 + $0xf10] sm:$0xff]
    %v4055 = vld [vmem:[#allocation4 + $0xf18] sm:$0xff]
    %v4056 = vld [vmem:[#allocation4 + $0xf20] sm:$0xff]
    %v4057 = vld [vmem:[#allocation4 + $0xf28] sm:$0xff]
    %v4058 = vld [vmem:[#allocation4 + $0xf30] sm:$0xff]
    %v4059 = vld [vmem:[#allocation4 + $0xf38] sm:$0xff]
    %v4060 = vld [vmem:[#allocation4 + $0xf40] sm:$0xff]
    %v4061 = vld [vmem:[#allocation4 + $0xf48] sm:$0xff]
    %v4062 = vld [vmem:[#allocation4 + $0xf50] sm:$0xff]
    %v4063 = vld [vmem:[#allocation4 + $0xf58] sm:$0xff]
    %v4064 = vld [vmem:[#allocation4 + $0xf60] sm:$0xff]
    %v4065 = vld [vmem:[#allocation4 + $0xf68] sm:$0xff]
    %v4066 = vld [vmem:[#allocation4 + $0xf70] sm:$0xff]
    %v4067 = vld [vmem:[#allocation4 + $0xf78] sm:$0xff]
    %v4068 = vld [vmem:[#allocation4 + $0xf80] sm:$0xff]
    %v4069 = vld [vmem:[#allocation4 + $0xf88] sm:$0xff]
    %v4070 = vld [vmem:[#allocation4 + $0xf90] sm:$0xff]
    %v4071 = vld [vmem:[#allocation4 + $0xf98] sm:$0xff]
    %v4072 = vld [vmem:[#allocation4 + $0xfa0] sm:$0xff]
    %v4073 = vld [vmem:[#allocation4 + $0xfa8] sm:$0xff]
    %v4074 = vld [vmem:[#allocation4 + $0xfb0] sm:$0xff]
    %v4075 = vld [vmem:[#allocation4 + $0xfb8] sm:$0xff]
    %v4076 = vld [vmem:[#allocation4 + $0xfc0] sm:$0xff]
    %v4077 = vld [vmem:[#allocation4 + $0xfc8] sm:$0xff]
    %v4078 = vld [vmem:[#allocation4 + $0xfd0] sm:$0xff]
    %v4079 = vld [vmem:[#allocation4 + $0xfd8] sm:$0xff]
    %v4080 = vld [vmem:[#allocation4 + $0xfe0] sm:$0xff]
    %v4081 = vld [vmem:[#allocation4 + $0xfe8] sm:$0xff]
    %v4082 = vld [vmem:[#allocation4 + $0xff0] sm:$0xff]
    %v4083 = vld [vmem:[#allocation4 + $0xff8] sm:$0xff]
    %v4084 = vld [vmem:[#allocation4 + $0x1000] sm:$0xff]
    %v4085 = vld [vmem:[#allocation4 + $0x1008] sm:$0xff]
    %v4086 = vld [vmem:[#allocation4 + $0x1010] sm:$0xff]
    %v4087 = vld [vmem:[#allocation4 + $0x1018] sm:$0xff]
    %v4088 = vld [vmem:[#allocation4 + $0x1020] sm:$0xff]
    %v4089 = vld [vmem:[#allocation4 + $0x1028] sm:$0xff]
    %v4090 = vld [vmem:[#allocation4 + $0x1030] sm:$0xff]
    %v4091 = vld [vmem:[#allocation4 + $0x1038] sm:$0xff]
    %v4092 = vld [vmem:[#allocation4 + $0x1040] sm:$0xff]
    %v4093 = vld [vmem:[#allocation4 + $0x1048] sm:$0xff]
    %v4094 = vld [vmem:[#allocation4 + $0x1050] sm:$0xff]
    %v4095 = vld [vmem:[#allocation4 + $0x1058] sm:$0xff]
    %v4096 = vld [vmem:[#allocation4 + $0x1060] sm:$0xff]
    %v4097 = vld [vmem:[#allocation4 + $0x1068] sm:$0xff]
    %v4098 = vld [vmem:[#allocation4 + $0x1070] sm:$0xff]
    %v4099 = vld [vmem:[#allocation4 + $0x1078] sm:$0xff]
    %v4100 = vld [vmem:[#allocation4 + $0x1080] sm:$0xff]
    %v4101 = vld [vmem:[#allocation4 + $0x1088] sm:$0xff]
    %v4102 = vld [vmem:[#allocation4 + $0x1090] sm:$0xff]
    %v4103 = vld [vmem:[#allocation4 + $0x1098] sm:$0xff]
    %v4104 = vld [vmem:[#allocation4 + $0x10a0] sm:$0xff]
    %v4105 = vld [vmem:[#allocation4 + $0x10a8] sm:$0xff]
    %v4106 = vld [vmem:[#allocation4 + $0x10b0] sm:$0xff]
    %v4107 = vld [vmem:[#allocation4 + $0x10b8] sm:$0xff]
    %v4108 = vld [vmem:[#allocation4 + $0x10c0] sm:$0xff]
    %v4109 = vld [vmem:[#allocation4 + $0x10c8] sm:$0xff]
    %v4110 = vld [vmem:[#allocation4 + $0x10d0] sm:$0xff]
    %v4111 = vld [vmem:[#allocation4 + $0x10d8] sm:$0xff]
    %v4112 = vld [vmem:[#allocation4 + $0x10e0] sm:$0xff]
    %v4113 = vld [vmem:[#allocation4 + $0x10e8] sm:$0xff]
    %v4114 = vld [vmem:[#allocation4 + $0x10f0] sm:$0xff]
    %v4115 = vld [vmem:[#allocation4 + $0x10f8] sm:$0xff]
    %v4116 = vld [vmem:[#allocation4 + $0x1100] sm:$0xff]
    %v4117 = vld [vmem:[#allocation4 + $0x1108] sm:$0xff]
    %v4118 = vld [vmem:[#allocation4 + $0x1110] sm:$0xff]
    %v4119 = vld [vmem:[#allocation4 + $0x1118] sm:$0xff]
    %v4120 = vld [vmem:[#allocation4 + $0x1120] sm:$0xff]
    %v4121 = vld [vmem:[#allocation4 + $0x1128] sm:$0xff]
    %v4122 = vld [vmem:[#allocation4 + $0x1130] sm:$0xff]
    %v4123 = vld [vmem:[#allocation4 + $0x1138] sm:$0xff]
    %v4124 = vld [vmem:[#allocation4 + $0x1140] sm:$0xff]
    %v4125 = vld [vmem:[#allocation4 + $0x1148] sm:$0xff]
    %v4126 = vld [vmem:[#allocation4 + $0x1150] sm:$0xff]
    %v4127 = vld [vmem:[#allocation4 + $0x1158] sm:$0xff]
    %v4128 = vld [vmem:[#allocation4 + $0x1160] sm:$0xff]
    %v4129 = vld [vmem:[#allocation4 + $0x1168] sm:$0xff]
    %v4130 = vld [vmem:[#allocation4 + $0x1170] sm:$0xff]
    %v4131 = vld [vmem:[#allocation4 + $0x1178] sm:$0xff]
    %v4132 = vld [vmem:[#allocation4 + $0x1180] sm:$0xff]
    %v4133 = vld [vmem:[#allocation4 + $0x1188] sm:$0xff]
    %v4134 = vld [vmem:[#allocation4 + $0x1190] sm:$0xff]
    %v4135 = vld [vmem:[#allocation4 + $0x1198] sm:$0xff]
    %v4136 = vld [vmem:[#allocation4 + $0x11a0] sm:$0xff]
    %v4137 = vld [vmem:[#allocation4 + $0x11a8] sm:$0xff]
    %v4138 = vld [vmem:[#allocation4 + $0x11b0] sm:$0xff]
    %v4139 = vld [vmem:[#allocation4 + $0x11b8] sm:$0xff]
    %v4140 = vld [vmem:[#allocation4 + $0x11c0] sm:$0xff]
    %v4141 = vld [vmem:[#allocation4 + $0x11c8] sm:$0xff]
    %v4142 = vld [vmem:[#allocation4 + $0x11d0] sm:$0xff]
    %v4143 = vld [vmem:[#allocation4 + $0x11d8] sm:$0xff]
    %v4144 = vld [vmem:[#allocation4 + $0x11e0] sm:$0xff]
    %v4145 = vld [vmem:[#allocation4 + $0x11e8] sm:$0xff]
    %v4146 = vld [vmem:[#allocation4 + $0x11f0] sm:$0xff]
    %v4147 = vld [vmem:[#allocation4 + $0x11f8] sm:$0xff]
    %v4148 = vld [vmem:[#allocation4 + $0x1200] sm:$0xff]
    %v4149 = vld [vmem:[#allocation4 + $0x1208] sm:$0xff]
    %v4150 = vld [vmem:[#allocation4 + $0x1210] sm:$0xff]
    %v4151 = vld [vmem:[#allocation4 + $0x1218] sm:$0xff]
    %v4152 = vld [vmem:[#allocation4 + $0x1220] sm:$0xff]
    %v4153 = vld [vmem:[#allocation4 + $0x1228] sm:$0xff]
    %v4154 = vld [vmem:[#allocation4 + $0x1230] sm:$0xff]
    %v4155 = vld [vmem:[#allocation4 + $0x1238] sm:$0xff]
    %v4156 = vld [vmem:[#allocation4 + $0x1240] sm:$0xff]
    %v4157 = vld [vmem:[#allocation4 + $0x1248] sm:$0xff]
    %v4158 = vld [vmem:[#allocation4 + $0x1250] sm:$0xff]
    %v4159 = vld [vmem:[#allocation4 + $0x1258] sm:$0xff]
    %v4160 = vld [vmem:[#allocation4 + $0x1260] sm:$0xff]
    %v4161 = vld [vmem:[#allocation4 + $0x1268] sm:$0xff]
    %v4162 = vld [vmem:[#allocation4 + $0x1270] sm:$0xff]
    %v4163 = vld [vmem:[#allocation4 + $0x1278] sm:$0xff]
    %v4164 = vld [vmem:[#allocation4 + $0x1280] sm:$0xff]
    %v4165 = vld [vmem:[#allocation4 + $0x1288] sm:$0xff]
    %v4166 = vld [vmem:[#allocation4 + $0x1290] sm:$0xff]
    %v4167 = vld [vmem:[#allocation4 + $0x1298] sm:$0xff]
    %v4168 = vld [vmem:[#allocation4 + $0x12a0] sm:$0xff]
    %v4169 = vld [vmem:[#allocation4 + $0x12a8] sm:$0xff]
    %v4170 = vld [vmem:[#allocation4 + $0x12b0] sm:$0xff]
    %v4171 = vld [vmem:[#allocation4 + $0x12b8] sm:$0xff]
    %v4172 = vld [vmem:[#allocation4 + $0x12c0] sm:$0xff]
    %v4173 = vld [vmem:[#allocation4 + $0x12c8] sm:$0xff]
    %v4174 = vld [vmem:[#allocation4 + $0x12d0] sm:$0xff]
    %v4175 = vld [vmem:[#allocation4 + $0x12d8] sm:$0xff]
    %v4176 = vld [vmem:[#allocation4 + $0x12e0] sm:$0xff]
    %v4177 = vld [vmem:[#allocation4 + $0x12e8] sm:$0xff]
    %v4178 = vld [vmem:[#allocation4 + $0x12f0] sm:$0xff]
    %v4179 = vld [vmem:[#allocation4 + $0x12f8] sm:$0xff]
    %v4180 = vld [vmem:[#allocation4 + $0x1300] sm:$0xff]
    %v4181 = vld [vmem:[#allocation4 + $0x1308] sm:$0xff]
    %v4182 = vld [vmem:[#allocation4 + $0x1310] sm:$0xff]
    %v4183 = vld [vmem:[#allocation4 + $0x1318] sm:$0xff]
    %v4184 = vld [vmem:[#allocation4 + $0x1320] sm:$0xff]
    %v4185 = vld [vmem:[#allocation4 + $0x1328] sm:$0xff]
    %v4186 = vld [vmem:[#allocation4 + $0x1330] sm:$0xff]
    %v4187 = vld [vmem:[#allocation4 + $0x1338] sm:$0xff]
    %v4188 = vld [vmem:[#allocation4 + $0x1340] sm:$0xff]
    %v4189 = vld [vmem:[#allocation4 + $0x1348] sm:$0xff]
    %v4190 = vld [vmem:[#allocation4 + $0x1350] sm:$0xff]
    %v4191 = vld [vmem:[#allocation4 + $0x1358] sm:$0xff]
    %v4192 = vld [vmem:[#allocation4 + $0x1360] sm:$0xff]
    %v4193 = vld [vmem:[#allocation4 + $0x1368] sm:$0xff]
    %v4194 = vld [vmem:[#allocation4 + $0x1370] sm:$0xff]
    %v4195 = vld [vmem:[#allocation4 + $0x1378] sm:$0xff]
    %v4196 = vld [vmem:[#allocation4 + $0x1380] sm:$0xff]
    %v4197 = vld [vmem:[#allocation4 + $0x1388] sm:$0xff]
    %v4198 = vld [vmem:[#allocation4 + $0x1390] sm:$0xff]
    %v4199 = vld [vmem:[#allocation4 + $0x1398] sm:$0xff]
    %v4200 = vld [vmem:[#allocation4 + $0x13a0] sm:$0xff]
    %v4201 = vld [vmem:[#allocation4 + $0x13a8] sm:$0xff]
    %v4202 = vld [vmem:[#allocation4 + $0x13b0] sm:$0xff]
    %v4203 = vld [vmem:[#allocation4 + $0x13b8] sm:$0xff]
    %v4204 = vld [vmem:[#allocation4 + $0x13c0] sm:$0xff]
    %v4205 = vld [vmem:[#allocation4 + $0x13c8] sm:$0xff]
    %v4206 = vld [vmem:[#allocation4 + $0x13d0] sm:$0xff]
    %v4207 = vld [vmem:[#allocation4 + $0x13d8] sm:$0xff]
    %v4208 = vld [vmem:[#allocation4 + $0x13e0] sm:$0xff]
    %v4209 = vld [vmem:[#allocation4 + $0x13e8] sm:$0xff]
    %v4210 = vld [vmem:[#allocation4 + $0x13f0] sm:$0xff]
    %v4211 = vld [vmem:[#allocation4 + $0x13f8] sm:$0xff]
    %v4212 = vpack.c.bf16 %v3558, %v3558
    %v4213 = vpack.c.bf16 %v3559, %v3559
    %v4214 = vpack.c.bf16 %v3560, %v3560
    %v4215 = vpack.c.bf16 %v3561, %v3561
    %v4216 = vpack.c.bf16 %v3562, %v3562
    %v4217 = vpack.c.bf16 %v3563, %v3563
    %v4218 = vpack.c.bf16 %v3564, %v3564
    %v4219 = vpack.c.bf16 %v3565, %v3565
    %v4220 = vpack.c.bf16 %v3566, %v3566
    %v4221 = vpack.c.bf16 %v3567, %v3567
    %v4222 = vld [vmem:[#allocation12] sm:$0xff]
    %v4224 = vlaneseq
    %v4225 = vshrl.u32 %v4224, 7
    %v4226 = vsub.s32 0, %v4225
    %v4227 = vrot.slane %v4222, %v4226
    %v4228 = vlaneseq
    %v4229 = vshrl.u32 %v4228, 7
    %v4230 = vsub.s32 1, %v4229
    %v4231 = vrot.slane %v4222, %v4230
    %v4232 = vlaneseq
    %v4233 = vshrl.u32 %v4232, 7
    %v4234 = vsub.s32 2, %v4233
    %v4235 = vrot.slane %v4222, %v4234
    %v4236 = vlaneseq
    %v4237 = vshrl.u32 %v4236, 7
    %v4238 = vsub.s32 3, %v4237
    %v4239 = vrot.slane %v4222, %v4238
    %v4240 = vlaneseq
    %v4241 = vshrl.u32 %v4240, 7
    %v4242 = vsub.s32 4, %v4241
    %v4243 = vrot.slane %v4222, %v4242
    %v4244 = vlaneseq
    %v4245 = vshrl.u32 %v4244, 7
    %v4246 = vsub.s32 5, %v4245
    %v4247 = vrot.slane %v4222, %v4246
    %v4248 = vlaneseq
    %v4249 = vshrl.u32 %v4248, 7
    %v4250 = vsub.s32 6, %v4249
    %v4251 = vrot.slane %v4222, %v4250
    %v4252 = vlaneseq
    %v4253 = vshrl.u32 %v4252, 7
    %v4254 = vsub.s32 7, %v4253
    %v4255 = vrot.slane %v4222, %v4254
    %4264 = vmatprep.subr.bf16.mxu0 %v3573
    %4265 = vmatpush1.bf16.msra.mxu0 %v3572
    %4266 = vmatprep.subr.bf16.mxu0 %v3581
    %4267 = vmatpush1.bf16.msra.mxu0 %v3580
    %4268 = vmatprep.subr.bf16.mxu0 %v3589
    %4269 = vmatpush1.bf16.msra.mxu0 %v3588
    %4270 = vmatprep.subr.bf16.mxu0 %v3597
    %4271 = vmatpush1.bf16.msra.mxu0 %v3596
    %4272 = vmatprep.subr.bf16.mxu0 %v3605
    %4273 = vmatpush1.bf16.msra.mxu0 %v3604
    %4274 = vmatprep.subr.bf16.mxu0 %v3613
    %4275 = vmatpush1.bf16.msra.mxu0 %v3612
    %4276 = vmatprep.subr.bf16.mxu0 %v3621
    %4277 = vmatpush1.bf16.msra.mxu0 %v3620
    %4278 = vmatprep.subr.bf16.mxu0 %v3629
    %4279 = vmatpush1.bf16.msra.mxu0 %v3628
    %4280 = vmatprep.subr.bf16.mxu0 %v3637
    %4281 = vmatpush1.bf16.msra.mxu0 %v3636
    %4282 = vmatprep.subr.bf16.mxu0 %v3645
    %4283 = vmatpush1.bf16.msra.mxu0 %v3644
    %4284 = vmatprep.subr.bf16.mxu0 %v3653
    %4285 = vmatpush1.bf16.msra.mxu0 %v3652
    %4286 = vmatprep.subr.bf16.mxu0 %v3661
    %4287 = vmatpush1.bf16.msra.mxu0 %v3660
    %4288 = vmatprep.subr.bf16.mxu0 %v3669
    %4289 = vmatpush1.bf16.msra.mxu0 %v3668
    %4290 = vmatprep.subr.bf16.mxu0 %v3677
    %4291 = vmatpush1.bf16.msra.mxu0 %v3676
    %4292 = vmatprep.subr.bf16.mxu0 %v3685
    %4293 = vmatpush1.bf16.msra.mxu0 %v3684
    %4294 = vmatprep.subr.bf16.mxu0 %v3693
    %4295 = vmatpush1.bf16.msra.mxu0 %v3692
    %4296 = vmatprep.mubr.bf16.mxu0 %v4213
    %4297 = vmatmul.mubr.bf16.gmra.mrb[0].mxu0 %v4212
    %v4298 = vpop.f32.mrb[0].mxu0
    %v4299 = vadd.f32 %v4227, %v4298
    %v4300 = vpop.f32.mrb[0].mxu0
    %v4301 = vadd.f32 %v4231, %v4300
    %v4302 = vpop.f32.mrb[0].mxu0
    %v4303 = vpop.f32.mrb[0].mxu0
    %4304 = vdwg.mxu0
    %4305 = vmatprep.subr.bf16.mxu0 %v3701
    %4306 = vmatpush1.bf16.msra.mxu0 %v3700
    %4307 = vmatprep.subr.bf16.mxu0 %v3709
    %4308 = vmatpush1.bf16.msra.mxu0 %v3708
    %4309 = vmatprep.subr.bf16.mxu0 %v3717
    %4310 = vmatpush1.bf16.msra.mxu0 %v3716
    %4311 = vmatprep.subr.bf16.mxu0 %v3725
    %4312 = vmatpush1.bf16.msra.mxu0 %v3724
    %4313 = vmatprep.subr.bf16.mxu0 %v3733
    %4314 = vmatpush1.bf16.msra.mxu0 %v3732
    %4315 = vmatprep.subr.bf16.mxu0 %v3741
    %4316 = vmatpush1.bf16.msra.mxu0 %v3740
    %4317 = vmatprep.subr.bf16.mxu0 %v3749
    %4318 = vmatpush1.bf16.msra.mxu0 %v3748
    %4319 = vmatprep.subr.bf16.mxu0 %v3757
    %4320 = vmatpush1.bf16.msra.mxu0 %v3756
    %4321 = vmatprep.subr.bf16.mxu0 %v3765
    %4322 = vmatpush1.bf16.msra.mxu0 %v3764
    %4323 = vmatprep.subr.bf16.mxu0 %v3773
    %4324 = vmatpush1.bf16.msra.mxu0 %v3772
    %4325 = vmatprep.subr.bf16.mxu0 %v3781
    %4326 = vmatpush1.bf16.msra.mxu0 %v3780
    %4327 = vmatprep.subr.bf16.mxu0 %v3789
    %4328 = vmatpush1.bf16.msra.mxu0 %v3788
    %4329 = vmatprep.subr.bf16.mxu0 %v3797
    %4330 = vmatpush1.bf16.msra.mxu0 %v3796
    %4331 = vmatprep.subr.bf16.mxu0 %v3805
    %4332 = vmatpush1.bf16.msra.mxu0 %v3804
    %4333 = vmatprep.subr.bf16.mxu0 %v3813
    %4334 = vmatpush1.bf16.msra.mxu0 %v3812
    %4335 = vmatprep.subr.bf16.mxu0 %v3821
    %4336 = vmatpush1.bf16.msra.mxu0 %v3820
    %4337 = vmatprep.mubr.bf16.mxu0 %v4215
    %4338 = vmatmul.mubr.bf16.gmra.mrb[0].mxu0 %v4214
    %v4339 = vpop.f32.mrb[0].mxu0
    %v4340 = vadd.f32 %v4299, %v4339
    %v4341 = vpop.f32.mrb[0].mxu0
    %v4342 = vadd.f32 %v4301, %v4341
    %v4343 = vpop.f32.mrb[0].mxu0
    %v4344 = vpop.f32.mrb[0].mxu0
    %4345 = vdwg.mxu0
    %4346 = vmatprep.subr.bf16.mxu0 %v3829
    %4347 = vmatpush1.bf16.msra.mxu0 %v3828
    %4348 = vmatprep.subr.bf16.mxu0 %v3837
    %4349 = vmatpush1.bf16.msra.mxu0 %v3836
    %4350 = vmatprep.subr.bf16.mxu0 %v3845
    %4351 = vmatpush1.bf16.msra.mxu0 %v3844
    %4352 = vmatprep.subr.bf16.mxu0 %v3853
    %4353 = vmatpush1.bf16.msra.mxu0 %v3852
    %4354 = vmatprep.subr.bf16.mxu0 %v3861
    %4355 = vmatpush1.bf16.msra.mxu0 %v3860
    %4356 = vmatprep.subr.bf16.mxu0 %v3869
    %4357 = vmatpush1.bf16.msra.mxu0 %v3868
    %4358 = vmatprep.subr.bf16.mxu0 %v3877
    %4359 = vmatpush1.bf16.msra.mxu0 %v3876
    %4360 = vmatprep.subr.bf16.mxu0 %v3885
    %4361 = vmatpush1.bf16.msra.mxu0 %v3884
    %4362 = vmatprep.subr.bf16.mxu0 %v3893
    %4363 = vmatpush1.bf16.msra.mxu0 %v3892
    %4364 = vmatprep.subr.bf16.mxu0 %v3901
    %4365 = vmatpush1.bf16.msra.mxu0 %v3900
    %4366 = vmatprep.subr.bf16.mxu0 %v3909
    %4367 = vmatpush1.bf16.msra.mxu0 %v3908
    %4368 = vmatprep.subr.bf16.mxu0 %v3917
    %4369 = vmatpush1.bf16.msra.mxu0 %v3916
    %4370 = vmatprep.subr.bf16.mxu0 %v3925
    %4371 = vmatpush1.bf16.msra.mxu0 %v3924
    %4372 = vmatprep.subr.bf16.mxu0 %v3933
    %4373 = vmatpush1.bf16.msra.mxu0 %v3932
    %4374 = vmatprep.subr.bf16.mxu0 %v3941
    %4375 = vmatpush1.bf16.msra.mxu0 %v3940
    %4376 = vmatprep.subr.bf16.mxu0 %v3949
    %4377 = vmatpush1.bf16.msra.mxu0 %v3948
    %4378 = vmatprep.mubr.bf16.mxu0 %v4217
    %4379 = vmatmul.mubr.bf16.gmra.mrb[0].mxu0 %v4216
    %v4380 = vpop.f32.mrb[0].mxu0
    %v4381 = vadd.f32 %v4340, %v4380
    %v4382 = vpop.f32.mrb[0].mxu0
    %v4383 = vadd.f32 %v4342, %v4382
    %v4384 = vpop.f32.mrb[0].mxu0
    %v4385 = vpop.f32.mrb[0].mxu0
    %4386 = vdwg.mxu0
    %4387 = vmatprep.subr.bf16.mxu0 %v3957
    %4388 = vmatpush1.bf16.msra.mxu0 %v3956
    %4389 = vmatprep.subr.bf16.mxu0 %v3965
    %4390 = vmatpush1.bf16.msra.mxu0 %v3964
    %4391 = vmatprep.subr.bf16.mxu0 %v3973
    %4392 = vmatpush1.bf16.msra.mxu0 %v3972
    %4393 = vmatprep.subr.bf16.mxu0 %v3981
    %4394 = vmatpush1.bf16.msra.mxu0 %v3980
    %4395 = vmatprep.subr.bf16.mxu0 %v3989
    %4396 = vmatpush1.bf16.msra.mxu0 %v3988
    %4397 = vmatprep.subr.bf16.mxu0 %v3997
    %4398 = vmatpush1.bf16.msra.mxu0 %v3996
    %4399 = vmatprep.subr.bf16.mxu0 %v4005
    %4400 = vmatpush1.bf16.msra.mxu0 %v4004
    %4401 = vmatprep.subr.bf16.mxu0 %v4013
    %4402 = vmatpush1.bf16.msra.mxu0 %v4012
    %4403 = vmatprep.subr.bf16.mxu0 %v4021
    %4404 = vmatpush1.bf16.msra.mxu0 %v4020
    %4405 = vmatprep.subr.bf16.mxu0 %v4029
    %4406 = vmatpush1.bf16.msra.mxu0 %v4028
    %4407 = vmatprep.subr.bf16.mxu0 %v4037
    %4408 = vmatpush1.bf16.msra.mxu0 %v4036
    %4409 = vmatprep.subr.bf16.mxu0 %v4045
    %4410 = vmatpush1.bf16.msra.mxu0 %v4044
    %4411 = vmatprep.subr.bf16.mxu0 %v4053
    %4412 = vmatpush1.bf16.msra.mxu0 %v4052
    %4413 = vmatprep.subr.bf16.mxu0 %v4061
    %4414 = vmatpush1.bf16.msra.mxu0 %v4060
    %4415 = vmatprep.subr.bf16.mxu0 %v4069
    %4416 = vmatpush1.bf16.msra.mxu0 %v4068
    %4417 = vmatprep.subr.bf16.mxu0 %v4077
    %4418 = vmatpush1.bf16.msra.mxu0 %v4076
    %4419 = vmatprep.mubr.bf16.mxu0 %v4219
    %4420 = vmatmul.mubr.bf16.gmra.mrb[0].mxu0 %v4218
    %v4421 = vpop.f32.mrb[0].mxu0
    %v4422 = vadd.f32 %v4381, %v4421
    %v4423 = vpop.f32.mrb[0].mxu0
    %v4424 = vadd.f32 %v4383, %v4423
    %v4425 = vpop.f32.mrb[0].mxu0
    %v4426 = vpop.f32.mrb[0].mxu0
    %4427 = vdwg.mxu0
    %4428 = vmatprep.subr.bf16.mxu0 %v4085
    %4429 = vmatpush1.bf16.msra.mxu0 %v4084
    %4430 = vmatprep.subr.bf16.mxu0 %v4093
    %4431 = vmatpush1.bf16.msra.mxu0 %v4092
    %4432 = vmatprep.subr.bf16.mxu0 %v4101
    %4433 = vmatpush1.bf16.msra.mxu0 %v4100
    %4434 = vmatprep.subr.bf16.mxu0 %v4109
    %4435 = vmatpush1.bf16.msra.mxu0 %v4108
    %4436 = vmatprep.subr.bf16.mxu0 %v4117
    %4437 = vmatpush1.bf16.msra.mxu0 %v4116
    %4438 = vmatprep.subr.bf16.mxu0 %v4125
    %4439 = vmatpush1.bf16.msra.mxu0 %v4124
    %4440 = vmatprep.subr.bf16.mxu0 %v4133
    %4441 = vmatpush1.bf16.msra.mxu0 %v4132
    %4442 = vmatprep.subr.bf16.mxu0 %v4141
    %4443 = vmatpush1.bf16.msra.mxu0 %v4140
    %4444 = vmatprep.subr.bf16.mxu0 %v4149
    %4445 = vmatpush1.bf16.msra.mxu0 %v4148
    %4446 = vmatprep.subr.bf16.mxu0 %v4157
    %4447 = vmatpush1.bf16.msra.mxu0 %v4156
    %4448 = vmatprep.subr.bf16.mxu0 %v4165
    %4449 = vmatpush1.bf16.msra.mxu0 %v4164
    %4450 = vmatprep.subr.bf16.mxu0 %v4173
    %4451 = vmatpush1.bf16.msra.mxu0 %v4172
    %4452 = vmatprep.subr.bf16.mxu0 %v4181
    %4453 = vmatpush1.bf16.msra.mxu0 %v4180
    %4454 = vmatprep.subr.bf16.mxu0 %v4189
    %4455 = vmatpush1.bf16.msra.mxu0 %v4188
    %4456 = vmatprep.subr.bf16.mxu0 %v4197
    %4457 = vmatpush1.bf16.msra.mxu0 %v4196
    %4458 = vmatprep.subr.bf16.mxu0 %v4205
    %4459 = vmatpush1.bf16.msra.mxu0 %v4204
    %4460 = vmatprep.mubr.bf16.mxu0 %v4221
    %4461 = vmatmul.mubr.bf16.gmra.mrb[0].mxu0 %v4220
    %v4462 = vpop.f32.mrb[0].mxu0
    %v4463 = vadd.f32 %v4422, %v4462
    %v4464 = vpop.f32.mrb[0].mxu0
    %v4465 = vadd.f32 %v4424, %v4464
    %v4466 = vpop.f32.mrb[0].mxu0
    %v4467 = vpop.f32.mrb[0].mxu0
    %4468 = vdwg.mxu0
    %4469 = vmatprep.subr.bf16.mxu0 %v3575
    %4470 = vmatpush1.bf16.msra.mxu0 %v3574
    %4471 = vmatprep.subr.bf16.mxu0 %v3583
    %4472 = vmatpush1.bf16.msra.mxu0 %v3582
    %4473 = vmatprep.subr.bf16.mxu0 %v3591
    %4474 = vmatpush1.bf16.msra.mxu0 %v3590
    %4475 = vmatprep.subr.bf16.mxu0 %v3599
    %4476 = vmatpush1.bf16.msra.mxu0 %v3598
    %4477 = vmatprep.subr.bf16.mxu0 %v3607
    %4478 = vmatpush1.bf16.msra.mxu0 %v3606
    %4479 = vmatprep.subr.bf16.mxu0 %v3615
    %4480 = vmatpush1.bf16.msra.mxu0 %v3614
    %4481 = vmatprep.subr.bf16.mxu0 %v3623
    %4482 = vmatpush1.bf16.msra.mxu0 %v3622
    %4483 = vmatprep.subr.bf16.mxu0 %v3631
    %4484 = vmatpush1.bf16.msra.mxu0 %v3630
    %4485 = vmatprep.subr.bf16.mxu0 %v3639
    %4486 = vmatpush1.bf16.msra.mxu0 %v3638
    %4487 = vmatprep.subr.bf16.mxu0 %v3647
    %4488 = vmatpush1.bf16.msra.mxu0 %v3646
    %4489 = vmatprep.subr.bf16.mxu0 %v3655
    %4490 = vmatpush1.bf16.msra.mxu0 %v3654
    %4491 = vmatprep.subr.bf16.mxu0 %v3663
    %4492 = vmatpush1.bf16.msra.mxu0 %v3662
    %4493 = vmatprep.subr.bf16.mxu0 %v3671
    %4494 = vmatpush1.bf16.msra.mxu0 %v3670
    %4495 = vmatprep.subr.bf16.mxu0 %v3679
    %4496 = vmatpush1.bf16.msra.mxu0 %v3678
    %4497 = vmatprep.subr.bf16.mxu0 %v3687
    %4498 = vmatpush1.bf16.msra.mxu0 %v3686
    %4499 = vmatprep.subr.bf16.mxu0 %v3695
    %4500 = vmatpush1.bf16.msra.mxu0 %v3694
    %4501 = vmatprep.mubr.bf16.mxu0 %v4213
    %4502 = vmatmul.mubr.bf16.gmra.mrb[0].mxu0 %v4212
    %v4503 = vpop.f32.mrb[0].mxu0
    %v4504 = vadd.f32 %v4235, %v4503
    %v4505 = vpop.f32.mrb[0].mxu0
    %v4506 = vadd.f32 %v4239, %v4505
    %v4507 = vpop.f32.mrb[0].mxu0
    %v4508 = vpop.f32.mrb[0].mxu0
    %4509 = vdwg.mxu0
    %4510 = vmatprep.subr.bf16.mxu0 %v3703
    %4511 = vmatpush1.bf16.msra.mxu0 %v3702
    %4512 = vmatprep.subr.bf16.mxu0 %v3711
    %4513 = vmatpush1.bf16.msra.mxu0 %v3710
    %4514 = vmatprep.subr.bf16.mxu0 %v3719
    %4515 = vmatpush1.bf16.msra.mxu0 %v3718
    %4516 = vmatprep.subr.bf16.mxu0 %v3727
    %4517 = vmatpush1.bf16.msra.mxu0 %v3726
    %4518 = vmatprep.subr.bf16.mxu0 %v3735
    %4519 = vmatpush1.bf16.msra.mxu0 %v3734
    %4520 = vmatprep.subr.bf16.mxu0 %v3743
    %4521 = vmatpush1.bf16.msra.mxu0 %v3742
    %4522 = vmatprep.subr.bf16.mxu0 %v3751
    %4523 = vmatpush1.bf16.msra.mxu0 %v3750
    %4524 = vmatprep.subr.bf16.mxu0 %v3759
    %4525 = vmatpush1.bf16.msra.mxu0 %v3758
    %4526 = vmatprep.subr.bf16.mxu0 %v3767
    %4527 = vmatpush1.bf16.msra.mxu0 %v3766
    %4528 = vmatprep.subr.bf16.mxu0 %v3775
    %4529 = vmatpush1.bf16.msra.mxu0 %v3774
    %4530 = vmatprep.subr.bf16.mxu0 %v3783
    %4531 = vmatpush1.bf16.msra.mxu0 %v3782
    %4532 = vmatprep.subr.bf16.mxu0 %v3791
    %4533 = vmatpush1.bf16.msra.mxu0 %v3790
    %4534 = vmatprep.subr.bf16.mxu0 %v3799
    %4535 = vmatpush1.bf16.msra.mxu0 %v3798
    %4536 = vmatprep.subr.bf16.mxu0 %v3807
    %4537 = vmatpush1.bf16.msra.mxu0 %v3806
    %4538 = vmatprep.subr.bf16.mxu0 %v3815
    %4539 = vmatpush1.bf16.msra.mxu0 %v3814
    %4540 = vmatprep.subr.bf16.mxu0 %v3823
    %4541 = vmatpush1.bf16.msra.mxu0 %v3822
    %4542 = vmatprep.mubr.bf16.mxu0 %v4215
    %4543 = vmatmul.mubr.bf16.gmra.mrb[0].mxu0 %v4214
    %v4544 = vpop.f32.mrb[0].mxu0
    %v4545 = vadd.f32 %v4504, %v4544
    %v4546 = vpop.f32.mrb[0].mxu0
    %v4547 = vadd.f32 %v4506, %v4546
    %v4548 = vpop.f32.mrb[0].mxu0
    %v4549 = vpop.f32.mrb[0].mxu0
    %4550 = vdwg.mxu0
    %4551 = vmatprep.subr.bf16.mxu0 %v3831
    %4552 = vmatpush1.bf16.msra.mxu0 %v3830
    %4553 = vmatprep.subr.bf16.mxu0 %v3839
    %4554 = vmatpush1.bf16.msra.mxu0 %v3838
    %4555 = vmatprep.subr.bf16.mxu0 %v3847
    %4556 = vmatpush1.bf16.msra.mxu0 %v3846
    %4557 = vmatprep.subr.bf16.mxu0 %v3855
    %4558 = vmatpush1.bf16.msra.mxu0 %v3854
    %4559 = vmatprep.subr.bf16.mxu0 %v3863
    %4560 = vmatpush1.bf16.msra.mxu0 %v3862
    %4561 = vmatprep.subr.bf16.mxu0 %v3871
    %4562 = vmatpush1.bf16.msra.mxu0 %v3870
    %4563 = vmatprep.subr.bf16.mxu0 %v3879
    %4564 = vmatpush1.bf16.msra.mxu0 %v3878
    %4565 = vmatprep.subr.bf16.mxu0 %v3887
    %4566 = vmatpush1.bf16.msra.mxu0 %v3886
    %4567 = vmatprep.subr.bf16.mxu0 %v3895
    %4568 = vmatpush1.bf16.msra.mxu0 %v3894
    %4569 = vmatprep.subr.bf16.mxu0 %v3903
    %4570 = vmatpush1.bf16.msra.mxu0 %v3902
    %4571 = vmatprep.subr.bf16.mxu0 %v3911
    %4572 = vmatpush1.bf16.msra.mxu0 %v3910
    %4573 = vmatprep.subr.bf16.mxu0 %v3919
    %4574 = vmatpush1.bf16.msra.mxu0 %v3918
    %4575 = vmatprep.subr.bf16.mxu0 %v3927
    %4576 = vmatpush1.bf16.msra.mxu0 %v3926
    %4577 = vmatprep.subr.bf16.mxu0 %v3935
    %4578 = vmatpush1.bf16.msra.mxu0 %v3934
    %4579 = vmatprep.subr.bf16.mxu0 %v3943
    %4580 = vmatpush1.bf16.msra.mxu0 %v3942
    %4581 = vmatprep.subr.bf16.mxu0 %v3951
    %4582 = vmatpush1.bf16.msra.mxu0 %v3950
    %4583 = vmatprep.mubr.bf16.mxu0 %v4217
    %4584 = vmatmul.mubr.bf16.gmra.mrb[0].mxu0 %v4216
    %v4585 = vpop.f32.mrb[0].mxu0
    %v4586 = vadd.f32 %v4545, %v4585
    %v4587 = vpop.f32.mrb[0].mxu0
    %v4588 = vadd.f32 %v4547, %v4587
    %v4589 = vpop.f32.mrb[0].mxu0
    %v4590 = vpop.f32.mrb[0].mxu0
    %4591 = vdwg.mxu0
    %4592 = vmatprep.subr.bf16.mxu0 %v3959
    %4593 = vmatpush1.bf16.msra.mxu0 %v3958
    %4594 = vmatprep.subr.bf16.mxu0 %v3967
    %4595 = vmatpush1.bf16.msra.mxu0 %v3966
    %4596 = vmatprep.subr.bf16.mxu0 %v3975
    %4597 = vmatpush1.bf16.msra.mxu0 %v3974
    %4598 = vmatprep.subr.bf16.mxu0 %v3983
    %4599 = vmatpush1.bf16.msra.mxu0 %v3982
    %4600 = vmatprep.subr.bf16.mxu0 %v3991
    %4601 = vmatpush1.bf16.msra.mxu0 %v3990
    %4602 = vmatprep.subr.bf16.mxu0 %v3999
    %4603 = vmatpush1.bf16.msra.mxu0 %v3998
    %4604 = vmatprep.subr.bf16.mxu0 %v4007
    %4605 = vmatpush1.bf16.msra.mxu0 %v4006
    %4606 = vmatprep.subr.bf16.mxu0 %v4015
    %4607 = vmatpush1.bf16.msra.mxu0 %v4014
    %4608 = vmatprep.subr.bf16.mxu0 %v4023
    %4609 = vmatpush1.bf16.msra.mxu0 %v4022
    %4610 = vmatprep.subr.bf16.mxu0 %v4031
    %4611 = vmatpush1.bf16.msra.mxu0 %v4030
    %4612 = vmatprep.subr.bf16.mxu0 %v4039
    %4613 = vmatpush1.bf16.msra.mxu0 %v4038
    %4614 = vmatprep.subr.bf16.mxu0 %v4047
    %4615 = vmatpush1.bf16.msra.mxu0 %v4046
    %4616 = vmatprep.subr.bf16.mxu0 %v4055
    %4617 = vmatpush1.bf16.msra.mxu0 %v4054
    %4618 = vmatprep.subr.bf16.mxu0 %v4063
    %4619 = vmatpush1.bf16.msra.mxu0 %v4062
    %4620 = vmatprep.subr.bf16.mxu0 %v4071
    %4621 = vmatpush1.bf16.msra.mxu0 %v4070
    %4622 = vmatprep.subr.bf16.mxu0 %v4079
    %4623 = vmatpush1.bf16.msra.mxu0 %v4078
    %4624 = vmatprep.mubr.bf16.mxu0 %v4219
    %4625 = vmatmul.mubr.bf16.gmra.mrb[0].mxu0 %v4218
    %v4626 = vpop.f32.mrb[0].mxu0
    %v4627 = vadd.f32 %v4586, %v4626
    %v4628 = vpop.f32.mrb[0].mxu0
    %v4629 = vadd.f32 %v4588, %v4628
    %v4630 = vpop.f32.mrb[0].mxu0
    %v4631 = vpop.f32.mrb[0].mxu0
    %4632 = vdwg.mxu0
    %4633 = vmatprep.subr.bf16.mxu0 %v4087
    %4634 = vmatpush1.bf16.msra.mxu0 %v4086
    %4635 = vmatprep.subr.bf16.mxu0 %v4095
    %4636 = vmatpush1.bf16.msra.mxu0 %v4094
    %4637 = vmatprep.subr.bf16.mxu0 %v4103
    %4638 = vmatpush1.bf16.msra.mxu0 %v4102
    %4639 = vmatprep.subr.bf16.mxu0 %v4111
    %4640 = vmatpush1.bf16.msra.mxu0 %v4110
    %4641 = vmatprep.subr.bf16.mxu0 %v4119
    %4642 = vmatpush1.bf16.msra.mxu0 %v4118
    %4643 = vmatprep.subr.bf16.mxu0 %v4127
    %4644 = vmatpush1.bf16.msra.mxu0 %v4126
    %4645 = vmatprep.subr.bf16.mxu0 %v4135
    %4646 = vmatpush1.bf16.msra.mxu0 %v4134
    %4647 = vmatprep.subr.bf16.mxu0 %v4143
    %4648 = vmatpush1.bf16.msra.mxu0 %v4142
    %4649 = vmatprep.subr.bf16.mxu0 %v4151
    %4650 = vmatpush1.bf16.msra.mxu0 %v4150
    %4651 = vmatprep.subr.bf16.mxu0 %v4159
    %4652 = vmatpush1.bf16.msra.mxu0 %v4158
    %4653 = vmatprep.subr.bf16.mxu0 %v4167
    %4654 = vmatpush1.bf16.msra.mxu0 %v4166
    %4655 = vmatprep.subr.bf16.mxu0 %v4175
    %4656 = vmatpush1.bf16.msra.mxu0 %v4174
    %4657 = vmatprep.subr.bf16.mxu0 %v4183
    %4658 = vmatpush1.bf16.msra.mxu0 %v4182
    %4659 = vmatprep.subr.bf16.mxu0 %v4191
    %4660 = vmatpush1.bf16.msra.mxu0 %v4190
    %4661 = vmatprep.subr.bf16.mxu0 %v4199
    %4662 = vmatpush1.bf16.msra.mxu0 %v4198
    %4663 = vmatprep.subr.bf16.mxu0 %v4207
    %4664 = vmatpush1.bf16.msra.mxu0 %v4206
    %4665 = vmatprep.mubr.bf16.mxu0 %v4221
    %4666 = vmatmul.mubr.bf16.gmra.mrb[0].mxu0 %v4220
    %v4667 = vpop.f32.mrb[0].mxu0
    %v4668 = vadd.f32 %v4627, %v4667
    %v4669 = vpop.f32.mrb[0].mxu0
    %v4670 = vadd.f32 %v4629, %v4669
    %v4671 = vpop.f32.mrb[0].mxu0
    %v4672 = vpop.f32.mrb[0].mxu0
    %4673 = vdwg.mxu0
    %4674 = vmatprep.subr.bf16.mxu0 %v3577
    %4675 = vmatpush1.bf16.msra.mxu0 %v3576
    %4676 = vmatprep.subr.bf16.mxu0 %v3585
    %4677 = vmatpush1.bf16.msra.mxu0 %v3584
    %4678 = vmatprep.subr.bf16.mxu0 %v3593
    %4679 = vmatpush1.bf16.msra.mxu0 %v3592
    %4680 = vmatprep.subr.bf16.mxu0 %v3601
    %4681 = vmatpush1.bf16.msra.mxu0 %v3600
    %4682 = vmatprep.subr.bf16.mxu0 %v3609
    %4683 = vmatpush1.bf16.msra.mxu0 %v3608
    %4684 = vmatprep.subr.bf16.mxu0 %v3617
    %4685 = vmatpush1.bf16.msra.mxu0 %v3616
    %4686 = vmatprep.subr.bf16.mxu0 %v3625
    %4687 = vmatpush1.bf16.msra.mxu0 %v3624
    %4688 = vmatprep.subr.bf16.mxu0 %v3633
    %4689 = vmatpush1.bf16.msra.mxu0 %v3632
    %4690 = vmatprep.subr.bf16.mxu0 %v3641
    %4691 = vmatpush1.bf16.msra.mxu0 %v3640
    %4692 = vmatprep.subr.bf16.mxu0 %v3649
    %4693 = vmatpush1.bf16.msra.mxu0 %v3648
    %4694 = vmatprep.subr.bf16.mxu0 %v3657
    %4695 = vmatpush1.bf16.msra.mxu0 %v3656
    %4696 = vmatprep.subr.bf16.mxu0 %v3665
    %4697 = vmatpush1.bf16.msra.mxu0 %v3664
    %4698 = vmatprep.subr.bf16.mxu0 %v3673
    %4699 = vmatpush1.bf16.msra.mxu0 %v3672
    %4700 = vmatprep.subr.bf16.mxu0 %v3681
    %4701 = vmatpush1.bf16.msra.mxu0 %v3680
    %4702 = vmatprep.subr.bf16.mxu0 %v3689
    %4703 = vmatpush1.bf16.msra.mxu0 %v3688
    %4704 = vmatprep.subr.bf16.mxu0 %v3697
    %4705 = vmatpush1.bf16.msra.mxu0 %v3696
    %4706 = vmatprep.mubr.bf16.mxu0 %v4213
    %4707 = vmatmul.mubr.bf16.gmra.mrb[0].mxu0 %v4212
    %v4708 = vpop.f32.mrb[0].mxu0
    %v4709 = vadd.f32 %v4243, %v4708
    %v4710 = vpop.f32.mrb[0].mxu0
    %v4711 = vadd.f32 %v4247, %v4710
    %v4712 = vpop.f32.mrb[0].mxu0
    %v4713 = vpop.f32.mrb[0].mxu0
    %4714 = vdwg.mxu0
    %4715 = vmatprep.subr.bf16.mxu0 %v3705
    %4716 = vmatpush1.bf16.msra.mxu0 %v3704
    %4717 = vmatprep.subr.bf16.mxu0 %v3713
    %4718 = vmatpush1.bf16.msra.mxu0 %v3712
    %4719 = vmatprep.subr.bf16.mxu0 %v3721
    %4720 = vmatpush1.bf16.msra.mxu0 %v3720
    %4721 = vmatprep.subr.bf16.mxu0 %v3729
    %4722 = vmatpush1.bf16.msra.mxu0 %v3728
    %4723 = vmatprep.subr.bf16.mxu0 %v3737
    %4724 = vmatpush1.bf16.msra.mxu0 %v3736
    %4725 = vmatprep.subr.bf16.mxu0 %v3745
    %4726 = vmatpush1.bf16.msra.mxu0 %v3744
    %4727 = vmatprep.subr.bf16.mxu0 %v3753
    %4728 = vmatpush1.bf16.msra.mxu0 %v3752
    %4729 = vmatprep.subr.bf16.mxu0 %v3761
    %4730 = vmatpush1.bf16.msra.mxu0 %v3760
    %4731 = vmatprep.subr.bf16.mxu0 %v3769
    %4732 = vmatpush1.bf16.msra.mxu0 %v3768
    %4733 = vmatprep.subr.bf16.mxu0 %v3777
    %4734 = vmatpush1.bf16.msra.mxu0 %v3776
    %4735 = vmatprep.subr.bf16.mxu0 %v3785
    %4736 = vmatpush1.bf16.msra.mxu0 %v3784
    %4737 = vmatprep.subr.bf16.mxu0 %v3793
    %4738 = vmatpush1.bf16.msra.mxu0 %v3792
    %4739 = vmatprep.subr.bf16.mxu0 %v3801
    %4740 = vmatpush1.bf16.msra.mxu0 %v3800
    %4741 = vmatprep.subr.bf16.mxu0 %v3809
    %4742 = vmatpush1.bf16.msra.mxu0 %v3808
    %4743 = vmatprep.subr.bf16.mxu0 %v3817
    %4744 = vmatpush1.bf16.msra.mxu0 %v3816
    %4745 = vmatprep.subr.bf16.mxu0 %v3825
    %4746 = vmatpush1.bf16.msra.mxu0 %v3824
    %4747 = vmatprep.mubr.bf16.mxu0 %v4215
    %4748 = vmatmul.mubr.bf16.gmra.mrb[0].mxu0 %v4214
    %v4749 = vpop.f32.mrb[0].mxu0
    %v4750 = vadd.f32 %v4709, %v4749
    %v4751 = vpop.f32.mrb[0].mxu0
    %v4752 = vadd.f32 %v4711, %v4751
    %v4753 = vpop.f32.mrb[0].mxu0
    %v4754 = vpop.f32.mrb[0].mxu0
    %4755 = vdwg.mxu0
    %4756 = vmatprep.subr.bf16.mxu0 %v3833
    %4757 = vmatpush1.bf16.msra.mxu0 %v3832
    %4758 = vmatprep.subr.bf16.mxu0 %v3841
    %4759 = vmatpush1.bf16.msra.mxu0 %v3840
    %4760 = vmatprep.subr.bf16.mxu0 %v3849
    %4761 = vmatpush1.bf16.msra.mxu0 %v3848
    %4762 = vmatprep.subr.bf16.mxu0 %v3857
    %4763 = vmatpush1.bf16.msra.mxu0 %v3856
    %4764 = vmatprep.subr.bf16.mxu0 %v3865
    %4765 = vmatpush1.bf16.msra.mxu0 %v3864
    %4766 = vmatprep.subr.bf16.mxu0 %v3873
    %4767 = vmatpush1.bf16.msra.mxu0 %v3872
    %4768 = vmatprep.subr.bf16.mxu0 %v3881
    %4769 = vmatpush1.bf16.msra.mxu0 %v3880
    %4770 = vmatprep.subr.bf16.mxu0 %v3889
    %4771 = vmatpush1.bf16.msra.mxu0 %v3888
    %4772 = vmatprep.subr.bf16.mxu0 %v3897
    %4773 = vmatpush1.bf16.msra.mxu0 %v3896
    %4774 = vmatprep.subr.bf16.mxu0 %v3905
    %4775 = vmatpush1.bf16.msra.mxu0 %v3904
    %4776 = vmatprep.subr.bf16.mxu0 %v3913
    %4777 = vmatpush1.bf16.msra.mxu0 %v3912
    %4778 = vmatprep.subr.bf16.mxu0 %v3921
    %4779 = vmatpush1.bf16.msra.mxu0 %v3920
    %4780 = vmatprep.subr.bf16.mxu0 %v3929
    %4781 = vmatpush1.bf16.msra.mxu0 %v3928
    %4782 = vmatprep.subr.bf16.mxu0 %v3937
    %4783 = vmatpush1.bf16.msra.mxu0 %v3936
    %4784 = vmatprep.subr.bf16.mxu0 %v3945
    %4785 = vmatpush1.bf16.msra.mxu0 %v3944
    %4786 = vmatprep.subr.bf16.mxu0 %v3953
    %4787 = vmatpush1.bf16.msra.mxu0 %v3952
    %4788 = vmatprep.mubr.bf16.mxu0 %v4217
    %4789 = vmatmul.mubr.bf16.gmra.mrb[0].mxu0 %v4216
    %v4790 = vpop.f32.mrb[0].mxu0
    %v4791 = vadd.f32 %v4750, %v4790
    %v4792 = vpop.f32.mrb[0].mxu0
    %v4793 = vadd.f32 %v4752, %v4792
    %v4794 = vpop.f32.mrb[0].mxu0
    %v4795 = vpop.f32.mrb[0].mxu0
    %4796 = vdwg.mxu0
    %4797 = vmatprep.subr.bf16.mxu0 %v3961
    %4798 = vmatpush1.bf16.msra.mxu0 %v3960
    %4799 = vmatprep.subr.bf16.mxu0 %v3969
    %4800 = vmatpush1.bf16.msra.mxu0 %v3968
    %4801 = vmatprep.subr.bf16.mxu0 %v3977
    %4802 = vmatpush1.bf16.msra.mxu0 %v3976
    %4803 = vmatprep.subr.bf16.mxu0 %v3985
    %4804 = vmatpush1.bf16.msra.mxu0 %v3984
    %4805 = vmatprep.subr.bf16.mxu0 %v3993
    %4806 = vmatpush1.bf16.msra.mxu0 %v3992
    %4807 = vmatprep.subr.bf16.mxu0 %v4001
    %4808 = vmatpush1.bf16.msra.mxu0 %v4000
    %4809 = vmatprep.subr.bf16.mxu0 %v4009
    %4810 = vmatpush1.bf16.msra.mxu0 %v4008
    %4811 = vmatprep.subr.bf16.mxu0 %v4017
    %4812 = vmatpush1.bf16.msra.mxu0 %v4016
    %4813 = vmatprep.subr.bf16.mxu0 %v4025
    %4814 = vmatpush1.bf16.msra.mxu0 %v4024
    %4815 = vmatprep.subr.bf16.mxu0 %v4033
    %4816 = vmatpush1.bf16.msra.mxu0 %v4032
    %4817 = vmatprep.subr.bf16.mxu0 %v4041
    %4818 = vmatpush1.bf16.msra.mxu0 %v4040
    %4819 = vmatprep.subr.bf16.mxu0 %v4049
    %4820 = vmatpush1.bf16.msra.mxu0 %v4048
    %4821 = vmatprep.subr.bf16.mxu0 %v4057
    %4822 = vmatpush1.bf16.msra.mxu0 %v4056
    %4823 = vmatprep.subr.bf16.mxu0 %v4065
    %4824 = vmatpush1.bf16.msra.mxu0 %v4064
    %4825 = vmatprep.subr.bf16.mxu0 %v4073
    %4826 = vmatpush1.bf16.msra.mxu0 %v4072
    %4827 = vmatprep.subr.bf16.mxu0 %v4081
    %4828 = vmatpush1.bf16.msra.mxu0 %v4080
    %4829 = vmatprep.mubr.bf16.mxu0 %v4219
    %4830 = vmatmul.mubr.bf16.gmra.mrb[0].mxu0 %v4218
    %v4831 = vpop.f32.mrb[0].mxu0
    %v4832 = vadd.f32 %v4791, %v4831
    %v4833 = vpop.f32.mrb[0].mxu0
    %v4834 = vadd.f32 %v4793, %v4833
    %v4835 = vpop.f32.mrb[0].mxu0
    %v4836 = vpop.f32.mrb[0].mxu0
    %4837 = vdwg.mxu0
    %4838 = vmatprep.subr.bf16.mxu0 %v4089
    %4839 = vmatpush1.bf16.msra.mxu0 %v4088
    %4840 = vmatprep.subr.bf16.mxu0 %v4097
    %4841 = vmatpush1.bf16.msra.mxu0 %v4096
    %4842 = vmatprep.subr.bf16.mxu0 %v4105
    %4843 = vmatpush1.bf16.msra.mxu0 %v4104
    %4844 = vmatprep.subr.bf16.mxu0 %v4113
    %4845 = vmatpush1.bf16.msra.mxu0 %v4112
    %4846 = vmatprep.subr.bf16.mxu0 %v4121
    %4847 = vmatpush1.bf16.msra.mxu0 %v4120
    %4848 = vmatprep.subr.bf16.mxu0 %v4129
    %4849 = vmatpush1.bf16.msra.mxu0 %v4128
    %4850 = vmatprep.subr.bf16.mxu0 %v4137
    %4851 = vmatpush1.bf16.msra.mxu0 %v4136
    %4852 = vmatprep.subr.bf16.mxu0 %v4145
    %4853 = vmatpush1.bf16.msra.mxu0 %v4144
    %4854 = vmatprep.subr.bf16.mxu0 %v4153
    %4855 = vmatpush1.bf16.msra.mxu0 %v4152
    %4856 = vmatprep.subr.bf16.mxu0 %v4161
    %4857 = vmatpush1.bf16.msra.mxu0 %v4160
    %4858 = vmatprep.subr.bf16.mxu0 %v4169
    %4859 = vmatpush1.bf16.msra.mxu0 %v4168
    %4860 = vmatprep.subr.bf16.mxu0 %v4177
    %4861 = vmatpush1.bf16.msra.mxu0 %v4176
    %4862 = vmatprep.subr.bf16.mxu0 %v4185
    %4863 = vmatpush1.bf16.msra.mxu0 %v4184
    %4864 = vmatprep.subr.bf16.mxu0 %v4193
    %4865 = vmatpush1.bf16.msra.mxu0 %v4192
    %4866 = vmatprep.subr.bf16.mxu0 %v4201
    %4867 = vmatpush1.bf16.msra.mxu0 %v4200
    %4868 = vmatprep.subr.bf16.mxu0 %v4209
    %4869 = vmatpush1.bf16.msra.mxu0 %v4208
    %4870 = vmatprep.mubr.bf16.mxu0 %v4221
    %4871 = vmatmul.mubr.bf16.gmra.mrb[0].mxu0 %v4220
    %v4872 = vpop.f32.mrb[0].mxu0
    %v4873 = vadd.f32 %v4832, %v4872
    %v4874 = vpop.f32.mrb[0].mxu0
    %v4875 = vadd.f32 %v4834, %v4874
    %v4876 = vpop.f32.mrb[0].mxu0
    %v4877 = vpop.f32.mrb[0].mxu0
    %4878 = vdwg.mxu0
    %4879 = vmatprep.subr.bf16.mxu0 %v3579
    %4880 = vmatpush1.bf16.msra.mxu0 %v3578
    %4881 = vmatprep.subr.bf16.mxu0 %v3587
    %4882 = vmatpush1.bf16.msra.mxu0 %v3586
    %4883 = vmatprep.subr.bf16.mxu0 %v3595
    %4884 = vmatpush1.bf16.msra.mxu0 %v3594
    %4885 = vmatprep.subr.bf16.mxu0 %v3603
    %4886 = vmatpush1.bf16.msra.mxu0 %v3602
    %4887 = vmatprep.subr.bf16.mxu0 %v3611
    %4888 = vmatpush1.bf16.msra.mxu0 %v3610
    %4889 = vmatprep.subr.bf16.mxu0 %v3619
    %4890 = vmatpush1.bf16.msra.mxu0 %v3618
    %4891 = vmatprep.subr.bf16.mxu0 %v3627
    %4892 = vmatpush1.bf16.msra.mxu0 %v3626
    %4893 = vmatprep.subr.bf16.mxu0 %v3635
    %4894 = vmatpush1.bf16.msra.mxu0 %v3634
    %4895 = vmatprep.subr.bf16.mxu0 %v3643
    %4896 = vmatpush1.bf16.msra.mxu0 %v3642
    %4897 = vmatprep.subr.bf16.mxu0 %v3651
    %4898 = vmatpush1.bf16.msra.mxu0 %v3650
    %4899 = vmatprep.subr.bf16.mxu0 %v3659
    %4900 = vmatpush1.bf16.msra.mxu0 %v3658
    %4901 = vmatprep.subr.bf16.mxu0 %v3667
    %4902 = vmatpush1.bf16.msra.mxu0 %v3666
    %4903 = vmatprep.subr.bf16.mxu0 %v3675
    %4904 = vmatpush1.bf16.msra.mxu0 %v3674
    %4905 = vmatprep.subr.bf16.mxu0 %v3683
    %4906 = vmatpush1.bf16.msra.mxu0 %v3682
    %4907 = vmatprep.subr.bf16.mxu0 %v3691
    %4908 = vmatpush1.bf16.msra.mxu0 %v3690
    %4909 = vmatprep.subr.bf16.mxu0 %v3699
    %4910 = vmatpush1.bf16.msra.mxu0 %v3698
    %4911 = vmatprep.mubr.bf16.mxu0 %v4213
    %4912 = vmatmul.mubr.bf16.gmra.mrb[0].mxu0 %v4212
    %v4913 = vpop.f32.mrb[0].mxu0
    %v4914 = vadd.f32 %v4251, %v4913
    %v4915 = vpop.f32.mrb[0].mxu0
    %v4916 = vadd.f32 %v4255, %v4915
    %v4917 = vpop.f32.mrb[0].mxu0
    %v4918 = vpop.f32.mrb[0].mxu0
    %4919 = vdwg.mxu0
    %4920 = vmatprep.subr.bf16.mxu0 %v3707
    %4921 = vmatpush1.bf16.msra.mxu0 %v3706
    %4922 = vmatprep.subr.bf16.mxu0 %v3715
    %4923 = vmatpush1.bf16.msra.mxu0 %v3714
    %4924 = vmatprep.subr.bf16.mxu0 %v3723
    %4925 = vmatpush1.bf16.msra.mxu0 %v3722
    %4926 = vmatprep.subr.bf16.mxu0 %v3731
    %4927 = vmatpush1.bf16.msra.mxu0 %v3730
    %4928 = vmatprep.subr.bf16.mxu0 %v3739
    %4929 = vmatpush1.bf16.msra.mxu0 %v3738
    %4930 = vmatprep.subr.bf16.mxu0 %v3747
    %4931 = vmatpush1.bf16.msra.mxu0 %v3746
    %4932 = vmatprep.subr.bf16.mxu0 %v3755
    %4933 = vmatpush1.bf16.msra.mxu0 %v3754
    %4934 = vmatprep.subr.bf16.mxu0 %v3763
    %4935 = vmatpush1.bf16.msra.mxu0 %v3762
    %4936 = vmatprep.subr.bf16.mxu0 %v3771
    %4937 = vmatpush1.bf16.msra.mxu0 %v3770
    %4938 = vmatprep.subr.bf16.mxu0 %v3779
    %4939 = vmatpush1.bf16.msra.mxu0 %v3778
    %4940 = vmatprep.subr.bf16.mxu0 %v3787
    %4941 = vmatpush1.bf16.msra.mxu0 %v3786
    %4942 = vmatprep.subr.bf16.mxu0 %v3795
    %4943 = vmatpush1.bf16.msra.mxu0 %v3794
    %4944 = vmatprep.subr.bf16.mxu0 %v3803
    %4945 = vmatpush1.bf16.msra.mxu0 %v3802
    %4946 = vmatprep.subr.bf16.mxu0 %v3811
    %4947 = vmatpush1.bf16.msra.mxu0 %v3810
    %4948 = vmatprep.subr.bf16.mxu0 %v3819
    %4949 = vmatpush1.bf16.msra.mxu0 %v3818
    %4950 = vmatprep.subr.bf16.mxu0 %v3827
    %4951 = vmatpush1.bf16.msra.mxu0 %v3826
    %4952 = vmatprep.mubr.bf16.mxu0 %v4215
    %4953 = vmatmul.mubr.bf16.gmra.mrb[0].mxu0 %v4214
    %v4954 = vpop.f32.mrb[0].mxu0
    %v4955 = vadd.f32 %v4914, %v4954
    %v4956 = vpop.f32.mrb[0].mxu0
    %v4957 = vadd.f32 %v4916, %v4956
    %v4958 = vpop.f32.mrb[0].mxu0
    %v4959 = vpop.f32.mrb[0].mxu0
    %4960 = vdwg.mxu0
    %4961 = vmatprep.subr.bf16.mxu0 %v3835
    %4962 = vmatpush1.bf16.msra.mxu0 %v3834
    %4963 = vmatprep.subr.bf16.mxu0 %v3843
    %4964 = vmatpush1.bf16.msra.mxu0 %v3842
    %4965 = vmatprep.subr.bf16.mxu0 %v3851
    %4966 = vmatpush1.bf16.msra.mxu0 %v3850
    %4967 = vmatprep.subr.bf16.mxu0 %v3859
    %4968 = vmatpush1.bf16.msra.mxu0 %v3858
    %4969 = vmatprep.subr.bf16.mxu0 %v3867
    %4970 = vmatpush1.bf16.msra.mxu0 %v3866
    %4971 = vmatprep.subr.bf16.mxu0 %v3875
    %4972 = vmatpush1.bf16.msra.mxu0 %v3874
    %4973 = vmatprep.subr.bf16.mxu0 %v3883
    %4974 = vmatpush1.bf16.msra.mxu0 %v3882
    %4975 = vmatprep.subr.bf16.mxu0 %v3891
    %4976 = vmatpush1.bf16.msra.mxu0 %v3890
    %4977 = vmatprep.subr.bf16.mxu0 %v3899
    %4978 = vmatpush1.bf16.msra.mxu0 %v3898
    %4979 = vmatprep.subr.bf16.mxu0 %v3907
    %4980 = vmatpush1.bf16.msra.mxu0 %v3906
    %4981 = vmatprep.subr.bf16.mxu0 %v3915
    %4982 = vmatpush1.bf16.msra.mxu0 %v3914
    %4983 = vmatprep.subr.bf16.mxu0 %v3923
    %4984 = vmatpush1.bf16.msra.mxu0 %v3922
    %4985 = vmatprep.subr.bf16.mxu0 %v3931
    %4986 = vmatpush1.bf16.msra.mxu0 %v3930
    %4987 = vmatprep.subr.bf16.mxu0 %v3939
    %4988 = vmatpush1.bf16.msra.mxu0 %v3938
    %4989 = vmatprep.subr.bf16.mxu0 %v3947
    %4990 = vmatpush1.bf16.msra.mxu0 %v3946
    %4991 = vmatprep.subr.bf16.mxu0 %v3955
    %4992 = vmatpush1.bf16.msra.mxu0 %v3954
    %4993 = vmatprep.mubr.bf16.mxu0 %v4217
    %4994 = vmatmul.mubr.bf16.gmra.mrb[0].mxu0 %v4216
    %v4995 = vpop.f32.mrb[0].mxu0
    %v4996 = vadd.f32 %v4955, %v4995
    %v4997 = vpop.f32.mrb[0].mxu0
    %v4998 = vadd.f32 %v4957, %v4997
    %v4999 = vpop.f32.mrb[0].mxu0
    %v5000 = vpop.f32.mrb[0].mxu0
    %5001 = vdwg.mxu0
    %5002 = vmatprep.subr.bf16.mxu0 %v3963
    %5003 = vmatpush1.bf16.msra.mxu0 %v3962
    %5004 = vmatprep.subr.bf16.mxu0 %v3971
    %5005 = vmatpush1.bf16.msra.mxu0 %v3970
    %5006 = vmatprep.subr.bf16.mxu0 %v3979
    %5007 = vmatpush1.bf16.msra.mxu0 %v3978
    %5008 = vmatprep.subr.bf16.mxu0 %v3987
    %5009 = vmatpush1.bf16.msra.mxu0 %v3986
    %5010 = vmatprep.subr.bf16.mxu0 %v3995
    %5011 = vmatpush1.bf16.msra.mxu0 %v3994
    %5012 = vmatprep.subr.bf16.mxu0 %v4003
    %5013 = vmatpush1.bf16.msra.mxu0 %v4002
    %5014 = vmatprep.subr.bf16.mxu0 %v4011
    %5015 = vmatpush1.bf16.msra.mxu0 %v4010
    %5016 = vmatprep.subr.bf16.mxu0 %v4019
    %5017 = vmatpush1.bf16.msra.mxu0 %v4018
    %5018 = vmatprep.subr.bf16.mxu0 %v4027
    %5019 = vmatpush1.bf16.msra.mxu0 %v4026
    %5020 = vmatprep.subr.bf16.mxu0 %v4035
    %5021 = vmatpush1.bf16.msra.mxu0 %v4034
    %5022 = vmatprep.subr.bf16.mxu0 %v4043
    %5023 = vmatpush1.bf16.msra.mxu0 %v4042
    %5024 = vmatprep.subr.bf16.mxu0 %v4051
    %5025 = vmatpush1.bf16.msra.mxu0 %v4050
    %5026 = vmatprep.subr.bf16.mxu0 %v4059
    %5027 = vmatpush1.bf16.msra.mxu0 %v4058
    %5028 = vmatprep.subr.bf16.mxu0 %v4067
    %5029 = vmatpush1.bf16.msra.mxu0 %v4066
    %5030 = vmatprep.subr.bf16.mxu0 %v4075
    %5031 = vmatpush1.bf16.msra.mxu0 %v4074
    %5032 = vmatprep.subr.bf16.mxu0 %v4083
    %5033 = vmatpush1.bf16.msra.mxu0 %v4082
    %5034 = vmatprep.mubr.bf16.mxu0 %v4219
    %5035 = vmatmul.mubr.bf16.gmra.mrb[0].mxu0 %v4218
    %v5036 = vpop.f32.mrb[0].mxu0
    %v5037 = vadd.f32 %v4996, %v5036
    %v5038 = vpop.f32.mrb[0].mxu0
    %v5039 = vadd.f32 %v4998, %v5038
    %v5040 = vpop.f32.mrb[0].mxu0
    %v5041 = vpop.f32.mrb[0].mxu0
    %5042 = vdwg.mxu0
    %5043 = vmatprep.subr.bf16.mxu0 %v4091
    %5044 = vmatpush1.bf16.msra.mxu0 %v4090
    %5045 = vmatprep.subr.bf16.mxu0 %v4099
    %5046 = vmatpush1.bf16.msra.mxu0 %v4098
    %5047 = vmatprep.subr.bf16.mxu0 %v4107
    %5048 = vmatpush1.bf16.msra.mxu0 %v4106
    %5049 = vmatprep.subr.bf16.mxu0 %v4115
    %5050 = vmatpush1.bf16.msra.mxu0 %v4114
    %5051 = vmatprep.subr.bf16.mxu0 %v4123
    %5052 = vmatpush1.bf16.msra.mxu0 %v4122
    %5053 = vmatprep.subr.bf16.mxu0 %v4131
    %5054 = vmatpush1.bf16.msra.mxu0 %v4130
    %5055 = vmatprep.subr.bf16.mxu0 %v4139
    %5056 = vmatpush1.bf16.msra.mxu0 %v4138
    %5057 = vmatprep.subr.bf16.mxu0 %v4147
    %5058 = vmatpush1.bf16.msra.mxu0 %v4146
    %5059 = vmatprep.subr.bf16.mxu0 %v4155
    %5060 = vmatpush1.bf16.msra.mxu0 %v4154
    %5061 = vmatprep.subr.bf16.mxu0 %v4163
    %5062 = vmatpush1.bf16.msra.mxu0 %v4162
    %5063 = vmatprep.subr.bf16.mxu0 %v4171
    %5064 = vmatpush1.bf16.msra.mxu0 %v4170
    %5065 = vmatprep.subr.bf16.mxu0 %v4179
    %5066 = vmatpush1.bf16.msra.mxu0 %v4178
    %5067 = vmatprep.subr.bf16.mxu0 %v4187
    %5068 = vmatpush1.bf16.msra.mxu0 %v4186
    %5069 = vmatprep.subr.bf16.mxu0 %v4195
    %5070 = vmatpush1.bf16.msra.mxu0 %v4194
    %5071 = vmatprep.subr.bf16.mxu0 %v4203
    %5072 = vmatpush1.bf16.msra.mxu0 %v4202
    %5073 = vmatprep.subr.bf16.mxu0 %v4211
    %5074 = vmatpush1.bf16.msra.mxu0 %v4210
    %5075 = vmatprep.mubr.bf16.mxu0 %v4221
    %5076 = vmatmul.mubr.bf16.gmra.mrb[0].mxu0 %v4220
    %v5077 = vpop.f32.mrb[0].mxu0
    %v5078 = vadd.f32 %v5037, %v5077
    %v5079 = vpop.f32.mrb[0].mxu0
    %v5080 = vadd.f32 %v5039, %v5079
    %v5081 = vpop.f32.mrb[0].mxu0
    %v5082 = vpop.f32.mrb[0].mxu0
    %5083 = vdwg.mxu0
    %v5084 = vlaneseq
    %v5085 = vand.u32 %v5084, 127
    %v5086 = vadd.s32 %v5085, 128
    %v5087 = vadd.s32 %v5085, 256
    %v5088 = vadd.s32 %v5085, 384
    %v5089 = vadd.s32 %v5085, 512
    %v5090 = vadd.s32 %v5085, 640
    %v5091 = vadd.s32 %v5085, 768
    %v5092 = vadd.s32 %v5085, 896
    %vm5093 = vcmp.lt.s32.totalorder %v5085, 1000
    %vm5094 = vcmp.lt.s32.totalorder %v5086, 1000
    %vm5095 = vcmp.lt.s32.totalorder %v5087, 1000
    %vm5096 = vcmp.lt.s32.totalorder %v5088, 1000
    %vm5097 = vcmp.lt.s32.totalorder %v5089, 1000
    %vm5098 = vcmp.lt.s32.totalorder %v5090, 1000
    %vm5099 = vcmp.lt.s32.totalorder %v5091, 1000
    %vm5100 = vcmp.lt.s32.totalorder %v5092, 1000
    %v5101 = vsel %vm5093, %v4463, -1e+30
    %v5102 = vsel %vm5094, %v4465, -1e+30
    %v5103 = vsel %vm5095, %v4668, -1e+30
    %v5104 = vsel %vm5096, %v4670, -1e+30
    %v5105 = vsel %vm5097, %v4873, -1e+30
    %v5106 = vsel %vm5098, %v4875, -1e+30
    %v5107 = vsel %vm5099, %v5078, -1e+30
    %v5108 = vsel %vm5100, %v5080, -1e+30
    %vm5109 = vcmask 1041408
    %v5110 = vsel %vm5109, %v5101, -inf
    %v5111 = vsel %vm5109, %v5102, -inf
    %v5112 = vsel %vm5109, %v5103, -inf
    %v5113 = vsel %vm5109, %v5104, -inf
    %v5114 = vsel %vm5109, %v5105, -inf
    %v5115 = vmax.f32 %v5110, %v5114
    %v5116 = vsel %vm5109, %v5106, -inf
    %v5117 = vmax.f32 %v5111, %v5116
    %v5118 = vsel %vm5109, %v5107, -inf
    %v5119 = vmax.f32 %v5112, %v5118
    %v5120 = vsel %vm5109, %v5108, -inf
    %v5121 = vmax.f32 %v5113, %v5120
    %v5122 = vmax.f32 %v5115, %v5117
    %v5123 = vmax.f32 %v5119, %v5121
    %v5124 = vmax.f32 %v5122, %v5123
    %5125 = vmax.xlane.f32.xlu0 %v5124
    %v5126 = vpop.xlane.xlu0 %5125
    %v5127 = vsub.f32 %v5101, %v5126
    %v5128 = vsub.f32 %v5102, %v5126
    %v5129 = vsub.f32 %v5103, %v5126
    %v5130 = vsub.f32 %v5104, %v5126
    %v5131 = vsub.f32 %v5105, %v5126
    %v5132 = vsub.f32 %v5106, %v5126
    %v5133 = vsub.f32 %v5107, %v5126
    %v5134 = vsub.f32 %v5108, %v5126
    %v5135 = vmul.f32 %v5127, 1.442695
    %v5136 = vpow.pop %v5135
    %v5137 = vmul.f32 %v5128, 1.442695
    %v5138 = vpow.pop %v5137
    %v5139 = vmul.f32 %v5129, 1.442695
    %v5140 = vpow.pop %v5139
    %v5141 = vmul.f32 %v5130, 1.442695
    %v5142 = vpow.pop %v5141
    %v5143 = vmul.f32 %v5131, 1.442695
    %v5144 = vpow.pop %v5143
    %v5145 = vmul.f32 %v5132, 1.442695
    %v5146 = vpow.pop %v5145
    %v5147 = vmul.f32 %v5133, 1.442695
    %v5148 = vpow.pop %v5147
    %v5149 = vmul.f32 %v5134, 1.442695
    %v5150 = vpow.pop %v5149
    %v5151 = vsel %vm5109, %v5136, 0.0
    %v5152 = vsel %vm5109, %v5138, 0.0
    %v5153 = vadd.f32 %v5151, %v5152
    %v5154 = vsel %vm5109, %v5140, 0.0
    %v5155 = vadd.f32 %v5153, %v5154
    %v5156 = vsel %vm5109, %v5142, 0.0
    %v5157 = vadd.f32 %v5155, %v5156
    %v5158 = vsel %vm5109, %v5144, 0.0
    %v5159 = vadd.f32 %v5157, %v5158
    %v5160 = vsel %vm5109, %v5146, 0.0
    %v5161 = vadd.f32 %v5159, %v5160
    %v5162 = vsel %vm5109, %v5148, 0.0
    %v5163 = vadd.f32 %v5161, %v5162
    %v5164 = vsel %vm5109, %v5150, 0.0
    %v5165 = vadd.f32 %v5163, %v5164
    %5166 = vadd.xlane.f32.xlu0 %v5165
    %v5167 = vpop.xlane.xlu0 %5166
    %v5168 = vrcp.pop %v5167
    %v5169 = vmul.f32 %v5136, %v5168
    %v5170 = vmul.f32 %v5138, %v5168
    %v5171 = vmul.f32 %v5140, %v5168
    %v5172 = vmul.f32 %v5142, %v5168
    %v5173 = vmul.f32 %v5144, %v5168
    %v5174 = vmul.f32 %v5146, %v5168
    %v5175 = vmul.f32 %v5148, %v5168
    %v5176 = vmul.f32 %v5150, %v5168
    %v5185 = vcombine.low %v5169, %v5170
    %v5186 = vcombine.low %v5171, %v5172
    %v5188 = vunpack.c.l.s4 1983009808
    %v5189 = vunpack.c.0.s8 %v5188
    %v5190 = vlaneseq
    %v5191 = vshrl.u32 %v5190, 7
    %v5192 = vsub.s32 %v5189, %v5191
    %v5193 = vrot.slane %v5185, %v5192
    %v5195 = vunpack.c.l.s4 1983009808
    %v5196 = vunpack.c.0.s8 %v5195
    %v5197 = vlaneseq
    %v5198 = vshrl.u32 %v5197, 7
    %v5199 = vsub.s32 %v5196, %v5198
    %v5200 = vrot.slane %v5186, %v5199
    %v5201 = vcombine.low %v5193, %v5200
    %v5202 = vcombine.low %v5173, %v5174
    %v5203 = vcombine.low %v5175, %v5176
    %v5205 = vunpack.c.l.s4 1983009808
    %v5206 = vunpack.c.0.s8 %v5205
    %v5207 = vlaneseq
    %v5208 = vshrl.u32 %v5207, 7
    %v5209 = vsub.s32 %v5206, %v5208
    %v5210 = vrot.slane %v5202, %v5209
    %v5212 = vunpack.c.l.s4 1983009808
    %v5213 = vunpack.c.0.s8 %v5212
    %v5214 = vlaneseq
    %v5215 = vshrl.u32 %v5214, 7
    %v5216 = vsub.s32 %v5213, %v5215
    %v5217 = vrot.slane %v5203, %v5216
    %v5218 = vcombine.low %v5210, %v5217
    %5221 = vst [vmem:[#allocation14] sm:$0xff] %v5201
    %5222 = vst [vmem:[#allocation14 + $0x8] sm:$0xff] %v5218
    // Predicated region
    $region42: #{mobilenet_v2_forward.1} parent=1 // pred_check
      _
    $region43: #{mobilenet_v2_forward.1} parent=1 // pred_check_branch
      %5224 = sbr.rel (0) target = $region45
    $region44: #{mobilenet_v2_forward.1} parent=1 // pred_region
      %s5226 = ssub.s32 256, 256
      %5227 = vsyncadd [#allocation8], %s5226
      %s5229 = sshll.u32 [#allocation14], 4
      %s5230 = int_to_ptr.vmem [resolvable:$true] %s5229
      %5232 = dma.vmem_to_hbm [thread:$0]  %s5230, 256, %s8, [#allocation8]
    $region45: #{mobilenet_v2_forward.1} parent=1 // pred_fallthru
      _
    // Predicated region
    $region46: #{mobilenet_v2_forward.1} parent=1 // pred_check
      _
    $region47: #{mobilenet_v2_forward.1} parent=1 // pred_check_branch
      %5234 = sbr.rel (0) target = $region49
    $region48: #{mobilenet_v2_forward.1} parent=1 // pred_region
      %5235 = dma.done [#allocation8], 256
    $region49: #{mobilenet_v2_forward.1} parent=1 // pred_fallthru
      _
    %5236 = vsyncpa [#allocation7], 1
    %5237 = vsyncpa [#allocation10], 1
    %5238 = vsyncpa [#allocation13], 1
    %5239 = vsyncpa [#allocation8], 1
  %5240 = vsyncmov [#allocation5]
  %s5241 = vpop.sfrf %5240
  %p5242 = scmp.eq.s32.totalorder %s5241, 0
  %p5243 = pneg %p5242
  %5245 = shalt.err (%p5243)
  %s5246 = scalar_lea.sflag [#allocation5], 1
  %5247 = vsyncmov %s5246
  %s5248 = vpop.sfrf %5247
  %p5249 = scmp.eq.s32.totalorder %s5248, 0
  %p5250 = pneg %p5249
  %5252 = shalt.err (%p5250)

</llo_original>
